<compile_context>
chip_gen: v6e
topology: v6e:2x2x1
jax: 0.10.0
libtpu: 0.0.40
codegen_flags: <defaults>
</compile_context>

<pallas_src>
import numpy as np
import jax
import jax.numpy as jnp
from jax.experimental import pallas as pl
from jax.experimental.pallas import tpu as pltpu

LANE = 128   # lane-dense width used for every padded weight block / output

# ---------------------------------------------------------------------------
# Static layout of the packed weight blob (bf16, (W_ROWS, 128)).  Every block
# starts at a multiple of 16 rows (bf16 sublane tile) and stores the real
# weights in its top-left corner, zeros elsewhere: zero activation lanes feed
# zero weight rows, so the lane padding never changes the math.
# ---------------------------------------------------------------------------
OFF_W1 = 0                      # stem   (rows 0:4*Cin_img, cols 0:16)
OFF_W2 = OFF_W1 + 16            # stage2: 4 taps x 128 rows
OFF_W3 = OFF_W2 + 4 * LANE      # stage3: 4 taps x 128 rows
OFF_W4 = OFF_W3 + 4 * LANE      # stage4: 4 taps x 128 rows
OFF_N3 = OFF_W4 + 4 * LANE      # neck P3
OFF_N4 = OFF_N3 + LANE          # neck P4
OFF_N5 = OFF_N4 + LANE          # neck P5
OFF_H3 = OFF_N5 + LANE          # head P3
OFF_H4 = OFF_H3 + LANE          # head P4
OFF_H5 = OFF_H4 + LANE          # head P5
W_ROWS = OFF_H5 + LANE          # 2320 rows total
B_ROWS = 16                     # 10 bias rows used, padded to a full tile


# ---------------------------------------------------------------------------
# Fused Pallas kernel: backbone + neck + head for B_TILE images per grid step.
#
# Row convention of the x block (B_TILE * (H/2*W/2) rows, 4*C channels):
#   row = ((t2*4 + t3)*4 + t4) * B_TILE*Q  +  b_local*Q  +  q
# with t2/t3/t4 the 2x2 taps of the 2nd/3rd/4th stride-2 convs, q the coarse
# (H/16, W/16) raster pixel, and channels (h0, w0, c) the stem's own window.
# With this ordering every stride-2 conv sees its 4 taps as 4 contiguous row
# blocks, so each stage is 4 matmuls + bias + SiLU, entirely in VMEM.
# ---------------------------------------------------------------------------
def _make_kernel(stem_k, m3, m4, m5):
    def kernel(x_ref, w_ref, b_ref, out_ref):
        f32 = jnp.float32

        def silu_bf16(a):                               # a: f32 pre-activation
            sig = 0.5 * jnp.tanh(0.5 * a) + 0.5         # one EUP op, no overflow
            return (a * sig).astype(jnp.bfloat16)

        def dense(y, w_off, k, b_row):                  # bf16 matmul, f32 acc
            return (jnp.dot(y, w_ref[w_off:w_off + k, :],
                            preferred_element_type=f32)
                    + b_ref[b_row:b_row + 1, :])

        def s2_conv(y, w_off, b_row):
            # 2x2 stride-2 conv: 4 taps = 4 contiguous row blocks of y and
            # 4 contiguous 128-row blocks of the packed weight blob.
            m = y.shape[0] // 4
            acc = jnp.dot(y[0:m, :], w_ref[w_off:w_off + LANE, :],
                          preferred_element_type=f32)
            for t in range(1, 4):
                acc = acc + jnp.dot(
                    y[t * m:(t + 1) * m, :],
                    w_ref[w_off + t * LANE:w_off + (t + 1) * LANE, :],
                    preferred_element_type=f32)
            return acc + b_ref[b_row:b_row + 1, :]

        # ---- backbone: stem + 3 stride-2 stages (all lane-padded to 128) ----
        y1 = silu_bf16(dense(x_ref[...], OFF_W1, stem_k, 0))   # H/2
        y2 = silu_bf16(s2_conv(y1, OFF_W2, 1))                 # H/4  (P3)
        y3 = silu_bf16(s2_conv(y2, OFF_W3, 2))                 # H/8  (P4)
        y4 = silu_bf16(s2_conv(y3, OFF_W4, 3))                 # H/16 (P5)

        # ---- neck (1x1 + SiLU) fused with head (1x1 linear), one bf16 out ---
        def neck_head(p, w_n, b_n, w_h, b_h, r0, r1):
            nk = silu_bf16(dense(p, w_n, LANE, b_n))
            out_ref[r0:r1, :] = dense(nk, w_h, LANE, b_h).astype(out_ref.dtype)

        neck_head(y2, OFF_N3, 4, OFF_H3, 7, 0, m3)
        neck_head(y3, OFF_N4, 5, OFF_H4, 8, m3, m3 + m4)
        neck_head(y4, OFF_N5, 6, OFF_H5, 9, m3 + m4, m3 + m4 + m5)

    return kernel


def _vmem_limit_bytes(b_tile, m1, stem_k):
    """Real buffer need + headroom (clamped so it is safe on v5e/v6e/v7x)."""
    blk_in = b_tile * m1 * stem_k * 2                          # bf16 input blk
    blk_out = b_tile * (m1 // 4 + m1 // 16 + m1 // 64) * LANE * 2
    blobs = W_ROWS * LANE * 2 + B_ROWS * LANE * 4
    scratch = 6 * b_tile * m1 * LANE * 4   # f32 intermediates (stem dominates)
    need = 2 * (blk_in + blk_out) + 2 * blobs + scratch
    return int(min(64 * 2 ** 20, max(16 * 2 ** 20, 2 * need)))


def fused_forward(x_rows, w_blob, b_blob, *, b_tile, m1):
    """x_rows: (n_blocks*b_tile*m1, 4*C) bf16 rows in kernel order.  Returns
    the concatenated lane-padded detections (n_blocks*(m3+m4+m5), 128) bf16."""
    stem_k = x_rows.shape[1]
    blk_in = b_tile * m1
    n_blocks = x_rows.shape[0] // blk_in
    m3, m4, m5 = blk_in // 4, blk_in // 16, blk_in // 64
    blk_out = m3 + m4 + m5
    assert blk_out % 16 == 0, "output block rows must stay bf16 tile aligned"

    kernel = _make_kernel(stem_k, m3, m4, m5)
    return pl.pallas_call(
        kernel,
        out_shape=jax.ShapeDtypeStruct((n_blocks * blk_out, LANE), jnp.bfloat16),
        grid=(n_blocks,),
        in_specs=[
            pl.BlockSpec((blk_in, stem_k), lambda g: (g, 0)),  # per-step rows
            pl.BlockSpec((W_ROWS, LANE), lambda g: (0, 0)),    # resident weights
            pl.BlockSpec((B_ROWS, LANE), lambda g: (0, 0)),    # resident biases
        ],
        out_specs=pl.BlockSpec((blk_out, LANE), lambda g: (g, 0)),
        compiler_params=pltpu.CompilerParams(
            dimension_semantics=("parallel",),
            vmem_limit_bytes=_vmem_limit_bytes(b_tile, m1, stem_k),
        ),
    )(x_rows, w_blob, b_blob)


# ---------------------------------------------------------------------------
# Wrapper-side layout plumbing: reshape + transpose only (no gathers).
# ---------------------------------------------------------------------------
def _pick_b_tile(n, cap=8):
    """Largest divisor of n <= cap that still leaves >= 2 grid steps."""
    best = 1
    for bt in range(1, min(cap, n) + 1):
        if n % bt:
            continue
        if n >= 2 and n // bt < 2:
            continue
        best = bt
    return best


def _rows_from_nchw(x_nchw, b_tile, img):
    """NCHW -> kernel tap-major row order via a single reshape+transpose."""
    n, c, h, w = x_nchw.shape
    assert h == img and w == img and img % 16 == 0 and n % b_tile == 0
    hq = img // 16
    x = jnp.transpose(x_nchw, (0, 2, 3, 1))                    # NHWC
    # axes: blk, bl, h5,h3,h2,h1,h0, w5,w3,w2,w1, (w0*c)
    x = x.reshape(n // b_tile, b_tile, hq, 2, 2, 2, 2, hq, 2, 2, 2, 2 * c)
    # target: blk, h1,w1, h2,w2, h3,w3, bl, h5,w5, h0, (w0*c)
    x = jnp.transpose(x, (0, 5, 10, 4, 9, 3, 8, 1, 2, 7, 6, 11))
    return x.reshape(n * (img // 2) ** 2, 4 * c)


def _split_outputs(out, n, b_tile, img, out_ch):
    """Un-permute the concatenated kernel output into per-scale NCHW f32."""
    hq = img // 16
    m1 = (img // 2) ** 2
    blk = b_tile * m1
    m3, m4, m5 = blk // 4, blk // 16, blk // 64
    nb = n // b_tile
    o = out.reshape(nb, m3 + m4 + m5, LANE)

    # P3 rows ordered (h2,w2, h3,w3, bl, h5,w5); pixel H = (h5,h3,h2).
    p3 = o[:, :m3, :].reshape(nb, 2, 2, 2, 2, b_tile, hq, hq, LANE)
    p3 = jnp.transpose(p3, (0, 5, 6, 3, 1, 7, 4, 2, 8))
    p3 = p3.reshape(n, img // 4, img // 4, LANE)

    # P4 rows ordered (h3,w3, bl, h5,w5); pixel H = (h5,h3).
    p4 = o[:, m3:m3 + m4, :].reshape(nb, 2, 2, b_tile, hq, hq, LANE)
    p4 = jnp.transpose(p4, (0, 3, 4, 1, 5, 2, 6))
    p4 = p4.reshape(n, img // 8, img // 8, LANE)

    # P5 rows ordered (bl, h5, w5) -> already raster.
    p5 = o[:, m3 + m4:, :].reshape(n, hq, hq, LANE)

    return [jnp.transpose(p[..., :out_ch].astype(jnp.float32), (0, 3, 1, 2))
            for p in (p3, p4, p5)]


# ---------------------------------------------------------------------------
# Parameters
# ---------------------------------------------------------------------------
def _dense_init(key, cin, cout):
    kw, _ = jax.random.split(key)
    w = jax.random.normal(kw, (cin, cout), jnp.float32) * (1.0 / jnp.sqrt(cin))
    b = jnp.zeros((cout,), jnp.float32)
    return w, b


def init_params(key, num_classes=7, num_anchors=3, neck_width=64):
    out_ch = num_anchors * (5 + num_classes)
    keys = jax.random.split(key, 10)
    bb = {}
    bb["w1"], bb["b1"] = _dense_init(keys[0], 4 * 3, 16)     # stem   H/2
    bb["w2"], bb["b2"] = _dense_init(keys[1], 4 * 16, 32)    # P3     H/4
    bb["w3"], bb["b3"] = _dense_init(keys[2], 4 * 32, 64)    # P4     H/8
    bb["w4"], bb["b4"] = _dense_init(keys[3], 4 * 64, 128)   # P5     H/16
    neck = [
        _dense_init(keys[4], 32, neck_width),
        _dense_init(keys[5], 64, neck_width),
        _dense_init(keys[6], 128, neck_width),
    ]
    head = [
        _dense_init(keys[7], neck_width, out_ch),
        _dense_init(keys[8], neck_width, out_ch),
        _dense_init(keys[9], neck_width, out_ch),
    ]
    return {"backbone": bb, "neck": neck, "head": head}


def _pack_params(params, out_ch):
    """Pack all weights into one bf16 (W_ROWS,128) blob and all biases into
    one f32 (B_ROWS,128) blob (zero padded, sublane-aligned block offsets)."""
    bb = params["backbone"]
    wblob = np.zeros((W_ROWS, LANE), np.float32)
    bblob = np.zeros((B_ROWS, LANE), np.float32)

    def put_w(off, w):
        w = np.asarray(w, np.float32)
        assert w.shape[0] <= 2 * LANE and w.shape[1] <= LANE
        wblob[off:off + w.shape[0], :w.shape[1]] = w

    def put_s2(off, w):                      # tap-major (4*cin, cout)
        w = np.asarray(w, np.float32)
        cin = w.shape[0] // 4
        assert cin <= LANE and w.shape[1] <= LANE
        for t in range(4):
            wblob[off + t * LANE:off + t * LANE + cin, :w.shape[1]] = \
                w[t * cin:(t + 1) * cin]

    def put_b(row, b):
        b = np.asarray(b, np.float32)
        assert b.shape[0] <= LANE
        bblob[row, :b.shape[0]] = b

    assert bb["w1"].shape[0] <= 16
    put_w(OFF_W1, bb["w1"]); put_b(0, bb["b1"])
    put_s2(OFF_W2, bb["w2"]); put_b(1, bb["b2"])
    put_s2(OFF_W3, bb["w3"]); put_b(2, bb["b3"])
    put_s2(OFF_W4, bb["w4"]); put_b(3, bb["b4"])
    for i, (w, b) in enumerate(params["neck"]):
        put_w((OFF_N3, OFF_N4, OFF_N5)[i], w); put_b(4 + i, b)
    for i, (w, b) in enumerate(params["head"]):
        assert w.shape[1] == out_ch
        put_w((OFF_H3, OFF_H4, OFF_H5)[i], w); put_b(7 + i, b)

    return jnp.asarray(wblob, jnp.bfloat16), jnp.asarray(bblob, jnp.float32)


# ---------------------------------------------------------------------------
# Model
# ---------------------------------------------------------------------------
class SmartCashYOLO:
    """backbone -> neck -> head; the whole forward is one fused Pallas call."""

    def __init__(self, params, config):
        self.params = params
        self.config = config
        self.img_size = config["img_size"]
        self.num_classes = config["num_classes"]
        self.num_anchors = config.get("num_anchors", 3)
        self.out_ch = self.num_anchors * (5 + self.num_classes)
        self._m1 = (self.img_size // 2) ** 2
        self._w_blob, self._b_blob = _pack_params(params, self.out_ch)
        self._fwd = jax.jit(self._forward_impl)

    def _forward_impl(self, x_nchw, w_blob, b_blob):
        n = x_nchw.shape[0]
        b_tile = _pick_b_tile(n)
        x_rows = _rows_from_nchw(x_nchw, b_tile, self.img_size)
        x_rows = x_rows.astype(jnp.bfloat16)
        out = fused_forward(x_rows, w_blob, b_blob,
                            b_tile=b_tile, m1=self._m1)
        return _split_outputs(out, n, b_tile, self.img_size, self.out_ch)

    def forward(self, x_nchw):
        return {"detections": self._fwd(x_nchw, self._w_blob, self._b_blob)}

    # TODO(synk): predict() post-processing (confidence filter + NMS) produces
    # dynamic-length outputs and has no clean Pallas equivalent; only the
    # forward pass is implemented.


# ---------------------------------------------------------------------------
# Pure-JAX reference (space-to-depth + matmuls) -- correctness check only.
# ---------------------------------------------------------------------------
def _reference_forward(params, x_nchw):
    hp = jax.lax.Precision.HIGHEST

    def s2d(x):
        n, h, w, c = x.shape
        x = x.reshape(n, h // 2, 2, w // 2, 2, c).transpose(0, 1, 3, 2, 4, 5)
        return x.reshape(n, h // 2, w // 2, 4 * c)

    def dense(x, w, b, act):
        y = jnp.einsum("nhwc,cd->nhwd", x, w, precision=hp) + b
        return y * jax.nn.sigmoid(y) if act == "silu" else y

    bb = params["backbone"]
    x = jnp.transpose(x_nchw, (0, 2, 3, 1))
    c1 = dense(s2d(x), bb["w1"], bb["b1"], "silu")
    c2 = dense(s2d(c1), bb["w2"], bb["b2"], "silu")
    c3 = dense(s2d(c2), bb["w3"], bb["b3"], "silu")
    c4 = dense(s2d(c3), bb["w4"], bb["b4"], "silu")
    dets = []
    for f, (wn, bn), (wh, bh) in zip((c2, c3, c4), params["neck"], params["head"]):
        nk = dense(f, wn, bn, "silu")
        dets.append(jnp.transpose(dense(nk, wh, bh, "linear"), (0, 3, 1, 2)))
    return dets


def _round_trip_bf16_weights(params):
    rt = lambda a: a.astype(jnp.bfloat16).astype(jnp.float32)
    bb = {k: (rt(v) if k.startswith("w") else v)
          for k, v in params["backbone"].items()}
    neck = [(rt(w), b) for w, b in params["neck"]]
    head = [(rt(w), b) for w, b in params["head"]]
    return {"backbone": bb, "neck": neck, "head": head}


if __name__ == "__main__":
    key = jax.random.PRNGKey(0)
    kx, kp = jax.random.split(key)

    config = {
        "backbone": "synthetic_s2d",
        "layer_mode": "multi",
        "detection_layers": ["P3", "P4", "P5"],
        "num_classes": 7,
        "num_anchors": 3,
        "img_size": 64,
    }

    # batch=4 so B_TILE=2 images run per grid step while keeping 2 grid steps.
    x = jax.random.normal(kx, (4, 3, 64, 64), jnp.float32)   # NCHW input
    params = init_params(kp, num_classes=config["num_classes"],
                         num_anchors=config["num_anchors"])

    model = SmartCashYOLO(params, config)
    out = jax.block_until_ready(model.forward(x))

    dets = out["detections"]
    assert dets[0].shape == (4, 36, 16, 16)
    assert dets[1].shape == (4, 36, 8, 8)
    assert dets[2].shape == (4, 36, 4, 4)

    # Numerical check against a pure-JAX reference with the same bf16-quantized
    # weights/input; the only remaining differences are bf16 rounding of the
    # intermediate activations and the bf16 output store (sigmoid is now the
    # exact tanh form, so the tolerance is tighter than before).
    ref = _reference_forward(_round_trip_bf16_weights(params),
                             x.astype(jnp.bfloat16).astype(jnp.float32))
    for got, want in zip(dets, ref):
        np.testing.assert_allclose(np.asarray(got), np.asarray(want),
                                   rtol=1e-1, atol=1e-1)

    print("KERNEL_OK")
</pallas_src>

<mosaic_0001>
module attributes {stable_mosaic.version = 11 : i64} {
  func.func @kernel(%arg0: i32, %arg1: memref<2048x12xbf16, #tpu.memory_space<vmem>>, %arg2: memref<2320x128xbf16, #tpu.memory_space<vmem>>, %arg3: memref<16x128xf32, #tpu.memory_space<vmem>>, %arg4: memref<672x128xbf16, #tpu.memory_space<vmem>>) attributes {dimension_semantics = [#tpu.dimension_semantics<parallel>], iteration_bounds = array<i64: 2>, scalar_prefetch = 0 : i64, scratch_operands = 0 : i64, tpu.core_type = #tpu.core_type<tc>, window_params = [{transform_indices = @transform_0, window_bounds = array<i64: 2048, 12>}, {pipeline_mode = #tpu.pipeline_mode<synchronous>, transform_indices = @transform_1, window_bounds = array<i64: 2320, 128>}, {pipeline_mode = #tpu.pipeline_mode<synchronous>, transform_indices = @transform_2, window_bounds = array<i64: 16, 128>}, {transform_indices = @transform_3, window_bounds = array<i64: 672, 128>}]} {
    %c0 = arith.constant 0 : index
    %c0_0 = arith.constant 0 : index
    %0 = vector.load %arg1[%c0, %c0_0] : memref<2048x12xbf16, #tpu.memory_space<vmem>>, vector<2048x12xbf16>
    %c0_1 = arith.constant 0 : index
    %c0_2 = arith.constant 0 : index
    %1 = vector.load %arg2[%c0_1, %c0_2] : memref<2320x128xbf16, #tpu.memory_space<vmem>>, vector<12x128xbf16>
    %cst = arith.constant dense<0.000000e+00> : vector<2048x128xf32>
    %2 = tpu.matmul %0, %1, %cst {dimension_numbers = #tpu.dot_dimension_numbers<[1], [0], [0], [1], [0, 0, 1, 1], [], []>} : vector<2048x12xbf16>, vector<12x128xbf16>, vector<2048x128xf32> -> vector<2048x128xf32>
    %c0_3 = arith.constant 0 : index
    %c0_4 = arith.constant 0 : index
    %3 = vector.load %arg3[%c0_3, %c0_4] : memref<16x128xf32, #tpu.memory_space<vmem>>, vector<1x128xf32>
    %4 = vector.broadcast %3 : vector<1x128xf32> to vector<2048x128xf32>
    %5 = arith.addf %2, %4 : vector<2048x128xf32>
    %cst_5 = arith.constant 5.000000e-01 : f32
    %6 = vector.broadcast %cst_5 : f32 to vector<2048x128xf32>
    %7 = arith.mulf %6, %5 : vector<2048x128xf32>
    %8 = math.tanh %7 : vector<2048x128xf32>
    %cst_6 = arith.constant 5.000000e-01 : f32
    %9 = vector.broadcast %cst_6 : f32 to vector<2048x128xf32>
    %10 = arith.mulf %9, %8 : vector<2048x128xf32>
    %cst_7 = arith.constant 5.000000e-01 : f32
    %11 = vector.broadcast %cst_7 : f32 to vector<2048x128xf32>
    %12 = arith.addf %10, %11 : vector<2048x128xf32>
    %13 = arith.mulf %5, %12 : vector<2048x128xf32>
    %14 = arith.truncf %13 : vector<2048x128xf32> to vector<2048x128xbf16>
    %15 = vector.extract_strided_slice %14 {offsets = [0, 0], sizes = [512, 128], strides = [1, 1]} : vector<2048x128xbf16> to vector<512x128xbf16>
    %c16 = arith.constant 16 : index
    %c0_8 = arith.constant 0 : index
    %16 = vector.load %arg2[%c16, %c0_8] : memref<2320x128xbf16, #tpu.memory_space<vmem>>, vector<128x128xbf16>
    %cst_9 = arith.constant dense<0.000000e+00> : vector<512x128xf32>
    %17 = tpu.matmul %15, %16, %cst_9 {dimension_numbers = #tpu.dot_dimension_numbers<[1], [0], [0], [1], [0, 0, 1, 1], [], []>} : vector<512x128xbf16>, vector<128x128xbf16>, vector<512x128xf32> -> vector<512x128xf32>
    %18 = vector.extract_strided_slice %14 {offsets = [512, 0], sizes = [512, 128], strides = [1, 1]} : vector<2048x128xbf16> to vector<512x128xbf16>
    %c144 = arith.constant 144 : index
    %c0_10 = arith.constant 0 : index
    %19 = vector.load %arg2[%c144, %c0_10] : memref<2320x128xbf16, #tpu.memory_space<vmem>>, vector<128x128xbf16>
    %cst_11 = arith.constant dense<0.000000e+00> : vector<512x128xf32>
    %20 = tpu.matmul %18, %19, %cst_11 {dimension_numbers = #tpu.dot_dimension_numbers<[1], [0], [0], [1], [0, 0, 1, 1], [], []>} : vector<512x128xbf16>, vector<128x128xbf16>, vector<512x128xf32> -> vector<512x128xf32>
    %21 = arith.addf %17, %20 : vector<512x128xf32>
    %22 = vector.extract_strided_slice %14 {offsets = [1024, 0], sizes = [512, 128], strides = [1, 1]} : vector<2048x128xbf16> to vector<512x128xbf16>
    %c272 = arith.constant 272 : index
    %c0_12 = arith.constant 0 : index
    %23 = vector.load %arg2[%c272, %c0_12] : memref<2320x128xbf16, #tpu.memory_space<vmem>>, vector<128x128xbf16>
    %cst_13 = arith.constant dense<0.000000e+00> : vector<512x128xf32>
    %24 = tpu.matmul %22, %23, %cst_13 {dimension_numbers = #tpu.dot_dimension_numbers<[1], [0], [0], [1], [0, 0, 1, 1], [], []>} : vector<512x128xbf16>, vector<128x128xbf16>, vector<512x128xf32> -> vector<512x128xf32>
    %25 = arith.addf %21, %24 : vector<512x128xf32>
    %26 = vector.extract_strided_slice %14 {offsets = [1536, 0], sizes = [512, 128], strides = [1, 1]} : vector<2048x128xbf16> to vector<512x128xbf16>
    %c400 = arith.constant 400 : index
    %c0_14 = arith.constant 0 : index
    %27 = vector.load %arg2[%c400, %c0_14] : memref<2320x128xbf16, #tpu.memory_space<vmem>>, vector<128x128xbf16>
    %cst_15 = arith.constant dense<0.000000e+00> : vector<512x128xf32>
    %28 = tpu.matmul %26, %27, %cst_15 {dimension_numbers = #tpu.dot_dimension_numbers<[1], [0], [0], [1], [0, 0, 1, 1], [], []>} : vector<512x128xbf16>, vector<128x128xbf16>, vector<512x128xf32> -> vector<512x128xf32>
    %29 = arith.addf %25, %28 : vector<512x128xf32>
    %c1 = arith.constant 1 : index
    %c0_16 = arith.constant 0 : index
    %30 = vector.load %arg3[%c1, %c0_16] : memref<16x128xf32, #tpu.memory_space<vmem>>, vector<1x128xf32>
    %31 = vector.broadcast %30 : vector<1x128xf32> to vector<512x128xf32>
    %32 = arith.addf %29, %31 : vector<512x128xf32>
    %cst_17 = arith.constant 5.000000e-01 : f32
    %33 = vector.broadcast %cst_17 : f32 to vector<512x128xf32>
    %34 = arith.mulf %33, %32 : vector<512x128xf32>
    %35 = math.tanh %34 : vector<512x128xf32>
    %cst_18 = arith.constant 5.000000e-01 : f32
    %36 = vector.broadcast %cst_18 : f32 to vector<512x128xf32>
    %37 = arith.mulf %36, %35 : vector<512x128xf32>
    %cst_19 = arith.constant 5.000000e-01 : f32
    %38 = vector.broadcast %cst_19 : f32 to vector<512x128xf32>
    %39 = arith.addf %37, %38 : vector<512x128xf32>
    %40 = arith.mulf %32, %39 : vector<512x128xf32>
    %41 = arith.truncf %40 : vector<512x128xf32> to vector<512x128xbf16>
    %42 = vector.extract_strided_slice %41 {offsets = [0, 0], sizes = [128, 128], strides = [1, 1]} : vector<512x128xbf16> to vector<128x128xbf16>
    %c528 = arith.constant 528 : index
    %c0_20 = arith.constant 0 : index
    %43 = vector.load %arg2[%c528, %c0_20] : memref<2320x128xbf16, #tpu.memory_space<vmem>>, vector<128x128xbf16>
    %cst_21 = arith.constant dense<0.000000e+00> : vector<128x128xf32>
    %44 = tpu.matmul %42, %43, %cst_21 {dimension_numbers = #tpu.dot_dimension_numbers<[1], [0], [0], [1], [0, 0, 1, 1], [], []>} : vector<128x128xbf16>, vector<128x128xbf16>, vector<128x128xf32> -> vector<128x128xf32>
    %45 = vector.extract_strided_slice %41 {offsets = [128, 0], sizes = [128, 128], strides = [1, 1]} : vector<512x128xbf16> to vector<128x128xbf16>
    %c656 = arith.constant 656 : index
    %c0_22 = arith.constant 0 : index
    %46 = vector.load %arg2[%c656, %c0_22] : memref<2320x128xbf16, #tpu.memory_space<vmem>>, vector<128x128xbf16>
    %cst_23 = arith.constant dense<0.000000e+00> : vector<128x128xf32>
    %47 = tpu.matmul %45, %46, %cst_23 {dimension_numbers = #tpu.dot_dimension_numbers<[1], [0], [0], [1], [0, 0, 1, 1], [], []>} : vector<128x128xbf16>, vector<128x128xbf16>, vector<128x128xf32> -> vector<128x128xf32>
    %48 = arith.addf %44, %47 : vector<128x128xf32>
    %49 = vector.extract_strided_slice %41 {offsets = [256, 0], sizes = [128, 128], strides = [1, 1]} : vector<512x128xbf16> to vector<128x128xbf16>
    %c784 = arith.constant 784 : index
    %c0_24 = arith.constant 0 : index
    %50 = vector.load %arg2[%c784, %c0_24] : memref<2320x128xbf16, #tpu.memory_space<vmem>>, vector<128x128xbf16>
    %cst_25 = arith.constant dense<0.000000e+00> : vector<128x128xf32>
    %51 = tpu.matmul %49, %50, %cst_25 {dimension_numbers = #tpu.dot_dimension_numbers<[1], [0], [0], [1], [0, 0, 1, 1], [], []>} : vector<128x128xbf16>, vector<128x128xbf16>, vector<128x128xf32> -> vector<128x128xf32>
    %52 = arith.addf %48, %51 : vector<128x128xf32>
    %53 = vector.extract_strided_slice %41 {offsets = [384, 0], sizes = [128, 128], strides = [1, 1]} : vector<512x128xbf16> to vector<128x128xbf16>
    %c912 = arith.constant 912 : index
    %c0_26 = arith.constant 0 : index
    %54 = vector.load %arg2[%c912, %c0_26] : memref<2320x128xbf16, #tpu.memory_space<vmem>>, vector<128x128xbf16>
    %cst_27 = arith.constant dense<0.000000e+00> : vector<128x128xf32>
    %55 = tpu.matmul %53, %54, %cst_27 {dimension_numbers = #tpu.dot_dimension_numbers<[1], [0], [0], [1], [0, 0, 1, 1], [], []>} : vector<128x128xbf16>, vector<128x128xbf16>, vector<128x128xf32> -> vector<128x128xf32>
    %56 = arith.addf %52, %55 : vector<128x128xf32>
    %c2 = arith.constant 2 : index
    %c0_28 = arith.constant 0 : index
    %57 = vector.load %arg3[%c2, %c0_28] : memref<16x128xf32, #tpu.memory_space<vmem>>, vector<1x128xf32>
    %58 = vector.broadcast %57 : vector<1x128xf32> to vector<128x128xf32>
    %59 = arith.addf %56, %58 : vector<128x128xf32>
    %cst_29 = arith.constant 5.000000e-01 : f32
    %60 = vector.broadcast %cst_29 : f32 to vector<128x128xf32>
    %61 = arith.mulf %60, %59 : vector<128x128xf32>
    %62 = math.tanh %61 : vector<128x128xf32>
    %cst_30 = arith.constant 5.000000e-01 : f32
    %63 = vector.broadcast %cst_30 : f32 to vector<128x128xf32>
    %64 = arith.mulf %63, %62 : vector<128x128xf32>
    %cst_31 = arith.constant 5.000000e-01 : f32
    %65 = vector.broadcast %cst_31 : f32 to vector<128x128xf32>
    %66 = arith.addf %64, %65 : vector<128x128xf32>
    %67 = arith.mulf %59, %66 : vector<128x128xf32>
    %68 = arith.truncf %67 : vector<128x128xf32> to vector<128x128xbf16>
    %69 = vector.extract_strided_slice %68 {offsets = [0, 0], sizes = [32, 128], strides = [1, 1]} : vector<128x128xbf16> to vector<32x128xbf16>
    %c1040 = arith.constant 1040 : index
    %c0_32 = arith.constant 0 : index
    %70 = vector.load %arg2[%c1040, %c0_32] : memref<2320x128xbf16, #tpu.memory_space<vmem>>, vector<128x128xbf16>
    %cst_33 = arith.constant dense<0.000000e+00> : vector<32x128xf32>
    %71 = tpu.matmul %69, %70, %cst_33 {dimension_numbers = #tpu.dot_dimension_numbers<[1], [0], [0], [1], [0, 0, 1, 1], [], []>} : vector<32x128xbf16>, vector<128x128xbf16>, vector<32x128xf32> -> vector<32x128xf32>
    %72 = vector.extract_strided_slice %68 {offsets = [32, 0], sizes = [32, 128], strides = [1, 1]} : vector<128x128xbf16> to vector<32x128xbf16>
    %c1168 = arith.constant 1168 : index
    %c0_34 = arith.constant 0 : index
    %73 = vector.load %arg2[%c1168, %c0_34] : memref<2320x128xbf16, #tpu.memory_space<vmem>>, vector<128x128xbf16>
    %cst_35 = arith.constant dense<0.000000e+00> : vector<32x128xf32>
    %74 = tpu.matmul %72, %73, %cst_35 {dimension_numbers = #tpu.dot_dimension_numbers<[1], [0], [0], [1], [0, 0, 1, 1], [], []>} : vector<32x128xbf16>, vector<128x128xbf16>, vector<32x128xf32> -> vector<32x128xf32>
    %75 = arith.addf %71, %74 : vector<32x128xf32>
    %76 = vector.extract_strided_slice %68 {offsets = [64, 0], sizes = [32, 128], strides = [1, 1]} : vector<128x128xbf16> to vector<32x128xbf16>
    %c1296 = arith.constant 1296 : index
    %c0_36 = arith.constant 0 : index
    %77 = vector.load %arg2[%c1296, %c0_36] : memref<2320x128xbf16, #tpu.memory_space<vmem>>, vector<128x128xbf16>
    %cst_37 = arith.constant dense<0.000000e+00> : vector<32x128xf32>
    %78 = tpu.matmul %76, %77, %cst_37 {dimension_numbers = #tpu.dot_dimension_numbers<[1], [0], [0], [1], [0, 0, 1, 1], [], []>} : vector<32x128xbf16>, vector<128x128xbf16>, vector<32x128xf32> -> vector<32x128xf32>
    %79 = arith.addf %75, %78 : vector<32x128xf32>
    %80 = vector.extract_strided_slice %68 {offsets = [96, 0], sizes = [32, 128], strides = [1, 1]} : vector<128x128xbf16> to vector<32x128xbf16>
    %c1424 = arith.constant 1424 : index
    %c0_38 = arith.constant 0 : index
    %81 = vector.load %arg2[%c1424, %c0_38] : memref<2320x128xbf16, #tpu.memory_space<vmem>>, vector<128x128xbf16>
    %cst_39 = arith.constant dense<0.000000e+00> : vector<32x128xf32>
    %82 = tpu.matmul %80, %81, %cst_39 {dimension_numbers = #tpu.dot_dimension_numbers<[1], [0], [0], [1], [0, 0, 1, 1], [], []>} : vector<32x128xbf16>, vector<128x128xbf16>, vector<32x128xf32> -> vector<32x128xf32>
    %83 = arith.addf %79, %82 : vector<32x128xf32>
    %c3 = arith.constant 3 : index
    %c0_40 = arith.constant 0 : index
    %84 = vector.load %arg3[%c3, %c0_40] : memref<16x128xf32, #tpu.memory_space<vmem>>, vector<1x128xf32>
    %85 = vector.broadcast %84 : vector<1x128xf32> to vector<32x128xf32>
    %86 = arith.addf %83, %85 : vector<32x128xf32>
    %cst_41 = arith.constant 5.000000e-01 : f32
    %87 = vector.broadcast %cst_41 : f32 to vector<32x128xf32>
    %88 = arith.mulf %87, %86 : vector<32x128xf32>
    %89 = math.tanh %88 : vector<32x128xf32>
    %cst_42 = arith.constant 5.000000e-01 : f32
    %90 = vector.broadcast %cst_42 : f32 to vector<32x128xf32>
    %91 = arith.mulf %90, %89 : vector<32x128xf32>
    %cst_43 = arith.constant 5.000000e-01 : f32
    %92 = vector.broadcast %cst_43 : f32 to vector<32x128xf32>
    %93 = arith.addf %91, %92 : vector<32x128xf32>
    %94 = arith.mulf %86, %93 : vector<32x128xf32>
    %95 = arith.truncf %94 : vector<32x128xf32> to vector<32x128xbf16>
    %c1552 = arith.constant 1552 : index
    %c0_44 = arith.constant 0 : index
    %96 = vector.load %arg2[%c1552, %c0_44] : memref<2320x128xbf16, #tpu.memory_space<vmem>>, vector<128x128xbf16>
    %cst_45 = arith.constant dense<0.000000e+00> : vector<512x128xf32>
    %97 = tpu.matmul %41, %96, %cst_45 {dimension_numbers = #tpu.dot_dimension_numbers<[1], [0], [0], [1], [0, 0, 1, 1], [], []>} : vector<512x128xbf16>, vector<128x128xbf16>, vector<512x128xf32> -> vector<512x128xf32>
    %c4 = arith.constant 4 : index
    %c0_46 = arith.constant 0 : index
    %98 = vector.load %arg3[%c4, %c0_46] : memref<16x128xf32, #tpu.memory_space<vmem>>, vector<1x128xf32>
    %99 = vector.broadcast %98 : vector<1x128xf32> to vector<512x128xf32>
    %100 = arith.addf %97, %99 : vector<512x128xf32>
    %cst_47 = arith.constant 5.000000e-01 : f32
    %101 = vector.broadcast %cst_47 : f32 to vector<512x128xf32>
    %102 = arith.mulf %101, %100 : vector<512x128xf32>
    %103 = math.tanh %102 : vector<512x128xf32>
    %cst_48 = arith.constant 5.000000e-01 : f32
    %104 = vector.broadcast %cst_48 : f32 to vector<512x128xf32>
    %105 = arith.mulf %104, %103 : vector<512x128xf32>
    %cst_49 = arith.constant 5.000000e-01 : f32
    %106 = vector.broadcast %cst_49 : f32 to vector<512x128xf32>
    %107 = arith.addf %105, %106 : vector<512x128xf32>
    %108 = arith.mulf %100, %107 : vector<512x128xf32>
    %109 = arith.truncf %108 : vector<512x128xf32> to vector<512x128xbf16>
    %c1936 = arith.constant 1936 : index
    %c0_50 = arith.constant 0 : index
    %110 = vector.load %arg2[%c1936, %c0_50] : memref<2320x128xbf16, #tpu.memory_space<vmem>>, vector<128x128xbf16>
    %cst_51 = arith.constant dense<0.000000e+00> : vector<512x128xf32>
    %111 = tpu.matmul %109, %110, %cst_51 {dimension_numbers = #tpu.dot_dimension_numbers<[1], [0], [0], [1], [0, 0, 1, 1], [], []>} : vector<512x128xbf16>, vector<128x128xbf16>, vector<512x128xf32> -> vector<512x128xf32>
    %c7 = arith.constant 7 : index
    %c0_52 = arith.constant 0 : index
    %112 = vector.load %arg3[%c7, %c0_52] : memref<16x128xf32, #tpu.memory_space<vmem>>, vector<1x128xf32>
    %113 = vector.broadcast %112 : vector<1x128xf32> to vector<512x128xf32>
    %114 = arith.addf %111, %113 : vector<512x128xf32>
    %115 = arith.truncf %114 : vector<512x128xf32> to vector<512x128xbf16>
    %c0_53 = arith.constant 0 : index
    %c0_54 = arith.constant 0 : index
    %116 = vector.load %arg4[%c0_53, %c0_54] : memref<672x128xbf16, #tpu.memory_space<vmem>>, vector<512x128xbf16>
    tpu.vector_store %arg4[%c0_53, %c0_54], %115 {strides = array<i32>} : memref<672x128xbf16, #tpu.memory_space<vmem>>, vector<512x128xbf16>,
    %c1680 = arith.constant 1680 : index
    %c0_55 = arith.constant 0 : index
    %117 = vector.load %arg2[%c1680, %c0_55] : memref<2320x128xbf16, #tpu.memory_space<vmem>>, vector<128x128xbf16>
    %cst_56 = arith.constant dense<0.000000e+00> : vector<128x128xf32>
    %118 = tpu.matmul %68, %117, %cst_56 {dimension_numbers = #tpu.dot_dimension_numbers<[1], [0], [0], [1], [0, 0, 1, 1], [], []>} : vector<128x128xbf16>, vector<128x128xbf16>, vector<128x128xf32> -> vector<128x128xf32>
    %c5 = arith.constant 5 : index
    %c0_57 = arith.constant 0 : index
    %119 = vector.load %arg3[%c5, %c0_57] : memref<16x128xf32, #tpu.memory_space<vmem>>, vector<1x128xf32>
    %120 = vector.broadcast %119 : vector<1x128xf32> to vector<128x128xf32>
    %121 = arith.addf %118, %120 : vector<128x128xf32>
    %cst_58 = arith.constant 5.000000e-01 : f32
    %122 = vector.broadcast %cst_58 : f32 to vector<128x128xf32>
    %123 = arith.mulf %122, %121 : vector<128x128xf32>
    %124 = math.tanh %123 : vector<128x128xf32>
    %cst_59 = arith.constant 5.000000e-01 : f32
    %125 = vector.broadcast %cst_59 : f32 to vector<128x128xf32>
    %126 = arith.mulf %125, %124 : vector<128x128xf32>
    %cst_60 = arith.constant 5.000000e-01 : f32
    %127 = vector.broadcast %cst_60 : f32 to vector<128x128xf32>
    %128 = arith.addf %126, %127 : vector<128x128xf32>
    %129 = arith.mulf %121, %128 : vector<128x128xf32>
    %130 = arith.truncf %129 : vector<128x128xf32> to vector<128x128xbf16>
    %c2064 = arith.constant 2064 : index
    %c0_61 = arith.constant 0 : index
    %131 = vector.load %arg2[%c2064, %c0_61] : memref<2320x128xbf16, #tpu.memory_space<vmem>>, vector<128x128xbf16>
    %cst_62 = arith.constant dense<0.000000e+00> : vector<128x128xf32>
    %132 = tpu.matmul %130, %131, %cst_62 {dimension_numbers = #tpu.dot_dimension_numbers<[1], [0], [0], [1], [0, 0, 1, 1], [], []>} : vector<128x128xbf16>, vector<128x128xbf16>, vector<128x128xf32> -> vector<128x128xf32>
    %c8 = arith.constant 8 : index
    %c0_63 = arith.constant 0 : index
    %133 = vector.load %arg3[%c8, %c0_63] : memref<16x128xf32, #tpu.memory_space<vmem>>, vector<1x128xf32>
    %134 = vector.broadcast %133 : vector<1x128xf32> to vector<128x128xf32>
    %135 = arith.addf %132, %134 : vector<128x128xf32>
    %136 = arith.truncf %135 : vector<128x128xf32> to vector<128x128xbf16>
    %c512 = arith.constant 512 : index
    %c0_64 = arith.constant 0 : index
    %137 = vector.load %arg4[%c512, %c0_64] : memref<672x128xbf16, #tpu.memory_space<vmem>>, vector<128x128xbf16>
    tpu.vector_store %arg4[%c512, %c0_64], %136 {strides = array<i32>} : memref<672x128xbf16, #tpu.memory_space<vmem>>, vector<128x128xbf16>,
    %c1808 = arith.constant 1808 : index
    %c0_65 = arith.constant 0 : index
    %138 = vector.load %arg2[%c1808, %c0_65] : memref<2320x128xbf16, #tpu.memory_space<vmem>>, vector<128x128xbf16>
    %cst_66 = arith.constant dense<0.000000e+00> : vector<32x128xf32>
    %139 = tpu.matmul %95, %138, %cst_66 {dimension_numbers = #tpu.dot_dimension_numbers<[1], [0], [0], [1], [0, 0, 1, 1], [], []>} : vector<32x128xbf16>, vector<128x128xbf16>, vector<32x128xf32> -> vector<32x128xf32>
    %c6 = arith.constant 6 : index
    %c0_67 = arith.constant 0 : index
    %140 = vector.load %arg3[%c6, %c0_67] : memref<16x128xf32, #tpu.memory_space<vmem>>, vector<1x128xf32>
    %141 = vector.broadcast %140 : vector<1x128xf32> to vector<32x128xf32>
    %142 = arith.addf %139, %141 : vector<32x128xf32>
    %cst_68 = arith.constant 5.000000e-01 : f32
    %143 = vector.broadcast %cst_68 : f32 to vector<32x128xf32>
    %144 = arith.mulf %143, %142 : vector<32x128xf32>
    %145 = math.tanh %144 : vector<32x128xf32>
    %cst_69 = arith.constant 5.000000e-01 : f32
    %146 = vector.broadcast %cst_69 : f32 to vector<32x128xf32>
    %147 = arith.mulf %146, %145 : vector<32x128xf32>
    %cst_70 = arith.constant 5.000000e-01 : f32
    %148 = vector.broadcast %cst_70 : f32 to vector<32x128xf32>
    %149 = arith.addf %147, %148 : vector<32x128xf32>
    %150 = arith.mulf %142, %149 : vector<32x128xf32>
    %151 = arith.truncf %150 : vector<32x128xf32> to vector<32x128xbf16>
    %c2192 = arith.constant 2192 : index
    %c0_71 = arith.constant 0 : index
    %152 = vector.load %arg2[%c2192, %c0_71] : memref<2320x128xbf16, #tpu.memory_space<vmem>>, vector<128x128xbf16>
    %cst_72 = arith.constant dense<0.000000e+00> : vector<32x128xf32>
    %153 = tpu.matmul %151, %152, %cst_72 {dimension_numbers = #tpu.dot_dimension_numbers<[1], [0], [0], [1], [0, 0, 1, 1], [], []>} : vector<32x128xbf16>, vector<128x128xbf16>, vector<32x128xf32> -> vector<32x128xf32>
    %c9 = arith.constant 9 : index
    %c0_73 = arith.constant 0 : index
    %154 = vector.load %arg3[%c9, %c0_73] : memref<16x128xf32, #tpu.memory_space<vmem>>, vector<1x128xf32>
    %155 = vector.broadcast %154 : vector<1x128xf32> to vector<32x128xf32>
    %156 = arith.addf %153, %155 : vector<32x128xf32>
    %157 = arith.truncf %156 : vector<32x128xf32> to vector<32x128xbf16>
    %c640 = arith.constant 640 : index
    %c0_74 = arith.constant 0 : index
    %158 = vector.load %arg4[%c640, %c0_74] : memref<672x128xbf16, #tpu.memory_space<vmem>>, vector<32x128xbf16>
    tpu.vector_store %arg4[%c640, %c0_74], %157 {strides = array<i32>} : memref<672x128xbf16, #tpu.memory_space<vmem>>, vector<32x128xbf16>,
    return
  }
  func.func @transform_0(%arg0: i32) -> (i32, i32) {
    %c0_i32 = arith.constant 0 : i32
    %c0_i32_0 = arith.constant 0 : i32
    return %arg0, %c0_i32 : i32, i32
  }
  func.func @transform_1(%arg0: i32) -> (i32, i32) {
    %c0_i32 = arith.constant 0 : i32
    %c0_i32_0 = arith.constant 0 : i32
    %c0_i32_1 = arith.constant 0 : i32
    return %c0_i32, %c0_i32_0 : i32, i32
  }
  func.func @transform_2(%arg0: i32) -> (i32, i32) {
    %c0_i32 = arith.constant 0 : i32
    %c0_i32_0 = arith.constant 0 : i32
    %c0_i32_1 = arith.constant 0 : i32
    return %c0_i32, %c0_i32_0 : i32, i32
  }
  func.func @transform_3(%arg0: i32) -> (i32, i32) {
    %c0_i32 = arith.constant 0 : i32
    %c0_i32_0 = arith.constant 0 : i32
    return %arg0, %c0_i32 : i32, i32
  }
}

</mosaic_0001>

<llo_original>
// kernel: _forward_impl.1
$region0: #{_forward_impl.1}
  #allocation0 [shape = 'u32[]', space=smem, size = 0x4, offset = 0x4, fixed_abs, tag = 'smem constant byte address 0x4 - core index']
  #allocation1 [shape = 'u32[144,128]{1,0:T(1,128)}', space=vmem, size = 0x12000, scoped, tag = 'internal scratch']
  %s0 = inlined_call_operand.vmem [shape: bf16[4096,12], index: 0, kind: input, shape index: {}]
  %s1 = inlined_call_operand.vmem [shape: bf16[2320,128], index: 1, kind: input, shape index: {}]
  %s2 = inlined_call_operand.vmem [shape: f32[16,128], index: 2, kind: input, shape index: {}]
  %s3 = inlined_call_operand.vmem [shape: bf16[1344,128], index: 3, kind: output, shape index: {}]
  %s4 = sld [smem:[#allocation0]]
  $region45: #{_forward_impl.1} parent=0
    _
  %s6 = ssub.s32 1, %s4
  %s7 = scalar_select 0, %s6, %s4
  loop: start=0, step=1, limit=4
  $region2: #{_forward_impl.1} parent=0 // loop_pre_header
    _
  $region3: #{_forward_impl.1} parent=0 // loop_header
    %s9 = sphi 0, %s13
    %p10 = scmp.ge.s32.totalorder %s9, 4
    %s19 = sphi 0, %s21
    %s22 = sphi 0, %s19
    %s23 = sphi 0, %s22
    %s39 = sphi 0, %s23
    %s43 = sphi 0, %s43
    %s45 = sphi 0, %s43
    %s46 = sphi 0, %s45
    %s60 = sphi 0, %s46
    %s64 = sphi 0, %s64
    %s66 = sphi 0, %s64
    %s67 = sphi 0, %s66
    %s81 = sphi 0, %s67
    %s87 = sphi 0, %s89
    %s90 = sphi 0, %s87
    %s91 = sphi 0, %s90
    %s107 = sphi 0, %s91
  $region4: #{_forward_impl.1} parent=0 // loop_header_branch
    %12 = sbr.rel (%p10) target = $region8
  $region5: #{_forward_impl.1} parent=0 // loop_body
    %s14 = ssub.s32 %s9, 1
    %s15 = ssub.s32 %s9, 2
    %s16 = sadd.s32 %s9, 1
    %s17 = ssub.s32 %s9, %s16
    %p18 = scmp.eq.s32.totalorder %s17, 0
    %s20 = sadd.s32 %s19, 1
    %s21 = scalar_select %p18, %s19, %s20
    %p24 = pneg %p18
    %p25 = scmp.eq.s32.totalorder %s9, 1
    %p26 = por %p24, %p25
    %p27 = scmp.ne.s32.totalorder %s19, %s22
    %p28 = scmp.eq.s32.totalorder %s9, 0
    %p29 = por %p27, %p28
    %p30 = scmp.ne.s32.totalorder %s19, %s22
    %p31 = scmp.eq.s32.totalorder %s14, 1
    %p32 = por %p30, %p31
    %p33 = scmp.ne.s32.totalorder %s22, %s23
    %p34 = scmp.eq.s32.totalorder %s14, 0
    %p35 = por %p33, %p34
    %p36 = scmp.ne.s32.totalorder %s22, %s23
    %p37 = scmp.eq.s32.totalorder %s15, 1
    %p38 = por %p36, %p37
    %p40 = scmp.ne.s32.totalorder %s23, %s39
    %p41 = scmp.eq.s32.totalorder %s15, 0
    %p42 = por %p40, %p41
    %s44 = sadd.s32 %s43, 1
    %p47 = scmp.eq.s32.totalorder %s9, 1
    %p48 = scmp.ne.s32.totalorder %s43, %s45
    %p49 = scmp.eq.s32.totalorder %s9, 0
    %p50 = por %p48, %p49
    %p51 = scmp.ne.s32.totalorder %s43, %s45
    %p52 = scmp.eq.s32.totalorder %s14, 1
    %p53 = por %p51, %p52
    %p54 = scmp.ne.s32.totalorder %s45, %s46
    %p55 = scmp.eq.s32.totalorder %s14, 0
    %p56 = por %p54, %p55
    %p57 = scmp.ne.s32.totalorder %s45, %s46
    %p58 = scmp.eq.s32.totalorder %s15, 1
    %p59 = por %p57, %p58
    %p61 = scmp.ne.s32.totalorder %s46, %s60
    %p62 = scmp.eq.s32.totalorder %s15, 0
    %p63 = por %p61, %p62
    %s65 = sadd.s32 %s64, 1
    %p68 = scmp.eq.s32.totalorder %s9, 1
    %p69 = scmp.ne.s32.totalorder %s64, %s66
    %p70 = scmp.eq.s32.totalorder %s9, 0
    %p71 = por %p69, %p70
    %p72 = scmp.ne.s32.totalorder %s64, %s66
    %p73 = scmp.eq.s32.totalorder %s14, 1
    %p74 = por %p72, %p73
    %p75 = scmp.ne.s32.totalorder %s66, %s67
    %p76 = scmp.eq.s32.totalorder %s14, 0
    %p77 = por %p75, %p76
    %p78 = scmp.ne.s32.totalorder %s66, %s67
    %p79 = scmp.eq.s32.totalorder %s15, 1
    %p80 = por %p78, %p79
    %p82 = scmp.ne.s32.totalorder %s67, %s81
    %p83 = scmp.eq.s32.totalorder %s15, 0
    %p84 = por %p82, %p83
    %s85 = ssub.s32 %s9, %s16
    %p86 = scmp.eq.s32.totalorder %s85, 0
    %s88 = sadd.s32 %s87, 1
    %s89 = scalar_select %p86, %s87, %s88
    %p92 = pneg %p86
    %p93 = scmp.eq.s32.totalorder %s9, 1
    %p94 = por %p92, %p93
    %p95 = scmp.ne.s32.totalorder %s87, %s90
    %p96 = scmp.eq.s32.totalorder %s9, 0
    %p97 = por %p95, %p96
    %p98 = scmp.ne.s32.totalorder %s87, %s90
    %p99 = scmp.eq.s32.totalorder %s14, 1
    %p100 = por %p98, %p99
    %p101 = scmp.ne.s32.totalorder %s90, %s91
    %p102 = scmp.eq.s32.totalorder %s14, 0
    %p103 = por %p101, %p102
    %p104 = scmp.ne.s32.totalorder %s90, %s91
    %p105 = scmp.eq.s32.totalorder %s15, 1
    %p106 = por %p104, %p105
    %p108 = scmp.ne.s32.totalorder %s91, %s107
    %p109 = scmp.eq.s32.totalorder %s15, 0
    %p110 = por %p108, %p109
    %p111 = scmp.le.s32.totalorder 1, %s9
    %p112 = scmp.lt.s32.totalorder %s9, 3
    %p113 = pnand %p111, %p112
    %p114 = pneg %p113
    // Predicated region
    $region9: #{_forward_impl.1} parent=5 // pred_check
      _
    $region10: #{_forward_impl.1} parent=5 // pred_check_branch
      %116 = sbr.rel (%p113) target = $region12
    $region11: #{_forward_impl.1} parent=5 // pred_region
      %s117 = ssub.s32 %s9, 1
      // Predicated region
      $region13: #{_forward_impl.1} parent=11 // pred_check
        %p118 = pneg %p56
      $region14: #{_forward_impl.1} parent=11 // pred_check_branch
        %120 = sbr.rel (%p118) target = $region16
      $region15: #{_forward_impl.1} parent=11 // pred_region
        _
      $region16: #{_forward_impl.1} parent=11 // pred_fallthru
        _
      // Predicated region
      $region17: #{_forward_impl.1} parent=11 // pred_check
        %p121 = pneg %p77
      $region18: #{_forward_impl.1} parent=11 // pred_check_branch
        %123 = sbr.rel (%p121) target = $region20
      $region19: #{_forward_impl.1} parent=11 // pred_region
        _
      $region20: #{_forward_impl.1} parent=11 // pred_fallthru
        _
    $region12: #{_forward_impl.1} parent=5 // pred_fallthru
      _
    %p124 = scmp.lt.s32.totalorder %s9, 2
    // Predicated region
    $region21: #{_forward_impl.1} parent=5 // pred_check
      %p125 = pneg %p124
    $region22: #{_forward_impl.1} parent=5 // pred_check_branch
      %127 = sbr.rel (%p125) target = $region24
    $region23: #{_forward_impl.1} parent=5 // pred_region
      // Predicated region
      $region25: #{_forward_impl.1} parent=23 // pred_check
        %p128 = pneg %p29
      $region26: #{_forward_impl.1} parent=23 // pred_check_branch
        %130 = sbr.rel (%p128) target = $region28
      $region27: #{_forward_impl.1} parent=23 // pred_region
        %s131 = smul.u32 256, %s9
        %p132 = scmp.lt.s32.totalorder %s131, 511
        %s133 = scalar_select %p132, %s131, 511
        %s134 = smul.addr %s133, 4
        %s135 = scalar_lea.vmem %s0, %s134
        %s136 = smul.u32 256, %s9
      $region28: #{_forward_impl.1} parent=23 // pred_fallthru
        _
    $region24: #{_forward_impl.1} parent=5 // pred_fallthru
      _
    %p137 = scmp.le.s32.totalorder 1, %s9
    %p138 = scmp.lt.s32.totalorder %s9, 3
    %p139 = pnand %p137, %p138
    %p140 = pneg %p139
    // Predicated region
    $region29: #{_forward_impl.1} parent=5 // pred_check
      _
    $region30: #{_forward_impl.1} parent=5 // pred_check_branch
      %142 = sbr.rel (%p139) target = $region32
    $region31: #{_forward_impl.1} parent=5 // pred_region
      %s143 = ssub.s32 %s9, 1
      %s144 = smul.u32 256, %s14
      %p145 = scmp.lt.s32.totalorder %s144, 511
      %s146 = scalar_select %p145, %s144, 511
      %s147 = smul.addr %s146, 4
      %s148 = scalar_lea.vmem %s0, %s147
      %p149 = pneg %p35
      %p150 = pneg %p32
      %p151 = pneg %p56
      %p152 = pneg %p53
      %p153 = pneg %p77
      %p154 = pneg %p74
      %p155 = pneg %p103
      %p156 = pneg %p100
      %s157 = smul.u32 84, %s14
      %p158 = scmp.lt.s32.totalorder %s157, 167
      %s159 = scalar_select %p158, %s157, 167
      %s160 = smul.addr %s159, 4
      %s161 = scalar_lea.vmem %s3, %s160
      %s162 = smul.u32 256, %s14
      %p163 = scmp.lt.s32.totalorder %s162, 511
      %s164 = scalar_select %p163, %s162, 511
      %s165 = smul.addr %s164, 4
      %s166 = scalar_lea.vmem %s0, %s165
      %s167 = smul.u32 256, %s14
      %s168 = smul.u32 84, %s14
      %p169 = scmp.lt.s32.totalorder %s168, 167
      %s170 = scalar_select %p169, %s168, 167
      %s171 = smul.addr %s170, 4
      %s172 = scalar_lea.vmem %s3, %s171
      %s173 = smul.u32 84, %s14
      %v175 = vld [vmem:[%s166] sm:$0xf]
      %v176 = vld [vmem:[%s166 + $0x4] sm:$0xf]
      %v177 = vld [vmem:[%s166 + $0x8] sm:$0xf]
      %v178 = vld [vmem:[%s166 + $0xc] sm:$0xf]
      %v179 = vld [vmem:[%s166 + $0x10] sm:$0xf]
      %v180 = vld [vmem:[%s166 + $0x14] sm:$0xf]
      %v181 = vld [vmem:[%s166 + $0x18] sm:$0xf]
      %v182 = vld [vmem:[%s166 + $0x1c] sm:$0xf]
      %v183 = vld [vmem:[%s166 + $0x20] sm:$0xf]
      %v184 = vld [vmem:[%s166 + $0x24] sm:$0xf]
      %v185 = vld [vmem:[%s166 + $0x28] sm:$0xf]
      %v186 = vld [vmem:[%s166 + $0x2c] sm:$0xf]
      %v187 = vld [vmem:[%s166 + $0x30] sm:$0xf]
      %v188 = vld [vmem:[%s166 + $0x34] sm:$0xf]
      %v189 = vld [vmem:[%s166 + $0x38] sm:$0xf]
      %v190 = vld [vmem:[%s166 + $0x3c] sm:$0xf]
      %v191 = vld [vmem:[%s166 + $0x40] sm:$0xf]
      %v192 = vld [vmem:[%s166 + $0x44] sm:$0xf]
      %v193 = vld [vmem:[%s166 + $0x48] sm:$0xf]
      %v194 = vld [vmem:[%s166 + $0x4c] sm:$0xf]
      %v195 = vld [vmem:[%s166 + $0x50] sm:$0xf]
      %v196 = vld [vmem:[%s166 + $0x54] sm:$0xf]
      %v197 = vld [vmem:[%s166 + $0x58] sm:$0xf]
      %v198 = vld [vmem:[%s166 + $0x5c] sm:$0xf]
      %v199 = vld [vmem:[%s166 + $0x60] sm:$0xf]
      %v200 = vld [vmem:[%s166 + $0x64] sm:$0xf]
      %v201 = vld [vmem:[%s166 + $0x68] sm:$0xf]
      %v202 = vld [vmem:[%s166 + $0x6c] sm:$0xf]
      %v203 = vld [vmem:[%s166 + $0x70] sm:$0xf]
      %v204 = vld [vmem:[%s166 + $0x74] sm:$0xf]
      %v205 = vld [vmem:[%s166 + $0x78] sm:$0xf]
      %v206 = vld [vmem:[%s166 + $0x7c] sm:$0xf]
      %v207 = vld [vmem:[%s166 + $0x80] sm:$0xf]
      %v208 = vld [vmem:[%s166 + $0x84] sm:$0xf]
      %v209 = vld [vmem:[%s166 + $0x88] sm:$0xf]
      %v210 = vld [vmem:[%s166 + $0x8c] sm:$0xf]
      %v211 = vld [vmem:[%s166 + $0x90] sm:$0xf]
      %v212 = vld [vmem:[%s166 + $0x94] sm:$0xf]
      %v213 = vld [vmem:[%s166 + $0x98] sm:$0xf]
      %v214 = vld [vmem:[%s166 + $0x9c] sm:$0xf]
      %v215 = vld [vmem:[%s166 + $0xa0] sm:$0xf]
      %v216 = vld [vmem:[%s166 + $0xa4] sm:$0xf]
      %v217 = vld [vmem:[%s166 + $0xa8] sm:$0xf]
      %v218 = vld [vmem:[%s166 + $0xac] sm:$0xf]
      %v219 = vld [vmem:[%s166 + $0xb0] sm:$0xf]
      %v220 = vld [vmem:[%s166 + $0xb4] sm:$0xf]
      %v221 = vld [vmem:[%s166 + $0xb8] sm:$0xf]
      %v222 = vld [vmem:[%s166 + $0xbc] sm:$0xf]
      %v223 = vld [vmem:[%s166 + $0xc0] sm:$0xf]
      %v224 = vld [vmem:[%s166 + $0xc4] sm:$0xf]
      %v225 = vld [vmem:[%s166 + $0xc8] sm:$0xf]
      %v226 = vld [vmem:[%s166 + $0xcc] sm:$0xf]
      %v227 = vld [vmem:[%s166 + $0xd0] sm:$0xf]
      %v228 = vld [vmem:[%s166 + $0xd4] sm:$0xf]
      %v229 = vld [vmem:[%s166 + $0xd8] sm:$0xf]
      %v230 = vld [vmem:[%s166 + $0xdc] sm:$0xf]
      %v231 = vld [vmem:[%s166 + $0xe0] sm:$0xf]
      %v232 = vld [vmem:[%s166 + $0xe4] sm:$0xf]
      %v233 = vld [vmem:[%s166 + $0xe8] sm:$0xf]
      %v234 = vld [vmem:[%s166 + $0xec] sm:$0xf]
      %v235 = vld [vmem:[%s166 + $0xf0] sm:$0xf]
      %v236 = vld [vmem:[%s166 + $0xf4] sm:$0xf]
      %v237 = vld [vmem:[%s166 + $0xf8] sm:$0xf]
      %v238 = vld [vmem:[%s166 + $0xfc] sm:$0xf]
      %v239 = vld [vmem:[%s166 + $0x100] sm:$0xf]
      %v240 = vld [vmem:[%s166 + $0x104] sm:$0xf]
      %v241 = vld [vmem:[%s166 + $0x108] sm:$0xf]
      %v242 = vld [vmem:[%s166 + $0x10c] sm:$0xf]
      %v243 = vld [vmem:[%s166 + $0x110] sm:$0xf]
      %v244 = vld [vmem:[%s166 + $0x114] sm:$0xf]
      %v245 = vld [vmem:[%s166 + $0x118] sm:$0xf]
      %v246 = vld [vmem:[%s166 + $0x11c] sm:$0xf]
      %v247 = vld [vmem:[%s166 + $0x120] sm:$0xf]
      %v248 = vld [vmem:[%s166 + $0x124] sm:$0xf]
      %v249 = vld [vmem:[%s166 + $0x128] sm:$0xf]
      %v250 = vld [vmem:[%s166 + $0x12c] sm:$0xf]
      %v251 = vld [vmem:[%s166 + $0x130] sm:$0xf]
      %v252 = vld [vmem:[%s166 + $0x134] sm:$0xf]
      %v253 = vld [vmem:[%s166 + $0x138] sm:$0xf]
      %v254 = vld [vmem:[%s166 + $0x13c] sm:$0xf]
      %v255 = vld [vmem:[%s166 + $0x140] sm:$0xf]
      %v256 = vld [vmem:[%s166 + $0x144] sm:$0xf]
      %v257 = vld [vmem:[%s166 + $0x148] sm:$0xf]
      %v258 = vld [vmem:[%s166 + $0x14c] sm:$0xf]
      %v259 = vld [vmem:[%s166 + $0x150] sm:$0xf]
      %v260 = vld [vmem:[%s166 + $0x154] sm:$0xf]
      %v261 = vld [vmem:[%s166 + $0x158] sm:$0xf]
      %v262 = vld [vmem:[%s166 + $0x15c] sm:$0xf]
      %v263 = vld [vmem:[%s166 + $0x160] sm:$0xf]
      %v264 = vld [vmem:[%s166 + $0x164] sm:$0xf]
      %v265 = vld [vmem:[%s166 + $0x168] sm:$0xf]
      %v266 = vld [vmem:[%s166 + $0x16c] sm:$0xf]
      %v267 = vld [vmem:[%s166 + $0x170] sm:$0xf]
      %v268 = vld [vmem:[%s166 + $0x174] sm:$0xf]
      %v269 = vld [vmem:[%s166 + $0x178] sm:$0xf]
      %v270 = vld [vmem:[%s166 + $0x17c] sm:$0xf]
      %v271 = vld [vmem:[%s166 + $0x180] sm:$0xf]
      %v272 = vld [vmem:[%s166 + $0x184] sm:$0xf]
      %v273 = vld [vmem:[%s166 + $0x188] sm:$0xf]
      %v274 = vld [vmem:[%s166 + $0x18c] sm:$0xf]
      %v275 = vld [vmem:[%s166 + $0x190] sm:$0xf]
      %v276 = vld [vmem:[%s166 + $0x194] sm:$0xf]
      %v277 = vld [vmem:[%s166 + $0x198] sm:$0xf]
      %v278 = vld [vmem:[%s166 + $0x19c] sm:$0xf]
      %v279 = vld [vmem:[%s166 + $0x1a0] sm:$0xf]
      %v280 = vld [vmem:[%s166 + $0x1a4] sm:$0xf]
      %v281 = vld [vmem:[%s166 + $0x1a8] sm:$0xf]
      %v282 = vld [vmem:[%s166 + $0x1ac] sm:$0xf]
      %v283 = vld [vmem:[%s166 + $0x1b0] sm:$0xf]
      %v284 = vld [vmem:[%s166 + $0x1b4] sm:$0xf]
      %v285 = vld [vmem:[%s166 + $0x1b8] sm:$0xf]
      %v286 = vld [vmem:[%s166 + $0x1bc] sm:$0xf]
      %v287 = vld [vmem:[%s166 + $0x1c0] sm:$0xf]
      %v288 = vld [vmem:[%s166 + $0x1c4] sm:$0xf]
      %v289 = vld [vmem:[%s166 + $0x1c8] sm:$0xf]
      %v290 = vld [vmem:[%s166 + $0x1cc] sm:$0xf]
      %v291 = vld [vmem:[%s166 + $0x1d0] sm:$0xf]
      %v292 = vld [vmem:[%s166 + $0x1d4] sm:$0xf]
      %v293 = vld [vmem:[%s166 + $0x1d8] sm:$0xf]
      %v294 = vld [vmem:[%s166 + $0x1dc] sm:$0xf]
      %v295 = vld [vmem:[%s166 + $0x1e0] sm:$0xf]
      %v296 = vld [vmem:[%s166 + $0x1e4] sm:$0xf]
      %v297 = vld [vmem:[%s166 + $0x1e8] sm:$0xf]
      %v298 = vld [vmem:[%s166 + $0x1ec] sm:$0xf]
      %v299 = vld [vmem:[%s166 + $0x1f0] sm:$0xf]
      %v300 = vld [vmem:[%s166 + $0x1f4] sm:$0xf]
      %v301 = vld [vmem:[%s166 + $0x1f8] sm:$0xf]
      %v302 = vld [vmem:[%s166 + $0x1fc] sm:$0xf]
      %v303 = vld [vmem:[%s166 + $0x200] sm:$0xf]
      %v304 = vld [vmem:[%s166 + $0x204] sm:$0xf]
      %v305 = vld [vmem:[%s166 + $0x208] sm:$0xf]
      %v306 = vld [vmem:[%s166 + $0x20c] sm:$0xf]
      %v307 = vld [vmem:[%s166 + $0x210] sm:$0xf]
      %v308 = vld [vmem:[%s166 + $0x214] sm:$0xf]
      %v309 = vld [vmem:[%s166 + $0x218] sm:$0xf]
      %v310 = vld [vmem:[%s166 + $0x21c] sm:$0xf]
      %v311 = vld [vmem:[%s166 + $0x220] sm:$0xf]
      %v312 = vld [vmem:[%s166 + $0x224] sm:$0xf]
      %v313 = vld [vmem:[%s166 + $0x228] sm:$0xf]
      %v314 = vld [vmem:[%s166 + $0x22c] sm:$0xf]
      %v315 = vld [vmem:[%s166 + $0x230] sm:$0xf]
      %v316 = vld [vmem:[%s166 + $0x234] sm:$0xf]
      %v317 = vld [vmem:[%s166 + $0x238] sm:$0xf]
      %v318 = vld [vmem:[%s166 + $0x23c] sm:$0xf]
      %v319 = vld [vmem:[%s166 + $0x240] sm:$0xf]
      %v320 = vld [vmem:[%s166 + $0x244] sm:$0xf]
      %v321 = vld [vmem:[%s166 + $0x248] sm:$0xf]
      %v322 = vld [vmem:[%s166 + $0x24c] sm:$0xf]
      %v323 = vld [vmem:[%s166 + $0x250] sm:$0xf]
      %v324 = vld [vmem:[%s166 + $0x254] sm:$0xf]
      %v325 = vld [vmem:[%s166 + $0x258] sm:$0xf]
      %v326 = vld [vmem:[%s166 + $0x25c] sm:$0xf]
      %v327 = vld [vmem:[%s166 + $0x260] sm:$0xf]
      %v328 = vld [vmem:[%s166 + $0x264] sm:$0xf]
      %v329 = vld [vmem:[%s166 + $0x268] sm:$0xf]
      %v330 = vld [vmem:[%s166 + $0x26c] sm:$0xf]
      %v331 = vld [vmem:[%s166 + $0x270] sm:$0xf]
      %v332 = vld [vmem:[%s166 + $0x274] sm:$0xf]
      %v333 = vld [vmem:[%s166 + $0x278] sm:$0xf]
      %v334 = vld [vmem:[%s166 + $0x27c] sm:$0xf]
      %v335 = vld [vmem:[%s166 + $0x280] sm:$0xf]
      %v336 = vld [vmem:[%s166 + $0x284] sm:$0xf]
      %v337 = vld [vmem:[%s166 + $0x288] sm:$0xf]
      %v338 = vld [vmem:[%s166 + $0x28c] sm:$0xf]
      %v339 = vld [vmem:[%s166 + $0x290] sm:$0xf]
      %v340 = vld [vmem:[%s166 + $0x294] sm:$0xf]
      %v341 = vld [vmem:[%s166 + $0x298] sm:$0xf]
      %v342 = vld [vmem:[%s166 + $0x29c] sm:$0xf]
      %v343 = vld [vmem:[%s166 + $0x2a0] sm:$0xf]
      %v344 = vld [vmem:[%s166 + $0x2a4] sm:$0xf]
      %v345 = vld [vmem:[%s166 + $0x2a8] sm:$0xf]
      %v346 = vld [vmem:[%s166 + $0x2ac] sm:$0xf]
      %v347 = vld [vmem:[%s166 + $0x2b0] sm:$0xf]
      %v348 = vld [vmem:[%s166 + $0x2b4] sm:$0xf]
      %v349 = vld [vmem:[%s166 + $0x2b8] sm:$0xf]
      %v350 = vld [vmem:[%s166 + $0x2bc] sm:$0xf]
      %v351 = vld [vmem:[%s166 + $0x2c0] sm:$0xf]
      %v352 = vld [vmem:[%s166 + $0x2c4] sm:$0xf]
      %v353 = vld [vmem:[%s166 + $0x2c8] sm:$0xf]
      %v354 = vld [vmem:[%s166 + $0x2cc] sm:$0xf]
      %v355 = vld [vmem:[%s166 + $0x2d0] sm:$0xf]
      %v356 = vld [vmem:[%s166 + $0x2d4] sm:$0xf]
      %v357 = vld [vmem:[%s166 + $0x2d8] sm:$0xf]
      %v358 = vld [vmem:[%s166 + $0x2dc] sm:$0xf]
      %v359 = vld [vmem:[%s166 + $0x2e0] sm:$0xf]
      %v360 = vld [vmem:[%s166 + $0x2e4] sm:$0xf]
      %v361 = vld [vmem:[%s166 + $0x2e8] sm:$0xf]
      %v362 = vld [vmem:[%s166 + $0x2ec] sm:$0xf]
      %v363 = vld [vmem:[%s166 + $0x2f0] sm:$0xf]
      %v364 = vld [vmem:[%s166 + $0x2f4] sm:$0xf]
      %v365 = vld [vmem:[%s166 + $0x2f8] sm:$0xf]
      %v366 = vld [vmem:[%s166 + $0x2fc] sm:$0xf]
      %v367 = vld [vmem:[%s166 + $0x300] sm:$0xf]
      %v368 = vld [vmem:[%s166 + $0x304] sm:$0xf]
      %v369 = vld [vmem:[%s166 + $0x308] sm:$0xf]
      %v370 = vld [vmem:[%s166 + $0x30c] sm:$0xf]
      %v371 = vld [vmem:[%s166 + $0x310] sm:$0xf]
      %v372 = vld [vmem:[%s166 + $0x314] sm:$0xf]
      %v373 = vld [vmem:[%s166 + $0x318] sm:$0xf]
      %v374 = vld [vmem:[%s166 + $0x31c] sm:$0xf]
      %v375 = vld [vmem:[%s166 + $0x320] sm:$0xf]
      %v376 = vld [vmem:[%s166 + $0x324] sm:$0xf]
      %v377 = vld [vmem:[%s166 + $0x328] sm:$0xf]
      %v378 = vld [vmem:[%s166 + $0x32c] sm:$0xf]
      %v379 = vld [vmem:[%s166 + $0x330] sm:$0xf]
      %v380 = vld [vmem:[%s166 + $0x334] sm:$0xf]
      %v381 = vld [vmem:[%s166 + $0x338] sm:$0xf]
      %v382 = vld [vmem:[%s166 + $0x33c] sm:$0xf]
      %v383 = vld [vmem:[%s166 + $0x340] sm:$0xf]
      %v384 = vld [vmem:[%s166 + $0x344] sm:$0xf]
      %v385 = vld [vmem:[%s166 + $0x348] sm:$0xf]
      %v386 = vld [vmem:[%s166 + $0x34c] sm:$0xf]
      %v387 = vld [vmem:[%s166 + $0x350] sm:$0xf]
      %v388 = vld [vmem:[%s166 + $0x354] sm:$0xf]
      %v389 = vld [vmem:[%s166 + $0x358] sm:$0xf]
      %v390 = vld [vmem:[%s166 + $0x35c] sm:$0xf]
      %v391 = vld [vmem:[%s166 + $0x360] sm:$0xf]
      %v392 = vld [vmem:[%s166 + $0x364] sm:$0xf]
      %v393 = vld [vmem:[%s166 + $0x368] sm:$0xf]
      %v394 = vld [vmem:[%s166 + $0x36c] sm:$0xf]
      %v395 = vld [vmem:[%s166 + $0x370] sm:$0xf]
      %v396 = vld [vmem:[%s166 + $0x374] sm:$0xf]
      %v397 = vld [vmem:[%s166 + $0x378] sm:$0xf]
      %v398 = vld [vmem:[%s166 + $0x37c] sm:$0xf]
      %v399 = vld [vmem:[%s166 + $0x380] sm:$0xf]
      %v400 = vld [vmem:[%s166 + $0x384] sm:$0xf]
      %v401 = vld [vmem:[%s166 + $0x388] sm:$0xf]
      %v402 = vld [vmem:[%s166 + $0x38c] sm:$0xf]
      %v403 = vld [vmem:[%s166 + $0x390] sm:$0xf]
      %v404 = vld [vmem:[%s166 + $0x394] sm:$0xf]
      %v405 = vld [vmem:[%s166 + $0x398] sm:$0xf]
      %v406 = vld [vmem:[%s166 + $0x39c] sm:$0xf]
      %v407 = vld [vmem:[%s166 + $0x3a0] sm:$0xf]
      %v408 = vld [vmem:[%s166 + $0x3a4] sm:$0xf]
      %v409 = vld [vmem:[%s166 + $0x3a8] sm:$0xf]
      %v410 = vld [vmem:[%s166 + $0x3ac] sm:$0xf]
      %v411 = vld [vmem:[%s166 + $0x3b0] sm:$0xf]
      %v412 = vld [vmem:[%s166 + $0x3b4] sm:$0xf]
      %v413 = vld [vmem:[%s166 + $0x3b8] sm:$0xf]
      %v414 = vld [vmem:[%s166 + $0x3bc] sm:$0xf]
      %v415 = vld [vmem:[%s166 + $0x3c0] sm:$0xf]
      %v416 = vld [vmem:[%s166 + $0x3c4] sm:$0xf]
      %v417 = vld [vmem:[%s166 + $0x3c8] sm:$0xf]
      %v418 = vld [vmem:[%s166 + $0x3cc] sm:$0xf]
      %v419 = vld [vmem:[%s166 + $0x3d0] sm:$0xf]
      %v420 = vld [vmem:[%s166 + $0x3d4] sm:$0xf]
      %v421 = vld [vmem:[%s166 + $0x3d8] sm:$0xf]
      %v422 = vld [vmem:[%s166 + $0x3dc] sm:$0xf]
      %v423 = vld [vmem:[%s166 + $0x3e0] sm:$0xf]
      %v424 = vld [vmem:[%s166 + $0x3e4] sm:$0xf]
      %v425 = vld [vmem:[%s166 + $0x3e8] sm:$0xf]
      %v426 = vld [vmem:[%s166 + $0x3ec] sm:$0xf]
      %v427 = vld [vmem:[%s166 + $0x3f0] sm:$0xf]
      %v428 = vld [vmem:[%s166 + $0x3f4] sm:$0xf]
      %v429 = vld [vmem:[%s166 + $0x3f8] sm:$0xf]
      %v430 = vld [vmem:[%s166 + $0x3fc] sm:$0xf]
      %v431 = vld [vmem:[%s1] sm:$0xf]
      %v432 = vld [vmem:[%s1 + $0x4] sm:$0x3]
      %v433 = vld [vmem:[%s2] sm:$0x1]
      %v434 = vlaneseq
      %v435 = vshrl.u32 %v434, 7
      %v436 = vsub.s32 0, %v435
      %v437 = vrot.slane %v433, %v436
      %v694 = vunpack.c.l.b16 %v175
      %v695 = vunpack.c.l.b16 %v176
      %v696 = vunpack.c.l.b16 %v177
      %v697 = vunpack.c.l.b16 %v178
      %v698 = vunpack.c.l.b16 %v179
      %v699 = vunpack.c.l.b16 %v180
      %v700 = vunpack.c.l.b16 %v181
      %v701 = vunpack.c.l.b16 %v182
      %v702 = vunpack.c.l.b16 %v183
      %v703 = vunpack.c.l.b16 %v184
      %v704 = vunpack.c.l.b16 %v185
      %v705 = vunpack.c.l.b16 %v186
      %v706 = vunpack.c.l.b16 %v187
      %v707 = vunpack.c.l.b16 %v188
      %v708 = vunpack.c.l.b16 %v189
      %v709 = vunpack.c.l.b16 %v190
      %v710 = vunpack.c.l.b16 %v191
      %v711 = vunpack.c.l.b16 %v192
      %v712 = vunpack.c.l.b16 %v193
      %v713 = vunpack.c.l.b16 %v194
      %v714 = vunpack.c.l.b16 %v195
      %v715 = vunpack.c.l.b16 %v196
      %v716 = vunpack.c.l.b16 %v197
      %v717 = vunpack.c.l.b16 %v198
      %v718 = vunpack.c.l.b16 %v199
      %v719 = vunpack.c.l.b16 %v200
      %v720 = vunpack.c.l.b16 %v201
      %v721 = vunpack.c.l.b16 %v202
      %v722 = vunpack.c.l.b16 %v203
      %v723 = vunpack.c.l.b16 %v204
      %v724 = vunpack.c.l.b16 %v205
      %v725 = vunpack.c.l.b16 %v206
      %v726 = vunpack.c.l.b16 %v207
      %v727 = vunpack.c.l.b16 %v208
      %v728 = vunpack.c.l.b16 %v209
      %v729 = vunpack.c.l.b16 %v210
      %v730 = vunpack.c.l.b16 %v211
      %v731 = vunpack.c.l.b16 %v212
      %v732 = vunpack.c.l.b16 %v213
      %v733 = vunpack.c.l.b16 %v214
      %v734 = vunpack.c.l.b16 %v215
      %v735 = vunpack.c.l.b16 %v216
      %v736 = vunpack.c.l.b16 %v217
      %v737 = vunpack.c.l.b16 %v218
      %v738 = vunpack.c.l.b16 %v219
      %v739 = vunpack.c.l.b16 %v220
      %v740 = vunpack.c.l.b16 %v221
      %v741 = vunpack.c.l.b16 %v222
      %v742 = vunpack.c.l.b16 %v223
      %v743 = vunpack.c.l.b16 %v224
      %v744 = vunpack.c.l.b16 %v225
      %v745 = vunpack.c.l.b16 %v226
      %v746 = vunpack.c.l.b16 %v227
      %v747 = vunpack.c.l.b16 %v228
      %v748 = vunpack.c.l.b16 %v229
      %v749 = vunpack.c.l.b16 %v230
      %v750 = vunpack.c.l.b16 %v231
      %v751 = vunpack.c.l.b16 %v232
      %v752 = vunpack.c.l.b16 %v233
      %v753 = vunpack.c.l.b16 %v234
      %v754 = vunpack.c.l.b16 %v235
      %v755 = vunpack.c.l.b16 %v236
      %v756 = vunpack.c.l.b16 %v237
      %v757 = vunpack.c.l.b16 %v238
      %v758 = vunpack.c.l.b16 %v239
      %v759 = vunpack.c.l.b16 %v240
      %v760 = vunpack.c.l.b16 %v241
      %v761 = vunpack.c.l.b16 %v242
      %v762 = vunpack.c.l.b16 %v243
      %v763 = vunpack.c.l.b16 %v244
      %v764 = vunpack.c.l.b16 %v245
      %v765 = vunpack.c.l.b16 %v246
      %v766 = vunpack.c.l.b16 %v247
      %v767 = vunpack.c.l.b16 %v248
      %v768 = vunpack.c.l.b16 %v249
      %v769 = vunpack.c.l.b16 %v250
      %v770 = vunpack.c.l.b16 %v251
      %v771 = vunpack.c.l.b16 %v252
      %v772 = vunpack.c.l.b16 %v253
      %v773 = vunpack.c.l.b16 %v254
      %v774 = vunpack.c.l.b16 %v255
      %v775 = vunpack.c.l.b16 %v256
      %v776 = vunpack.c.l.b16 %v257
      %v777 = vunpack.c.l.b16 %v258
      %v778 = vunpack.c.l.b16 %v259
      %v779 = vunpack.c.l.b16 %v260
      %v780 = vunpack.c.l.b16 %v261
      %v781 = vunpack.c.l.b16 %v262
      %v782 = vunpack.c.l.b16 %v263
      %v783 = vunpack.c.l.b16 %v264
      %v784 = vunpack.c.l.b16 %v265
      %v785 = vunpack.c.l.b16 %v266
      %v786 = vunpack.c.l.b16 %v267
      %v787 = vunpack.c.l.b16 %v268
      %v788 = vunpack.c.l.b16 %v269
      %v789 = vunpack.c.l.b16 %v270
      %v790 = vunpack.c.l.b16 %v271
      %v791 = vunpack.c.l.b16 %v272
      %v792 = vunpack.c.l.b16 %v273
      %v793 = vunpack.c.l.b16 %v274
      %v794 = vunpack.c.l.b16 %v275
      %v795 = vunpack.c.l.b16 %v276
      %v796 = vunpack.c.l.b16 %v277
      %v797 = vunpack.c.l.b16 %v278
      %v798 = vunpack.c.l.b16 %v279
      %v799 = vunpack.c.l.b16 %v280
      %v800 = vunpack.c.l.b16 %v281
      %v801 = vunpack.c.l.b16 %v282
      %v802 = vunpack.c.l.b16 %v283
      %v803 = vunpack.c.l.b16 %v284
      %v804 = vunpack.c.l.b16 %v285
      %v805 = vunpack.c.l.b16 %v286
      %v806 = vunpack.c.l.b16 %v287
      %v807 = vunpack.c.l.b16 %v288
      %v808 = vunpack.c.l.b16 %v289
      %v809 = vunpack.c.l.b16 %v290
      %v810 = vunpack.c.l.b16 %v291
      %v811 = vunpack.c.l.b16 %v292
      %v812 = vunpack.c.l.b16 %v293
      %v813 = vunpack.c.l.b16 %v294
      %v814 = vunpack.c.l.b16 %v295
      %v815 = vunpack.c.l.b16 %v296
      %v816 = vunpack.c.l.b16 %v297
      %v817 = vunpack.c.l.b16 %v298
      %v818 = vunpack.c.l.b16 %v299
      %v819 = vunpack.c.l.b16 %v300
      %v820 = vunpack.c.l.b16 %v301
      %v821 = vunpack.c.l.b16 %v302
      %v822 = vunpack.c.l.b16 %v303
      %v823 = vunpack.c.l.b16 %v304
      %v824 = vunpack.c.l.b16 %v305
      %v825 = vunpack.c.l.b16 %v306
      %v826 = vunpack.c.l.b16 %v307
      %v827 = vunpack.c.l.b16 %v308
      %v828 = vunpack.c.l.b16 %v309
      %v829 = vunpack.c.l.b16 %v310
      %v830 = vunpack.c.l.b16 %v311
      %v831 = vunpack.c.l.b16 %v312
      %v832 = vunpack.c.l.b16 %v313
      %v833 = vunpack.c.l.b16 %v314
      %v834 = vunpack.c.l.b16 %v315
      %v835 = vunpack.c.l.b16 %v316
      %v836 = vunpack.c.l.b16 %v317
      %v837 = vunpack.c.l.b16 %v318
      %v838 = vunpack.c.l.b16 %v319
      %v839 = vunpack.c.l.b16 %v320
      %v840 = vunpack.c.l.b16 %v321
      %v841 = vunpack.c.l.b16 %v322
      %v842 = vunpack.c.l.b16 %v323
      %v843 = vunpack.c.l.b16 %v324
      %v844 = vunpack.c.l.b16 %v325
      %v845 = vunpack.c.l.b16 %v326
      %v846 = vunpack.c.l.b16 %v327
      %v847 = vunpack.c.l.b16 %v328
      %v848 = vunpack.c.l.b16 %v329
      %v849 = vunpack.c.l.b16 %v330
      %v850 = vunpack.c.l.b16 %v331
      %v851 = vunpack.c.l.b16 %v332
      %v852 = vunpack.c.l.b16 %v333
      %v853 = vunpack.c.l.b16 %v334
      %v854 = vunpack.c.l.b16 %v335
      %v855 = vunpack.c.l.b16 %v336
      %v856 = vunpack.c.l.b16 %v337
      %v857 = vunpack.c.l.b16 %v338
      %v858 = vunpack.c.l.b16 %v339
      %v859 = vunpack.c.l.b16 %v340
      %v860 = vunpack.c.l.b16 %v341
      %v861 = vunpack.c.l.b16 %v342
      %v862 = vunpack.c.l.b16 %v343
      %v863 = vunpack.c.l.b16 %v344
      %v864 = vunpack.c.l.b16 %v345
      %v865 = vunpack.c.l.b16 %v346
      %v866 = vunpack.c.l.b16 %v347
      %v867 = vunpack.c.l.b16 %v348
      %v868 = vunpack.c.l.b16 %v349
      %v869 = vunpack.c.l.b16 %v350
      %v870 = vunpack.c.l.b16 %v351
      %v871 = vunpack.c.l.b16 %v352
      %v872 = vunpack.c.l.b16 %v353
      %v873 = vunpack.c.l.b16 %v354
      %v874 = vunpack.c.l.b16 %v355
      %v875 = vunpack.c.l.b16 %v356
      %v876 = vunpack.c.l.b16 %v357
      %v877 = vunpack.c.l.b16 %v358
      %v878 = vunpack.c.l.b16 %v359
      %v879 = vunpack.c.l.b16 %v360
      %v880 = vunpack.c.l.b16 %v361
      %v881 = vunpack.c.l.b16 %v362
      %v882 = vunpack.c.l.b16 %v363
      %v883 = vunpack.c.l.b16 %v364
      %v884 = vunpack.c.l.b16 %v365
      %v885 = vunpack.c.l.b16 %v366
      %v886 = vunpack.c.l.b16 %v367
      %v887 = vunpack.c.l.b16 %v368
      %v888 = vunpack.c.l.b16 %v369
      %v889 = vunpack.c.l.b16 %v370
      %v890 = vunpack.c.l.b16 %v371
      %v891 = vunpack.c.l.b16 %v372
      %v892 = vunpack.c.l.b16 %v373
      %v893 = vunpack.c.l.b16 %v374
      %v894 = vunpack.c.l.b16 %v375
      %v895 = vunpack.c.l.b16 %v376
      %v896 = vunpack.c.l.b16 %v377
      %v897 = vunpack.c.l.b16 %v378
      %v898 = vunpack.c.l.b16 %v379
      %v899 = vunpack.c.l.b16 %v380
      %v900 = vunpack.c.l.b16 %v381
      %v901 = vunpack.c.l.b16 %v382
      %v902 = vunpack.c.l.b16 %v383
      %v903 = vunpack.c.l.b16 %v384
      %v904 = vunpack.c.l.b16 %v385
      %v905 = vunpack.c.l.b16 %v386
      %v906 = vunpack.c.l.b16 %v387
      %v907 = vunpack.c.l.b16 %v388
      %v908 = vunpack.c.l.b16 %v389
      %v909 = vunpack.c.l.b16 %v390
      %v910 = vunpack.c.l.b16 %v391
      %v911 = vunpack.c.l.b16 %v392
      %v912 = vunpack.c.l.b16 %v393
      %v913 = vunpack.c.l.b16 %v394
      %v914 = vunpack.c.l.b16 %v395
      %v915 = vunpack.c.l.b16 %v396
      %v916 = vunpack.c.l.b16 %v397
      %v917 = vunpack.c.l.b16 %v398
      %v918 = vunpack.c.l.b16 %v399
      %v919 = vunpack.c.l.b16 %v400
      %v920 = vunpack.c.l.b16 %v401
      %v921 = vunpack.c.l.b16 %v402
      %v922 = vunpack.c.l.b16 %v403
      %v923 = vunpack.c.l.b16 %v404
      %v924 = vunpack.c.l.b16 %v405
      %v925 = vunpack.c.l.b16 %v406
      %v926 = vunpack.c.l.b16 %v407
      %v927 = vunpack.c.l.b16 %v408
      %v928 = vunpack.c.l.b16 %v409
      %v929 = vunpack.c.l.b16 %v410
      %v930 = vunpack.c.l.b16 %v411
      %v931 = vunpack.c.l.b16 %v412
      %v932 = vunpack.c.l.b16 %v413
      %v933 = vunpack.c.l.b16 %v414
      %v934 = vunpack.c.l.b16 %v415
      %v935 = vunpack.c.l.b16 %v416
      %v936 = vunpack.c.l.b16 %v417
      %v937 = vunpack.c.l.b16 %v418
      %v938 = vunpack.c.l.b16 %v419
      %v939 = vunpack.c.l.b16 %v420
      %v940 = vunpack.c.l.b16 %v421
      %v941 = vunpack.c.l.b16 %v422
      %v942 = vunpack.c.l.b16 %v423
      %v943 = vunpack.c.l.b16 %v424
      %v944 = vunpack.c.l.b16 %v425
      %v945 = vunpack.c.l.b16 %v426
      %v946 = vunpack.c.l.b16 %v427
      %v947 = vunpack.c.l.b16 %v428
      %v948 = vunpack.c.l.b16 %v429
      %v949 = vunpack.c.l.b16 %v430
      %v950 = vpack.c.b16 %v695, %v694
      %v951 = vpack.c.b16 %v697, %v696
      %v952 = vpack.c.b16 %v699, %v698
      %v953 = vpack.c.b16 %v701, %v700
      %v954 = vpack.c.b16 %v703, %v702
      %v955 = vpack.c.b16 %v705, %v704
      %v956 = vpack.c.b16 %v707, %v706
      %v957 = vpack.c.b16 %v709, %v708
      %v958 = vpack.c.b16 %v711, %v710
      %v959 = vpack.c.b16 %v713, %v712
      %v960 = vpack.c.b16 %v715, %v714
      %v961 = vpack.c.b16 %v717, %v716
      %v962 = vpack.c.b16 %v719, %v718
      %v963 = vpack.c.b16 %v721, %v720
      %v964 = vpack.c.b16 %v723, %v722
      %v965 = vpack.c.b16 %v725, %v724
      %v966 = vpack.c.b16 %v727, %v726
      %v967 = vpack.c.b16 %v729, %v728
      %v968 = vpack.c.b16 %v731, %v730
      %v969 = vpack.c.b16 %v733, %v732
      %v970 = vpack.c.b16 %v735, %v734
      %v971 = vpack.c.b16 %v737, %v736
      %v972 = vpack.c.b16 %v739, %v738
      %v973 = vpack.c.b16 %v741, %v740
      %v974 = vpack.c.b16 %v743, %v742
      %v975 = vpack.c.b16 %v745, %v744
      %v976 = vpack.c.b16 %v747, %v746
      %v977 = vpack.c.b16 %v749, %v748
      %v978 = vpack.c.b16 %v751, %v750
      %v979 = vpack.c.b16 %v753, %v752
      %v980 = vpack.c.b16 %v755, %v754
      %v981 = vpack.c.b16 %v757, %v756
      %v982 = vpack.c.b16 %v759, %v758
      %v983 = vpack.c.b16 %v761, %v760
      %v984 = vpack.c.b16 %v763, %v762
      %v985 = vpack.c.b16 %v765, %v764
      %v986 = vpack.c.b16 %v767, %v766
      %v987 = vpack.c.b16 %v769, %v768
      %v988 = vpack.c.b16 %v771, %v770
      %v989 = vpack.c.b16 %v773, %v772
      %v990 = vpack.c.b16 %v775, %v774
      %v991 = vpack.c.b16 %v777, %v776
      %v992 = vpack.c.b16 %v779, %v778
      %v993 = vpack.c.b16 %v781, %v780
      %v994 = vpack.c.b16 %v783, %v782
      %v995 = vpack.c.b16 %v785, %v784
      %v996 = vpack.c.b16 %v787, %v786
      %v997 = vpack.c.b16 %v789, %v788
      %v998 = vpack.c.b16 %v791, %v790
      %v999 = vpack.c.b16 %v793, %v792
      %v1000 = vpack.c.b16 %v795, %v794
      %v1001 = vpack.c.b16 %v797, %v796
      %v1002 = vpack.c.b16 %v799, %v798
      %v1003 = vpack.c.b16 %v801, %v800
      %v1004 = vpack.c.b16 %v803, %v802
      %v1005 = vpack.c.b16 %v805, %v804
      %v1006 = vpack.c.b16 %v807, %v806
      %v1007 = vpack.c.b16 %v809, %v808
      %v1008 = vpack.c.b16 %v811, %v810
      %v1009 = vpack.c.b16 %v813, %v812
      %v1010 = vpack.c.b16 %v815, %v814
      %v1011 = vpack.c.b16 %v817, %v816
      %v1012 = vpack.c.b16 %v819, %v818
      %v1013 = vpack.c.b16 %v821, %v820
      %v1014 = vpack.c.b16 %v823, %v822
      %v1015 = vpack.c.b16 %v825, %v824
      %v1016 = vpack.c.b16 %v827, %v826
      %v1017 = vpack.c.b16 %v829, %v828
      %v1018 = vpack.c.b16 %v831, %v830
      %v1019 = vpack.c.b16 %v833, %v832
      %v1020 = vpack.c.b16 %v835, %v834
      %v1021 = vpack.c.b16 %v837, %v836
      %v1022 = vpack.c.b16 %v839, %v838
      %v1023 = vpack.c.b16 %v841, %v840
      %v1024 = vpack.c.b16 %v843, %v842
      %v1025 = vpack.c.b16 %v845, %v844
      %v1026 = vpack.c.b16 %v847, %v846
      %v1027 = vpack.c.b16 %v849, %v848
      %v1028 = vpack.c.b16 %v851, %v850
      %v1029 = vpack.c.b16 %v853, %v852
      %v1030 = vpack.c.b16 %v855, %v854
      %v1031 = vpack.c.b16 %v857, %v856
      %v1032 = vpack.c.b16 %v859, %v858
      %v1033 = vpack.c.b16 %v861, %v860
      %v1034 = vpack.c.b16 %v863, %v862
      %v1035 = vpack.c.b16 %v865, %v864
      %v1036 = vpack.c.b16 %v867, %v866
      %v1037 = vpack.c.b16 %v869, %v868
      %v1038 = vpack.c.b16 %v871, %v870
      %v1039 = vpack.c.b16 %v873, %v872
      %v1040 = vpack.c.b16 %v875, %v874
      %v1041 = vpack.c.b16 %v877, %v876
      %v1042 = vpack.c.b16 %v879, %v878
      %v1043 = vpack.c.b16 %v881, %v880
      %v1044 = vpack.c.b16 %v883, %v882
      %v1045 = vpack.c.b16 %v885, %v884
      %v1046 = vpack.c.b16 %v887, %v886
      %v1047 = vpack.c.b16 %v889, %v888
      %v1048 = vpack.c.b16 %v891, %v890
      %v1049 = vpack.c.b16 %v893, %v892
      %v1050 = vpack.c.b16 %v895, %v894
      %v1051 = vpack.c.b16 %v897, %v896
      %v1052 = vpack.c.b16 %v899, %v898
      %v1053 = vpack.c.b16 %v901, %v900
      %v1054 = vpack.c.b16 %v903, %v902
      %v1055 = vpack.c.b16 %v905, %v904
      %v1056 = vpack.c.b16 %v907, %v906
      %v1057 = vpack.c.b16 %v909, %v908
      %v1058 = vpack.c.b16 %v911, %v910
      %v1059 = vpack.c.b16 %v913, %v912
      %v1060 = vpack.c.b16 %v915, %v914
      %v1061 = vpack.c.b16 %v917, %v916
      %v1062 = vpack.c.b16 %v919, %v918
      %v1063 = vpack.c.b16 %v921, %v920
      %v1064 = vpack.c.b16 %v923, %v922
      %v1065 = vpack.c.b16 %v925, %v924
      %v1066 = vpack.c.b16 %v927, %v926
      %v1067 = vpack.c.b16 %v929, %v928
      %v1068 = vpack.c.b16 %v931, %v930
      %v1069 = vpack.c.b16 %v933, %v932
      %v1070 = vpack.c.b16 %v935, %v934
      %v1071 = vpack.c.b16 %v937, %v936
      %v1072 = vpack.c.b16 %v939, %v938
      %v1073 = vpack.c.b16 %v941, %v940
      %v1074 = vpack.c.b16 %v943, %v942
      %v1075 = vpack.c.b16 %v945, %v944
      %v1076 = vpack.c.b16 %v947, %v946
      %v1077 = vpack.c.b16 %v949, %v948
      %v1080 = vunpack.c.l.b16 %v431
      %v1081 = vunpack.c.l.b16 %v432
      %v1082 = vpack.c.b16 %v1081, %v1080
      %vm1083 = vcmask 97280
      %v1085 = vsel %vm1083, %v950, 0
      %v1088 = vsel %vm1083, %v951, 0
      %v1091 = vsel %vm1083, %v952, 0
      %v1094 = vsel %vm1083, %v953, 0
      %v1097 = vsel %vm1083, %v954, 0
      %v1100 = vsel %vm1083, %v955, 0
      %v1103 = vsel %vm1083, %v956, 0
      %v1106 = vsel %vm1083, %v957, 0
      %v1109 = vsel %vm1083, %v958, 0
      %v1112 = vsel %vm1083, %v959, 0
      %v1115 = vsel %vm1083, %v960, 0
      %v1118 = vsel %vm1083, %v961, 0
      %v1121 = vsel %vm1083, %v962, 0
      %v1124 = vsel %vm1083, %v963, 0
      %v1127 = vsel %vm1083, %v964, 0
      %v1130 = vsel %vm1083, %v965, 0
      %v1133 = vsel %vm1083, %v966, 0
      %v1136 = vsel %vm1083, %v967, 0
      %v1139 = vsel %vm1083, %v968, 0
      %v1142 = vsel %vm1083, %v969, 0
      %v1145 = vsel %vm1083, %v970, 0
      %v1148 = vsel %vm1083, %v971, 0
      %v1151 = vsel %vm1083, %v972, 0
      %v1154 = vsel %vm1083, %v973, 0
      %v1157 = vsel %vm1083, %v974, 0
      %v1160 = vsel %vm1083, %v975, 0
      %v1163 = vsel %vm1083, %v976, 0
      %v1166 = vsel %vm1083, %v977, 0
      %v1169 = vsel %vm1083, %v978, 0
      %v1172 = vsel %vm1083, %v979, 0
      %v1175 = vsel %vm1083, %v980, 0
      %v1178 = vsel %vm1083, %v981, 0
      %v1181 = vsel %vm1083, %v982, 0
      %v1184 = vsel %vm1083, %v983, 0
      %v1187 = vsel %vm1083, %v984, 0
      %v1190 = vsel %vm1083, %v985, 0
      %v1193 = vsel %vm1083, %v986, 0
      %v1196 = vsel %vm1083, %v987, 0
      %v1199 = vsel %vm1083, %v988, 0
      %v1202 = vsel %vm1083, %v989, 0
      %v1205 = vsel %vm1083, %v990, 0
      %v1208 = vsel %vm1083, %v991, 0
      %v1211 = vsel %vm1083, %v992, 0
      %v1214 = vsel %vm1083, %v993, 0
      %v1217 = vsel %vm1083, %v994, 0
      %v1220 = vsel %vm1083, %v995, 0
      %v1223 = vsel %vm1083, %v996, 0
      %v1226 = vsel %vm1083, %v997, 0
      %v1229 = vsel %vm1083, %v998, 0
      %v1232 = vsel %vm1083, %v999, 0
      %v1235 = vsel %vm1083, %v1000, 0
      %v1238 = vsel %vm1083, %v1001, 0
      %v1241 = vsel %vm1083, %v1002, 0
      %v1244 = vsel %vm1083, %v1003, 0
      %v1247 = vsel %vm1083, %v1004, 0
      %v1250 = vsel %vm1083, %v1005, 0
      %v1253 = vsel %vm1083, %v1006, 0
      %v1256 = vsel %vm1083, %v1007, 0
      %v1259 = vsel %vm1083, %v1008, 0
      %v1262 = vsel %vm1083, %v1009, 0
      %v1265 = vsel %vm1083, %v1010, 0
      %v1268 = vsel %vm1083, %v1011, 0
      %v1271 = vsel %vm1083, %v1012, 0
      %v1274 = vsel %vm1083, %v1013, 0
      %v1277 = vsel %vm1083, %v1014, 0
      %v1280 = vsel %vm1083, %v1015, 0
      %v1283 = vsel %vm1083, %v1016, 0
      %v1286 = vsel %vm1083, %v1017, 0
      %v1289 = vsel %vm1083, %v1018, 0
      %v1292 = vsel %vm1083, %v1019, 0
      %v1295 = vsel %vm1083, %v1020, 0
      %v1298 = vsel %vm1083, %v1021, 0
      %v1301 = vsel %vm1083, %v1022, 0
      %v1304 = vsel %vm1083, %v1023, 0
      %v1307 = vsel %vm1083, %v1024, 0
      %v1310 = vsel %vm1083, %v1025, 0
      %v1313 = vsel %vm1083, %v1026, 0
      %v1316 = vsel %vm1083, %v1027, 0
      %v1319 = vsel %vm1083, %v1028, 0
      %v1322 = vsel %vm1083, %v1029, 0
      %v1325 = vsel %vm1083, %v1030, 0
      %v1328 = vsel %vm1083, %v1031, 0
      %v1331 = vsel %vm1083, %v1032, 0
      %v1334 = vsel %vm1083, %v1033, 0
      %v1337 = vsel %vm1083, %v1034, 0
      %v1340 = vsel %vm1083, %v1035, 0
      %v1343 = vsel %vm1083, %v1036, 0
      %v1346 = vsel %vm1083, %v1037, 0
      %v1349 = vsel %vm1083, %v1038, 0
      %v1352 = vsel %vm1083, %v1039, 0
      %v1355 = vsel %vm1083, %v1040, 0
      %v1358 = vsel %vm1083, %v1041, 0
      %v1361 = vsel %vm1083, %v1042, 0
      %v1364 = vsel %vm1083, %v1043, 0
      %v1367 = vsel %vm1083, %v1044, 0
      %v1370 = vsel %vm1083, %v1045, 0
      %v1373 = vsel %vm1083, %v1046, 0
      %v1376 = vsel %vm1083, %v1047, 0
      %v1379 = vsel %vm1083, %v1048, 0
      %v1382 = vsel %vm1083, %v1049, 0
      %v1385 = vsel %vm1083, %v1050, 0
      %v1388 = vsel %vm1083, %v1051, 0
      %v1391 = vsel %vm1083, %v1052, 0
      %v1394 = vsel %vm1083, %v1053, 0
      %v1397 = vsel %vm1083, %v1054, 0
      %v1400 = vsel %vm1083, %v1055, 0
      %v1403 = vsel %vm1083, %v1056, 0
      %v1406 = vsel %vm1083, %v1057, 0
      %v1409 = vsel %vm1083, %v1058, 0
      %v1412 = vsel %vm1083, %v1059, 0
      %v1415 = vsel %vm1083, %v1060, 0
      %v1418 = vsel %vm1083, %v1061, 0
      %v1421 = vsel %vm1083, %v1062, 0
      %v1424 = vsel %vm1083, %v1063, 0
      %v1427 = vsel %vm1083, %v1064, 0
      %v1430 = vsel %vm1083, %v1065, 0
      %v1433 = vsel %vm1083, %v1066, 0
      %v1436 = vsel %vm1083, %v1067, 0
      %v1439 = vsel %vm1083, %v1068, 0
      %v1442 = vsel %vm1083, %v1069, 0
      %v1445 = vsel %vm1083, %v1070, 0
      %v1448 = vsel %vm1083, %v1071, 0
      %v1451 = vsel %vm1083, %v1072, 0
      %v1454 = vsel %vm1083, %v1073, 0
      %v1457 = vsel %vm1083, %v1074, 0
      %v1460 = vsel %vm1083, %v1075, 0
      %v1463 = vsel %vm1083, %v1076, 0
      %v1466 = vsel %vm1083, %v1077, 0
      %vm1468 = vcmask 1045504
      %v1470 = vsel %vm1468, %v1082, 0
      %1472 = vmatprep.subr.bf16.mxu0 0
      %1473 = vmatpush1.bf16.msra.mxu0 0
      %1474 = vmatprep.subr.bf16.mxu0 0
      %1475 = vmatpush1.bf16.msra.mxu0 0
      %1476 = vmatprep.subr.bf16.mxu0 0
      %1477 = vmatpush1.bf16.msra.mxu0 0
      %1478 = vmatprep.subr.bf16.mxu0 0
      %1479 = vmatpush1.bf16.msra.mxu0 0
      %1480 = vmatprep.subr.bf16.mxu0 0
      %1481 = vmatpush1.bf16.msra.mxu0 0
      %1482 = vmatprep.subr.bf16.mxu0 0
      %1483 = vmatpush1.bf16.msra.mxu0 0
      %1484 = vmatprep.subr.bf16.mxu0 0
      %1485 = vmatpush1.bf16.msra.mxu0 0
      %1486 = vmatprep.subr.bf16.mxu0 0
      %1487 = vmatpush1.bf16.msra.mxu0 %v1470
      %1488 = vmatprep.subr.bf16.mxu0 0
      %1489 = vmatpush2.bf16.msra.mxu0 0
      %1490 = vmatprep.subr.bf16.mxu0 0
      %1491 = vmatpush2.bf16.msra.mxu0 0
      %1492 = vmatprep.subr.bf16.mxu0 0
      %1493 = vmatpush2.bf16.msra.mxu0 0
      %1494 = vmatprep.subr.bf16.mxu0 0
      %1495 = vmatpush2.bf16.msra.mxu0 0
      %1496 = vmatprep.subr.bf16.mxu0 0
      %1497 = vmatpush2.bf16.msra.mxu0 0
      %1498 = vmatprep.subr.bf16.mxu0 0
      %1499 = vmatpush2.bf16.msra.mxu0 0
      %1500 = vmatprep.subr.bf16.mxu0 0
      %1501 = vmatpush2.bf16.msra.mxu0 0
      %1502 = vmatprep.subr.bf16.mxu0 0
      %1503 = vmatpush2.bf16.msra.mxu0 0
      %1504 = vmatprep.mubr.bf16.mxu0 0
      %1505 = vmatmul.mubr.bf16.gmra.mxu0 %v1085
      %v1506 = vpop.f32.mrf.mxu0
      %v1507 = vadd.f32 %v437, %v1506
      %v1508 = vpop.f32.mrf.mxu0
      %v1509 = vpop.f32.mrf.mxu0
      %v1510 = vadd.f32 %v437, %v1509
      %v1511 = vpop.f32.mrf.mxu0
      %1512 = vmatprep.mubr.bf16.mxu0 0
      %1513 = vmatmul.mubr.bf16.gmra.mxu0 %v1088
      %v1514 = vpop.f32.mrf.mxu0
      %v1515 = vadd.f32 %v437, %v1514
      %v1516 = vpop.f32.mrf.mxu0
      %v1517 = vpop.f32.mrf.mxu0
      %v1518 = vadd.f32 %v437, %v1517
      %v1519 = vpop.f32.mrf.mxu0
      %1520 = vmatprep.mubr.bf16.mxu0 0
      %1521 = vmatmul.mubr.bf16.gmra.mxu0 %v1091
      %v1522 = vpop.f32.mrf.mxu0
      %v1523 = vadd.f32 %v437, %v1522
      %v1524 = vpop.f32.mrf.mxu0
      %v1525 = vpop.f32.mrf.mxu0
      %v1526 = vadd.f32 %v437, %v1525
      %v1527 = vpop.f32.mrf.mxu0
      %1528 = vmatprep.mubr.bf16.mxu0 0
      %1529 = vmatmul.mubr.bf16.gmra.mxu0 %v1094
      %v1530 = vpop.f32.mrf.mxu0
      %v1531 = vadd.f32 %v437, %v1530
      %v1532 = vpop.f32.mrf.mxu0
      %v1533 = vpop.f32.mrf.mxu0
      %v1534 = vadd.f32 %v437, %v1533
      %v1535 = vpop.f32.mrf.mxu0
      %1536 = vmatprep.mubr.bf16.mxu0 0
      %1537 = vmatmul.mubr.bf16.gmra.mxu0 %v1097
      %v1538 = vpop.f32.mrf.mxu0
      %v1539 = vadd.f32 %v437, %v1538
      %v1540 = vpop.f32.mrf.mxu0
      %v1541 = vpop.f32.mrf.mxu0
      %v1542 = vadd.f32 %v437, %v1541
      %v1543 = vpop.f32.mrf.mxu0
      %1544 = vmatprep.mubr.bf16.mxu0 0
      %1545 = vmatmul.mubr.bf16.gmra.mxu0 %v1100
      %v1546 = vpop.f32.mrf.mxu0
      %v1547 = vadd.f32 %v437, %v1546
      %v1548 = vpop.f32.mrf.mxu0
      %v1549 = vpop.f32.mrf.mxu0
      %v1550 = vadd.f32 %v437, %v1549
      %v1551 = vpop.f32.mrf.mxu0
      %1552 = vmatprep.mubr.bf16.mxu0 0
      %1553 = vmatmul.mubr.bf16.gmra.mxu0 %v1103
      %v1554 = vpop.f32.mrf.mxu0
      %v1555 = vadd.f32 %v437, %v1554
      %v1556 = vpop.f32.mrf.mxu0
      %v1557 = vpop.f32.mrf.mxu0
      %v1558 = vadd.f32 %v437, %v1557
      %v1559 = vpop.f32.mrf.mxu0
      %1560 = vmatprep.mubr.bf16.mxu0 0
      %1561 = vmatmul.mubr.bf16.gmra.mxu0 %v1106
      %v1562 = vpop.f32.mrf.mxu0
      %v1563 = vadd.f32 %v437, %v1562
      %v1564 = vpop.f32.mrf.mxu0
      %v1565 = vpop.f32.mrf.mxu0
      %v1566 = vadd.f32 %v437, %v1565
      %v1567 = vpop.f32.mrf.mxu0
      %1568 = vmatprep.mubr.bf16.mxu0 0
      %1569 = vmatmul.mubr.bf16.gmra.mxu0 %v1109
      %v1570 = vpop.f32.mrf.mxu0
      %v1571 = vadd.f32 %v437, %v1570
      %v1572 = vpop.f32.mrf.mxu0
      %v1573 = vpop.f32.mrf.mxu0
      %v1574 = vadd.f32 %v437, %v1573
      %v1575 = vpop.f32.mrf.mxu0
      %1576 = vmatprep.mubr.bf16.mxu0 0
      %1577 = vmatmul.mubr.bf16.gmra.mxu0 %v1112
      %v1578 = vpop.f32.mrf.mxu0
      %v1579 = vadd.f32 %v437, %v1578
      %v1580 = vpop.f32.mrf.mxu0
      %v1581 = vpop.f32.mrf.mxu0
      %v1582 = vadd.f32 %v437, %v1581
      %v1583 = vpop.f32.mrf.mxu0
      %1584 = vmatprep.mubr.bf16.mxu0 0
      %1585 = vmatmul.mubr.bf16.gmra.mxu0 %v1115
      %v1586 = vpop.f32.mrf.mxu0
      %v1587 = vadd.f32 %v437, %v1586
      %v1588 = vpop.f32.mrf.mxu0
      %v1589 = vpop.f32.mrf.mxu0
      %v1590 = vadd.f32 %v437, %v1589
      %v1591 = vpop.f32.mrf.mxu0
      %1592 = vmatprep.mubr.bf16.mxu0 0
      %1593 = vmatmul.mubr.bf16.gmra.mxu0 %v1118
      %v1594 = vpop.f32.mrf.mxu0
      %v1595 = vadd.f32 %v437, %v1594
      %v1596 = vpop.f32.mrf.mxu0
      %v1597 = vpop.f32.mrf.mxu0
      %v1598 = vadd.f32 %v437, %v1597
      %v1599 = vpop.f32.mrf.mxu0
      %1600 = vmatprep.mubr.bf16.mxu0 0
      %1601 = vmatmul.mubr.bf16.gmra.mxu0 %v1121
      %v1602 = vpop.f32.mrf.mxu0
      %v1603 = vadd.f32 %v437, %v1602
      %v1604 = vpop.f32.mrf.mxu0
      %v1605 = vpop.f32.mrf.mxu0
      %v1606 = vadd.f32 %v437, %v1605
      %v1607 = vpop.f32.mrf.mxu0
      %1608 = vmatprep.mubr.bf16.mxu0 0
      %1609 = vmatmul.mubr.bf16.gmra.mxu0 %v1124
      %v1610 = vpop.f32.mrf.mxu0
      %v1611 = vadd.f32 %v437, %v1610
      %v1612 = vpop.f32.mrf.mxu0
      %v1613 = vpop.f32.mrf.mxu0
      %v1614 = vadd.f32 %v437, %v1613
      %v1615 = vpop.f32.mrf.mxu0
      %1616 = vmatprep.mubr.bf16.mxu0 0
      %1617 = vmatmul.mubr.bf16.gmra.mxu0 %v1127
      %v1618 = vpop.f32.mrf.mxu0
      %v1619 = vadd.f32 %v437, %v1618
      %v1620 = vpop.f32.mrf.mxu0
      %v1621 = vpop.f32.mrf.mxu0
      %v1622 = vadd.f32 %v437, %v1621
      %v1623 = vpop.f32.mrf.mxu0
      %1624 = vmatprep.mubr.bf16.mxu0 0
      %1625 = vmatmul.mubr.bf16.gmra.mxu0 %v1130
      %v1626 = vpop.f32.mrf.mxu0
      %v1627 = vadd.f32 %v437, %v1626
      %v1628 = vpop.f32.mrf.mxu0
      %v1629 = vpop.f32.mrf.mxu0
      %v1630 = vadd.f32 %v437, %v1629
      %v1631 = vpop.f32.mrf.mxu0
      %1632 = vmatprep.mubr.bf16.mxu0 0
      %1633 = vmatmul.mubr.bf16.gmra.mxu0 %v1133
      %v1634 = vpop.f32.mrf.mxu0
      %v1635 = vadd.f32 %v437, %v1634
      %v1636 = vpop.f32.mrf.mxu0
      %v1637 = vpop.f32.mrf.mxu0
      %v1638 = vadd.f32 %v437, %v1637
      %v1639 = vpop.f32.mrf.mxu0
      %1640 = vmatprep.mubr.bf16.mxu0 0
      %1641 = vmatmul.mubr.bf16.gmra.mxu0 %v1136
      %v1642 = vpop.f32.mrf.mxu0
      %v1643 = vadd.f32 %v437, %v1642
      %v1644 = vpop.f32.mrf.mxu0
      %v1645 = vpop.f32.mrf.mxu0
      %v1646 = vadd.f32 %v437, %v1645
      %v1647 = vpop.f32.mrf.mxu0
      %1648 = vmatprep.mubr.bf16.mxu0 0
      %1649 = vmatmul.mubr.bf16.gmra.mxu0 %v1139
      %v1650 = vpop.f32.mrf.mxu0
      %v1651 = vadd.f32 %v437, %v1650
      %v1652 = vpop.f32.mrf.mxu0
      %v1653 = vpop.f32.mrf.mxu0
      %v1654 = vadd.f32 %v437, %v1653
      %v1655 = vpop.f32.mrf.mxu0
      %1656 = vmatprep.mubr.bf16.mxu0 0
      %1657 = vmatmul.mubr.bf16.gmra.mxu0 %v1142
      %v1658 = vpop.f32.mrf.mxu0
      %v1659 = vadd.f32 %v437, %v1658
      %v1660 = vpop.f32.mrf.mxu0
      %v1661 = vpop.f32.mrf.mxu0
      %v1662 = vadd.f32 %v437, %v1661
      %v1663 = vpop.f32.mrf.mxu0
      %1664 = vmatprep.mubr.bf16.mxu0 0
      %1665 = vmatmul.mubr.bf16.gmra.mxu0 %v1145
      %v1666 = vpop.f32.mrf.mxu0
      %v1667 = vadd.f32 %v437, %v1666
      %v1668 = vpop.f32.mrf.mxu0
      %v1669 = vpop.f32.mrf.mxu0
      %v1670 = vadd.f32 %v437, %v1669
      %v1671 = vpop.f32.mrf.mxu0
      %1672 = vmatprep.mubr.bf16.mxu0 0
      %1673 = vmatmul.mubr.bf16.gmra.mxu0 %v1148
      %v1674 = vpop.f32.mrf.mxu0
      %v1675 = vadd.f32 %v437, %v1674
      %v1676 = vpop.f32.mrf.mxu0
      %v1677 = vpop.f32.mrf.mxu0
      %v1678 = vadd.f32 %v437, %v1677
      %v1679 = vpop.f32.mrf.mxu0
      %1680 = vmatprep.mubr.bf16.mxu0 0
      %1681 = vmatmul.mubr.bf16.gmra.mxu0 %v1151
      %v1682 = vpop.f32.mrf.mxu0
      %v1683 = vadd.f32 %v437, %v1682
      %v1684 = vpop.f32.mrf.mxu0
      %v1685 = vpop.f32.mrf.mxu0
      %v1686 = vadd.f32 %v437, %v1685
      %v1687 = vpop.f32.mrf.mxu0
      %1688 = vmatprep.mubr.bf16.mxu0 0
      %1689 = vmatmul.mubr.bf16.gmra.mxu0 %v1154
      %v1690 = vpop.f32.mrf.mxu0
      %v1691 = vadd.f32 %v437, %v1690
      %v1692 = vpop.f32.mrf.mxu0
      %v1693 = vpop.f32.mrf.mxu0
      %v1694 = vadd.f32 %v437, %v1693
      %v1695 = vpop.f32.mrf.mxu0
      %1696 = vmatprep.mubr.bf16.mxu0 0
      %1697 = vmatmul.mubr.bf16.gmra.mxu0 %v1157
      %v1698 = vpop.f32.mrf.mxu0
      %v1699 = vadd.f32 %v437, %v1698
      %v1700 = vpop.f32.mrf.mxu0
      %v1701 = vpop.f32.mrf.mxu0
      %v1702 = vadd.f32 %v437, %v1701
      %v1703 = vpop.f32.mrf.mxu0
      %1704 = vmatprep.mubr.bf16.mxu0 0
      %1705 = vmatmul.mubr.bf16.gmra.mxu0 %v1160
      %v1706 = vpop.f32.mrf.mxu0
      %v1707 = vadd.f32 %v437, %v1706
      %v1708 = vpop.f32.mrf.mxu0
      %v1709 = vpop.f32.mrf.mxu0
      %v1710 = vadd.f32 %v437, %v1709
      %v1711 = vpop.f32.mrf.mxu0
      %1712 = vmatprep.mubr.bf16.mxu0 0
      %1713 = vmatmul.mubr.bf16.gmra.mxu0 %v1163
      %v1714 = vpop.f32.mrf.mxu0
      %v1715 = vadd.f32 %v437, %v1714
      %v1716 = vpop.f32.mrf.mxu0
      %v1717 = vpop.f32.mrf.mxu0
      %v1718 = vadd.f32 %v437, %v1717
      %v1719 = vpop.f32.mrf.mxu0
      %1720 = vmatprep.mubr.bf16.mxu0 0
      %1721 = vmatmul.mubr.bf16.gmra.mxu0 %v1166
      %v1722 = vpop.f32.mrf.mxu0
      %v1723 = vadd.f32 %v437, %v1722
      %v1724 = vpop.f32.mrf.mxu0
      %v1725 = vpop.f32.mrf.mxu0
      %v1726 = vadd.f32 %v437, %v1725
      %v1727 = vpop.f32.mrf.mxu0
      %1728 = vmatprep.mubr.bf16.mxu0 0
      %1729 = vmatmul.mubr.bf16.gmra.mxu0 %v1169
      %v1730 = vpop.f32.mrf.mxu0
      %v1731 = vadd.f32 %v437, %v1730
      %v1732 = vpop.f32.mrf.mxu0
      %v1733 = vpop.f32.mrf.mxu0
      %v1734 = vadd.f32 %v437, %v1733
      %v1735 = vpop.f32.mrf.mxu0
      %1736 = vmatprep.mubr.bf16.mxu0 0
      %1737 = vmatmul.mubr.bf16.gmra.mxu0 %v1172
      %v1738 = vpop.f32.mrf.mxu0
      %v1739 = vadd.f32 %v437, %v1738
      %v1740 = vpop.f32.mrf.mxu0
      %v1741 = vpop.f32.mrf.mxu0
      %v1742 = vadd.f32 %v437, %v1741
      %v1743 = vpop.f32.mrf.mxu0
      %1744 = vmatprep.mubr.bf16.mxu0 0
      %1745 = vmatmul.mubr.bf16.gmra.mxu0 %v1175
      %v1746 = vpop.f32.mrf.mxu0
      %v1747 = vadd.f32 %v437, %v1746
      %v1748 = vpop.f32.mrf.mxu0
      %v1749 = vpop.f32.mrf.mxu0
      %v1750 = vadd.f32 %v437, %v1749
      %v1751 = vpop.f32.mrf.mxu0
      %1752 = vmatprep.mubr.bf16.mxu0 0
      %1753 = vmatmul.mubr.bf16.gmra.mxu0 %v1178
      %v1754 = vpop.f32.mrf.mxu0
      %v1755 = vadd.f32 %v437, %v1754
      %v1756 = vpop.f32.mrf.mxu0
      %v1757 = vpop.f32.mrf.mxu0
      %v1758 = vadd.f32 %v437, %v1757
      %v1759 = vpop.f32.mrf.mxu0
      %1760 = vmatprep.mubr.bf16.mxu0 0
      %1761 = vmatmul.mubr.bf16.gmra.mxu0 %v1181
      %v1762 = vpop.f32.mrf.mxu0
      %v1763 = vadd.f32 %v437, %v1762
      %v1764 = vpop.f32.mrf.mxu0
      %v1765 = vpop.f32.mrf.mxu0
      %v1766 = vadd.f32 %v437, %v1765
      %v1767 = vpop.f32.mrf.mxu0
      %1768 = vmatprep.mubr.bf16.mxu0 0
      %1769 = vmatmul.mubr.bf16.gmra.mxu0 %v1184
      %v1770 = vpop.f32.mrf.mxu0
      %v1771 = vadd.f32 %v437, %v1770
      %v1772 = vpop.f32.mrf.mxu0
      %v1773 = vpop.f32.mrf.mxu0
      %v1774 = vadd.f32 %v437, %v1773
      %v1775 = vpop.f32.mrf.mxu0
      %1776 = vmatprep.mubr.bf16.mxu0 0
      %1777 = vmatmul.mubr.bf16.gmra.mxu0 %v1187
      %v1778 = vpop.f32.mrf.mxu0
      %v1779 = vadd.f32 %v437, %v1778
      %v1780 = vpop.f32.mrf.mxu0
      %v1781 = vpop.f32.mrf.mxu0
      %v1782 = vadd.f32 %v437, %v1781
      %v1783 = vpop.f32.mrf.mxu0
      %1784 = vmatprep.mubr.bf16.mxu0 0
      %1785 = vmatmul.mubr.bf16.gmra.mxu0 %v1190
      %v1786 = vpop.f32.mrf.mxu0
      %v1787 = vadd.f32 %v437, %v1786
      %v1788 = vpop.f32.mrf.mxu0
      %v1789 = vpop.f32.mrf.mxu0
      %v1790 = vadd.f32 %v437, %v1789
      %v1791 = vpop.f32.mrf.mxu0
      %1792 = vmatprep.mubr.bf16.mxu0 0
      %1793 = vmatmul.mubr.bf16.gmra.mxu0 %v1193
      %v1794 = vpop.f32.mrf.mxu0
      %v1795 = vadd.f32 %v437, %v1794
      %v1796 = vpop.f32.mrf.mxu0
      %v1797 = vpop.f32.mrf.mxu0
      %v1798 = vadd.f32 %v437, %v1797
      %v1799 = vpop.f32.mrf.mxu0
      %1800 = vmatprep.mubr.bf16.mxu0 0
      %1801 = vmatmul.mubr.bf16.gmra.mxu0 %v1196
      %v1802 = vpop.f32.mrf.mxu0
      %v1803 = vadd.f32 %v437, %v1802
      %v1804 = vpop.f32.mrf.mxu0
      %v1805 = vpop.f32.mrf.mxu0
      %v1806 = vadd.f32 %v437, %v1805
      %v1807 = vpop.f32.mrf.mxu0
      %1808 = vmatprep.mubr.bf16.mxu0 0
      %1809 = vmatmul.mubr.bf16.gmra.mxu0 %v1199
      %v1810 = vpop.f32.mrf.mxu0
      %v1811 = vadd.f32 %v437, %v1810
      %v1812 = vpop.f32.mrf.mxu0
      %v1813 = vpop.f32.mrf.mxu0
      %v1814 = vadd.f32 %v437, %v1813
      %v1815 = vpop.f32.mrf.mxu0
      %1816 = vmatprep.mubr.bf16.mxu0 0
      %1817 = vmatmul.mubr.bf16.gmra.mxu0 %v1202
      %v1818 = vpop.f32.mrf.mxu0
      %v1819 = vadd.f32 %v437, %v1818
      %v1820 = vpop.f32.mrf.mxu0
      %v1821 = vpop.f32.mrf.mxu0
      %v1822 = vadd.f32 %v437, %v1821
      %v1823 = vpop.f32.mrf.mxu0
      %1824 = vmatprep.mubr.bf16.mxu0 0
      %1825 = vmatmul.mubr.bf16.gmra.mxu0 %v1205
      %v1826 = vpop.f32.mrf.mxu0
      %v1827 = vadd.f32 %v437, %v1826
      %v1828 = vpop.f32.mrf.mxu0
      %v1829 = vpop.f32.mrf.mxu0
      %v1830 = vadd.f32 %v437, %v1829
      %v1831 = vpop.f32.mrf.mxu0
      %1832 = vmatprep.mubr.bf16.mxu0 0
      %1833 = vmatmul.mubr.bf16.gmra.mxu0 %v1208
      %v1834 = vpop.f32.mrf.mxu0
      %v1835 = vadd.f32 %v437, %v1834
      %v1836 = vpop.f32.mrf.mxu0
      %v1837 = vpop.f32.mrf.mxu0
      %v1838 = vadd.f32 %v437, %v1837
      %v1839 = vpop.f32.mrf.mxu0
      %1840 = vmatprep.mubr.bf16.mxu0 0
      %1841 = vmatmul.mubr.bf16.gmra.mxu0 %v1211
      %v1842 = vpop.f32.mrf.mxu0
      %v1843 = vadd.f32 %v437, %v1842
      %v1844 = vpop.f32.mrf.mxu0
      %v1845 = vpop.f32.mrf.mxu0
      %v1846 = vadd.f32 %v437, %v1845
      %v1847 = vpop.f32.mrf.mxu0
      %1848 = vmatprep.mubr.bf16.mxu0 0
      %1849 = vmatmul.mubr.bf16.gmra.mxu0 %v1214
      %v1850 = vpop.f32.mrf.mxu0
      %v1851 = vadd.f32 %v437, %v1850
      %v1852 = vpop.f32.mrf.mxu0
      %v1853 = vpop.f32.mrf.mxu0
      %v1854 = vadd.f32 %v437, %v1853
      %v1855 = vpop.f32.mrf.mxu0
      %1856 = vmatprep.mubr.bf16.mxu0 0
      %1857 = vmatmul.mubr.bf16.gmra.mxu0 %v1217
      %v1858 = vpop.f32.mrf.mxu0
      %v1859 = vadd.f32 %v437, %v1858
      %v1860 = vpop.f32.mrf.mxu0
      %v1861 = vpop.f32.mrf.mxu0
      %v1862 = vadd.f32 %v437, %v1861
      %v1863 = vpop.f32.mrf.mxu0
      %1864 = vmatprep.mubr.bf16.mxu0 0
      %1865 = vmatmul.mubr.bf16.gmra.mxu0 %v1220
      %v1866 = vpop.f32.mrf.mxu0
      %v1867 = vadd.f32 %v437, %v1866
      %v1868 = vpop.f32.mrf.mxu0
      %v1869 = vpop.f32.mrf.mxu0
      %v1870 = vadd.f32 %v437, %v1869
      %v1871 = vpop.f32.mrf.mxu0
      %1872 = vmatprep.mubr.bf16.mxu0 0
      %1873 = vmatmul.mubr.bf16.gmra.mxu0 %v1223
      %v1874 = vpop.f32.mrf.mxu0
      %v1875 = vadd.f32 %v437, %v1874
      %v1876 = vpop.f32.mrf.mxu0
      %v1877 = vpop.f32.mrf.mxu0
      %v1878 = vadd.f32 %v437, %v1877
      %v1879 = vpop.f32.mrf.mxu0
      %1880 = vmatprep.mubr.bf16.mxu0 0
      %1881 = vmatmul.mubr.bf16.gmra.mxu0 %v1226
      %v1882 = vpop.f32.mrf.mxu0
      %v1883 = vadd.f32 %v437, %v1882
      %v1884 = vpop.f32.mrf.mxu0
      %v1885 = vpop.f32.mrf.mxu0
      %v1886 = vadd.f32 %v437, %v1885
      %v1887 = vpop.f32.mrf.mxu0
      %1888 = vmatprep.mubr.bf16.mxu0 0
      %1889 = vmatmul.mubr.bf16.gmra.mxu0 %v1229
      %v1890 = vpop.f32.mrf.mxu0
      %v1891 = vadd.f32 %v437, %v1890
      %v1892 = vpop.f32.mrf.mxu0
      %v1893 = vpop.f32.mrf.mxu0
      %v1894 = vadd.f32 %v437, %v1893
      %v1895 = vpop.f32.mrf.mxu0
      %1896 = vmatprep.mubr.bf16.mxu0 0
      %1897 = vmatmul.mubr.bf16.gmra.mxu0 %v1232
      %v1898 = vpop.f32.mrf.mxu0
      %v1899 = vadd.f32 %v437, %v1898
      %v1900 = vpop.f32.mrf.mxu0
      %v1901 = vpop.f32.mrf.mxu0
      %v1902 = vadd.f32 %v437, %v1901
      %v1903 = vpop.f32.mrf.mxu0
      %1904 = vmatprep.mubr.bf16.mxu0 0
      %1905 = vmatmul.mubr.bf16.gmra.mxu0 %v1235
      %v1906 = vpop.f32.mrf.mxu0
      %v1907 = vadd.f32 %v437, %v1906
      %v1908 = vpop.f32.mrf.mxu0
      %v1909 = vpop.f32.mrf.mxu0
      %v1910 = vadd.f32 %v437, %v1909
      %v1911 = vpop.f32.mrf.mxu0
      %1912 = vmatprep.mubr.bf16.mxu0 0
      %1913 = vmatmul.mubr.bf16.gmra.mxu0 %v1238
      %v1914 = vpop.f32.mrf.mxu0
      %v1915 = vadd.f32 %v437, %v1914
      %v1916 = vpop.f32.mrf.mxu0
      %v1917 = vpop.f32.mrf.mxu0
      %v1918 = vadd.f32 %v437, %v1917
      %v1919 = vpop.f32.mrf.mxu0
      %1920 = vmatprep.mubr.bf16.mxu0 0
      %1921 = vmatmul.mubr.bf16.gmra.mxu0 %v1241
      %v1922 = vpop.f32.mrf.mxu0
      %v1923 = vadd.f32 %v437, %v1922
      %v1924 = vpop.f32.mrf.mxu0
      %v1925 = vpop.f32.mrf.mxu0
      %v1926 = vadd.f32 %v437, %v1925
      %v1927 = vpop.f32.mrf.mxu0
      %1928 = vmatprep.mubr.bf16.mxu0 0
      %1929 = vmatmul.mubr.bf16.gmra.mxu0 %v1244
      %v1930 = vpop.f32.mrf.mxu0
      %v1931 = vadd.f32 %v437, %v1930
      %v1932 = vpop.f32.mrf.mxu0
      %v1933 = vpop.f32.mrf.mxu0
      %v1934 = vadd.f32 %v437, %v1933
      %v1935 = vpop.f32.mrf.mxu0
      %1936 = vmatprep.mubr.bf16.mxu0 0
      %1937 = vmatmul.mubr.bf16.gmra.mxu0 %v1247
      %v1938 = vpop.f32.mrf.mxu0
      %v1939 = vadd.f32 %v437, %v1938
      %v1940 = vpop.f32.mrf.mxu0
      %v1941 = vpop.f32.mrf.mxu0
      %v1942 = vadd.f32 %v437, %v1941
      %v1943 = vpop.f32.mrf.mxu0
      %1944 = vmatprep.mubr.bf16.mxu0 0
      %1945 = vmatmul.mubr.bf16.gmra.mxu0 %v1250
      %v1946 = vpop.f32.mrf.mxu0
      %v1947 = vadd.f32 %v437, %v1946
      %v1948 = vpop.f32.mrf.mxu0
      %v1949 = vpop.f32.mrf.mxu0
      %v1950 = vadd.f32 %v437, %v1949
      %v1951 = vpop.f32.mrf.mxu0
      %1952 = vmatprep.mubr.bf16.mxu0 0
      %1953 = vmatmul.mubr.bf16.gmra.mxu0 %v1253
      %v1954 = vpop.f32.mrf.mxu0
      %v1955 = vadd.f32 %v437, %v1954
      %v1956 = vpop.f32.mrf.mxu0
      %v1957 = vpop.f32.mrf.mxu0
      %v1958 = vadd.f32 %v437, %v1957
      %v1959 = vpop.f32.mrf.mxu0
      %1960 = vmatprep.mubr.bf16.mxu0 0
      %1961 = vmatmul.mubr.bf16.gmra.mxu0 %v1256
      %v1962 = vpop.f32.mrf.mxu0
      %v1963 = vadd.f32 %v437, %v1962
      %v1964 = vpop.f32.mrf.mxu0
      %v1965 = vpop.f32.mrf.mxu0
      %v1966 = vadd.f32 %v437, %v1965
      %v1967 = vpop.f32.mrf.mxu0
      %1968 = vmatprep.mubr.bf16.mxu0 0
      %1969 = vmatmul.mubr.bf16.gmra.mxu0 %v1259
      %v1970 = vpop.f32.mrf.mxu0
      %v1971 = vadd.f32 %v437, %v1970
      %v1972 = vpop.f32.mrf.mxu0
      %v1973 = vpop.f32.mrf.mxu0
      %v1974 = vadd.f32 %v437, %v1973
      %v1975 = vpop.f32.mrf.mxu0
      %1976 = vmatprep.mubr.bf16.mxu0 0
      %1977 = vmatmul.mubr.bf16.gmra.mxu0 %v1262
      %v1978 = vpop.f32.mrf.mxu0
      %v1979 = vadd.f32 %v437, %v1978
      %v1980 = vpop.f32.mrf.mxu0
      %v1981 = vpop.f32.mrf.mxu0
      %v1982 = vadd.f32 %v437, %v1981
      %v1983 = vpop.f32.mrf.mxu0
      %1984 = vmatprep.mubr.bf16.mxu0 0
      %1985 = vmatmul.mubr.bf16.gmra.mxu0 %v1265
      %v1986 = vpop.f32.mrf.mxu0
      %v1987 = vadd.f32 %v437, %v1986
      %v1988 = vpop.f32.mrf.mxu0
      %v1989 = vpop.f32.mrf.mxu0
      %v1990 = vadd.f32 %v437, %v1989
      %v1991 = vpop.f32.mrf.mxu0
      %1992 = vmatprep.mubr.bf16.mxu0 0
      %1993 = vmatmul.mubr.bf16.gmra.mxu0 %v1268
      %v1994 = vpop.f32.mrf.mxu0
      %v1995 = vadd.f32 %v437, %v1994
      %v1996 = vpop.f32.mrf.mxu0
      %v1997 = vpop.f32.mrf.mxu0
      %v1998 = vadd.f32 %v437, %v1997
      %v1999 = vpop.f32.mrf.mxu0
      %2000 = vmatprep.mubr.bf16.mxu0 0
      %2001 = vmatmul.mubr.bf16.gmra.mxu0 %v1271
      %v2002 = vpop.f32.mrf.mxu0
      %v2003 = vadd.f32 %v437, %v2002
      %v2004 = vpop.f32.mrf.mxu0
      %v2005 = vpop.f32.mrf.mxu0
      %v2006 = vadd.f32 %v437, %v2005
      %v2007 = vpop.f32.mrf.mxu0
      %2008 = vmatprep.mubr.bf16.mxu0 0
      %2009 = vmatmul.mubr.bf16.gmra.mxu0 %v1274
      %v2010 = vpop.f32.mrf.mxu0
      %v2011 = vadd.f32 %v437, %v2010
      %v2012 = vpop.f32.mrf.mxu0
      %v2013 = vpop.f32.mrf.mxu0
      %v2014 = vadd.f32 %v437, %v2013
      %v2015 = vpop.f32.mrf.mxu0
      %2016 = vmatprep.mubr.bf16.mxu0 0
      %2017 = vmatmul.mubr.bf16.gmra.mxu0 %v1277
      %v2018 = vpop.f32.mrf.mxu0
      %v2019 = vadd.f32 %v437, %v2018
      %v2020 = vpop.f32.mrf.mxu0
      %v2021 = vpop.f32.mrf.mxu0
      %v2022 = vadd.f32 %v437, %v2021
      %v2023 = vpop.f32.mrf.mxu0
      %2024 = vmatprep.mubr.bf16.mxu0 0
      %2025 = vmatmul.mubr.bf16.gmra.mxu0 %v1280
      %v2026 = vpop.f32.mrf.mxu0
      %v2027 = vadd.f32 %v437, %v2026
      %v2028 = vpop.f32.mrf.mxu0
      %v2029 = vpop.f32.mrf.mxu0
      %v2030 = vadd.f32 %v437, %v2029
      %v2031 = vpop.f32.mrf.mxu0
      %2032 = vmatprep.mubr.bf16.mxu0 0
      %2033 = vmatmul.mubr.bf16.gmra.mxu0 %v1283
      %v2034 = vpop.f32.mrf.mxu0
      %v2035 = vadd.f32 %v437, %v2034
      %v2036 = vpop.f32.mrf.mxu0
      %v2037 = vpop.f32.mrf.mxu0
      %v2038 = vadd.f32 %v437, %v2037
      %v2039 = vpop.f32.mrf.mxu0
      %2040 = vmatprep.mubr.bf16.mxu0 0
      %2041 = vmatmul.mubr.bf16.gmra.mxu0 %v1286
      %v2042 = vpop.f32.mrf.mxu0
      %v2043 = vadd.f32 %v437, %v2042
      %v2044 = vpop.f32.mrf.mxu0
      %v2045 = vpop.f32.mrf.mxu0
      %v2046 = vadd.f32 %v437, %v2045
      %v2047 = vpop.f32.mrf.mxu0
      %2048 = vmatprep.mubr.bf16.mxu0 0
      %2049 = vmatmul.mubr.bf16.gmra.mxu0 %v1289
      %v2050 = vpop.f32.mrf.mxu0
      %v2051 = vadd.f32 %v437, %v2050
      %v2052 = vpop.f32.mrf.mxu0
      %v2053 = vpop.f32.mrf.mxu0
      %v2054 = vadd.f32 %v437, %v2053
      %v2055 = vpop.f32.mrf.mxu0
      %2056 = vmatprep.mubr.bf16.mxu0 0
      %2057 = vmatmul.mubr.bf16.gmra.mxu0 %v1292
      %v2058 = vpop.f32.mrf.mxu0
      %v2059 = vadd.f32 %v437, %v2058
      %v2060 = vpop.f32.mrf.mxu0
      %v2061 = vpop.f32.mrf.mxu0
      %v2062 = vadd.f32 %v437, %v2061
      %v2063 = vpop.f32.mrf.mxu0
      %2064 = vmatprep.mubr.bf16.mxu0 0
      %2065 = vmatmul.mubr.bf16.gmra.mxu0 %v1295
      %v2066 = vpop.f32.mrf.mxu0
      %v2067 = vadd.f32 %v437, %v2066
      %v2068 = vpop.f32.mrf.mxu0
      %v2069 = vpop.f32.mrf.mxu0
      %v2070 = vadd.f32 %v437, %v2069
      %v2071 = vpop.f32.mrf.mxu0
      %2072 = vmatprep.mubr.bf16.mxu0 0
      %2073 = vmatmul.mubr.bf16.gmra.mxu0 %v1298
      %v2074 = vpop.f32.mrf.mxu0
      %v2075 = vadd.f32 %v437, %v2074
      %v2076 = vpop.f32.mrf.mxu0
      %v2077 = vpop.f32.mrf.mxu0
      %v2078 = vadd.f32 %v437, %v2077
      %v2079 = vpop.f32.mrf.mxu0
      %2080 = vmatprep.mubr.bf16.mxu0 0
      %2081 = vmatmul.mubr.bf16.gmra.mxu0 %v1301
      %v2082 = vpop.f32.mrf.mxu0
      %v2083 = vadd.f32 %v437, %v2082
      %v2084 = vpop.f32.mrf.mxu0
      %v2085 = vpop.f32.mrf.mxu0
      %v2086 = vadd.f32 %v437, %v2085
      %v2087 = vpop.f32.mrf.mxu0
      %2088 = vmatprep.mubr.bf16.mxu0 0
      %2089 = vmatmul.mubr.bf16.gmra.mxu0 %v1304
      %v2090 = vpop.f32.mrf.mxu0
      %v2091 = vadd.f32 %v437, %v2090
      %v2092 = vpop.f32.mrf.mxu0
      %v2093 = vpop.f32.mrf.mxu0
      %v2094 = vadd.f32 %v437, %v2093
      %v2095 = vpop.f32.mrf.mxu0
      %2096 = vmatprep.mubr.bf16.mxu0 0
      %2097 = vmatmul.mubr.bf16.gmra.mxu0 %v1307
      %v2098 = vpop.f32.mrf.mxu0
      %v2099 = vadd.f32 %v437, %v2098
      %v2100 = vpop.f32.mrf.mxu0
      %v2101 = vpop.f32.mrf.mxu0
      %v2102 = vadd.f32 %v437, %v2101
      %v2103 = vpop.f32.mrf.mxu0
      %2104 = vmatprep.mubr.bf16.mxu0 0
      %2105 = vmatmul.mubr.bf16.gmra.mxu0 %v1310
      %v2106 = vpop.f32.mrf.mxu0
      %v2107 = vadd.f32 %v437, %v2106
      %v2108 = vpop.f32.mrf.mxu0
      %v2109 = vpop.f32.mrf.mxu0
      %v2110 = vadd.f32 %v437, %v2109
      %v2111 = vpop.f32.mrf.mxu0
      %2112 = vmatprep.mubr.bf16.mxu0 0
      %2113 = vmatmul.mubr.bf16.gmra.mxu0 %v1313
      %v2114 = vpop.f32.mrf.mxu0
      %v2115 = vadd.f32 %v437, %v2114
      %v2116 = vpop.f32.mrf.mxu0
      %v2117 = vpop.f32.mrf.mxu0
      %v2118 = vadd.f32 %v437, %v2117
      %v2119 = vpop.f32.mrf.mxu0
      %2120 = vmatprep.mubr.bf16.mxu0 0
      %2121 = vmatmul.mubr.bf16.gmra.mxu0 %v1316
      %v2122 = vpop.f32.mrf.mxu0
      %v2123 = vadd.f32 %v437, %v2122
      %v2124 = vpop.f32.mrf.mxu0
      %v2125 = vpop.f32.mrf.mxu0
      %v2126 = vadd.f32 %v437, %v2125
      %v2127 = vpop.f32.mrf.mxu0
      %2128 = vmatprep.mubr.bf16.mxu0 0
      %2129 = vmatmul.mubr.bf16.gmra.mxu0 %v1319
      %v2130 = vpop.f32.mrf.mxu0
      %v2131 = vadd.f32 %v437, %v2130
      %v2132 = vpop.f32.mrf.mxu0
      %v2133 = vpop.f32.mrf.mxu0
      %v2134 = vadd.f32 %v437, %v2133
      %v2135 = vpop.f32.mrf.mxu0
      %2136 = vmatprep.mubr.bf16.mxu0 0
      %2137 = vmatmul.mubr.bf16.gmra.mxu0 %v1322
      %v2138 = vpop.f32.mrf.mxu0
      %v2139 = vadd.f32 %v437, %v2138
      %v2140 = vpop.f32.mrf.mxu0
      %v2141 = vpop.f32.mrf.mxu0
      %v2142 = vadd.f32 %v437, %v2141
      %v2143 = vpop.f32.mrf.mxu0
      %2144 = vmatprep.mubr.bf16.mxu0 0
      %2145 = vmatmul.mubr.bf16.gmra.mxu0 %v1325
      %v2146 = vpop.f32.mrf.mxu0
      %v2147 = vadd.f32 %v437, %v2146
      %v2148 = vpop.f32.mrf.mxu0
      %v2149 = vpop.f32.mrf.mxu0
      %v2150 = vadd.f32 %v437, %v2149
      %v2151 = vpop.f32.mrf.mxu0
      %2152 = vmatprep.mubr.bf16.mxu0 0
      %2153 = vmatmul.mubr.bf16.gmra.mxu0 %v1328
      %v2154 = vpop.f32.mrf.mxu0
      %v2155 = vadd.f32 %v437, %v2154
      %v2156 = vpop.f32.mrf.mxu0
      %v2157 = vpop.f32.mrf.mxu0
      %v2158 = vadd.f32 %v437, %v2157
      %v2159 = vpop.f32.mrf.mxu0
      %2160 = vmatprep.mubr.bf16.mxu0 0
      %2161 = vmatmul.mubr.bf16.gmra.mxu0 %v1331
      %v2162 = vpop.f32.mrf.mxu0
      %v2163 = vadd.f32 %v437, %v2162
      %v2164 = vpop.f32.mrf.mxu0
      %v2165 = vpop.f32.mrf.mxu0
      %v2166 = vadd.f32 %v437, %v2165
      %v2167 = vpop.f32.mrf.mxu0
      %2168 = vmatprep.mubr.bf16.mxu0 0
      %2169 = vmatmul.mubr.bf16.gmra.mxu0 %v1334
      %v2170 = vpop.f32.mrf.mxu0
      %v2171 = vadd.f32 %v437, %v2170
      %v2172 = vpop.f32.mrf.mxu0
      %v2173 = vpop.f32.mrf.mxu0
      %v2174 = vadd.f32 %v437, %v2173
      %v2175 = vpop.f32.mrf.mxu0
      %2176 = vmatprep.mubr.bf16.mxu0 0
      %2177 = vmatmul.mubr.bf16.gmra.mxu0 %v1337
      %v2178 = vpop.f32.mrf.mxu0
      %v2179 = vadd.f32 %v437, %v2178
      %v2180 = vpop.f32.mrf.mxu0
      %v2181 = vpop.f32.mrf.mxu0
      %v2182 = vadd.f32 %v437, %v2181
      %v2183 = vpop.f32.mrf.mxu0
      %2184 = vmatprep.mubr.bf16.mxu0 0
      %2185 = vmatmul.mubr.bf16.gmra.mxu0 %v1340
      %v2186 = vpop.f32.mrf.mxu0
      %v2187 = vadd.f32 %v437, %v2186
      %v2188 = vpop.f32.mrf.mxu0
      %v2189 = vpop.f32.mrf.mxu0
      %v2190 = vadd.f32 %v437, %v2189
      %v2191 = vpop.f32.mrf.mxu0
      %2192 = vmatprep.mubr.bf16.mxu0 0
      %2193 = vmatmul.mubr.bf16.gmra.mxu0 %v1343
      %v2194 = vpop.f32.mrf.mxu0
      %v2195 = vadd.f32 %v437, %v2194
      %v2196 = vpop.f32.mrf.mxu0
      %v2197 = vpop.f32.mrf.mxu0
      %v2198 = vadd.f32 %v437, %v2197
      %v2199 = vpop.f32.mrf.mxu0
      %2200 = vmatprep.mubr.bf16.mxu0 0
      %2201 = vmatmul.mubr.bf16.gmra.mxu0 %v1346
      %v2202 = vpop.f32.mrf.mxu0
      %v2203 = vadd.f32 %v437, %v2202
      %v2204 = vpop.f32.mrf.mxu0
      %v2205 = vpop.f32.mrf.mxu0
      %v2206 = vadd.f32 %v437, %v2205
      %v2207 = vpop.f32.mrf.mxu0
      %2208 = vmatprep.mubr.bf16.mxu0 0
      %2209 = vmatmul.mubr.bf16.gmra.mxu0 %v1349
      %v2210 = vpop.f32.mrf.mxu0
      %v2211 = vadd.f32 %v437, %v2210
      %v2212 = vpop.f32.mrf.mxu0
      %v2213 = vpop.f32.mrf.mxu0
      %v2214 = vadd.f32 %v437, %v2213
      %v2215 = vpop.f32.mrf.mxu0
      %2216 = vmatprep.mubr.bf16.mxu0 0
      %2217 = vmatmul.mubr.bf16.gmra.mxu0 %v1352
      %v2218 = vpop.f32.mrf.mxu0
      %v2219 = vadd.f32 %v437, %v2218
      %v2220 = vpop.f32.mrf.mxu0
      %v2221 = vpop.f32.mrf.mxu0
      %v2222 = vadd.f32 %v437, %v2221
      %v2223 = vpop.f32.mrf.mxu0
      %2224 = vmatprep.mubr.bf16.mxu0 0
      %2225 = vmatmul.mubr.bf16.gmra.mxu0 %v1355
      %v2226 = vpop.f32.mrf.mxu0
      %v2227 = vadd.f32 %v437, %v2226
      %v2228 = vpop.f32.mrf.mxu0
      %v2229 = vpop.f32.mrf.mxu0
      %v2230 = vadd.f32 %v437, %v2229
      %v2231 = vpop.f32.mrf.mxu0
      %2232 = vmatprep.mubr.bf16.mxu0 0
      %2233 = vmatmul.mubr.bf16.gmra.mxu0 %v1358
      %v2234 = vpop.f32.mrf.mxu0
      %v2235 = vadd.f32 %v437, %v2234
      %v2236 = vpop.f32.mrf.mxu0
      %v2237 = vpop.f32.mrf.mxu0
      %v2238 = vadd.f32 %v437, %v2237
      %v2239 = vpop.f32.mrf.mxu0
      %2240 = vmatprep.mubr.bf16.mxu0 0
      %2241 = vmatmul.mubr.bf16.gmra.mxu0 %v1361
      %v2242 = vpop.f32.mrf.mxu0
      %v2243 = vadd.f32 %v437, %v2242
      %v2244 = vpop.f32.mrf.mxu0
      %v2245 = vpop.f32.mrf.mxu0
      %v2246 = vadd.f32 %v437, %v2245
      %v2247 = vpop.f32.mrf.mxu0
      %2248 = vmatprep.mubr.bf16.mxu0 0
      %2249 = vmatmul.mubr.bf16.gmra.mxu0 %v1364
      %v2250 = vpop.f32.mrf.mxu0
      %v2251 = vadd.f32 %v437, %v2250
      %v2252 = vpop.f32.mrf.mxu0
      %v2253 = vpop.f32.mrf.mxu0
      %v2254 = vadd.f32 %v437, %v2253
      %v2255 = vpop.f32.mrf.mxu0
      %2256 = vmatprep.mubr.bf16.mxu0 0
      %2257 = vmatmul.mubr.bf16.gmra.mxu0 %v1367
      %v2258 = vpop.f32.mrf.mxu0
      %v2259 = vadd.f32 %v437, %v2258
      %v2260 = vpop.f32.mrf.mxu0
      %v2261 = vpop.f32.mrf.mxu0
      %v2262 = vadd.f32 %v437, %v2261
      %v2263 = vpop.f32.mrf.mxu0
      %2264 = vmatprep.mubr.bf16.mxu0 0
      %2265 = vmatmul.mubr.bf16.gmra.mxu0 %v1370
      %v2266 = vpop.f32.mrf.mxu0
      %v2267 = vadd.f32 %v437, %v2266
      %v2268 = vpop.f32.mrf.mxu0
      %v2269 = vpop.f32.mrf.mxu0
      %v2270 = vadd.f32 %v437, %v2269
      %v2271 = vpop.f32.mrf.mxu0
      %2272 = vmatprep.mubr.bf16.mxu0 0
      %2273 = vmatmul.mubr.bf16.gmra.mxu0 %v1373
      %v2274 = vpop.f32.mrf.mxu0
      %v2275 = vadd.f32 %v437, %v2274
      %v2276 = vpop.f32.mrf.mxu0
      %v2277 = vpop.f32.mrf.mxu0
      %v2278 = vadd.f32 %v437, %v2277
      %v2279 = vpop.f32.mrf.mxu0
      %2280 = vmatprep.mubr.bf16.mxu0 0
      %2281 = vmatmul.mubr.bf16.gmra.mxu0 %v1376
      %v2282 = vpop.f32.mrf.mxu0
      %v2283 = vadd.f32 %v437, %v2282
      %v2284 = vpop.f32.mrf.mxu0
      %v2285 = vpop.f32.mrf.mxu0
      %v2286 = vadd.f32 %v437, %v2285
      %v2287 = vpop.f32.mrf.mxu0
      %2288 = vmatprep.mubr.bf16.mxu0 0
      %2289 = vmatmul.mubr.bf16.gmra.mxu0 %v1379
      %v2290 = vpop.f32.mrf.mxu0
      %v2291 = vadd.f32 %v437, %v2290
      %v2292 = vpop.f32.mrf.mxu0
      %v2293 = vpop.f32.mrf.mxu0
      %v2294 = vadd.f32 %v437, %v2293
      %v2295 = vpop.f32.mrf.mxu0
      %2296 = vmatprep.mubr.bf16.mxu0 0
      %2297 = vmatmul.mubr.bf16.gmra.mxu0 %v1382
      %v2298 = vpop.f32.mrf.mxu0
      %v2299 = vadd.f32 %v437, %v2298
      %v2300 = vpop.f32.mrf.mxu0
      %v2301 = vpop.f32.mrf.mxu0
      %v2302 = vadd.f32 %v437, %v2301
      %v2303 = vpop.f32.mrf.mxu0
      %2304 = vmatprep.mubr.bf16.mxu0 0
      %2305 = vmatmul.mubr.bf16.gmra.mxu0 %v1385
      %v2306 = vpop.f32.mrf.mxu0
      %v2307 = vadd.f32 %v437, %v2306
      %v2308 = vpop.f32.mrf.mxu0
      %v2309 = vpop.f32.mrf.mxu0
      %v2310 = vadd.f32 %v437, %v2309
      %v2311 = vpop.f32.mrf.mxu0
      %2312 = vmatprep.mubr.bf16.mxu0 0
      %2313 = vmatmul.mubr.bf16.gmra.mxu0 %v1388
      %v2314 = vpop.f32.mrf.mxu0
      %v2315 = vadd.f32 %v437, %v2314
      %v2316 = vpop.f32.mrf.mxu0
      %v2317 = vpop.f32.mrf.mxu0
      %v2318 = vadd.f32 %v437, %v2317
      %v2319 = vpop.f32.mrf.mxu0
      %2320 = vmatprep.mubr.bf16.mxu0 0
      %2321 = vmatmul.mubr.bf16.gmra.mxu0 %v1391
      %v2322 = vpop.f32.mrf.mxu0
      %v2323 = vadd.f32 %v437, %v2322
      %v2324 = vpop.f32.mrf.mxu0
      %v2325 = vpop.f32.mrf.mxu0
      %v2326 = vadd.f32 %v437, %v2325
      %v2327 = vpop.f32.mrf.mxu0
      %2328 = vmatprep.mubr.bf16.mxu0 0
      %2329 = vmatmul.mubr.bf16.gmra.mxu0 %v1394
      %v2330 = vpop.f32.mrf.mxu0
      %v2331 = vadd.f32 %v437, %v2330
      %v2332 = vpop.f32.mrf.mxu0
      %v2333 = vpop.f32.mrf.mxu0
      %v2334 = vadd.f32 %v437, %v2333
      %v2335 = vpop.f32.mrf.mxu0
      %2336 = vmatprep.mubr.bf16.mxu0 0
      %2337 = vmatmul.mubr.bf16.gmra.mxu0 %v1397
      %v2338 = vpop.f32.mrf.mxu0
      %v2339 = vadd.f32 %v437, %v2338
      %v2340 = vpop.f32.mrf.mxu0
      %v2341 = vpop.f32.mrf.mxu0
      %v2342 = vadd.f32 %v437, %v2341
      %v2343 = vpop.f32.mrf.mxu0
      %2344 = vmatprep.mubr.bf16.mxu0 0
      %2345 = vmatmul.mubr.bf16.gmra.mxu0 %v1400
      %v2346 = vpop.f32.mrf.mxu0
      %v2347 = vadd.f32 %v437, %v2346
      %v2348 = vpop.f32.mrf.mxu0
      %v2349 = vpop.f32.mrf.mxu0
      %v2350 = vadd.f32 %v437, %v2349
      %v2351 = vpop.f32.mrf.mxu0
      %2352 = vmatprep.mubr.bf16.mxu0 0
      %2353 = vmatmul.mubr.bf16.gmra.mxu0 %v1403
      %v2354 = vpop.f32.mrf.mxu0
      %v2355 = vadd.f32 %v437, %v2354
      %v2356 = vpop.f32.mrf.mxu0
      %v2357 = vpop.f32.mrf.mxu0
      %v2358 = vadd.f32 %v437, %v2357
      %v2359 = vpop.f32.mrf.mxu0
      %2360 = vmatprep.mubr.bf16.mxu0 0
      %2361 = vmatmul.mubr.bf16.gmra.mxu0 %v1406
      %v2362 = vpop.f32.mrf.mxu0
      %v2363 = vadd.f32 %v437, %v2362
      %v2364 = vpop.f32.mrf.mxu0
      %v2365 = vpop.f32.mrf.mxu0
      %v2366 = vadd.f32 %v437, %v2365
      %v2367 = vpop.f32.mrf.mxu0
      %2368 = vmatprep.mubr.bf16.mxu0 0
      %2369 = vmatmul.mubr.bf16.gmra.mxu0 %v1409
      %v2370 = vpop.f32.mrf.mxu0
      %v2371 = vadd.f32 %v437, %v2370
      %v2372 = vpop.f32.mrf.mxu0
      %v2373 = vpop.f32.mrf.mxu0
      %v2374 = vadd.f32 %v437, %v2373
      %v2375 = vpop.f32.mrf.mxu0
      %2376 = vmatprep.mubr.bf16.mxu0 0
      %2377 = vmatmul.mubr.bf16.gmra.mxu0 %v1412
      %v2378 = vpop.f32.mrf.mxu0
      %v2379 = vadd.f32 %v437, %v2378
      %v2380 = vpop.f32.mrf.mxu0
      %v2381 = vpop.f32.mrf.mxu0
      %v2382 = vadd.f32 %v437, %v2381
      %v2383 = vpop.f32.mrf.mxu0
      %2384 = vmatprep.mubr.bf16.mxu0 0
      %2385 = vmatmul.mubr.bf16.gmra.mxu0 %v1415
      %v2386 = vpop.f32.mrf.mxu0
      %v2387 = vadd.f32 %v437, %v2386
      %v2388 = vpop.f32.mrf.mxu0
      %v2389 = vpop.f32.mrf.mxu0
      %v2390 = vadd.f32 %v437, %v2389
      %v2391 = vpop.f32.mrf.mxu0
      %2392 = vmatprep.mubr.bf16.mxu0 0
      %2393 = vmatmul.mubr.bf16.gmra.mxu0 %v1418
      %v2394 = vpop.f32.mrf.mxu0
      %v2395 = vadd.f32 %v437, %v2394
      %v2396 = vpop.f32.mrf.mxu0
      %v2397 = vpop.f32.mrf.mxu0
      %v2398 = vadd.f32 %v437, %v2397
      %v2399 = vpop.f32.mrf.mxu0
      %2400 = vmatprep.mubr.bf16.mxu0 0
      %2401 = vmatmul.mubr.bf16.gmra.mxu0 %v1421
      %v2402 = vpop.f32.mrf.mxu0
      %v2403 = vadd.f32 %v437, %v2402
      %v2404 = vpop.f32.mrf.mxu0
      %v2405 = vpop.f32.mrf.mxu0
      %v2406 = vadd.f32 %v437, %v2405
      %v2407 = vpop.f32.mrf.mxu0
      %2408 = vmatprep.mubr.bf16.mxu0 0
      %2409 = vmatmul.mubr.bf16.gmra.mxu0 %v1424
      %v2410 = vpop.f32.mrf.mxu0
      %v2411 = vadd.f32 %v437, %v2410
      %v2412 = vpop.f32.mrf.mxu0
      %v2413 = vpop.f32.mrf.mxu0
      %v2414 = vadd.f32 %v437, %v2413
      %v2415 = vpop.f32.mrf.mxu0
      %2416 = vmatprep.mubr.bf16.mxu0 0
      %2417 = vmatmul.mubr.bf16.gmra.mxu0 %v1427
      %v2418 = vpop.f32.mrf.mxu0
      %v2419 = vadd.f32 %v437, %v2418
      %v2420 = vpop.f32.mrf.mxu0
      %v2421 = vpop.f32.mrf.mxu0
      %v2422 = vadd.f32 %v437, %v2421
      %v2423 = vpop.f32.mrf.mxu0
      %2424 = vmatprep.mubr.bf16.mxu0 0
      %2425 = vmatmul.mubr.bf16.gmra.mxu0 %v1430
      %v2426 = vpop.f32.mrf.mxu0
      %v2427 = vadd.f32 %v437, %v2426
      %v2428 = vpop.f32.mrf.mxu0
      %v2429 = vpop.f32.mrf.mxu0
      %v2430 = vadd.f32 %v437, %v2429
      %v2431 = vpop.f32.mrf.mxu0
      %2432 = vmatprep.mubr.bf16.mxu0 0
      %2433 = vmatmul.mubr.bf16.gmra.mxu0 %v1433
      %v2434 = vpop.f32.mrf.mxu0
      %v2435 = vadd.f32 %v437, %v2434
      %v2436 = vpop.f32.mrf.mxu0
      %v2437 = vpop.f32.mrf.mxu0
      %v2438 = vadd.f32 %v437, %v2437
      %v2439 = vpop.f32.mrf.mxu0
      %2440 = vmatprep.mubr.bf16.mxu0 0
      %2441 = vmatmul.mubr.bf16.gmra.mxu0 %v1436
      %v2442 = vpop.f32.mrf.mxu0
      %v2443 = vadd.f32 %v437, %v2442
      %v2444 = vpop.f32.mrf.mxu0
      %v2445 = vpop.f32.mrf.mxu0
      %v2446 = vadd.f32 %v437, %v2445
      %v2447 = vpop.f32.mrf.mxu0
      %2448 = vmatprep.mubr.bf16.mxu0 0
      %2449 = vmatmul.mubr.bf16.gmra.mxu0 %v1439
      %v2450 = vpop.f32.mrf.mxu0
      %v2451 = vadd.f32 %v437, %v2450
      %v2452 = vpop.f32.mrf.mxu0
      %v2453 = vpop.f32.mrf.mxu0
      %v2454 = vadd.f32 %v437, %v2453
      %v2455 = vpop.f32.mrf.mxu0
      %2456 = vmatprep.mubr.bf16.mxu0 0
      %2457 = vmatmul.mubr.bf16.gmra.mxu0 %v1442
      %v2458 = vpop.f32.mrf.mxu0
      %v2459 = vadd.f32 %v437, %v2458
      %v2460 = vpop.f32.mrf.mxu0
      %v2461 = vpop.f32.mrf.mxu0
      %v2462 = vadd.f32 %v437, %v2461
      %v2463 = vpop.f32.mrf.mxu0
      %2464 = vmatprep.mubr.bf16.mxu0 0
      %2465 = vmatmul.mubr.bf16.gmra.mxu0 %v1445
      %v2466 = vpop.f32.mrf.mxu0
      %v2467 = vadd.f32 %v437, %v2466
      %v2468 = vpop.f32.mrf.mxu0
      %v2469 = vpop.f32.mrf.mxu0
      %v2470 = vadd.f32 %v437, %v2469
      %v2471 = vpop.f32.mrf.mxu0
      %2472 = vmatprep.mubr.bf16.mxu0 0
      %2473 = vmatmul.mubr.bf16.gmra.mxu0 %v1448
      %v2474 = vpop.f32.mrf.mxu0
      %v2475 = vadd.f32 %v437, %v2474
      %v2476 = vpop.f32.mrf.mxu0
      %v2477 = vpop.f32.mrf.mxu0
      %v2478 = vadd.f32 %v437, %v2477
      %v2479 = vpop.f32.mrf.mxu0
      %2480 = vmatprep.mubr.bf16.mxu0 0
      %2481 = vmatmul.mubr.bf16.gmra.mxu0 %v1451
      %v2482 = vpop.f32.mrf.mxu0
      %v2483 = vadd.f32 %v437, %v2482
      %v2484 = vpop.f32.mrf.mxu0
      %v2485 = vpop.f32.mrf.mxu0
      %v2486 = vadd.f32 %v437, %v2485
      %v2487 = vpop.f32.mrf.mxu0
      %2488 = vmatprep.mubr.bf16.mxu0 0
      %2489 = vmatmul.mubr.bf16.gmra.mxu0 %v1454
      %v2490 = vpop.f32.mrf.mxu0
      %v2491 = vadd.f32 %v437, %v2490
      %v2492 = vpop.f32.mrf.mxu0
      %v2493 = vpop.f32.mrf.mxu0
      %v2494 = vadd.f32 %v437, %v2493
      %v2495 = vpop.f32.mrf.mxu0
      %2496 = vmatprep.mubr.bf16.mxu0 0
      %2497 = vmatmul.mubr.bf16.gmra.mxu0 %v1457
      %v2498 = vpop.f32.mrf.mxu0
      %v2499 = vadd.f32 %v437, %v2498
      %v2500 = vpop.f32.mrf.mxu0
      %v2501 = vpop.f32.mrf.mxu0
      %v2502 = vadd.f32 %v437, %v2501
      %v2503 = vpop.f32.mrf.mxu0
      %2504 = vmatprep.mubr.bf16.mxu0 0
      %2505 = vmatmul.mubr.bf16.gmra.mxu0 %v1460
      %v2506 = vpop.f32.mrf.mxu0
      %v2507 = vadd.f32 %v437, %v2506
      %v2508 = vpop.f32.mrf.mxu0
      %v2509 = vpop.f32.mrf.mxu0
      %v2510 = vadd.f32 %v437, %v2509
      %v2511 = vpop.f32.mrf.mxu0
      %2512 = vmatprep.mubr.bf16.mxu0 0
      %2513 = vmatmul.mubr.bf16.gmra.mxu0 %v1463
      %v2514 = vpop.f32.mrf.mxu0
      %v2515 = vadd.f32 %v437, %v2514
      %v2516 = vpop.f32.mrf.mxu0
      %v2517 = vpop.f32.mrf.mxu0
      %v2518 = vadd.f32 %v437, %v2517
      %v2519 = vpop.f32.mrf.mxu0
      %2520 = vmatprep.mubr.bf16.mxu0 0
      %2521 = vmatmul.mubr.bf16.gmra.mxu0 %v1466
      %v2522 = vpop.f32.mrf.mxu0
      %v2523 = vadd.f32 %v437, %v2522
      %v2524 = vpop.f32.mrf.mxu0
      %v2525 = vpop.f32.mrf.mxu0
      %v2526 = vadd.f32 %v437, %v2525
      %v2527 = vpop.f32.mrf.mxu0
      %2528 = vdwg.mxu0
      %v2529 = vmul.f32 %v1507, 0.5
      %v2530 = vmul.f32 %v1510, 0.5
      %v2531 = vmul.f32 %v1515, 0.5
      %v2532 = vmul.f32 %v1518, 0.5
      %v2533 = vmul.f32 %v1523, 0.5
      %v2534 = vmul.f32 %v1526, 0.5
      %v2535 = vmul.f32 %v1531, 0.5
      %v2536 = vmul.f32 %v1534, 0.5
      %v2537 = vmul.f32 %v1539, 0.5
      %v2538 = vmul.f32 %v1542, 0.5
      %v2539 = vmul.f32 %v1547, 0.5
      %v2540 = vmul.f32 %v1550, 0.5
      %v2541 = vmul.f32 %v1555, 0.5
      %v2542 = vmul.f32 %v1558, 0.5
      %v2543 = vmul.f32 %v1563, 0.5
      %v2544 = vmul.f32 %v1566, 0.5
      %v2545 = vmul.f32 %v1571, 0.5
      %v2546 = vmul.f32 %v1574, 0.5
      %v2547 = vmul.f32 %v1579, 0.5
      %v2548 = vmul.f32 %v1582, 0.5
      %v2549 = vmul.f32 %v1587, 0.5
      %v2550 = vmul.f32 %v1590, 0.5
      %v2551 = vmul.f32 %v1595, 0.5
      %v2552 = vmul.f32 %v1598, 0.5
      %v2553 = vmul.f32 %v1603, 0.5
      %v2554 = vmul.f32 %v1606, 0.5
      %v2555 = vmul.f32 %v1611, 0.5
      %v2556 = vmul.f32 %v1614, 0.5
      %v2557 = vmul.f32 %v1619, 0.5
      %v2558 = vmul.f32 %v1622, 0.5
      %v2559 = vmul.f32 %v1627, 0.5
      %v2560 = vmul.f32 %v1630, 0.5
      %v2561 = vmul.f32 %v1635, 0.5
      %v2562 = vmul.f32 %v1638, 0.5
      %v2563 = vmul.f32 %v1643, 0.5
      %v2564 = vmul.f32 %v1646, 0.5
      %v2565 = vmul.f32 %v1651, 0.5
      %v2566 = vmul.f32 %v1654, 0.5
      %v2567 = vmul.f32 %v1659, 0.5
      %v2568 = vmul.f32 %v1662, 0.5
      %v2569 = vmul.f32 %v1667, 0.5
      %v2570 = vmul.f32 %v1670, 0.5
      %v2571 = vmul.f32 %v1675, 0.5
      %v2572 = vmul.f32 %v1678, 0.5
      %v2573 = vmul.f32 %v1683, 0.5
      %v2574 = vmul.f32 %v1686, 0.5
      %v2575 = vmul.f32 %v1691, 0.5
      %v2576 = vmul.f32 %v1694, 0.5
      %v2577 = vmul.f32 %v1699, 0.5
      %v2578 = vmul.f32 %v1702, 0.5
      %v2579 = vmul.f32 %v1707, 0.5
      %v2580 = vmul.f32 %v1710, 0.5
      %v2581 = vmul.f32 %v1715, 0.5
      %v2582 = vmul.f32 %v1718, 0.5
      %v2583 = vmul.f32 %v1723, 0.5
      %v2584 = vmul.f32 %v1726, 0.5
      %v2585 = vmul.f32 %v1731, 0.5
      %v2586 = vmul.f32 %v1734, 0.5
      %v2587 = vmul.f32 %v1739, 0.5
      %v2588 = vmul.f32 %v1742, 0.5
      %v2589 = vmul.f32 %v1747, 0.5
      %v2590 = vmul.f32 %v1750, 0.5
      %v2591 = vmul.f32 %v1755, 0.5
      %v2592 = vmul.f32 %v1758, 0.5
      %v2593 = vmul.f32 %v1763, 0.5
      %v2594 = vmul.f32 %v1766, 0.5
      %v2595 = vmul.f32 %v1771, 0.5
      %v2596 = vmul.f32 %v1774, 0.5
      %v2597 = vmul.f32 %v1779, 0.5
      %v2598 = vmul.f32 %v1782, 0.5
      %v2599 = vmul.f32 %v1787, 0.5
      %v2600 = vmul.f32 %v1790, 0.5
      %v2601 = vmul.f32 %v1795, 0.5
      %v2602 = vmul.f32 %v1798, 0.5
      %v2603 = vmul.f32 %v1803, 0.5
      %v2604 = vmul.f32 %v1806, 0.5
      %v2605 = vmul.f32 %v1811, 0.5
      %v2606 = vmul.f32 %v1814, 0.5
      %v2607 = vmul.f32 %v1819, 0.5
      %v2608 = vmul.f32 %v1822, 0.5
      %v2609 = vmul.f32 %v1827, 0.5
      %v2610 = vmul.f32 %v1830, 0.5
      %v2611 = vmul.f32 %v1835, 0.5
      %v2612 = vmul.f32 %v1838, 0.5
      %v2613 = vmul.f32 %v1843, 0.5
      %v2614 = vmul.f32 %v1846, 0.5
      %v2615 = vmul.f32 %v1851, 0.5
      %v2616 = vmul.f32 %v1854, 0.5
      %v2617 = vmul.f32 %v1859, 0.5
      %v2618 = vmul.f32 %v1862, 0.5
      %v2619 = vmul.f32 %v1867, 0.5
      %v2620 = vmul.f32 %v1870, 0.5
      %v2621 = vmul.f32 %v1875, 0.5
      %v2622 = vmul.f32 %v1878, 0.5
      %v2623 = vmul.f32 %v1883, 0.5
      %v2624 = vmul.f32 %v1886, 0.5
      %v2625 = vmul.f32 %v1891, 0.5
      %v2626 = vmul.f32 %v1894, 0.5
      %v2627 = vmul.f32 %v1899, 0.5
      %v2628 = vmul.f32 %v1902, 0.5
      %v2629 = vmul.f32 %v1907, 0.5
      %v2630 = vmul.f32 %v1910, 0.5
      %v2631 = vmul.f32 %v1915, 0.5
      %v2632 = vmul.f32 %v1918, 0.5
      %v2633 = vmul.f32 %v1923, 0.5
      %v2634 = vmul.f32 %v1926, 0.5
      %v2635 = vmul.f32 %v1931, 0.5
      %v2636 = vmul.f32 %v1934, 0.5
      %v2637 = vmul.f32 %v1939, 0.5
      %v2638 = vmul.f32 %v1942, 0.5
      %v2639 = vmul.f32 %v1947, 0.5
      %v2640 = vmul.f32 %v1950, 0.5
      %v2641 = vmul.f32 %v1955, 0.5
      %v2642 = vmul.f32 %v1958, 0.5
      %v2643 = vmul.f32 %v1963, 0.5
      %v2644 = vmul.f32 %v1966, 0.5
      %v2645 = vmul.f32 %v1971, 0.5
      %v2646 = vmul.f32 %v1974, 0.5
      %v2647 = vmul.f32 %v1979, 0.5
      %v2648 = vmul.f32 %v1982, 0.5
      %v2649 = vmul.f32 %v1987, 0.5
      %v2650 = vmul.f32 %v1990, 0.5
      %v2651 = vmul.f32 %v1995, 0.5
      %v2652 = vmul.f32 %v1998, 0.5
      %v2653 = vmul.f32 %v2003, 0.5
      %v2654 = vmul.f32 %v2006, 0.5
      %v2655 = vmul.f32 %v2011, 0.5
      %v2656 = vmul.f32 %v2014, 0.5
      %v2657 = vmul.f32 %v2019, 0.5
      %v2658 = vmul.f32 %v2022, 0.5
      %v2659 = vmul.f32 %v2027, 0.5
      %v2660 = vmul.f32 %v2030, 0.5
      %v2661 = vmul.f32 %v2035, 0.5
      %v2662 = vmul.f32 %v2038, 0.5
      %v2663 = vmul.f32 %v2043, 0.5
      %v2664 = vmul.f32 %v2046, 0.5
      %v2665 = vmul.f32 %v2051, 0.5
      %v2666 = vmul.f32 %v2054, 0.5
      %v2667 = vmul.f32 %v2059, 0.5
      %v2668 = vmul.f32 %v2062, 0.5
      %v2669 = vmul.f32 %v2067, 0.5
      %v2670 = vmul.f32 %v2070, 0.5
      %v2671 = vmul.f32 %v2075, 0.5
      %v2672 = vmul.f32 %v2078, 0.5
      %v2673 = vmul.f32 %v2083, 0.5
      %v2674 = vmul.f32 %v2086, 0.5
      %v2675 = vmul.f32 %v2091, 0.5
      %v2676 = vmul.f32 %v2094, 0.5
      %v2677 = vmul.f32 %v2099, 0.5
      %v2678 = vmul.f32 %v2102, 0.5
      %v2679 = vmul.f32 %v2107, 0.5
      %v2680 = vmul.f32 %v2110, 0.5
      %v2681 = vmul.f32 %v2115, 0.5
      %v2682 = vmul.f32 %v2118, 0.5
      %v2683 = vmul.f32 %v2123, 0.5
      %v2684 = vmul.f32 %v2126, 0.5
      %v2685 = vmul.f32 %v2131, 0.5
      %v2686 = vmul.f32 %v2134, 0.5
      %v2687 = vmul.f32 %v2139, 0.5
      %v2688 = vmul.f32 %v2142, 0.5
      %v2689 = vmul.f32 %v2147, 0.5
      %v2690 = vmul.f32 %v2150, 0.5
      %v2691 = vmul.f32 %v2155, 0.5
      %v2692 = vmul.f32 %v2158, 0.5
      %v2693 = vmul.f32 %v2163, 0.5
      %v2694 = vmul.f32 %v2166, 0.5
      %v2695 = vmul.f32 %v2171, 0.5
      %v2696 = vmul.f32 %v2174, 0.5
      %v2697 = vmul.f32 %v2179, 0.5
      %v2698 = vmul.f32 %v2182, 0.5
      %v2699 = vmul.f32 %v2187, 0.5
      %v2700 = vmul.f32 %v2190, 0.5
      %v2701 = vmul.f32 %v2195, 0.5
      %v2702 = vmul.f32 %v2198, 0.5
      %v2703 = vmul.f32 %v2203, 0.5
      %v2704 = vmul.f32 %v2206, 0.5
      %v2705 = vmul.f32 %v2211, 0.5
      %v2706 = vmul.f32 %v2214, 0.5
      %v2707 = vmul.f32 %v2219, 0.5
      %v2708 = vmul.f32 %v2222, 0.5
      %v2709 = vmul.f32 %v2227, 0.5
      %v2710 = vmul.f32 %v2230, 0.5
      %v2711 = vmul.f32 %v2235, 0.5
      %v2712 = vmul.f32 %v2238, 0.5
      %v2713 = vmul.f32 %v2243, 0.5
      %v2714 = vmul.f32 %v2246, 0.5
      %v2715 = vmul.f32 %v2251, 0.5
      %v2716 = vmul.f32 %v2254, 0.5
      %v2717 = vmul.f32 %v2259, 0.5
      %v2718 = vmul.f32 %v2262, 0.5
      %v2719 = vmul.f32 %v2267, 0.5
      %v2720 = vmul.f32 %v2270, 0.5
      %v2721 = vmul.f32 %v2275, 0.5
      %v2722 = vmul.f32 %v2278, 0.5
      %v2723 = vmul.f32 %v2283, 0.5
      %v2724 = vmul.f32 %v2286, 0.5
      %v2725 = vmul.f32 %v2291, 0.5
      %v2726 = vmul.f32 %v2294, 0.5
      %v2727 = vmul.f32 %v2299, 0.5
      %v2728 = vmul.f32 %v2302, 0.5
      %v2729 = vmul.f32 %v2307, 0.5
      %v2730 = vmul.f32 %v2310, 0.5
      %v2731 = vmul.f32 %v2315, 0.5
      %v2732 = vmul.f32 %v2318, 0.5
      %v2733 = vmul.f32 %v2323, 0.5
      %v2734 = vmul.f32 %v2326, 0.5
      %v2735 = vmul.f32 %v2331, 0.5
      %v2736 = vmul.f32 %v2334, 0.5
      %v2737 = vmul.f32 %v2339, 0.5
      %v2738 = vmul.f32 %v2342, 0.5
      %v2739 = vmul.f32 %v2347, 0.5
      %v2740 = vmul.f32 %v2350, 0.5
      %v2741 = vmul.f32 %v2355, 0.5
      %v2742 = vmul.f32 %v2358, 0.5
      %v2743 = vmul.f32 %v2363, 0.5
      %v2744 = vmul.f32 %v2366, 0.5
      %v2745 = vmul.f32 %v2371, 0.5
      %v2746 = vmul.f32 %v2374, 0.5
      %v2747 = vmul.f32 %v2379, 0.5
      %v2748 = vmul.f32 %v2382, 0.5
      %v2749 = vmul.f32 %v2387, 0.5
      %v2750 = vmul.f32 %v2390, 0.5
      %v2751 = vmul.f32 %v2395, 0.5
      %v2752 = vmul.f32 %v2398, 0.5
      %v2753 = vmul.f32 %v2403, 0.5
      %v2754 = vmul.f32 %v2406, 0.5
      %v2755 = vmul.f32 %v2411, 0.5
      %v2756 = vmul.f32 %v2414, 0.5
      %v2757 = vmul.f32 %v2419, 0.5
      %v2758 = vmul.f32 %v2422, 0.5
      %v2759 = vmul.f32 %v2427, 0.5
      %v2760 = vmul.f32 %v2430, 0.5
      %v2761 = vmul.f32 %v2435, 0.5
      %v2762 = vmul.f32 %v2438, 0.5
      %v2763 = vmul.f32 %v2443, 0.5
      %v2764 = vmul.f32 %v2446, 0.5
      %v2765 = vmul.f32 %v2451, 0.5
      %v2766 = vmul.f32 %v2454, 0.5
      %v2767 = vmul.f32 %v2459, 0.5
      %v2768 = vmul.f32 %v2462, 0.5
      %v2769 = vmul.f32 %v2467, 0.5
      %v2770 = vmul.f32 %v2470, 0.5
      %v2771 = vmul.f32 %v2475, 0.5
      %v2772 = vmul.f32 %v2478, 0.5
      %v2773 = vmul.f32 %v2483, 0.5
      %v2774 = vmul.f32 %v2486, 0.5
      %v2775 = vmul.f32 %v2491, 0.5
      %v2776 = vmul.f32 %v2494, 0.5
      %v2777 = vmul.f32 %v2499, 0.5
      %v2778 = vmul.f32 %v2502, 0.5
      %v2779 = vmul.f32 %v2507, 0.5
      %v2780 = vmul.f32 %v2510, 0.5
      %v2781 = vmul.f32 %v2515, 0.5
      %v2782 = vmul.f32 %v2518, 0.5
      %v2783 = vmul.f32 %v2523, 0.5
      %v2784 = vmul.f32 %v2526, 0.5
      %v2785 = vtanh.pop %v2529
      %v2786 = vtanh.pop %v2530
      %v2787 = vtanh.pop %v2531
      %v2788 = vtanh.pop %v2532
      %v2789 = vtanh.pop %v2533
      %v2790 = vtanh.pop %v2534
      %v2791 = vtanh.pop %v2535
      %v2792 = vtanh.pop %v2536
      %v2793 = vtanh.pop %v2537
      %v2794 = vtanh.pop %v2538
      %v2795 = vtanh.pop %v2539
      %v2796 = vtanh.pop %v2540
      %v2797 = vtanh.pop %v2541
      %v2798 = vtanh.pop %v2542
      %v2799 = vtanh.pop %v2543
      %v2800 = vtanh.pop %v2544
      %v2801 = vtanh.pop %v2545
      %v2802 = vtanh.pop %v2546
      %v2803 = vtanh.pop %v2547
      %v2804 = vtanh.pop %v2548
      %v2805 = vtanh.pop %v2549
      %v2806 = vtanh.pop %v2550
      %v2807 = vtanh.pop %v2551
      %v2808 = vtanh.pop %v2552
      %v2809 = vtanh.pop %v2553
      %v2810 = vtanh.pop %v2554
      %v2811 = vtanh.pop %v2555
      %v2812 = vtanh.pop %v2556
      %v2813 = vtanh.pop %v2557
      %v2814 = vtanh.pop %v2558
      %v2815 = vtanh.pop %v2559
      %v2816 = vtanh.pop %v2560
      %v2817 = vtanh.pop %v2561
      %v2818 = vtanh.pop %v2562
      %v2819 = vtanh.pop %v2563
      %v2820 = vtanh.pop %v2564
      %v2821 = vtanh.pop %v2565
      %v2822 = vtanh.pop %v2566
      %v2823 = vtanh.pop %v2567
      %v2824 = vtanh.pop %v2568
      %v2825 = vtanh.pop %v2569
      %v2826 = vtanh.pop %v2570
      %v2827 = vtanh.pop %v2571
      %v2828 = vtanh.pop %v2572
      %v2829 = vtanh.pop %v2573
      %v2830 = vtanh.pop %v2574
      %v2831 = vtanh.pop %v2575
      %v2832 = vtanh.pop %v2576
      %v2833 = vtanh.pop %v2577
      %v2834 = vtanh.pop %v2578
      %v2835 = vtanh.pop %v2579
      %v2836 = vtanh.pop %v2580
      %v2837 = vtanh.pop %v2581
      %v2838 = vtanh.pop %v2582
      %v2839 = vtanh.pop %v2583
      %v2840 = vtanh.pop %v2584
      %v2841 = vtanh.pop %v2585
      %v2842 = vtanh.pop %v2586
      %v2843 = vtanh.pop %v2587
      %v2844 = vtanh.pop %v2588
      %v2845 = vtanh.pop %v2589
      %v2846 = vtanh.pop %v2590
      %v2847 = vtanh.pop %v2591
      %v2848 = vtanh.pop %v2592
      %v2849 = vtanh.pop %v2593
      %v2850 = vtanh.pop %v2594
      %v2851 = vtanh.pop %v2595
      %v2852 = vtanh.pop %v2596
      %v2853 = vtanh.pop %v2597
      %v2854 = vtanh.pop %v2598
      %v2855 = vtanh.pop %v2599
      %v2856 = vtanh.pop %v2600
      %v2857 = vtanh.pop %v2601
      %v2858 = vtanh.pop %v2602
      %v2859 = vtanh.pop %v2603
      %v2860 = vtanh.pop %v2604
      %v2861 = vtanh.pop %v2605
      %v2862 = vtanh.pop %v2606
      %v2863 = vtanh.pop %v2607
      %v2864 = vtanh.pop %v2608
      %v2865 = vtanh.pop %v2609
      %v2866 = vtanh.pop %v2610
      %v2867 = vtanh.pop %v2611
      %v2868 = vtanh.pop %v2612
      %v2869 = vtanh.pop %v2613
      %v2870 = vtanh.pop %v2614
      %v2871 = vtanh.pop %v2615
      %v2872 = vtanh.pop %v2616
      %v2873 = vtanh.pop %v2617
      %v2874 = vtanh.pop %v2618
      %v2875 = vtanh.pop %v2619
      %v2876 = vtanh.pop %v2620
      %v2877 = vtanh.pop %v2621
      %v2878 = vtanh.pop %v2622
      %v2879 = vtanh.pop %v2623
      %v2880 = vtanh.pop %v2624
      %v2881 = vtanh.pop %v2625
      %v2882 = vtanh.pop %v2626
      %v2883 = vtanh.pop %v2627
      %v2884 = vtanh.pop %v2628
      %v2885 = vtanh.pop %v2629
      %v2886 = vtanh.pop %v2630
      %v2887 = vtanh.pop %v2631
      %v2888 = vtanh.pop %v2632
      %v2889 = vtanh.pop %v2633
      %v2890 = vtanh.pop %v2634
      %v2891 = vtanh.pop %v2635
      %v2892 = vtanh.pop %v2636
      %v2893 = vtanh.pop %v2637
      %v2894 = vtanh.pop %v2638
      %v2895 = vtanh.pop %v2639
      %v2896 = vtanh.pop %v2640
      %v2897 = vtanh.pop %v2641
      %v2898 = vtanh.pop %v2642
      %v2899 = vtanh.pop %v2643
      %v2900 = vtanh.pop %v2644
      %v2901 = vtanh.pop %v2645
      %v2902 = vtanh.pop %v2646
      %v2903 = vtanh.pop %v2647
      %v2904 = vtanh.pop %v2648
      %v2905 = vtanh.pop %v2649
      %v2906 = vtanh.pop %v2650
      %v2907 = vtanh.pop %v2651
      %v2908 = vtanh.pop %v2652
      %v2909 = vtanh.pop %v2653
      %v2910 = vtanh.pop %v2654
      %v2911 = vtanh.pop %v2655
      %v2912 = vtanh.pop %v2656
      %v2913 = vtanh.pop %v2657
      %v2914 = vtanh.pop %v2658
      %v2915 = vtanh.pop %v2659
      %v2916 = vtanh.pop %v2660
      %v2917 = vtanh.pop %v2661
      %v2918 = vtanh.pop %v2662
      %v2919 = vtanh.pop %v2663
      %v2920 = vtanh.pop %v2664
      %v2921 = vtanh.pop %v2665
      %v2922 = vtanh.pop %v2666
      %v2923 = vtanh.pop %v2667
      %v2924 = vtanh.pop %v2668
      %v2925 = vtanh.pop %v2669
      %v2926 = vtanh.pop %v2670
      %v2927 = vtanh.pop %v2671
      %v2928 = vtanh.pop %v2672
      %v2929 = vtanh.pop %v2673
      %v2930 = vtanh.pop %v2674
      %v2931 = vtanh.pop %v2675
      %v2932 = vtanh.pop %v2676
      %v2933 = vtanh.pop %v2677
      %v2934 = vtanh.pop %v2678
      %v2935 = vtanh.pop %v2679
      %v2936 = vtanh.pop %v2680
      %v2937 = vtanh.pop %v2681
      %v2938 = vtanh.pop %v2682
      %v2939 = vtanh.pop %v2683
      %v2940 = vtanh.pop %v2684
      %v2941 = vtanh.pop %v2685
      %v2942 = vtanh.pop %v2686
      %v2943 = vtanh.pop %v2687
      %v2944 = vtanh.pop %v2688
      %v2945 = vtanh.pop %v2689
      %v2946 = vtanh.pop %v2690
      %v2947 = vtanh.pop %v2691
      %v2948 = vtanh.pop %v2692
      %v2949 = vtanh.pop %v2693
      %v2950 = vtanh.pop %v2694
      %v2951 = vtanh.pop %v2695
      %v2952 = vtanh.pop %v2696
      %v2953 = vtanh.pop %v2697
      %v2954 = vtanh.pop %v2698
      %v2955 = vtanh.pop %v2699
      %v2956 = vtanh.pop %v2700
      %v2957 = vtanh.pop %v2701
      %v2958 = vtanh.pop %v2702
      %v2959 = vtanh.pop %v2703
      %v2960 = vtanh.pop %v2704
      %v2961 = vtanh.pop %v2705
      %v2962 = vtanh.pop %v2706
      %v2963 = vtanh.pop %v2707
      %v2964 = vtanh.pop %v2708
      %v2965 = vtanh.pop %v2709
      %v2966 = vtanh.pop %v2710
      %v2967 = vtanh.pop %v2711
      %v2968 = vtanh.pop %v2712
      %v2969 = vtanh.pop %v2713
      %v2970 = vtanh.pop %v2714
      %v2971 = vtanh.pop %v2715
      %v2972 = vtanh.pop %v2716
      %v2973 = vtanh.pop %v2717
      %v2974 = vtanh.pop %v2718
      %v2975 = vtanh.pop %v2719
      %v2976 = vtanh.pop %v2720
      %v2977 = vtanh.pop %v2721
      %v2978 = vtanh.pop %v2722
      %v2979 = vtanh.pop %v2723
      %v2980 = vtanh.pop %v2724
      %v2981 = vtanh.pop %v2725
      %v2982 = vtanh.pop %v2726
      %v2983 = vtanh.pop %v2727
      %v2984 = vtanh.pop %v2728
      %v2985 = vtanh.pop %v2729
      %v2986 = vtanh.pop %v2730
      %v2987 = vtanh.pop %v2731
      %v2988 = vtanh.pop %v2732
      %v2989 = vtanh.pop %v2733
      %v2990 = vtanh.pop %v2734
      %v2991 = vtanh.pop %v2735
      %v2992 = vtanh.pop %v2736
      %v2993 = vtanh.pop %v2737
      %v2994 = vtanh.pop %v2738
      %v2995 = vtanh.pop %v2739
      %v2996 = vtanh.pop %v2740
      %v2997 = vtanh.pop %v2741
      %v2998 = vtanh.pop %v2742
      %v2999 = vtanh.pop %v2743
      %v3000 = vtanh.pop %v2744
      %v3001 = vtanh.pop %v2745
      %v3002 = vtanh.pop %v2746
      %v3003 = vtanh.pop %v2747
      %v3004 = vtanh.pop %v2748
      %v3005 = vtanh.pop %v2749
      %v3006 = vtanh.pop %v2750
      %v3007 = vtanh.pop %v2751
      %v3008 = vtanh.pop %v2752
      %v3009 = vtanh.pop %v2753
      %v3010 = vtanh.pop %v2754
      %v3011 = vtanh.pop %v2755
      %v3012 = vtanh.pop %v2756
      %v3013 = vtanh.pop %v2757
      %v3014 = vtanh.pop %v2758
      %v3015 = vtanh.pop %v2759
      %v3016 = vtanh.pop %v2760
      %v3017 = vtanh.pop %v2761
      %v3018 = vtanh.pop %v2762
      %v3019 = vtanh.pop %v2763
      %v3020 = vtanh.pop %v2764
      %v3021 = vtanh.pop %v2765
      %v3022 = vtanh.pop %v2766
      %v3023 = vtanh.pop %v2767
      %v3024 = vtanh.pop %v2768
      %v3025 = vtanh.pop %v2769
      %v3026 = vtanh.pop %v2770
      %v3027 = vtanh.pop %v2771
      %v3028 = vtanh.pop %v2772
      %v3029 = vtanh.pop %v2773
      %v3030 = vtanh.pop %v2774
      %v3031 = vtanh.pop %v2775
      %v3032 = vtanh.pop %v2776
      %v3033 = vtanh.pop %v2777
      %v3034 = vtanh.pop %v2778
      %v3035 = vtanh.pop %v2779
      %v3036 = vtanh.pop %v2780
      %v3037 = vtanh.pop %v2781
      %v3038 = vtanh.pop %v2782
      %v3039 = vtanh.pop %v2783
      %v3040 = vtanh.pop %v2784
      %v3041 = vmul.f32 %v2785, 0.5
      %v3042 = vmul.f32 %v2786, 0.5
      %v3043 = vmul.f32 %v2787, 0.5
      %v3044 = vmul.f32 %v2788, 0.5
      %v3045 = vmul.f32 %v2789, 0.5
      %v3046 = vmul.f32 %v2790, 0.5
      %v3047 = vmul.f32 %v2791, 0.5
      %v3048 = vmul.f32 %v2792, 0.5
      %v3049 = vmul.f32 %v2793, 0.5
      %v3050 = vmul.f32 %v2794, 0.5
      %v3051 = vmul.f32 %v2795, 0.5
      %v3052 = vmul.f32 %v2796, 0.5
      %v3053 = vmul.f32 %v2797, 0.5
      %v3054 = vmul.f32 %v2798, 0.5
      %v3055 = vmul.f32 %v2799, 0.5
      %v3056 = vmul.f32 %v2800, 0.5
      %v3057 = vmul.f32 %v2801, 0.5
      %v3058 = vmul.f32 %v2802, 0.5
      %v3059 = vmul.f32 %v2803, 0.5
      %v3060 = vmul.f32 %v2804, 0.5
      %v3061 = vmul.f32 %v2805, 0.5
      %v3062 = vmul.f32 %v2806, 0.5
      %v3063 = vmul.f32 %v2807, 0.5
      %v3064 = vmul.f32 %v2808, 0.5
      %v3065 = vmul.f32 %v2809, 0.5
      %v3066 = vmul.f32 %v2810, 0.5
      %v3067 = vmul.f32 %v2811, 0.5
      %v3068 = vmul.f32 %v2812, 0.5
      %v3069 = vmul.f32 %v2813, 0.5
      %v3070 = vmul.f32 %v2814, 0.5
      %v3071 = vmul.f32 %v2815, 0.5
      %v3072 = vmul.f32 %v2816, 0.5
      %v3073 = vmul.f32 %v2817, 0.5
      %v3074 = vmul.f32 %v2818, 0.5
      %v3075 = vmul.f32 %v2819, 0.5
      %v3076 = vmul.f32 %v2820, 0.5
      %v3077 = vmul.f32 %v2821, 0.5
      %v3078 = vmul.f32 %v2822, 0.5
      %v3079 = vmul.f32 %v2823, 0.5
      %v3080 = vmul.f32 %v2824, 0.5
      %v3081 = vmul.f32 %v2825, 0.5
      %v3082 = vmul.f32 %v2826, 0.5
      %v3083 = vmul.f32 %v2827, 0.5
      %v3084 = vmul.f32 %v2828, 0.5
      %v3085 = vmul.f32 %v2829, 0.5
      %v3086 = vmul.f32 %v2830, 0.5
      %v3087 = vmul.f32 %v2831, 0.5
      %v3088 = vmul.f32 %v2832, 0.5
      %v3089 = vmul.f32 %v2833, 0.5
      %v3090 = vmul.f32 %v2834, 0.5
      %v3091 = vmul.f32 %v2835, 0.5
      %v3092 = vmul.f32 %v2836, 0.5
      %v3093 = vmul.f32 %v2837, 0.5
      %v3094 = vmul.f32 %v2838, 0.5
      %v3095 = vmul.f32 %v2839, 0.5
      %v3096 = vmul.f32 %v2840, 0.5
      %v3097 = vmul.f32 %v2841, 0.5
      %v3098 = vmul.f32 %v2842, 0.5
      %v3099 = vmul.f32 %v2843, 0.5
      %v3100 = vmul.f32 %v2844, 0.5
      %v3101 = vmul.f32 %v2845, 0.5
      %v3102 = vmul.f32 %v2846, 0.5
      %v3103 = vmul.f32 %v2847, 0.5
      %v3104 = vmul.f32 %v2848, 0.5
      %v3105 = vmul.f32 %v2849, 0.5
      %v3106 = vmul.f32 %v2850, 0.5
      %v3107 = vmul.f32 %v2851, 0.5
      %v3108 = vmul.f32 %v2852, 0.5
      %v3109 = vmul.f32 %v2853, 0.5
      %v3110 = vmul.f32 %v2854, 0.5
      %v3111 = vmul.f32 %v2855, 0.5
      %v3112 = vmul.f32 %v2856, 0.5
      %v3113 = vmul.f32 %v2857, 0.5
      %v3114 = vmul.f32 %v2858, 0.5
      %v3115 = vmul.f32 %v2859, 0.5
      %v3116 = vmul.f32 %v2860, 0.5
      %v3117 = vmul.f32 %v2861, 0.5
      %v3118 = vmul.f32 %v2862, 0.5
      %v3119 = vmul.f32 %v2863, 0.5
      %v3120 = vmul.f32 %v2864, 0.5
      %v3121 = vmul.f32 %v2865, 0.5
      %v3122 = vmul.f32 %v2866, 0.5
      %v3123 = vmul.f32 %v2867, 0.5
      %v3124 = vmul.f32 %v2868, 0.5
      %v3125 = vmul.f32 %v2869, 0.5
      %v3126 = vmul.f32 %v2870, 0.5
      %v3127 = vmul.f32 %v2871, 0.5
      %v3128 = vmul.f32 %v2872, 0.5
      %v3129 = vmul.f32 %v2873, 0.5
      %v3130 = vmul.f32 %v2874, 0.5
      %v3131 = vmul.f32 %v2875, 0.5
      %v3132 = vmul.f32 %v2876, 0.5
      %v3133 = vmul.f32 %v2877, 0.5
      %v3134 = vmul.f32 %v2878, 0.5
      %v3135 = vmul.f32 %v2879, 0.5
      %v3136 = vmul.f32 %v2880, 0.5
      %v3137 = vmul.f32 %v2881, 0.5
      %v3138 = vmul.f32 %v2882, 0.5
      %v3139 = vmul.f32 %v2883, 0.5
      %v3140 = vmul.f32 %v2884, 0.5
      %v3141 = vmul.f32 %v2885, 0.5
      %v3142 = vmul.f32 %v2886, 0.5
      %v3143 = vmul.f32 %v2887, 0.5
      %v3144 = vmul.f32 %v2888, 0.5
      %v3145 = vmul.f32 %v2889, 0.5
      %v3146 = vmul.f32 %v2890, 0.5
      %v3147 = vmul.f32 %v2891, 0.5
      %v3148 = vmul.f32 %v2892, 0.5
      %v3149 = vmul.f32 %v2893, 0.5
      %v3150 = vmul.f32 %v2894, 0.5
      %v3151 = vmul.f32 %v2895, 0.5
      %v3152 = vmul.f32 %v2896, 0.5
      %v3153 = vmul.f32 %v2897, 0.5
      %v3154 = vmul.f32 %v2898, 0.5
      %v3155 = vmul.f32 %v2899, 0.5
      %v3156 = vmul.f32 %v2900, 0.5
      %v3157 = vmul.f32 %v2901, 0.5
      %v3158 = vmul.f32 %v2902, 0.5
      %v3159 = vmul.f32 %v2903, 0.5
      %v3160 = vmul.f32 %v2904, 0.5
      %v3161 = vmul.f32 %v2905, 0.5
      %v3162 = vmul.f32 %v2906, 0.5
      %v3163 = vmul.f32 %v2907, 0.5
      %v3164 = vmul.f32 %v2908, 0.5
      %v3165 = vmul.f32 %v2909, 0.5
      %v3166 = vmul.f32 %v2910, 0.5
      %v3167 = vmul.f32 %v2911, 0.5
      %v3168 = vmul.f32 %v2912, 0.5
      %v3169 = vmul.f32 %v2913, 0.5
      %v3170 = vmul.f32 %v2914, 0.5
      %v3171 = vmul.f32 %v2915, 0.5
      %v3172 = vmul.f32 %v2916, 0.5
      %v3173 = vmul.f32 %v2917, 0.5
      %v3174 = vmul.f32 %v2918, 0.5
      %v3175 = vmul.f32 %v2919, 0.5
      %v3176 = vmul.f32 %v2920, 0.5
      %v3177 = vmul.f32 %v2921, 0.5
      %v3178 = vmul.f32 %v2922, 0.5
      %v3179 = vmul.f32 %v2923, 0.5
      %v3180 = vmul.f32 %v2924, 0.5
      %v3181 = vmul.f32 %v2925, 0.5
      %v3182 = vmul.f32 %v2926, 0.5
      %v3183 = vmul.f32 %v2927, 0.5
      %v3184 = vmul.f32 %v2928, 0.5
      %v3185 = vmul.f32 %v2929, 0.5
      %v3186 = vmul.f32 %v2930, 0.5
      %v3187 = vmul.f32 %v2931, 0.5
      %v3188 = vmul.f32 %v2932, 0.5
      %v3189 = vmul.f32 %v2933, 0.5
      %v3190 = vmul.f32 %v2934, 0.5
      %v3191 = vmul.f32 %v2935, 0.5
      %v3192 = vmul.f32 %v2936, 0.5
      %v3193 = vmul.f32 %v2937, 0.5
      %v3194 = vmul.f32 %v2938, 0.5
      %v3195 = vmul.f32 %v2939, 0.5
      %v3196 = vmul.f32 %v2940, 0.5
      %v3197 = vmul.f32 %v2941, 0.5
      %v3198 = vmul.f32 %v2942, 0.5
      %v3199 = vmul.f32 %v2943, 0.5
      %v3200 = vmul.f32 %v2944, 0.5
      %v3201 = vmul.f32 %v2945, 0.5
      %v3202 = vmul.f32 %v2946, 0.5
      %v3203 = vmul.f32 %v2947, 0.5
      %v3204 = vmul.f32 %v2948, 0.5
      %v3205 = vmul.f32 %v2949, 0.5
      %v3206 = vmul.f32 %v2950, 0.5
      %v3207 = vmul.f32 %v2951, 0.5
      %v3208 = vmul.f32 %v2952, 0.5
      %v3209 = vmul.f32 %v2953, 0.5
      %v3210 = vmul.f32 %v2954, 0.5
      %v3211 = vmul.f32 %v2955, 0.5
      %v3212 = vmul.f32 %v2956, 0.5
      %v3213 = vmul.f32 %v2957, 0.5
      %v3214 = vmul.f32 %v2958, 0.5
      %v3215 = vmul.f32 %v2959, 0.5
      %v3216 = vmul.f32 %v2960, 0.5
      %v3217 = vmul.f32 %v2961, 0.5
      %v3218 = vmul.f32 %v2962, 0.5
      %v3219 = vmul.f32 %v2963, 0.5
      %v3220 = vmul.f32 %v2964, 0.5
      %v3221 = vmul.f32 %v2965, 0.5
      %v3222 = vmul.f32 %v2966, 0.5
      %v3223 = vmul.f32 %v2967, 0.5
      %v3224 = vmul.f32 %v2968, 0.5
      %v3225 = vmul.f32 %v2969, 0.5
      %v3226 = vmul.f32 %v2970, 0.5
      %v3227 = vmul.f32 %v2971, 0.5
      %v3228 = vmul.f32 %v2972, 0.5
      %v3229 = vmul.f32 %v2973, 0.5
      %v3230 = vmul.f32 %v2974, 0.5
      %v3231 = vmul.f32 %v2975, 0.5
      %v3232 = vmul.f32 %v2976, 0.5
      %v3233 = vmul.f32 %v2977, 0.5
      %v3234 = vmul.f32 %v2978, 0.5
      %v3235 = vmul.f32 %v2979, 0.5
      %v3236 = vmul.f32 %v2980, 0.5
      %v3237 = vmul.f32 %v2981, 0.5
      %v3238 = vmul.f32 %v2982, 0.5
      %v3239 = vmul.f32 %v2983, 0.5
      %v3240 = vmul.f32 %v2984, 0.5
      %v3241 = vmul.f32 %v2985, 0.5
      %v3242 = vmul.f32 %v2986, 0.5
      %v3243 = vmul.f32 %v2987, 0.5
      %v3244 = vmul.f32 %v2988, 0.5
      %v3245 = vmul.f32 %v2989, 0.5
      %v3246 = vmul.f32 %v2990, 0.5
      %v3247 = vmul.f32 %v2991, 0.5
      %v3248 = vmul.f32 %v2992, 0.5
      %v3249 = vmul.f32 %v2993, 0.5
      %v3250 = vmul.f32 %v2994, 0.5
      %v3251 = vmul.f32 %v2995, 0.5
      %v3252 = vmul.f32 %v2996, 0.5
      %v3253 = vmul.f32 %v2997, 0.5
      %v3254 = vmul.f32 %v2998, 0.5
      %v3255 = vmul.f32 %v2999, 0.5
      %v3256 = vmul.f32 %v3000, 0.5
      %v3257 = vmul.f32 %v3001, 0.5
      %v3258 = vmul.f32 %v3002, 0.5
      %v3259 = vmul.f32 %v3003, 0.5
      %v3260 = vmul.f32 %v3004, 0.5
      %v3261 = vmul.f32 %v3005, 0.5
      %v3262 = vmul.f32 %v3006, 0.5
      %v3263 = vmul.f32 %v3007, 0.5
      %v3264 = vmul.f32 %v3008, 0.5
      %v3265 = vmul.f32 %v3009, 0.5
      %v3266 = vmul.f32 %v3010, 0.5
      %v3267 = vmul.f32 %v3011, 0.5
      %v3268 = vmul.f32 %v3012, 0.5
      %v3269 = vmul.f32 %v3013, 0.5
      %v3270 = vmul.f32 %v3014, 0.5
      %v3271 = vmul.f32 %v3015, 0.5
      %v3272 = vmul.f32 %v3016, 0.5
      %v3273 = vmul.f32 %v3017, 0.5
      %v3274 = vmul.f32 %v3018, 0.5
      %v3275 = vmul.f32 %v3019, 0.5
      %v3276 = vmul.f32 %v3020, 0.5
      %v3277 = vmul.f32 %v3021, 0.5
      %v3278 = vmul.f32 %v3022, 0.5
      %v3279 = vmul.f32 %v3023, 0.5
      %v3280 = vmul.f32 %v3024, 0.5
      %v3281 = vmul.f32 %v3025, 0.5
      %v3282 = vmul.f32 %v3026, 0.5
      %v3283 = vmul.f32 %v3027, 0.5
      %v3284 = vmul.f32 %v3028, 0.5
      %v3285 = vmul.f32 %v3029, 0.5
      %v3286 = vmul.f32 %v3030, 0.5
      %v3287 = vmul.f32 %v3031, 0.5
      %v3288 = vmul.f32 %v3032, 0.5
      %v3289 = vmul.f32 %v3033, 0.5
      %v3290 = vmul.f32 %v3034, 0.5
      %v3291 = vmul.f32 %v3035, 0.5
      %v3292 = vmul.f32 %v3036, 0.5
      %v3293 = vmul.f32 %v3037, 0.5
      %v3294 = vmul.f32 %v3038, 0.5
      %v3295 = vmul.f32 %v3039, 0.5
      %v3296 = vmul.f32 %v3040, 0.5
      %v3297 = vadd.f32 %v3041, 0.5
      %v3298 = vadd.f32 %v3042, 0.5
      %v3299 = vadd.f32 %v3043, 0.5
      %v3300 = vadd.f32 %v3044, 0.5
      %v3301 = vadd.f32 %v3045, 0.5
      %v3302 = vadd.f32 %v3046, 0.5
      %v3303 = vadd.f32 %v3047, 0.5
      %v3304 = vadd.f32 %v3048, 0.5
      %v3305 = vadd.f32 %v3049, 0.5
      %v3306 = vadd.f32 %v3050, 0.5
      %v3307 = vadd.f32 %v3051, 0.5
      %v3308 = vadd.f32 %v3052, 0.5
      %v3309 = vadd.f32 %v3053, 0.5
      %v3310 = vadd.f32 %v3054, 0.5
      %v3311 = vadd.f32 %v3055, 0.5
      %v3312 = vadd.f32 %v3056, 0.5
      %v3313 = vadd.f32 %v3057, 0.5
      %v3314 = vadd.f32 %v3058, 0.5
      %v3315 = vadd.f32 %v3059, 0.5
      %v3316 = vadd.f32 %v3060, 0.5
      %v3317 = vadd.f32 %v3061, 0.5
      %v3318 = vadd.f32 %v3062, 0.5
      %v3319 = vadd.f32 %v3063, 0.5
      %v3320 = vadd.f32 %v3064, 0.5
      %v3321 = vadd.f32 %v3065, 0.5
      %v3322 = vadd.f32 %v3066, 0.5
      %v3323 = vadd.f32 %v3067, 0.5
      %v3324 = vadd.f32 %v3068, 0.5
      %v3325 = vadd.f32 %v3069, 0.5
      %v3326 = vadd.f32 %v3070, 0.5
      %v3327 = vadd.f32 %v3071, 0.5
      %v3328 = vadd.f32 %v3072, 0.5
      %v3329 = vadd.f32 %v3073, 0.5
      %v3330 = vadd.f32 %v3074, 0.5
      %v3331 = vadd.f32 %v3075, 0.5
      %v3332 = vadd.f32 %v3076, 0.5
      %v3333 = vadd.f32 %v3077, 0.5
      %v3334 = vadd.f32 %v3078, 0.5
      %v3335 = vadd.f32 %v3079, 0.5
      %v3336 = vadd.f32 %v3080, 0.5
      %v3337 = vadd.f32 %v3081, 0.5
      %v3338 = vadd.f32 %v3082, 0.5
      %v3339 = vadd.f32 %v3083, 0.5
      %v3340 = vadd.f32 %v3084, 0.5
      %v3341 = vadd.f32 %v3085, 0.5
      %v3342 = vadd.f32 %v3086, 0.5
      %v3343 = vadd.f32 %v3087, 0.5
      %v3344 = vadd.f32 %v3088, 0.5
      %v3345 = vadd.f32 %v3089, 0.5
      %v3346 = vadd.f32 %v3090, 0.5
      %v3347 = vadd.f32 %v3091, 0.5
      %v3348 = vadd.f32 %v3092, 0.5
      %v3349 = vadd.f32 %v3093, 0.5
      %v3350 = vadd.f32 %v3094, 0.5
      %v3351 = vadd.f32 %v3095, 0.5
      %v3352 = vadd.f32 %v3096, 0.5
      %v3353 = vadd.f32 %v3097, 0.5
      %v3354 = vadd.f32 %v3098, 0.5
      %v3355 = vadd.f32 %v3099, 0.5
      %v3356 = vadd.f32 %v3100, 0.5
      %v3357 = vadd.f32 %v3101, 0.5
      %v3358 = vadd.f32 %v3102, 0.5
      %v3359 = vadd.f32 %v3103, 0.5
      %v3360 = vadd.f32 %v3104, 0.5
      %v3361 = vadd.f32 %v3105, 0.5
      %v3362 = vadd.f32 %v3106, 0.5
      %v3363 = vadd.f32 %v3107, 0.5
      %v3364 = vadd.f32 %v3108, 0.5
      %v3365 = vadd.f32 %v3109, 0.5
      %v3366 = vadd.f32 %v3110, 0.5
      %v3367 = vadd.f32 %v3111, 0.5
      %v3368 = vadd.f32 %v3112, 0.5
      %v3369 = vadd.f32 %v3113, 0.5
      %v3370 = vadd.f32 %v3114, 0.5
      %v3371 = vadd.f32 %v3115, 0.5
      %v3372 = vadd.f32 %v3116, 0.5
      %v3373 = vadd.f32 %v3117, 0.5
      %v3374 = vadd.f32 %v3118, 0.5
      %v3375 = vadd.f32 %v3119, 0.5
      %v3376 = vadd.f32 %v3120, 0.5
      %v3377 = vadd.f32 %v3121, 0.5
      %v3378 = vadd.f32 %v3122, 0.5
      %v3379 = vadd.f32 %v3123, 0.5
      %v3380 = vadd.f32 %v3124, 0.5
      %v3381 = vadd.f32 %v3125, 0.5
      %v3382 = vadd.f32 %v3126, 0.5
      %v3383 = vadd.f32 %v3127, 0.5
      %v3384 = vadd.f32 %v3128, 0.5
      %v3385 = vadd.f32 %v3129, 0.5
      %v3386 = vadd.f32 %v3130, 0.5
      %v3387 = vadd.f32 %v3131, 0.5
      %v3388 = vadd.f32 %v3132, 0.5
      %v3389 = vadd.f32 %v3133, 0.5
      %v3390 = vadd.f32 %v3134, 0.5
      %v3391 = vadd.f32 %v3135, 0.5
      %v3392 = vadd.f32 %v3136, 0.5
      %v3393 = vadd.f32 %v3137, 0.5
      %v3394 = vadd.f32 %v3138, 0.5
      %v3395 = vadd.f32 %v3139, 0.5
      %v3396 = vadd.f32 %v3140, 0.5
      %v3397 = vadd.f32 %v3141, 0.5
      %v3398 = vadd.f32 %v3142, 0.5
      %v3399 = vadd.f32 %v3143, 0.5
      %v3400 = vadd.f32 %v3144, 0.5
      %v3401 = vadd.f32 %v3145, 0.5
      %v3402 = vadd.f32 %v3146, 0.5
      %v3403 = vadd.f32 %v3147, 0.5
      %v3404 = vadd.f32 %v3148, 0.5
      %v3405 = vadd.f32 %v3149, 0.5
      %v3406 = vadd.f32 %v3150, 0.5
      %v3407 = vadd.f32 %v3151, 0.5
      %v3408 = vadd.f32 %v3152, 0.5
      %v3409 = vadd.f32 %v3153, 0.5
      %v3410 = vadd.f32 %v3154, 0.5
      %v3411 = vadd.f32 %v3155, 0.5
      %v3412 = vadd.f32 %v3156, 0.5
      %v3413 = vadd.f32 %v3157, 0.5
      %v3414 = vadd.f32 %v3158, 0.5
      %v3415 = vadd.f32 %v3159, 0.5
      %v3416 = vadd.f32 %v3160, 0.5
      %v3417 = vadd.f32 %v3161, 0.5
      %v3418 = vadd.f32 %v3162, 0.5
      %v3419 = vadd.f32 %v3163, 0.5
      %v3420 = vadd.f32 %v3164, 0.5
      %v3421 = vadd.f32 %v3165, 0.5
      %v3422 = vadd.f32 %v3166, 0.5
      %v3423 = vadd.f32 %v3167, 0.5
      %v3424 = vadd.f32 %v3168, 0.5
      %v3425 = vadd.f32 %v3169, 0.5
      %v3426 = vadd.f32 %v3170, 0.5
      %v3427 = vadd.f32 %v3171, 0.5
      %v3428 = vadd.f32 %v3172, 0.5
      %v3429 = vadd.f32 %v3173, 0.5
      %v3430 = vadd.f32 %v3174, 0.5
      %v3431 = vadd.f32 %v3175, 0.5
      %v3432 = vadd.f32 %v3176, 0.5
      %v3433 = vadd.f32 %v3177, 0.5
      %v3434 = vadd.f32 %v3178, 0.5
      %v3435 = vadd.f32 %v3179, 0.5
      %v3436 = vadd.f32 %v3180, 0.5
      %v3437 = vadd.f32 %v3181, 0.5
      %v3438 = vadd.f32 %v3182, 0.5
      %v3439 = vadd.f32 %v3183, 0.5
      %v3440 = vadd.f32 %v3184, 0.5
      %v3441 = vadd.f32 %v3185, 0.5
      %v3442 = vadd.f32 %v3186, 0.5
      %v3443 = vadd.f32 %v3187, 0.5
      %v3444 = vadd.f32 %v3188, 0.5
      %v3445 = vadd.f32 %v3189, 0.5
      %v3446 = vadd.f32 %v3190, 0.5
      %v3447 = vadd.f32 %v3191, 0.5
      %v3448 = vadd.f32 %v3192, 0.5
      %v3449 = vadd.f32 %v3193, 0.5
      %v3450 = vadd.f32 %v3194, 0.5
      %v3451 = vadd.f32 %v3195, 0.5
      %v3452 = vadd.f32 %v3196, 0.5
      %v3453 = vadd.f32 %v3197, 0.5
      %v3454 = vadd.f32 %v3198, 0.5
      %v3455 = vadd.f32 %v3199, 0.5
      %v3456 = vadd.f32 %v3200, 0.5
      %v3457 = vadd.f32 %v3201, 0.5
      %v3458 = vadd.f32 %v3202, 0.5
      %v3459 = vadd.f32 %v3203, 0.5
      %v3460 = vadd.f32 %v3204, 0.5
      %v3461 = vadd.f32 %v3205, 0.5
      %v3462 = vadd.f32 %v3206, 0.5
      %v3463 = vadd.f32 %v3207, 0.5
      %v3464 = vadd.f32 %v3208, 0.5
      %v3465 = vadd.f32 %v3209, 0.5
      %v3466 = vadd.f32 %v3210, 0.5
      %v3467 = vadd.f32 %v3211, 0.5
      %v3468 = vadd.f32 %v3212, 0.5
      %v3469 = vadd.f32 %v3213, 0.5
      %v3470 = vadd.f32 %v3214, 0.5
      %v3471 = vadd.f32 %v3215, 0.5
      %v3472 = vadd.f32 %v3216, 0.5
      %v3473 = vadd.f32 %v3217, 0.5
      %v3474 = vadd.f32 %v3218, 0.5
      %v3475 = vadd.f32 %v3219, 0.5
      %v3476 = vadd.f32 %v3220, 0.5
      %v3477 = vadd.f32 %v3221, 0.5
      %v3478 = vadd.f32 %v3222, 0.5
      %v3479 = vadd.f32 %v3223, 0.5
      %v3480 = vadd.f32 %v3224, 0.5
      %v3481 = vadd.f32 %v3225, 0.5
      %v3482 = vadd.f32 %v3226, 0.5
      %v3483 = vadd.f32 %v3227, 0.5
      %v3484 = vadd.f32 %v3228, 0.5
      %v3485 = vadd.f32 %v3229, 0.5
      %v3486 = vadd.f32 %v3230, 0.5
      %v3487 = vadd.f32 %v3231, 0.5
      %v3488 = vadd.f32 %v3232, 0.5
      %v3489 = vadd.f32 %v3233, 0.5
      %v3490 = vadd.f32 %v3234, 0.5
      %v3491 = vadd.f32 %v3235, 0.5
      %v3492 = vadd.f32 %v3236, 0.5
      %v3493 = vadd.f32 %v3237, 0.5
      %v3494 = vadd.f32 %v3238, 0.5
      %v3495 = vadd.f32 %v3239, 0.5
      %v3496 = vadd.f32 %v3240, 0.5
      %v3497 = vadd.f32 %v3241, 0.5
      %v3498 = vadd.f32 %v3242, 0.5
      %v3499 = vadd.f32 %v3243, 0.5
      %v3500 = vadd.f32 %v3244, 0.5
      %v3501 = vadd.f32 %v3245, 0.5
      %v3502 = vadd.f32 %v3246, 0.5
      %v3503 = vadd.f32 %v3247, 0.5
      %v3504 = vadd.f32 %v3248, 0.5
      %v3505 = vadd.f32 %v3249, 0.5
      %v3506 = vadd.f32 %v3250, 0.5
      %v3507 = vadd.f32 %v3251, 0.5
      %v3508 = vadd.f32 %v3252, 0.5
      %v3509 = vadd.f32 %v3253, 0.5
      %v3510 = vadd.f32 %v3254, 0.5
      %v3511 = vadd.f32 %v3255, 0.5
      %v3512 = vadd.f32 %v3256, 0.5
      %v3513 = vadd.f32 %v3257, 0.5
      %v3514 = vadd.f32 %v3258, 0.5
      %v3515 = vadd.f32 %v3259, 0.5
      %v3516 = vadd.f32 %v3260, 0.5
      %v3517 = vadd.f32 %v3261, 0.5
      %v3518 = vadd.f32 %v3262, 0.5
      %v3519 = vadd.f32 %v3263, 0.5
      %v3520 = vadd.f32 %v3264, 0.5
      %v3521 = vadd.f32 %v3265, 0.5
      %v3522 = vadd.f32 %v3266, 0.5
      %v3523 = vadd.f32 %v3267, 0.5
      %v3524 = vadd.f32 %v3268, 0.5
      %v3525 = vadd.f32 %v3269, 0.5
      %v3526 = vadd.f32 %v3270, 0.5
      %v3527 = vadd.f32 %v3271, 0.5
      %v3528 = vadd.f32 %v3272, 0.5
      %v3529 = vadd.f32 %v3273, 0.5
      %v3530 = vadd.f32 %v3274, 0.5
      %v3531 = vadd.f32 %v3275, 0.5
      %v3532 = vadd.f32 %v3276, 0.5
      %v3533 = vadd.f32 %v3277, 0.5
      %v3534 = vadd.f32 %v3278, 0.5
      %v3535 = vadd.f32 %v3279, 0.5
      %v3536 = vadd.f32 %v3280, 0.5
      %v3537 = vadd.f32 %v3281, 0.5
      %v3538 = vadd.f32 %v3282, 0.5
      %v3539 = vadd.f32 %v3283, 0.5
      %v3540 = vadd.f32 %v3284, 0.5
      %v3541 = vadd.f32 %v3285, 0.5
      %v3542 = vadd.f32 %v3286, 0.5
      %v3543 = vadd.f32 %v3287, 0.5
      %v3544 = vadd.f32 %v3288, 0.5
      %v3545 = vadd.f32 %v3289, 0.5
      %v3546 = vadd.f32 %v3290, 0.5
      %v3547 = vadd.f32 %v3291, 0.5
      %v3548 = vadd.f32 %v3292, 0.5
      %v3549 = vadd.f32 %v3293, 0.5
      %v3550 = vadd.f32 %v3294, 0.5
      %v3551 = vadd.f32 %v3295, 0.5
      %v3552 = vadd.f32 %v3296, 0.5
      %v3553 = vmul.f32 %v1507, %v3297
      %v3554 = vmul.f32 %v1510, %v3298
      %v3555 = vmul.f32 %v1515, %v3299
      %v3556 = vmul.f32 %v1518, %v3300
      %v3557 = vmul.f32 %v1523, %v3301
      %v3558 = vmul.f32 %v1526, %v3302
      %v3559 = vmul.f32 %v1531, %v3303
      %v3560 = vmul.f32 %v1534, %v3304
      %v3561 = vmul.f32 %v1539, %v3305
      %v3562 = vmul.f32 %v1542, %v3306
      %v3563 = vmul.f32 %v1547, %v3307
      %v3564 = vmul.f32 %v1550, %v3308
      %v3565 = vmul.f32 %v1555, %v3309
      %v3566 = vmul.f32 %v1558, %v3310
      %v3567 = vmul.f32 %v1563, %v3311
      %v3568 = vmul.f32 %v1566, %v3312
      %v3569 = vmul.f32 %v1571, %v3313
      %v3570 = vmul.f32 %v1574, %v3314
      %v3571 = vmul.f32 %v1579, %v3315
      %v3572 = vmul.f32 %v1582, %v3316
      %v3573 = vmul.f32 %v1587, %v3317
      %v3574 = vmul.f32 %v1590, %v3318
      %v3575 = vmul.f32 %v1595, %v3319
      %v3576 = vmul.f32 %v1598, %v3320
      %v3577 = vmul.f32 %v1603, %v3321
      %v3578 = vmul.f32 %v1606, %v3322
      %v3579 = vmul.f32 %v1611, %v3323
      %v3580 = vmul.f32 %v1614, %v3324
      %v3581 = vmul.f32 %v1619, %v3325
      %v3582 = vmul.f32 %v1622, %v3326
      %v3583 = vmul.f32 %v1627, %v3327
      %v3584 = vmul.f32 %v1630, %v3328
      %v3585 = vmul.f32 %v1635, %v3329
      %v3586 = vmul.f32 %v1638, %v3330
      %v3587 = vmul.f32 %v1643, %v3331
      %v3588 = vmul.f32 %v1646, %v3332
      %v3589 = vmul.f32 %v1651, %v3333
      %v3590 = vmul.f32 %v1654, %v3334
      %v3591 = vmul.f32 %v1659, %v3335
      %v3592 = vmul.f32 %v1662, %v3336
      %v3593 = vmul.f32 %v1667, %v3337
      %v3594 = vmul.f32 %v1670, %v3338
      %v3595 = vmul.f32 %v1675, %v3339
      %v3596 = vmul.f32 %v1678, %v3340
      %v3597 = vmul.f32 %v1683, %v3341
      %v3598 = vmul.f32 %v1686, %v3342
      %v3599 = vmul.f32 %v1691, %v3343
      %v3600 = vmul.f32 %v1694, %v3344
      %v3601 = vmul.f32 %v1699, %v3345
      %v3602 = vmul.f32 %v1702, %v3346
      %v3603 = vmul.f32 %v1707, %v3347
      %v3604 = vmul.f32 %v1710, %v3348
      %v3605 = vmul.f32 %v1715, %v3349
      %v3606 = vmul.f32 %v1718, %v3350
      %v3607 = vmul.f32 %v1723, %v3351
      %v3608 = vmul.f32 %v1726, %v3352
      %v3609 = vmul.f32 %v1731, %v3353
      %v3610 = vmul.f32 %v1734, %v3354
      %v3611 = vmul.f32 %v1739, %v3355
      %v3612 = vmul.f32 %v1742, %v3356
      %v3613 = vmul.f32 %v1747, %v3357
      %v3614 = vmul.f32 %v1750, %v3358
      %v3615 = vmul.f32 %v1755, %v3359
      %v3616 = vmul.f32 %v1758, %v3360
      %v3617 = vmul.f32 %v1763, %v3361
      %v3618 = vmul.f32 %v1766, %v3362
      %v3619 = vmul.f32 %v1771, %v3363
      %v3620 = vmul.f32 %v1774, %v3364
      %v3621 = vmul.f32 %v1779, %v3365
      %v3622 = vmul.f32 %v1782, %v3366
      %v3623 = vmul.f32 %v1787, %v3367
      %v3624 = vmul.f32 %v1790, %v3368
      %v3625 = vmul.f32 %v1795, %v3369
      %v3626 = vmul.f32 %v1798, %v3370
      %v3627 = vmul.f32 %v1803, %v3371
      %v3628 = vmul.f32 %v1806, %v3372
      %v3629 = vmul.f32 %v1811, %v3373
      %v3630 = vmul.f32 %v1814, %v3374
      %v3631 = vmul.f32 %v1819, %v3375
      %v3632 = vmul.f32 %v1822, %v3376
      %v3633 = vmul.f32 %v1827, %v3377
      %v3634 = vmul.f32 %v1830, %v3378
      %v3635 = vmul.f32 %v1835, %v3379
      %v3636 = vmul.f32 %v1838, %v3380
      %v3637 = vmul.f32 %v1843, %v3381
      %v3638 = vmul.f32 %v1846, %v3382
      %v3639 = vmul.f32 %v1851, %v3383
      %v3640 = vmul.f32 %v1854, %v3384
      %v3641 = vmul.f32 %v1859, %v3385
      %v3642 = vmul.f32 %v1862, %v3386
      %v3643 = vmul.f32 %v1867, %v3387
      %v3644 = vmul.f32 %v1870, %v3388
      %v3645 = vmul.f32 %v1875, %v3389
      %v3646 = vmul.f32 %v1878, %v3390
      %v3647 = vmul.f32 %v1883, %v3391
      %v3648 = vmul.f32 %v1886, %v3392
      %v3649 = vmul.f32 %v1891, %v3393
      %v3650 = vmul.f32 %v1894, %v3394
      %v3651 = vmul.f32 %v1899, %v3395
      %v3652 = vmul.f32 %v1902, %v3396
      %v3653 = vmul.f32 %v1907, %v3397
      %v3654 = vmul.f32 %v1910, %v3398
      %v3655 = vmul.f32 %v1915, %v3399
      %v3656 = vmul.f32 %v1918, %v3400
      %v3657 = vmul.f32 %v1923, %v3401
      %v3658 = vmul.f32 %v1926, %v3402
      %v3659 = vmul.f32 %v1931, %v3403
      %v3660 = vmul.f32 %v1934, %v3404
      %v3661 = vmul.f32 %v1939, %v3405
      %v3662 = vmul.f32 %v1942, %v3406
      %v3663 = vmul.f32 %v1947, %v3407
      %v3664 = vmul.f32 %v1950, %v3408
      %v3665 = vmul.f32 %v1955, %v3409
      %v3666 = vmul.f32 %v1958, %v3410
      %v3667 = vmul.f32 %v1963, %v3411
      %v3668 = vmul.f32 %v1966, %v3412
      %v3669 = vmul.f32 %v1971, %v3413
      %v3670 = vmul.f32 %v1974, %v3414
      %v3671 = vmul.f32 %v1979, %v3415
      %v3672 = vmul.f32 %v1982, %v3416
      %v3673 = vmul.f32 %v1987, %v3417
      %v3674 = vmul.f32 %v1990, %v3418
      %v3675 = vmul.f32 %v1995, %v3419
      %v3676 = vmul.f32 %v1998, %v3420
      %v3677 = vmul.f32 %v2003, %v3421
      %v3678 = vmul.f32 %v2006, %v3422
      %v3679 = vmul.f32 %v2011, %v3423
      %v3680 = vmul.f32 %v2014, %v3424
      %v3681 = vmul.f32 %v2019, %v3425
      %v3682 = vmul.f32 %v2022, %v3426
      %v3683 = vmul.f32 %v2027, %v3427
      %v3684 = vmul.f32 %v2030, %v3428
      %v3685 = vmul.f32 %v2035, %v3429
      %v3686 = vmul.f32 %v2038, %v3430
      %v3687 = vmul.f32 %v2043, %v3431
      %v3688 = vmul.f32 %v2046, %v3432
      %v3689 = vmul.f32 %v2051, %v3433
      %v3690 = vmul.f32 %v2054, %v3434
      %v3691 = vmul.f32 %v2059, %v3435
      %v3692 = vmul.f32 %v2062, %v3436
      %v3693 = vmul.f32 %v2067, %v3437
      %v3694 = vmul.f32 %v2070, %v3438
      %v3695 = vmul.f32 %v2075, %v3439
      %v3696 = vmul.f32 %v2078, %v3440
      %v3697 = vmul.f32 %v2083, %v3441
      %v3698 = vmul.f32 %v2086, %v3442
      %v3699 = vmul.f32 %v2091, %v3443
      %v3700 = vmul.f32 %v2094, %v3444
      %v3701 = vmul.f32 %v2099, %v3445
      %v3702 = vmul.f32 %v2102, %v3446
      %v3703 = vmul.f32 %v2107, %v3447
      %v3704 = vmul.f32 %v2110, %v3448
      %v3705 = vmul.f32 %v2115, %v3449
      %v3706 = vmul.f32 %v2118, %v3450
      %v3707 = vmul.f32 %v2123, %v3451
      %v3708 = vmul.f32 %v2126, %v3452
      %v3709 = vmul.f32 %v2131, %v3453
      %v3710 = vmul.f32 %v2134, %v3454
      %v3711 = vmul.f32 %v2139, %v3455
      %v3712 = vmul.f32 %v2142, %v3456
      %v3713 = vmul.f32 %v2147, %v3457
      %v3714 = vmul.f32 %v2150, %v3458
      %v3715 = vmul.f32 %v2155, %v3459
      %v3716 = vmul.f32 %v2158, %v3460
      %v3717 = vmul.f32 %v2163, %v3461
      %v3718 = vmul.f32 %v2166, %v3462
      %v3719 = vmul.f32 %v2171, %v3463
      %v3720 = vmul.f32 %v2174, %v3464
      %v3721 = vmul.f32 %v2179, %v3465
      %v3722 = vmul.f32 %v2182, %v3466
      %v3723 = vmul.f32 %v2187, %v3467
      %v3724 = vmul.f32 %v2190, %v3468
      %v3725 = vmul.f32 %v2195, %v3469
      %v3726 = vmul.f32 %v2198, %v3470
      %v3727 = vmul.f32 %v2203, %v3471
      %v3728 = vmul.f32 %v2206, %v3472
      %v3729 = vmul.f32 %v2211, %v3473
      %v3730 = vmul.f32 %v2214, %v3474
      %v3731 = vmul.f32 %v2219, %v3475
      %v3732 = vmul.f32 %v2222, %v3476
      %v3733 = vmul.f32 %v2227, %v3477
      %v3734 = vmul.f32 %v2230, %v3478
      %v3735 = vmul.f32 %v2235, %v3479
      %v3736 = vmul.f32 %v2238, %v3480
      %v3737 = vmul.f32 %v2243, %v3481
      %v3738 = vmul.f32 %v2246, %v3482
      %v3739 = vmul.f32 %v2251, %v3483
      %v3740 = vmul.f32 %v2254, %v3484
      %v3741 = vmul.f32 %v2259, %v3485
      %v3742 = vmul.f32 %v2262, %v3486
      %v3743 = vmul.f32 %v2267, %v3487
      %v3744 = vmul.f32 %v2270, %v3488
      %v3745 = vmul.f32 %v2275, %v3489
      %v3746 = vmul.f32 %v2278, %v3490
      %v3747 = vmul.f32 %v2283, %v3491
      %v3748 = vmul.f32 %v2286, %v3492
      %v3749 = vmul.f32 %v2291, %v3493
      %v3750 = vmul.f32 %v2294, %v3494
      %v3751 = vmul.f32 %v2299, %v3495
      %v3752 = vmul.f32 %v2302, %v3496
      %v3753 = vmul.f32 %v2307, %v3497
      %v3754 = vmul.f32 %v2310, %v3498
      %v3755 = vmul.f32 %v2315, %v3499
      %v3756 = vmul.f32 %v2318, %v3500
      %v3757 = vmul.f32 %v2323, %v3501
      %v3758 = vmul.f32 %v2326, %v3502
      %v3759 = vmul.f32 %v2331, %v3503
      %v3760 = vmul.f32 %v2334, %v3504
      %v3761 = vmul.f32 %v2339, %v3505
      %v3762 = vmul.f32 %v2342, %v3506
      %v3763 = vmul.f32 %v2347, %v3507
      %v3764 = vmul.f32 %v2350, %v3508
      %v3765 = vmul.f32 %v2355, %v3509
      %v3766 = vmul.f32 %v2358, %v3510
      %v3767 = vmul.f32 %v2363, %v3511
      %v3768 = vmul.f32 %v2366, %v3512
      %v3769 = vmul.f32 %v2371, %v3513
      %v3770 = vmul.f32 %v2374, %v3514
      %v3771 = vmul.f32 %v2379, %v3515
      %v3772 = vmul.f32 %v2382, %v3516
      %v3773 = vmul.f32 %v2387, %v3517
      %v3774 = vmul.f32 %v2390, %v3518
      %v3775 = vmul.f32 %v2395, %v3519
      %v3776 = vmul.f32 %v2398, %v3520
      %v3777 = vmul.f32 %v2403, %v3521
      %v3778 = vmul.f32 %v2406, %v3522
      %v3779 = vmul.f32 %v2411, %v3523
      %v3780 = vmul.f32 %v2414, %v3524
      %v3781 = vmul.f32 %v2419, %v3525
      %v3782 = vmul.f32 %v2422, %v3526
      %v3783 = vmul.f32 %v2427, %v3527
      %v3784 = vmul.f32 %v2430, %v3528
      %v3785 = vmul.f32 %v2435, %v3529
      %v3786 = vmul.f32 %v2438, %v3530
      %v3787 = vmul.f32 %v2443, %v3531
      %v3788 = vmul.f32 %v2446, %v3532
      %v3789 = vmul.f32 %v2451, %v3533
      %v3790 = vmul.f32 %v2454, %v3534
      %v3791 = vmul.f32 %v2459, %v3535
      %v3792 = vmul.f32 %v2462, %v3536
      %v3793 = vmul.f32 %v2467, %v3537
      %v3794 = vmul.f32 %v2470, %v3538
      %v3795 = vmul.f32 %v2475, %v3539
      %v3796 = vmul.f32 %v2478, %v3540
      %v3797 = vmul.f32 %v2483, %v3541
      %v3798 = vmul.f32 %v2486, %v3542
      %v3799 = vmul.f32 %v2491, %v3543
      %v3800 = vmul.f32 %v2494, %v3544
      %v3801 = vmul.f32 %v2499, %v3545
      %v3802 = vmul.f32 %v2502, %v3546
      %v3803 = vmul.f32 %v2507, %v3547
      %v3804 = vmul.f32 %v2510, %v3548
      %v3805 = vmul.f32 %v2515, %v3549
      %v3806 = vmul.f32 %v2518, %v3550
      %v3807 = vmul.f32 %v2523, %v3551
      %v3808 = vmul.f32 %v2526, %v3552
      %v3809 = vpack.c.bf16 %v3554, %v3553
      %v3810 = vpack.c.bf16 %v3556, %v3555
      %v3811 = vpack.c.bf16 %v3558, %v3557
      %v3812 = vpack.c.bf16 %v3560, %v3559
      %v3813 = vpack.c.bf16 %v3562, %v3561
      %v3814 = vpack.c.bf16 %v3564, %v3563
      %v3815 = vpack.c.bf16 %v3566, %v3565
      %v3816 = vpack.c.bf16 %v3568, %v3567
      %v3817 = vpack.c.bf16 %v3570, %v3569
      %v3818 = vpack.c.bf16 %v3572, %v3571
      %v3819 = vpack.c.bf16 %v3574, %v3573
      %v3820 = vpack.c.bf16 %v3576, %v3575
      %v3821 = vpack.c.bf16 %v3578, %v3577
      %v3822 = vpack.c.bf16 %v3580, %v3579
      %v3823 = vpack.c.bf16 %v3582, %v3581
      %v3824 = vpack.c.bf16 %v3584, %v3583
      %v3825 = vpack.c.bf16 %v3586, %v3585
      %v3826 = vpack.c.bf16 %v3588, %v3587
      %v3827 = vpack.c.bf16 %v3590, %v3589
      %v3828 = vpack.c.bf16 %v3592, %v3591
      %v3829 = vpack.c.bf16 %v3594, %v3593
      %v3830 = vpack.c.bf16 %v3596, %v3595
      %v3831 = vpack.c.bf16 %v3598, %v3597
      %v3832 = vpack.c.bf16 %v3600, %v3599
      %v3833 = vpack.c.bf16 %v3602, %v3601
      %v3834 = vpack.c.bf16 %v3604, %v3603
      %v3835 = vpack.c.bf16 %v3606, %v3605
      %v3836 = vpack.c.bf16 %v3608, %v3607
      %v3837 = vpack.c.bf16 %v3610, %v3609
      %v3838 = vpack.c.bf16 %v3612, %v3611
      %v3839 = vpack.c.bf16 %v3614, %v3613
      %v3840 = vpack.c.bf16 %v3616, %v3615
      %v3841 = vpack.c.bf16 %v3618, %v3617
      %v3842 = vpack.c.bf16 %v3620, %v3619
      %v3843 = vpack.c.bf16 %v3622, %v3621
      %v3844 = vpack.c.bf16 %v3624, %v3623
      %v3845 = vpack.c.bf16 %v3626, %v3625
      %v3846 = vpack.c.bf16 %v3628, %v3627
      %v3847 = vpack.c.bf16 %v3630, %v3629
      %v3848 = vpack.c.bf16 %v3632, %v3631
      %v3849 = vpack.c.bf16 %v3634, %v3633
      %v3850 = vpack.c.bf16 %v3636, %v3635
      %v3851 = vpack.c.bf16 %v3638, %v3637
      %v3852 = vpack.c.bf16 %v3640, %v3639
      %v3853 = vpack.c.bf16 %v3642, %v3641
      %v3854 = vpack.c.bf16 %v3644, %v3643
      %v3855 = vpack.c.bf16 %v3646, %v3645
      %v3856 = vpack.c.bf16 %v3648, %v3647
      %v3857 = vpack.c.bf16 %v3650, %v3649
      %v3858 = vpack.c.bf16 %v3652, %v3651
      %v3859 = vpack.c.bf16 %v3654, %v3653
      %v3860 = vpack.c.bf16 %v3656, %v3655
      %v3861 = vpack.c.bf16 %v3658, %v3657
      %v3862 = vpack.c.bf16 %v3660, %v3659
      %v3863 = vpack.c.bf16 %v3662, %v3661
      %v3864 = vpack.c.bf16 %v3664, %v3663
      %v3865 = vpack.c.bf16 %v3666, %v3665
      %v3866 = vpack.c.bf16 %v3668, %v3667
      %v3867 = vpack.c.bf16 %v3670, %v3669
      %v3868 = vpack.c.bf16 %v3672, %v3671
      %v3869 = vpack.c.bf16 %v3674, %v3673
      %v3870 = vpack.c.bf16 %v3676, %v3675
      %v3871 = vpack.c.bf16 %v3678, %v3677
      %v3872 = vpack.c.bf16 %v3680, %v3679
      %v3873 = vpack.c.bf16 %v3682, %v3681
      %v3874 = vpack.c.bf16 %v3684, %v3683
      %v3875 = vpack.c.bf16 %v3686, %v3685
      %v3876 = vpack.c.bf16 %v3688, %v3687
      %v3877 = vpack.c.bf16 %v3690, %v3689
      %v3878 = vpack.c.bf16 %v3692, %v3691
      %v3879 = vpack.c.bf16 %v3694, %v3693
      %v3880 = vpack.c.bf16 %v3696, %v3695
      %v3881 = vpack.c.bf16 %v3698, %v3697
      %v3882 = vpack.c.bf16 %v3700, %v3699
      %v3883 = vpack.c.bf16 %v3702, %v3701
      %v3884 = vpack.c.bf16 %v3704, %v3703
      %v3885 = vpack.c.bf16 %v3706, %v3705
      %v3886 = vpack.c.bf16 %v3708, %v3707
      %v3887 = vpack.c.bf16 %v3710, %v3709
      %v3888 = vpack.c.bf16 %v3712, %v3711
      %v3889 = vpack.c.bf16 %v3714, %v3713
      %v3890 = vpack.c.bf16 %v3716, %v3715
      %v3891 = vpack.c.bf16 %v3718, %v3717
      %v3892 = vpack.c.bf16 %v3720, %v3719
      %v3893 = vpack.c.bf16 %v3722, %v3721
      %v3894 = vpack.c.bf16 %v3724, %v3723
      %v3895 = vpack.c.bf16 %v3726, %v3725
      %v3896 = vpack.c.bf16 %v3728, %v3727
      %v3897 = vpack.c.bf16 %v3730, %v3729
      %v3898 = vpack.c.bf16 %v3732, %v3731
      %v3899 = vpack.c.bf16 %v3734, %v3733
      %v3900 = vpack.c.bf16 %v3736, %v3735
      %v3901 = vpack.c.bf16 %v3738, %v3737
      %v3902 = vpack.c.bf16 %v3740, %v3739
      %v3903 = vpack.c.bf16 %v3742, %v3741
      %v3904 = vpack.c.bf16 %v3744, %v3743
      %v3905 = vpack.c.bf16 %v3746, %v3745
      %v3906 = vpack.c.bf16 %v3748, %v3747
      %v3907 = vpack.c.bf16 %v3750, %v3749
      %v3908 = vpack.c.bf16 %v3752, %v3751
      %v3909 = vpack.c.bf16 %v3754, %v3753
      %v3910 = vpack.c.bf16 %v3756, %v3755
      %v3911 = vpack.c.bf16 %v3758, %v3757
      %v3912 = vpack.c.bf16 %v3760, %v3759
      %v3913 = vpack.c.bf16 %v3762, %v3761
      %v3914 = vpack.c.bf16 %v3764, %v3763
      %v3915 = vpack.c.bf16 %v3766, %v3765
      %v3916 = vpack.c.bf16 %v3768, %v3767
      %v3917 = vpack.c.bf16 %v3770, %v3769
      %v3918 = vpack.c.bf16 %v3772, %v3771
      %v3919 = vpack.c.bf16 %v3774, %v3773
      %v3920 = vpack.c.bf16 %v3776, %v3775
      %v3921 = vpack.c.bf16 %v3778, %v3777
      %v3922 = vpack.c.bf16 %v3780, %v3779
      %v3923 = vpack.c.bf16 %v3782, %v3781
      %v3924 = vpack.c.bf16 %v3784, %v3783
      %v3925 = vpack.c.bf16 %v3786, %v3785
      %v3926 = vpack.c.bf16 %v3788, %v3787
      %v3927 = vpack.c.bf16 %v3790, %v3789
      %v3928 = vpack.c.bf16 %v3792, %v3791
      %v3929 = vpack.c.bf16 %v3794, %v3793
      %v3930 = vpack.c.bf16 %v3796, %v3795
      %v3931 = vpack.c.bf16 %v3798, %v3797
      %v3932 = vpack.c.bf16 %v3800, %v3799
      %v3933 = vpack.c.bf16 %v3802, %v3801
      %v3934 = vpack.c.bf16 %v3804, %v3803
      %v3935 = vpack.c.bf16 %v3806, %v3805
      %v3936 = vpack.c.bf16 %v3808, %v3807
      %v3937 = vld [vmem:[%s1 + $0x8] sm:$0xf]
      %v3938 = vld [vmem:[%s1 + $0xc] sm:$0xf]
      %v3939 = vld [vmem:[%s1 + $0x10] sm:$0xf]
      %v3940 = vld [vmem:[%s1 + $0x14] sm:$0xf]
      %v3941 = vld [vmem:[%s1 + $0x18] sm:$0xf]
      %v3942 = vld [vmem:[%s1 + $0x1c] sm:$0xf]
      %v3943 = vld [vmem:[%s1 + $0x20] sm:$0xf]
      %v3944 = vld [vmem:[%s1 + $0x24] sm:$0xf]
      %v3945 = vld [vmem:[%s1 + $0x28] sm:$0xf]
      %v3946 = vld [vmem:[%s1 + $0x2c] sm:$0xf]
      %v3947 = vld [vmem:[%s1 + $0x30] sm:$0xf]
      %v3948 = vld [vmem:[%s1 + $0x34] sm:$0xf]
      %v3949 = vld [vmem:[%s1 + $0x38] sm:$0xf]
      %v3950 = vld [vmem:[%s1 + $0x3c] sm:$0xf]
      %v3951 = vld [vmem:[%s1 + $0x40] sm:$0xf]
      %v3952 = vld [vmem:[%s1 + $0x44] sm:$0xf]
      %v3953 = vld [vmem:[%s1 + $0x48] sm:$0xf]
      %v3954 = vld [vmem:[%s1 + $0x4c] sm:$0xf]
      %v3955 = vld [vmem:[%s1 + $0x50] sm:$0xf]
      %v3956 = vld [vmem:[%s1 + $0x54] sm:$0xf]
      %v3957 = vld [vmem:[%s1 + $0x58] sm:$0xf]
      %v3958 = vld [vmem:[%s1 + $0x5c] sm:$0xf]
      %v3959 = vld [vmem:[%s1 + $0x60] sm:$0xf]
      %v3960 = vld [vmem:[%s1 + $0x64] sm:$0xf]
      %v3961 = vld [vmem:[%s1 + $0x68] sm:$0xf]
      %v3962 = vld [vmem:[%s1 + $0x6c] sm:$0xf]
      %v3963 = vld [vmem:[%s1 + $0x70] sm:$0xf]
      %v3964 = vld [vmem:[%s1 + $0x74] sm:$0xf]
      %v3965 = vld [vmem:[%s1 + $0x78] sm:$0xf]
      %v3966 = vld [vmem:[%s1 + $0x7c] sm:$0xf]
      %v3967 = vld [vmem:[%s1 + $0x80] sm:$0xf]
      %v3968 = vld [vmem:[%s1 + $0x84] sm:$0xf]
      %v3985 = vunpack.c.l.b16 %v3953
      %v3986 = vunpack.c.l.b16 %v3954
      %v3987 = vunpack.c.l.b16 %v3955
      %v3988 = vunpack.c.l.b16 %v3956
      %v3989 = vunpack.c.l.b16 %v3957
      %v3990 = vunpack.c.l.b16 %v3958
      %v3991 = vunpack.c.l.b16 %v3959
      %v3992 = vunpack.c.l.b16 %v3960
      %v3993 = vunpack.c.l.b16 %v3961
      %v3994 = vunpack.c.l.b16 %v3962
      %v3995 = vunpack.c.l.b16 %v3963
      %v3996 = vunpack.c.l.b16 %v3964
      %v3997 = vunpack.c.l.b16 %v3965
      %v3998 = vunpack.c.l.b16 %v3966
      %v3999 = vunpack.c.l.b16 %v3967
      %v4000 = vunpack.c.l.b16 %v3968
      %v4001 = vpack.c.b16 %v3986, %v3985
      %v4002 = vpack.c.b16 %v3988, %v3987
      %v4003 = vpack.c.b16 %v3990, %v3989
      %v4004 = vpack.c.b16 %v3992, %v3991
      %v4005 = vpack.c.b16 %v3994, %v3993
      %v4006 = vpack.c.b16 %v3996, %v3995
      %v4007 = vpack.c.b16 %v3998, %v3997
      %v4008 = vpack.c.b16 %v4000, %v3999
      %4017 = vmatprep.subr.bf16.mxu0 0
      %4018 = vmatpush1.bf16.msra.mxu0 %v4008
      %4019 = vmatprep.subr.bf16.mxu0 0
      %4020 = vmatpush1.bf16.msra.mxu0 %v4007
      %4021 = vmatprep.subr.bf16.mxu0 0
      %4022 = vmatpush1.bf16.msra.mxu0 %v4006
      %4023 = vmatprep.subr.bf16.mxu0 0
      %4024 = vmatpush1.bf16.msra.mxu0 %v4005
      %4025 = vmatprep.subr.bf16.mxu0 0
      %4026 = vmatpush1.bf16.msra.mxu0 %v4004
      %4027 = vmatprep.subr.bf16.mxu0 0
      %4028 = vmatpush1.bf16.msra.mxu0 %v4003
      %4029 = vmatprep.subr.bf16.mxu0 0
      %4030 = vmatpush1.bf16.msra.mxu0 %v4002
      %4031 = vmatprep.subr.bf16.mxu0 0
      %4032 = vmatpush1.bf16.msra.mxu0 %v4001
      %4033 = vmatprep.subr.bf16.mxu0 0
      %4034 = vmatpush2.bf16.msra.mxu0 0
      %4035 = vmatprep.subr.bf16.mxu0 0
      %4036 = vmatpush2.bf16.msra.mxu0 0
      %4037 = vmatprep.subr.bf16.mxu0 0
      %4038 = vmatpush2.bf16.msra.mxu0 0
      %4039 = vmatprep.subr.bf16.mxu0 0
      %4040 = vmatpush2.bf16.msra.mxu0 0
      %4041 = vmatprep.subr.bf16.mxu0 0
      %4042 = vmatpush2.bf16.msra.mxu0 0
      %4043 = vmatprep.subr.bf16.mxu0 0
      %4044 = vmatpush2.bf16.msra.mxu0 0
      %4045 = vmatprep.subr.bf16.mxu0 0
      %4046 = vmatpush2.bf16.msra.mxu0 0
      %4047 = vmatprep.subr.bf16.mxu0 0
      %4048 = vmatpush2.bf16.msra.mxu0 0
      %4049 = vmatprep.mubr.bf16.mxu0 0
      %4050 = vmatmul.mubr.bf16.gmra.mxu0 %v3841
      %v4051 = vpop.f32.mrf.mxu0
      %v4052 = vadd.f32 0.0, %v4051
      %v4053 = vpop.f32.mrf.mxu0
      %v4054 = vpop.f32.mrf.mxu0
      %v4055 = vadd.f32 0.0, %v4054
      %v4056 = vpop.f32.mrf.mxu0
      %4057 = vmatprep.mubr.bf16.mxu0 0
      %4058 = vmatmul.mubr.bf16.gmra.mxu0 %v3842
      %v4059 = vpop.f32.mrf.mxu0
      %v4060 = vadd.f32 0.0, %v4059
      %v4061 = vpop.f32.mrf.mxu0
      %v4062 = vpop.f32.mrf.mxu0
      %v4063 = vadd.f32 0.0, %v4062
      %v4064 = vpop.f32.mrf.mxu0
      %4065 = vmatprep.mubr.bf16.mxu0 0
      %4066 = vmatmul.mubr.bf16.gmra.mxu0 %v3843
      %v4067 = vpop.f32.mrf.mxu0
      %v4068 = vadd.f32 0.0, %v4067
      %v4069 = vpop.f32.mrf.mxu0
      %v4070 = vpop.f32.mrf.mxu0
      %v4071 = vadd.f32 0.0, %v4070
      %v4072 = vpop.f32.mrf.mxu0
      %4073 = vmatprep.mubr.bf16.mxu0 0
      %4074 = vmatmul.mubr.bf16.gmra.mxu0 %v3844
      %v4075 = vpop.f32.mrf.mxu0
      %v4076 = vadd.f32 0.0, %v4075
      %v4077 = vpop.f32.mrf.mxu0
      %v4078 = vpop.f32.mrf.mxu0
      %v4079 = vadd.f32 0.0, %v4078
      %v4080 = vpop.f32.mrf.mxu0
      %4081 = vmatprep.mubr.bf16.mxu0 0
      %4082 = vmatmul.mubr.bf16.gmra.mxu0 %v3845
      %v4083 = vpop.f32.mrf.mxu0
      %v4084 = vadd.f32 0.0, %v4083
      %v4085 = vpop.f32.mrf.mxu0
      %v4086 = vpop.f32.mrf.mxu0
      %v4087 = vadd.f32 0.0, %v4086
      %v4088 = vpop.f32.mrf.mxu0
      %4089 = vmatprep.mubr.bf16.mxu0 0
      %4090 = vmatmul.mubr.bf16.gmra.mxu0 %v3846
      %v4091 = vpop.f32.mrf.mxu0
      %v4092 = vadd.f32 0.0, %v4091
      %v4093 = vpop.f32.mrf.mxu0
      %v4094 = vpop.f32.mrf.mxu0
      %v4095 = vadd.f32 0.0, %v4094
      %v4096 = vpop.f32.mrf.mxu0
      %4097 = vmatprep.mubr.bf16.mxu0 0
      %4098 = vmatmul.mubr.bf16.gmra.mxu0 %v3847
      %v4099 = vpop.f32.mrf.mxu0
      %v4100 = vadd.f32 0.0, %v4099
      %v4101 = vpop.f32.mrf.mxu0
      %v4102 = vpop.f32.mrf.mxu0
      %v4103 = vadd.f32 0.0, %v4102
      %v4104 = vpop.f32.mrf.mxu0
      %4105 = vmatprep.mubr.bf16.mxu0 0
      %4106 = vmatmul.mubr.bf16.gmra.mxu0 %v3848
      %v4107 = vpop.f32.mrf.mxu0
      %v4108 = vadd.f32 0.0, %v4107
      %v4109 = vpop.f32.mrf.mxu0
      %v4110 = vpop.f32.mrf.mxu0
      %v4111 = vadd.f32 0.0, %v4110
      %v4112 = vpop.f32.mrf.mxu0
      %4113 = vmatprep.mubr.bf16.mxu0 0
      %4114 = vmatmul.mubr.bf16.gmra.mxu0 %v3849
      %v4115 = vpop.f32.mrf.mxu0
      %v4116 = vadd.f32 0.0, %v4115
      %v4117 = vpop.f32.mrf.mxu0
      %v4118 = vpop.f32.mrf.mxu0
      %v4119 = vadd.f32 0.0, %v4118
      %v4120 = vpop.f32.mrf.mxu0
      %4121 = vmatprep.mubr.bf16.mxu0 0
      %4122 = vmatmul.mubr.bf16.gmra.mxu0 %v3850
      %v4123 = vpop.f32.mrf.mxu0
      %v4124 = vadd.f32 0.0, %v4123
      %v4125 = vpop.f32.mrf.mxu0
      %v4126 = vpop.f32.mrf.mxu0
      %v4127 = vadd.f32 0.0, %v4126
      %v4128 = vpop.f32.mrf.mxu0
      %4129 = vmatprep.mubr.bf16.mxu0 0
      %4130 = vmatmul.mubr.bf16.gmra.mxu0 %v3851
      %v4131 = vpop.f32.mrf.mxu0
      %v4132 = vadd.f32 0.0, %v4131
      %v4133 = vpop.f32.mrf.mxu0
      %v4134 = vpop.f32.mrf.mxu0
      %v4135 = vadd.f32 0.0, %v4134
      %v4136 = vpop.f32.mrf.mxu0
      %4137 = vmatprep.mubr.bf16.mxu0 0
      %4138 = vmatmul.mubr.bf16.gmra.mxu0 %v3852
      %v4139 = vpop.f32.mrf.mxu0
      %v4140 = vadd.f32 0.0, %v4139
      %v4141 = vpop.f32.mrf.mxu0
      %v4142 = vpop.f32.mrf.mxu0
      %v4143 = vadd.f32 0.0, %v4142
      %v4144 = vpop.f32.mrf.mxu0
      %4145 = vmatprep.mubr.bf16.mxu0 0
      %4146 = vmatmul.mubr.bf16.gmra.mxu0 %v3853
      %v4147 = vpop.f32.mrf.mxu0
      %v4148 = vadd.f32 0.0, %v4147
      %v4149 = vpop.f32.mrf.mxu0
      %v4150 = vpop.f32.mrf.mxu0
      %v4151 = vadd.f32 0.0, %v4150
      %v4152 = vpop.f32.mrf.mxu0
      %4153 = vmatprep.mubr.bf16.mxu0 0
      %4154 = vmatmul.mubr.bf16.gmra.mxu0 %v3854
      %v4155 = vpop.f32.mrf.mxu0
      %v4156 = vadd.f32 0.0, %v4155
      %v4157 = vpop.f32.mrf.mxu0
      %v4158 = vpop.f32.mrf.mxu0
      %v4159 = vadd.f32 0.0, %v4158
      %v4160 = vpop.f32.mrf.mxu0
      %4161 = vmatprep.mubr.bf16.mxu0 0
      %4162 = vmatmul.mubr.bf16.gmra.mxu0 %v3855
      %v4163 = vpop.f32.mrf.mxu0
      %v4164 = vadd.f32 0.0, %v4163
      %v4165 = vpop.f32.mrf.mxu0
      %v4166 = vpop.f32.mrf.mxu0
      %v4167 = vadd.f32 0.0, %v4166
      %v4168 = vpop.f32.mrf.mxu0
      %4169 = vmatprep.mubr.bf16.mxu0 0
      %4170 = vmatmul.mubr.bf16.gmra.mxu0 %v3856
      %v4171 = vpop.f32.mrf.mxu0
      %v4172 = vadd.f32 0.0, %v4171
      %v4173 = vpop.f32.mrf.mxu0
      %v4174 = vpop.f32.mrf.mxu0
      %v4175 = vadd.f32 0.0, %v4174
      %v4176 = vpop.f32.mrf.mxu0
      %4177 = vmatprep.mubr.bf16.mxu0 0
      %4178 = vmatmul.mubr.bf16.gmra.mxu0 %v3857
      %v4179 = vpop.f32.mrf.mxu0
      %v4180 = vadd.f32 0.0, %v4179
      %v4181 = vpop.f32.mrf.mxu0
      %v4182 = vpop.f32.mrf.mxu0
      %v4183 = vadd.f32 0.0, %v4182
      %v4184 = vpop.f32.mrf.mxu0
      %4185 = vmatprep.mubr.bf16.mxu0 0
      %4186 = vmatmul.mubr.bf16.gmra.mxu0 %v3858
      %v4187 = vpop.f32.mrf.mxu0
      %v4188 = vadd.f32 0.0, %v4187
      %v4189 = vpop.f32.mrf.mxu0
      %v4190 = vpop.f32.mrf.mxu0
      %v4191 = vadd.f32 0.0, %v4190
      %v4192 = vpop.f32.mrf.mxu0
      %4193 = vmatprep.mubr.bf16.mxu0 0
      %4194 = vmatmul.mubr.bf16.gmra.mxu0 %v3859
      %v4195 = vpop.f32.mrf.mxu0
      %v4196 = vadd.f32 0.0, %v4195
      %v4197 = vpop.f32.mrf.mxu0
      %v4198 = vpop.f32.mrf.mxu0
      %v4199 = vadd.f32 0.0, %v4198
      %v4200 = vpop.f32.mrf.mxu0
      %4201 = vmatprep.mubr.bf16.mxu0 0
      %4202 = vmatmul.mubr.bf16.gmra.mxu0 %v3860
      %v4203 = vpop.f32.mrf.mxu0
      %v4204 = vadd.f32 0.0, %v4203
      %v4205 = vpop.f32.mrf.mxu0
      %v4206 = vpop.f32.mrf.mxu0
      %v4207 = vadd.f32 0.0, %v4206
      %v4208 = vpop.f32.mrf.mxu0
      %4209 = vmatprep.mubr.bf16.mxu0 0
      %4210 = vmatmul.mubr.bf16.gmra.mxu0 %v3861
      %v4211 = vpop.f32.mrf.mxu0
      %v4212 = vadd.f32 0.0, %v4211
      %v4213 = vpop.f32.mrf.mxu0
      %v4214 = vpop.f32.mrf.mxu0
      %v4215 = vadd.f32 0.0, %v4214
      %v4216 = vpop.f32.mrf.mxu0
      %4217 = vmatprep.mubr.bf16.mxu0 0
      %4218 = vmatmul.mubr.bf16.gmra.mxu0 %v3862
      %v4219 = vpop.f32.mrf.mxu0
      %v4220 = vadd.f32 0.0, %v4219
      %v4221 = vpop.f32.mrf.mxu0
      %v4222 = vpop.f32.mrf.mxu0
      %v4223 = vadd.f32 0.0, %v4222
      %v4224 = vpop.f32.mrf.mxu0
      %4225 = vmatprep.mubr.bf16.mxu0 0
      %4226 = vmatmul.mubr.bf16.gmra.mxu0 %v3863
      %v4227 = vpop.f32.mrf.mxu0
      %v4228 = vadd.f32 0.0, %v4227
      %v4229 = vpop.f32.mrf.mxu0
      %v4230 = vpop.f32.mrf.mxu0
      %v4231 = vadd.f32 0.0, %v4230
      %v4232 = vpop.f32.mrf.mxu0
      %4233 = vmatprep.mubr.bf16.mxu0 0
      %4234 = vmatmul.mubr.bf16.gmra.mxu0 %v3864
      %v4235 = vpop.f32.mrf.mxu0
      %v4236 = vadd.f32 0.0, %v4235
      %v4237 = vpop.f32.mrf.mxu0
      %v4238 = vpop.f32.mrf.mxu0
      %v4239 = vadd.f32 0.0, %v4238
      %v4240 = vpop.f32.mrf.mxu0
      %4241 = vmatprep.mubr.bf16.mxu0 0
      %4242 = vmatmul.mubr.bf16.gmra.mxu0 %v3865
      %v4243 = vpop.f32.mrf.mxu0
      %v4244 = vadd.f32 0.0, %v4243
      %v4245 = vpop.f32.mrf.mxu0
      %v4246 = vpop.f32.mrf.mxu0
      %v4247 = vadd.f32 0.0, %v4246
      %v4248 = vpop.f32.mrf.mxu0
      %4249 = vmatprep.mubr.bf16.mxu0 0
      %4250 = vmatmul.mubr.bf16.gmra.mxu0 %v3866
      %v4251 = vpop.f32.mrf.mxu0
      %v4252 = vadd.f32 0.0, %v4251
      %v4253 = vpop.f32.mrf.mxu0
      %v4254 = vpop.f32.mrf.mxu0
      %v4255 = vadd.f32 0.0, %v4254
      %v4256 = vpop.f32.mrf.mxu0
      %4257 = vmatprep.mubr.bf16.mxu0 0
      %4258 = vmatmul.mubr.bf16.gmra.mxu0 %v3867
      %v4259 = vpop.f32.mrf.mxu0
      %v4260 = vadd.f32 0.0, %v4259
      %v4261 = vpop.f32.mrf.mxu0
      %v4262 = vpop.f32.mrf.mxu0
      %v4263 = vadd.f32 0.0, %v4262
      %v4264 = vpop.f32.mrf.mxu0
      %4265 = vmatprep.mubr.bf16.mxu0 0
      %4266 = vmatmul.mubr.bf16.gmra.mxu0 %v3868
      %v4267 = vpop.f32.mrf.mxu0
      %v4268 = vadd.f32 0.0, %v4267
      %v4269 = vpop.f32.mrf.mxu0
      %v4270 = vpop.f32.mrf.mxu0
      %v4271 = vadd.f32 0.0, %v4270
      %v4272 = vpop.f32.mrf.mxu0
      %4273 = vmatprep.mubr.bf16.mxu0 0
      %4274 = vmatmul.mubr.bf16.gmra.mxu0 %v3869
      %v4275 = vpop.f32.mrf.mxu0
      %v4276 = vadd.f32 0.0, %v4275
      %v4277 = vpop.f32.mrf.mxu0
      %v4278 = vpop.f32.mrf.mxu0
      %v4279 = vadd.f32 0.0, %v4278
      %v4280 = vpop.f32.mrf.mxu0
      %4281 = vmatprep.mubr.bf16.mxu0 0
      %4282 = vmatmul.mubr.bf16.gmra.mxu0 %v3870
      %v4283 = vpop.f32.mrf.mxu0
      %v4284 = vadd.f32 0.0, %v4283
      %v4285 = vpop.f32.mrf.mxu0
      %v4286 = vpop.f32.mrf.mxu0
      %v4287 = vadd.f32 0.0, %v4286
      %v4288 = vpop.f32.mrf.mxu0
      %4289 = vmatprep.mubr.bf16.mxu0 0
      %4290 = vmatmul.mubr.bf16.gmra.mxu0 %v3871
      %v4291 = vpop.f32.mrf.mxu0
      %v4292 = vadd.f32 0.0, %v4291
      %v4293 = vpop.f32.mrf.mxu0
      %v4294 = vpop.f32.mrf.mxu0
      %v4295 = vadd.f32 0.0, %v4294
      %v4296 = vpop.f32.mrf.mxu0
      %4297 = vmatprep.mubr.bf16.mxu0 0
      %4298 = vmatmul.mubr.bf16.gmra.mxu0 %v3872
      %v4299 = vpop.f32.mrf.mxu0
      %v4300 = vadd.f32 0.0, %v4299
      %v4301 = vpop.f32.mrf.mxu0
      %v4302 = vpop.f32.mrf.mxu0
      %v4303 = vadd.f32 0.0, %v4302
      %v4304 = vpop.f32.mrf.mxu0
      %4305 = vdwg.mxu0
      %v4322 = vunpack.c.l.b16 %v3937
      %v4323 = vunpack.c.l.b16 %v3938
      %v4324 = vunpack.c.l.b16 %v3939
      %v4325 = vunpack.c.l.b16 %v3940
      %v4326 = vunpack.c.l.b16 %v3941
      %v4327 = vunpack.c.l.b16 %v3942
      %v4328 = vunpack.c.l.b16 %v3943
      %v4329 = vunpack.c.l.b16 %v3944
      %v4330 = vunpack.c.l.b16 %v3945
      %v4331 = vunpack.c.l.b16 %v3946
      %v4332 = vunpack.c.l.b16 %v3947
      %v4333 = vunpack.c.l.b16 %v3948
      %v4334 = vunpack.c.l.b16 %v3949
      %v4335 = vunpack.c.l.b16 %v3950
      %v4336 = vunpack.c.l.b16 %v3951
      %v4337 = vunpack.c.l.b16 %v3952
      %v4338 = vpack.c.b16 %v4323, %v4322
      %v4339 = vpack.c.b16 %v4325, %v4324
      %v4340 = vpack.c.b16 %v4327, %v4326
      %v4341 = vpack.c.b16 %v4329, %v4328
      %v4342 = vpack.c.b16 %v4331, %v4330
      %v4343 = vpack.c.b16 %v4333, %v4332
      %v4344 = vpack.c.b16 %v4335, %v4334
      %v4345 = vpack.c.b16 %v4337, %v4336
      %4354 = vmatprep.subr.bf16.mxu0 0
      %4355 = vmatpush1.bf16.msra.mxu0 %v4345
      %4356 = vmatprep.subr.bf16.mxu0 0
      %4357 = vmatpush1.bf16.msra.mxu0 %v4344
      %4358 = vmatprep.subr.bf16.mxu0 0
      %4359 = vmatpush1.bf16.msra.mxu0 %v4343
      %4360 = vmatprep.subr.bf16.mxu0 0
      %4361 = vmatpush1.bf16.msra.mxu0 %v4342
      %4362 = vmatprep.subr.bf16.mxu0 0
      %4363 = vmatpush1.bf16.msra.mxu0 %v4341
      %4364 = vmatprep.subr.bf16.mxu0 0
      %4365 = vmatpush1.bf16.msra.mxu0 %v4340
      %4366 = vmatprep.subr.bf16.mxu0 0
      %4367 = vmatpush1.bf16.msra.mxu0 %v4339
      %4368 = vmatprep.subr.bf16.mxu0 0
      %4369 = vmatpush1.bf16.msra.mxu0 %v4338
      %4370 = vmatprep.subr.bf16.mxu0 0
      %4371 = vmatpush2.bf16.msra.mxu0 0
      %4372 = vmatprep.subr.bf16.mxu0 0
      %4373 = vmatpush2.bf16.msra.mxu0 0
      %4374 = vmatprep.subr.bf16.mxu0 0
      %4375 = vmatpush2.bf16.msra.mxu0 0
      %4376 = vmatprep.subr.bf16.mxu0 0
      %4377 = vmatpush2.bf16.msra.mxu0 0
      %4378 = vmatprep.subr.bf16.mxu0 0
      %4379 = vmatpush2.bf16.msra.mxu0 0
      %4380 = vmatprep.subr.bf16.mxu0 0
      %4381 = vmatpush2.bf16.msra.mxu0 0
      %4382 = vmatprep.subr.bf16.mxu0 0
      %4383 = vmatpush2.bf16.msra.mxu0 0
      %4384 = vmatprep.subr.bf16.mxu0 0
      %4385 = vmatpush2.bf16.msra.mxu0 0
      %4386 = vmatprep.mubr.bf16.mxu0 0
      %4387 = vmatmul.mubr.bf16.gmra.mxu0 %v3809
      %v4388 = vpop.f32.mrf.mxu0
      %v4389 = vadd.f32 %v4052, %v4388
      %v4390 = vpop.f32.mrf.mxu0
      %v4391 = vpop.f32.mrf.mxu0
      %v4392 = vadd.f32 %v4055, %v4391
      %v4393 = vpop.f32.mrf.mxu0
      %4394 = vmatprep.mubr.bf16.mxu0 0
      %4395 = vmatmul.mubr.bf16.gmra.mxu0 %v3810
      %v4396 = vpop.f32.mrf.mxu0
      %v4397 = vadd.f32 %v4060, %v4396
      %v4398 = vpop.f32.mrf.mxu0
      %v4399 = vpop.f32.mrf.mxu0
      %v4400 = vadd.f32 %v4063, %v4399
      %v4401 = vpop.f32.mrf.mxu0
      %4402 = vmatprep.mubr.bf16.mxu0 0
      %4403 = vmatmul.mubr.bf16.gmra.mxu0 %v3811
      %v4404 = vpop.f32.mrf.mxu0
      %v4405 = vadd.f32 %v4068, %v4404
      %v4406 = vpop.f32.mrf.mxu0
      %v4407 = vpop.f32.mrf.mxu0
      %v4408 = vadd.f32 %v4071, %v4407
      %v4409 = vpop.f32.mrf.mxu0
      %4410 = vmatprep.mubr.bf16.mxu0 0
      %4411 = vmatmul.mubr.bf16.gmra.mxu0 %v3812
      %v4412 = vpop.f32.mrf.mxu0
      %v4413 = vadd.f32 %v4076, %v4412
      %v4414 = vpop.f32.mrf.mxu0
      %v4415 = vpop.f32.mrf.mxu0
      %v4416 = vadd.f32 %v4079, %v4415
      %v4417 = vpop.f32.mrf.mxu0
      %4418 = vmatprep.mubr.bf16.mxu0 0
      %4419 = vmatmul.mubr.bf16.gmra.mxu0 %v3813
      %v4420 = vpop.f32.mrf.mxu0
      %v4421 = vadd.f32 %v4084, %v4420
      %v4422 = vpop.f32.mrf.mxu0
      %v4423 = vpop.f32.mrf.mxu0
      %v4424 = vadd.f32 %v4087, %v4423
      %v4425 = vpop.f32.mrf.mxu0
      %4426 = vmatprep.mubr.bf16.mxu0 0
      %4427 = vmatmul.mubr.bf16.gmra.mxu0 %v3814
      %v4428 = vpop.f32.mrf.mxu0
      %v4429 = vadd.f32 %v4092, %v4428
      %v4430 = vpop.f32.mrf.mxu0
      %v4431 = vpop.f32.mrf.mxu0
      %v4432 = vadd.f32 %v4095, %v4431
      %v4433 = vpop.f32.mrf.mxu0
      %4434 = vmatprep.mubr.bf16.mxu0 0
      %4435 = vmatmul.mubr.bf16.gmra.mxu0 %v3815
      %v4436 = vpop.f32.mrf.mxu0
      %v4437 = vadd.f32 %v4100, %v4436
      %v4438 = vpop.f32.mrf.mxu0
      %v4439 = vpop.f32.mrf.mxu0
      %v4440 = vadd.f32 %v4103, %v4439
      %v4441 = vpop.f32.mrf.mxu0
      %4442 = vmatprep.mubr.bf16.mxu0 0
      %4443 = vmatmul.mubr.bf16.gmra.mxu0 %v3816
      %v4444 = vpop.f32.mrf.mxu0
      %v4445 = vadd.f32 %v4108, %v4444
      %v4446 = vpop.f32.mrf.mxu0
      %v4447 = vpop.f32.mrf.mxu0
      %v4448 = vadd.f32 %v4111, %v4447
      %v4449 = vpop.f32.mrf.mxu0
      %4450 = vmatprep.mubr.bf16.mxu0 0
      %4451 = vmatmul.mubr.bf16.gmra.mxu0 %v3817
      %v4452 = vpop.f32.mrf.mxu0
      %v4453 = vadd.f32 %v4116, %v4452
      %v4454 = vpop.f32.mrf.mxu0
      %v4455 = vpop.f32.mrf.mxu0
      %v4456 = vadd.f32 %v4119, %v4455
      %v4457 = vpop.f32.mrf.mxu0
      %4458 = vmatprep.mubr.bf16.mxu0 0
      %4459 = vmatmul.mubr.bf16.gmra.mxu0 %v3818
      %v4460 = vpop.f32.mrf.mxu0
      %v4461 = vadd.f32 %v4124, %v4460
      %v4462 = vpop.f32.mrf.mxu0
      %v4463 = vpop.f32.mrf.mxu0
      %v4464 = vadd.f32 %v4127, %v4463
      %v4465 = vpop.f32.mrf.mxu0
      %4466 = vmatprep.mubr.bf16.mxu0 0
      %4467 = vmatmul.mubr.bf16.gmra.mxu0 %v3819
      %v4468 = vpop.f32.mrf.mxu0
      %v4469 = vadd.f32 %v4132, %v4468
      %v4470 = vpop.f32.mrf.mxu0
      %v4471 = vpop.f32.mrf.mxu0
      %v4472 = vadd.f32 %v4135, %v4471
      %v4473 = vpop.f32.mrf.mxu0
      %4474 = vmatprep.mubr.bf16.mxu0 0
      %4475 = vmatmul.mubr.bf16.gmra.mxu0 %v3820
      %v4476 = vpop.f32.mrf.mxu0
      %v4477 = vadd.f32 %v4140, %v4476
      %v4478 = vpop.f32.mrf.mxu0
      %v4479 = vpop.f32.mrf.mxu0
      %v4480 = vadd.f32 %v4143, %v4479
      %v4481 = vpop.f32.mrf.mxu0
      %4482 = vmatprep.mubr.bf16.mxu0 0
      %4483 = vmatmul.mubr.bf16.gmra.mxu0 %v3821
      %v4484 = vpop.f32.mrf.mxu0
      %v4485 = vadd.f32 %v4148, %v4484
      %v4486 = vpop.f32.mrf.mxu0
      %v4487 = vpop.f32.mrf.mxu0
      %v4488 = vadd.f32 %v4151, %v4487
      %v4489 = vpop.f32.mrf.mxu0
      %4490 = vmatprep.mubr.bf16.mxu0 0
      %4491 = vmatmul.mubr.bf16.gmra.mxu0 %v3822
      %v4492 = vpop.f32.mrf.mxu0
      %v4493 = vadd.f32 %v4156, %v4492
      %v4494 = vpop.f32.mrf.mxu0
      %v4495 = vpop.f32.mrf.mxu0
      %v4496 = vadd.f32 %v4159, %v4495
      %v4497 = vpop.f32.mrf.mxu0
      %4498 = vmatprep.mubr.bf16.mxu0 0
      %4499 = vmatmul.mubr.bf16.gmra.mxu0 %v3823
      %v4500 = vpop.f32.mrf.mxu0
      %v4501 = vadd.f32 %v4164, %v4500
      %v4502 = vpop.f32.mrf.mxu0
      %v4503 = vpop.f32.mrf.mxu0
      %v4504 = vadd.f32 %v4167, %v4503
      %v4505 = vpop.f32.mrf.mxu0
      %4506 = vmatprep.mubr.bf16.mxu0 0
      %4507 = vmatmul.mubr.bf16.gmra.mxu0 %v3824
      %v4508 = vpop.f32.mrf.mxu0
      %v4509 = vadd.f32 %v4172, %v4508
      %v4510 = vpop.f32.mrf.mxu0
      %v4511 = vpop.f32.mrf.mxu0
      %v4512 = vadd.f32 %v4175, %v4511
      %v4513 = vpop.f32.mrf.mxu0
      %4514 = vmatprep.mubr.bf16.mxu0 0
      %4515 = vmatmul.mubr.bf16.gmra.mxu0 %v3825
      %v4516 = vpop.f32.mrf.mxu0
      %v4517 = vadd.f32 %v4180, %v4516
      %v4518 = vpop.f32.mrf.mxu0
      %v4519 = vpop.f32.mrf.mxu0
      %v4520 = vadd.f32 %v4183, %v4519
      %v4521 = vpop.f32.mrf.mxu0
      %4522 = vmatprep.mubr.bf16.mxu0 0
      %4523 = vmatmul.mubr.bf16.gmra.mxu0 %v3826
      %v4524 = vpop.f32.mrf.mxu0
      %v4525 = vadd.f32 %v4188, %v4524
      %v4526 = vpop.f32.mrf.mxu0
      %v4527 = vpop.f32.mrf.mxu0
      %v4528 = vadd.f32 %v4191, %v4527
      %v4529 = vpop.f32.mrf.mxu0
      %4530 = vmatprep.mubr.bf16.mxu0 0
      %4531 = vmatmul.mubr.bf16.gmra.mxu0 %v3827
      %v4532 = vpop.f32.mrf.mxu0
      %v4533 = vadd.f32 %v4196, %v4532
      %v4534 = vpop.f32.mrf.mxu0
      %v4535 = vpop.f32.mrf.mxu0
      %v4536 = vadd.f32 %v4199, %v4535
      %v4537 = vpop.f32.mrf.mxu0
      %4538 = vmatprep.mubr.bf16.mxu0 0
      %4539 = vmatmul.mubr.bf16.gmra.mxu0 %v3828
      %v4540 = vpop.f32.mrf.mxu0
      %v4541 = vadd.f32 %v4204, %v4540
      %v4542 = vpop.f32.mrf.mxu0
      %v4543 = vpop.f32.mrf.mxu0
      %v4544 = vadd.f32 %v4207, %v4543
      %v4545 = vpop.f32.mrf.mxu0
      %4546 = vmatprep.mubr.bf16.mxu0 0
      %4547 = vmatmul.mubr.bf16.gmra.mxu0 %v3829
      %v4548 = vpop.f32.mrf.mxu0
      %v4549 = vadd.f32 %v4212, %v4548
      %v4550 = vpop.f32.mrf.mxu0
      %v4551 = vpop.f32.mrf.mxu0
      %v4552 = vadd.f32 %v4215, %v4551
      %v4553 = vpop.f32.mrf.mxu0
      %4554 = vmatprep.mubr.bf16.mxu0 0
      %4555 = vmatmul.mubr.bf16.gmra.mxu0 %v3830
      %v4556 = vpop.f32.mrf.mxu0
      %v4557 = vadd.f32 %v4220, %v4556
      %v4558 = vpop.f32.mrf.mxu0
      %v4559 = vpop.f32.mrf.mxu0
      %v4560 = vadd.f32 %v4223, %v4559
      %v4561 = vpop.f32.mrf.mxu0
      %4562 = vmatprep.mubr.bf16.mxu0 0
      %4563 = vmatmul.mubr.bf16.gmra.mxu0 %v3831
      %v4564 = vpop.f32.mrf.mxu0
      %v4565 = vadd.f32 %v4228, %v4564
      %v4566 = vpop.f32.mrf.mxu0
      %v4567 = vpop.f32.mrf.mxu0
      %v4568 = vadd.f32 %v4231, %v4567
      %v4569 = vpop.f32.mrf.mxu0
      %4570 = vmatprep.mubr.bf16.mxu0 0
      %4571 = vmatmul.mubr.bf16.gmra.mxu0 %v3832
      %v4572 = vpop.f32.mrf.mxu0
      %v4573 = vadd.f32 %v4236, %v4572
      %v4574 = vpop.f32.mrf.mxu0
      %v4575 = vpop.f32.mrf.mxu0
      %v4576 = vadd.f32 %v4239, %v4575
      %v4577 = vpop.f32.mrf.mxu0
      %4578 = vmatprep.mubr.bf16.mxu0 0
      %4579 = vmatmul.mubr.bf16.gmra.mxu0 %v3833
      %v4580 = vpop.f32.mrf.mxu0
      %v4581 = vadd.f32 %v4244, %v4580
      %v4582 = vpop.f32.mrf.mxu0
      %v4583 = vpop.f32.mrf.mxu0
      %v4584 = vadd.f32 %v4247, %v4583
      %v4585 = vpop.f32.mrf.mxu0
      %4586 = vmatprep.mubr.bf16.mxu0 0
      %4587 = vmatmul.mubr.bf16.gmra.mxu0 %v3834
      %v4588 = vpop.f32.mrf.mxu0
      %v4589 = vadd.f32 %v4252, %v4588
      %v4590 = vpop.f32.mrf.mxu0
      %v4591 = vpop.f32.mrf.mxu0
      %v4592 = vadd.f32 %v4255, %v4591
      %v4593 = vpop.f32.mrf.mxu0
      %4594 = vmatprep.mubr.bf16.mxu0 0
      %4595 = vmatmul.mubr.bf16.gmra.mxu0 %v3835
      %v4596 = vpop.f32.mrf.mxu0
      %v4597 = vadd.f32 %v4260, %v4596
      %v4598 = vpop.f32.mrf.mxu0
      %v4599 = vpop.f32.mrf.mxu0
      %v4600 = vadd.f32 %v4263, %v4599
      %v4601 = vpop.f32.mrf.mxu0
      %4602 = vmatprep.mubr.bf16.mxu0 0
      %4603 = vmatmul.mubr.bf16.gmra.mxu0 %v3836
      %v4604 = vpop.f32.mrf.mxu0
      %v4605 = vadd.f32 %v4268, %v4604
      %v4606 = vpop.f32.mrf.mxu0
      %v4607 = vpop.f32.mrf.mxu0
      %v4608 = vadd.f32 %v4271, %v4607
      %v4609 = vpop.f32.mrf.mxu0
      %4610 = vmatprep.mubr.bf16.mxu0 0
      %4611 = vmatmul.mubr.bf16.gmra.mxu0 %v3837
      %v4612 = vpop.f32.mrf.mxu0
      %v4613 = vadd.f32 %v4276, %v4612
      %v4614 = vpop.f32.mrf.mxu0
      %v4615 = vpop.f32.mrf.mxu0
      %v4616 = vadd.f32 %v4279, %v4615
      %v4617 = vpop.f32.mrf.mxu0
      %4618 = vmatprep.mubr.bf16.mxu0 0
      %4619 = vmatmul.mubr.bf16.gmra.mxu0 %v3838
      %v4620 = vpop.f32.mrf.mxu0
      %v4621 = vadd.f32 %v4284, %v4620
      %v4622 = vpop.f32.mrf.mxu0
      %v4623 = vpop.f32.mrf.mxu0
      %v4624 = vadd.f32 %v4287, %v4623
      %v4625 = vpop.f32.mrf.mxu0
      %4626 = vmatprep.mubr.bf16.mxu0 0
      %4627 = vmatmul.mubr.bf16.gmra.mxu0 %v3839
      %v4628 = vpop.f32.mrf.mxu0
      %v4629 = vadd.f32 %v4292, %v4628
      %v4630 = vpop.f32.mrf.mxu0
      %v4631 = vpop.f32.mrf.mxu0
      %v4632 = vadd.f32 %v4295, %v4631
      %v4633 = vpop.f32.mrf.mxu0
      %4634 = vmatprep.mubr.bf16.mxu0 0
      %4635 = vmatmul.mubr.bf16.gmra.mxu0 %v3840
      %v4636 = vpop.f32.mrf.mxu0
      %v4637 = vadd.f32 %v4300, %v4636
      %v4638 = vpop.f32.mrf.mxu0
      %v4639 = vpop.f32.mrf.mxu0
      %v4640 = vadd.f32 %v4303, %v4639
      %v4641 = vpop.f32.mrf.mxu0
      %4642 = vdwg.mxu0
      %v4643 = vld [vmem:[%s1 + $0x88] sm:$0xf]
      %v4644 = vld [vmem:[%s1 + $0x8c] sm:$0xf]
      %v4645 = vld [vmem:[%s1 + $0x90] sm:$0xf]
      %v4646 = vld [vmem:[%s1 + $0x94] sm:$0xf]
      %v4647 = vld [vmem:[%s1 + $0x98] sm:$0xf]
      %v4648 = vld [vmem:[%s1 + $0x9c] sm:$0xf]
      %v4649 = vld [vmem:[%s1 + $0xa0] sm:$0xf]
      %v4650 = vld [vmem:[%s1 + $0xa4] sm:$0xf]
      %v4651 = vld [vmem:[%s1 + $0xa8] sm:$0xf]
      %v4652 = vld [vmem:[%s1 + $0xac] sm:$0xf]
      %v4653 = vld [vmem:[%s1 + $0xb0] sm:$0xf]
      %v4654 = vld [vmem:[%s1 + $0xb4] sm:$0xf]
      %v4655 = vld [vmem:[%s1 + $0xb8] sm:$0xf]
      %v4656 = vld [vmem:[%s1 + $0xbc] sm:$0xf]
      %v4657 = vld [vmem:[%s1 + $0xc0] sm:$0xf]
      %v4658 = vld [vmem:[%s1 + $0xc4] sm:$0xf]
      %v4675 = vunpack.c.l.b16 %v4643
      %v4676 = vunpack.c.l.b16 %v4644
      %v4677 = vunpack.c.l.b16 %v4645
      %v4678 = vunpack.c.l.b16 %v4646
      %v4679 = vunpack.c.l.b16 %v4647
      %v4680 = vunpack.c.l.b16 %v4648
      %v4681 = vunpack.c.l.b16 %v4649
      %v4682 = vunpack.c.l.b16 %v4650
      %v4683 = vunpack.c.l.b16 %v4651
      %v4684 = vunpack.c.l.b16 %v4652
      %v4685 = vunpack.c.l.b16 %v4653
      %v4686 = vunpack.c.l.b16 %v4654
      %v4687 = vunpack.c.l.b16 %v4655
      %v4688 = vunpack.c.l.b16 %v4656
      %v4689 = vunpack.c.l.b16 %v4657
      %v4690 = vunpack.c.l.b16 %v4658
      %v4691 = vpack.c.b16 %v4676, %v4675
      %v4692 = vpack.c.b16 %v4678, %v4677
      %v4693 = vpack.c.b16 %v4680, %v4679
      %v4694 = vpack.c.b16 %v4682, %v4681
      %v4695 = vpack.c.b16 %v4684, %v4683
      %v4696 = vpack.c.b16 %v4686, %v4685
      %v4697 = vpack.c.b16 %v4688, %v4687
      %v4698 = vpack.c.b16 %v4690, %v4689
      %4707 = vmatprep.subr.bf16.mxu0 0
      %4708 = vmatpush1.bf16.msra.mxu0 %v4698
      %4709 = vmatprep.subr.bf16.mxu0 0
      %4710 = vmatpush1.bf16.msra.mxu0 %v4697
      %4711 = vmatprep.subr.bf16.mxu0 0
      %4712 = vmatpush1.bf16.msra.mxu0 %v4696
      %4713 = vmatprep.subr.bf16.mxu0 0
      %4714 = vmatpush1.bf16.msra.mxu0 %v4695
      %4715 = vmatprep.subr.bf16.mxu0 0
      %4716 = vmatpush1.bf16.msra.mxu0 %v4694
      %4717 = vmatprep.subr.bf16.mxu0 0
      %4718 = vmatpush1.bf16.msra.mxu0 %v4693
      %4719 = vmatprep.subr.bf16.mxu0 0
      %4720 = vmatpush1.bf16.msra.mxu0 %v4692
      %4721 = vmatprep.subr.bf16.mxu0 0
      %4722 = vmatpush1.bf16.msra.mxu0 %v4691
      %4723 = vmatprep.subr.bf16.mxu0 0
      %4724 = vmatpush2.bf16.msra.mxu0 0
      %4725 = vmatprep.subr.bf16.mxu0 0
      %4726 = vmatpush2.bf16.msra.mxu0 0
      %4727 = vmatprep.subr.bf16.mxu0 0
      %4728 = vmatpush2.bf16.msra.mxu0 0
      %4729 = vmatprep.subr.bf16.mxu0 0
      %4730 = vmatpush2.bf16.msra.mxu0 0
      %4731 = vmatprep.subr.bf16.mxu0 0
      %4732 = vmatpush2.bf16.msra.mxu0 0
      %4733 = vmatprep.subr.bf16.mxu0 0
      %4734 = vmatpush2.bf16.msra.mxu0 0
      %4735 = vmatprep.subr.bf16.mxu0 0
      %4736 = vmatpush2.bf16.msra.mxu0 0
      %4737 = vmatprep.subr.bf16.mxu0 0
      %4738 = vmatpush2.bf16.msra.mxu0 0
      %4739 = vmatprep.mubr.bf16.mxu0 0
      %4740 = vmatmul.mubr.bf16.gmra.mxu0 %v3873
      %v4741 = vpop.f32.mrf.mxu0
      %v4742 = vadd.f32 0.0, %v4741
      %v4743 = vpop.f32.mrf.mxu0
      %v4744 = vpop.f32.mrf.mxu0
      %v4745 = vadd.f32 0.0, %v4744
      %v4746 = vpop.f32.mrf.mxu0
      %4747 = vmatprep.mubr.bf16.mxu0 0
      %4748 = vmatmul.mubr.bf16.gmra.mxu0 %v3874
      %v4749 = vpop.f32.mrf.mxu0
      %v4750 = vadd.f32 0.0, %v4749
      %v4751 = vpop.f32.mrf.mxu0
      %v4752 = vpop.f32.mrf.mxu0
      %v4753 = vadd.f32 0.0, %v4752
      %v4754 = vpop.f32.mrf.mxu0
      %4755 = vmatprep.mubr.bf16.mxu0 0
      %4756 = vmatmul.mubr.bf16.gmra.mxu0 %v3875
      %v4757 = vpop.f32.mrf.mxu0
      %v4758 = vadd.f32 0.0, %v4757
      %v4759 = vpop.f32.mrf.mxu0
      %v4760 = vpop.f32.mrf.mxu0
      %v4761 = vadd.f32 0.0, %v4760
      %v4762 = vpop.f32.mrf.mxu0
      %4763 = vmatprep.mubr.bf16.mxu0 0
      %4764 = vmatmul.mubr.bf16.gmra.mxu0 %v3876
      %v4765 = vpop.f32.mrf.mxu0
      %v4766 = vadd.f32 0.0, %v4765
      %v4767 = vpop.f32.mrf.mxu0
      %v4768 = vpop.f32.mrf.mxu0
      %v4769 = vadd.f32 0.0, %v4768
      %v4770 = vpop.f32.mrf.mxu0
      %4771 = vmatprep.mubr.bf16.mxu0 0
      %4772 = vmatmul.mubr.bf16.gmra.mxu0 %v3877
      %v4773 = vpop.f32.mrf.mxu0
      %v4774 = vadd.f32 0.0, %v4773
      %v4775 = vpop.f32.mrf.mxu0
      %v4776 = vpop.f32.mrf.mxu0
      %v4777 = vadd.f32 0.0, %v4776
      %v4778 = vpop.f32.mrf.mxu0
      %4779 = vmatprep.mubr.bf16.mxu0 0
      %4780 = vmatmul.mubr.bf16.gmra.mxu0 %v3878
      %v4781 = vpop.f32.mrf.mxu0
      %v4782 = vadd.f32 0.0, %v4781
      %v4783 = vpop.f32.mrf.mxu0
      %v4784 = vpop.f32.mrf.mxu0
      %v4785 = vadd.f32 0.0, %v4784
      %v4786 = vpop.f32.mrf.mxu0
      %4787 = vmatprep.mubr.bf16.mxu0 0
      %4788 = vmatmul.mubr.bf16.gmra.mxu0 %v3879
      %v4789 = vpop.f32.mrf.mxu0
      %v4790 = vadd.f32 0.0, %v4789
      %v4791 = vpop.f32.mrf.mxu0
      %v4792 = vpop.f32.mrf.mxu0
      %v4793 = vadd.f32 0.0, %v4792
      %v4794 = vpop.f32.mrf.mxu0
      %4795 = vmatprep.mubr.bf16.mxu0 0
      %4796 = vmatmul.mubr.bf16.gmra.mxu0 %v3880
      %v4797 = vpop.f32.mrf.mxu0
      %v4798 = vadd.f32 0.0, %v4797
      %v4799 = vpop.f32.mrf.mxu0
      %v4800 = vpop.f32.mrf.mxu0
      %v4801 = vadd.f32 0.0, %v4800
      %v4802 = vpop.f32.mrf.mxu0
      %4803 = vmatprep.mubr.bf16.mxu0 0
      %4804 = vmatmul.mubr.bf16.gmra.mxu0 %v3881
      %v4805 = vpop.f32.mrf.mxu0
      %v4806 = vadd.f32 0.0, %v4805
      %v4807 = vpop.f32.mrf.mxu0
      %v4808 = vpop.f32.mrf.mxu0
      %v4809 = vadd.f32 0.0, %v4808
      %v4810 = vpop.f32.mrf.mxu0
      %4811 = vmatprep.mubr.bf16.mxu0 0
      %4812 = vmatmul.mubr.bf16.gmra.mxu0 %v3882
      %v4813 = vpop.f32.mrf.mxu0
      %v4814 = vadd.f32 0.0, %v4813
      %v4815 = vpop.f32.mrf.mxu0
      %v4816 = vpop.f32.mrf.mxu0
      %v4817 = vadd.f32 0.0, %v4816
      %v4818 = vpop.f32.mrf.mxu0
      %4819 = vmatprep.mubr.bf16.mxu0 0
      %4820 = vmatmul.mubr.bf16.gmra.mxu0 %v3883
      %v4821 = vpop.f32.mrf.mxu0
      %v4822 = vadd.f32 0.0, %v4821
      %v4823 = vpop.f32.mrf.mxu0
      %v4824 = vpop.f32.mrf.mxu0
      %v4825 = vadd.f32 0.0, %v4824
      %v4826 = vpop.f32.mrf.mxu0
      %4827 = vmatprep.mubr.bf16.mxu0 0
      %4828 = vmatmul.mubr.bf16.gmra.mxu0 %v3884
      %v4829 = vpop.f32.mrf.mxu0
      %v4830 = vadd.f32 0.0, %v4829
      %v4831 = vpop.f32.mrf.mxu0
      %v4832 = vpop.f32.mrf.mxu0
      %v4833 = vadd.f32 0.0, %v4832
      %v4834 = vpop.f32.mrf.mxu0
      %4835 = vmatprep.mubr.bf16.mxu0 0
      %4836 = vmatmul.mubr.bf16.gmra.mxu0 %v3885
      %v4837 = vpop.f32.mrf.mxu0
      %v4838 = vadd.f32 0.0, %v4837
      %v4839 = vpop.f32.mrf.mxu0
      %v4840 = vpop.f32.mrf.mxu0
      %v4841 = vadd.f32 0.0, %v4840
      %v4842 = vpop.f32.mrf.mxu0
      %4843 = vmatprep.mubr.bf16.mxu0 0
      %4844 = vmatmul.mubr.bf16.gmra.mxu0 %v3886
      %v4845 = vpop.f32.mrf.mxu0
      %v4846 = vadd.f32 0.0, %v4845
      %v4847 = vpop.f32.mrf.mxu0
      %v4848 = vpop.f32.mrf.mxu0
      %v4849 = vadd.f32 0.0, %v4848
      %v4850 = vpop.f32.mrf.mxu0
      %4851 = vmatprep.mubr.bf16.mxu0 0
      %4852 = vmatmul.mubr.bf16.gmra.mxu0 %v3887
      %v4853 = vpop.f32.mrf.mxu0
      %v4854 = vadd.f32 0.0, %v4853
      %v4855 = vpop.f32.mrf.mxu0
      %v4856 = vpop.f32.mrf.mxu0
      %v4857 = vadd.f32 0.0, %v4856
      %v4858 = vpop.f32.mrf.mxu0
      %4859 = vmatprep.mubr.bf16.mxu0 0
      %4860 = vmatmul.mubr.bf16.gmra.mxu0 %v3888
      %v4861 = vpop.f32.mrf.mxu0
      %v4862 = vadd.f32 0.0, %v4861
      %v4863 = vpop.f32.mrf.mxu0
      %v4864 = vpop.f32.mrf.mxu0
      %v4865 = vadd.f32 0.0, %v4864
      %v4866 = vpop.f32.mrf.mxu0
      %4867 = vmatprep.mubr.bf16.mxu0 0
      %4868 = vmatmul.mubr.bf16.gmra.mxu0 %v3889
      %v4869 = vpop.f32.mrf.mxu0
      %v4870 = vadd.f32 0.0, %v4869
      %v4871 = vpop.f32.mrf.mxu0
      %v4872 = vpop.f32.mrf.mxu0
      %v4873 = vadd.f32 0.0, %v4872
      %v4874 = vpop.f32.mrf.mxu0
      %4875 = vmatprep.mubr.bf16.mxu0 0
      %4876 = vmatmul.mubr.bf16.gmra.mxu0 %v3890
      %v4877 = vpop.f32.mrf.mxu0
      %v4878 = vadd.f32 0.0, %v4877
      %v4879 = vpop.f32.mrf.mxu0
      %v4880 = vpop.f32.mrf.mxu0
      %v4881 = vadd.f32 0.0, %v4880
      %v4882 = vpop.f32.mrf.mxu0
      %4883 = vmatprep.mubr.bf16.mxu0 0
      %4884 = vmatmul.mubr.bf16.gmra.mxu0 %v3891
      %v4885 = vpop.f32.mrf.mxu0
      %v4886 = vadd.f32 0.0, %v4885
      %v4887 = vpop.f32.mrf.mxu0
      %v4888 = vpop.f32.mrf.mxu0
      %v4889 = vadd.f32 0.0, %v4888
      %v4890 = vpop.f32.mrf.mxu0
      %4891 = vmatprep.mubr.bf16.mxu0 0
      %4892 = vmatmul.mubr.bf16.gmra.mxu0 %v3892
      %v4893 = vpop.f32.mrf.mxu0
      %v4894 = vadd.f32 0.0, %v4893
      %v4895 = vpop.f32.mrf.mxu0
      %v4896 = vpop.f32.mrf.mxu0
      %v4897 = vadd.f32 0.0, %v4896
      %v4898 = vpop.f32.mrf.mxu0
      %4899 = vmatprep.mubr.bf16.mxu0 0
      %4900 = vmatmul.mubr.bf16.gmra.mxu0 %v3893
      %v4901 = vpop.f32.mrf.mxu0
      %v4902 = vadd.f32 0.0, %v4901
      %v4903 = vpop.f32.mrf.mxu0
      %v4904 = vpop.f32.mrf.mxu0
      %v4905 = vadd.f32 0.0, %v4904
      %v4906 = vpop.f32.mrf.mxu0
      %4907 = vmatprep.mubr.bf16.mxu0 0
      %4908 = vmatmul.mubr.bf16.gmra.mxu0 %v3894
      %v4909 = vpop.f32.mrf.mxu0
      %v4910 = vadd.f32 0.0, %v4909
      %v4911 = vpop.f32.mrf.mxu0
      %v4912 = vpop.f32.mrf.mxu0
      %v4913 = vadd.f32 0.0, %v4912
      %v4914 = vpop.f32.mrf.mxu0
      %4915 = vmatprep.mubr.bf16.mxu0 0
      %4916 = vmatmul.mubr.bf16.gmra.mxu0 %v3895
      %v4917 = vpop.f32.mrf.mxu0
      %v4918 = vadd.f32 0.0, %v4917
      %v4919 = vpop.f32.mrf.mxu0
      %v4920 = vpop.f32.mrf.mxu0
      %v4921 = vadd.f32 0.0, %v4920
      %v4922 = vpop.f32.mrf.mxu0
      %4923 = vmatprep.mubr.bf16.mxu0 0
      %4924 = vmatmul.mubr.bf16.gmra.mxu0 %v3896
      %v4925 = vpop.f32.mrf.mxu0
      %v4926 = vadd.f32 0.0, %v4925
      %v4927 = vpop.f32.mrf.mxu0
      %v4928 = vpop.f32.mrf.mxu0
      %v4929 = vadd.f32 0.0, %v4928
      %v4930 = vpop.f32.mrf.mxu0
      %4931 = vmatprep.mubr.bf16.mxu0 0
      %4932 = vmatmul.mubr.bf16.gmra.mxu0 %v3897
      %v4933 = vpop.f32.mrf.mxu0
      %v4934 = vadd.f32 0.0, %v4933
      %v4935 = vpop.f32.mrf.mxu0
      %v4936 = vpop.f32.mrf.mxu0
      %v4937 = vadd.f32 0.0, %v4936
      %v4938 = vpop.f32.mrf.mxu0
      %4939 = vmatprep.mubr.bf16.mxu0 0
      %4940 = vmatmul.mubr.bf16.gmra.mxu0 %v3898
      %v4941 = vpop.f32.mrf.mxu0
      %v4942 = vadd.f32 0.0, %v4941
      %v4943 = vpop.f32.mrf.mxu0
      %v4944 = vpop.f32.mrf.mxu0
      %v4945 = vadd.f32 0.0, %v4944
      %v4946 = vpop.f32.mrf.mxu0
      %4947 = vmatprep.mubr.bf16.mxu0 0
      %4948 = vmatmul.mubr.bf16.gmra.mxu0 %v3899
      %v4949 = vpop.f32.mrf.mxu0
      %v4950 = vadd.f32 0.0, %v4949
      %v4951 = vpop.f32.mrf.mxu0
      %v4952 = vpop.f32.mrf.mxu0
      %v4953 = vadd.f32 0.0, %v4952
      %v4954 = vpop.f32.mrf.mxu0
      %4955 = vmatprep.mubr.bf16.mxu0 0
      %4956 = vmatmul.mubr.bf16.gmra.mxu0 %v3900
      %v4957 = vpop.f32.mrf.mxu0
      %v4958 = vadd.f32 0.0, %v4957
      %v4959 = vpop.f32.mrf.mxu0
      %v4960 = vpop.f32.mrf.mxu0
      %v4961 = vadd.f32 0.0, %v4960
      %v4962 = vpop.f32.mrf.mxu0
      %4963 = vmatprep.mubr.bf16.mxu0 0
      %4964 = vmatmul.mubr.bf16.gmra.mxu0 %v3901
      %v4965 = vpop.f32.mrf.mxu0
      %v4966 = vadd.f32 0.0, %v4965
      %v4967 = vpop.f32.mrf.mxu0
      %v4968 = vpop.f32.mrf.mxu0
      %v4969 = vadd.f32 0.0, %v4968
      %v4970 = vpop.f32.mrf.mxu0
      %4971 = vmatprep.mubr.bf16.mxu0 0
      %4972 = vmatmul.mubr.bf16.gmra.mxu0 %v3902
      %v4973 = vpop.f32.mrf.mxu0
      %v4974 = vadd.f32 0.0, %v4973
      %v4975 = vpop.f32.mrf.mxu0
      %v4976 = vpop.f32.mrf.mxu0
      %v4977 = vadd.f32 0.0, %v4976
      %v4978 = vpop.f32.mrf.mxu0
      %4979 = vmatprep.mubr.bf16.mxu0 0
      %4980 = vmatmul.mubr.bf16.gmra.mxu0 %v3903
      %v4981 = vpop.f32.mrf.mxu0
      %v4982 = vadd.f32 0.0, %v4981
      %v4983 = vpop.f32.mrf.mxu0
      %v4984 = vpop.f32.mrf.mxu0
      %v4985 = vadd.f32 0.0, %v4984
      %v4986 = vpop.f32.mrf.mxu0
      %4987 = vmatprep.mubr.bf16.mxu0 0
      %4988 = vmatmul.mubr.bf16.gmra.mxu0 %v3904
      %v4989 = vpop.f32.mrf.mxu0
      %v4990 = vadd.f32 0.0, %v4989
      %v4991 = vpop.f32.mrf.mxu0
      %v4992 = vpop.f32.mrf.mxu0
      %v4993 = vadd.f32 0.0, %v4992
      %v4994 = vpop.f32.mrf.mxu0
      %4995 = vdwg.mxu0
      %v4996 = vadd.f32 %v4389, %v4742
      %v4997 = vadd.f32 %v4392, %v4745
      %v4998 = vadd.f32 %v4397, %v4750
      %v4999 = vadd.f32 %v4400, %v4753
      %v5000 = vadd.f32 %v4405, %v4758
      %v5001 = vadd.f32 %v4408, %v4761
      %v5002 = vadd.f32 %v4413, %v4766
      %v5003 = vadd.f32 %v4416, %v4769
      %v5004 = vadd.f32 %v4421, %v4774
      %v5005 = vadd.f32 %v4424, %v4777
      %v5006 = vadd.f32 %v4429, %v4782
      %v5007 = vadd.f32 %v4432, %v4785
      %v5008 = vadd.f32 %v4437, %v4790
      %v5009 = vadd.f32 %v4440, %v4793
      %v5010 = vadd.f32 %v4445, %v4798
      %v5011 = vadd.f32 %v4448, %v4801
      %v5012 = vadd.f32 %v4453, %v4806
      %v5013 = vadd.f32 %v4456, %v4809
      %v5014 = vadd.f32 %v4461, %v4814
      %v5015 = vadd.f32 %v4464, %v4817
      %v5016 = vadd.f32 %v4469, %v4822
      %v5017 = vadd.f32 %v4472, %v4825
      %v5018 = vadd.f32 %v4477, %v4830
      %v5019 = vadd.f32 %v4480, %v4833
      %v5020 = vadd.f32 %v4485, %v4838
      %v5021 = vadd.f32 %v4488, %v4841
      %v5022 = vadd.f32 %v4493, %v4846
      %v5023 = vadd.f32 %v4496, %v4849
      %v5024 = vadd.f32 %v4501, %v4854
      %v5025 = vadd.f32 %v4504, %v4857
      %v5026 = vadd.f32 %v4509, %v4862
      %v5027 = vadd.f32 %v4512, %v4865
      %v5028 = vadd.f32 %v4517, %v4870
      %v5029 = vadd.f32 %v4520, %v4873
      %v5030 = vadd.f32 %v4525, %v4878
      %v5031 = vadd.f32 %v4528, %v4881
      %v5032 = vadd.f32 %v4533, %v4886
      %v5033 = vadd.f32 %v4536, %v4889
      %v5034 = vadd.f32 %v4541, %v4894
      %v5035 = vadd.f32 %v4544, %v4897
      %v5036 = vadd.f32 %v4549, %v4902
      %v5037 = vadd.f32 %v4552, %v4905
      %v5038 = vadd.f32 %v4557, %v4910
      %v5039 = vadd.f32 %v4560, %v4913
      %v5040 = vadd.f32 %v4565, %v4918
      %v5041 = vadd.f32 %v4568, %v4921
      %v5042 = vadd.f32 %v4573, %v4926
      %v5043 = vadd.f32 %v4576, %v4929
      %v5044 = vadd.f32 %v4581, %v4934
      %v5045 = vadd.f32 %v4584, %v4937
      %v5046 = vadd.f32 %v4589, %v4942
      %v5047 = vadd.f32 %v4592, %v4945
      %v5048 = vadd.f32 %v4597, %v4950
      %v5049 = vadd.f32 %v4600, %v4953
      %v5050 = vadd.f32 %v4605, %v4958
      %v5051 = vadd.f32 %v4608, %v4961
      %v5052 = vadd.f32 %v4613, %v4966
      %v5053 = vadd.f32 %v4616, %v4969
      %v5054 = vadd.f32 %v4621, %v4974
      %v5055 = vadd.f32 %v4624, %v4977
      %v5056 = vadd.f32 %v4629, %v4982
      %v5057 = vadd.f32 %v4632, %v4985
      %v5058 = vadd.f32 %v4637, %v4990
      %v5059 = vadd.f32 %v4640, %v4993
      %v5060 = vld [vmem:[%s1 + $0xc8] sm:$0xf]
      %v5061 = vld [vmem:[%s1 + $0xcc] sm:$0xf]
      %v5062 = vld [vmem:[%s1 + $0xd0] sm:$0xf]
      %v5063 = vld [vmem:[%s1 + $0xd4] sm:$0xf]
      %v5064 = vld [vmem:[%s1 + $0xd8] sm:$0xf]
      %v5065 = vld [vmem:[%s1 + $0xdc] sm:$0xf]
      %v5066 = vld [vmem:[%s1 + $0xe0] sm:$0xf]
      %v5067 = vld [vmem:[%s1 + $0xe4] sm:$0xf]
      %v5068 = vld [vmem:[%s1 + $0xe8] sm:$0xf]
      %v5069 = vld [vmem:[%s1 + $0xec] sm:$0xf]
      %v5070 = vld [vmem:[%s1 + $0xf0] sm:$0xf]
      %v5071 = vld [vmem:[%s1 + $0xf4] sm:$0xf]
      %v5072 = vld [vmem:[%s1 + $0xf8] sm:$0xf]
      %v5073 = vld [vmem:[%s1 + $0xfc] sm:$0xf]
      %v5074 = vld [vmem:[%s1 + $0x100] sm:$0xf]
      %v5075 = vld [vmem:[%s1 + $0x104] sm:$0xf]
      %v5092 = vunpack.c.l.b16 %v5060
      %v5093 = vunpack.c.l.b16 %v5061
      %v5094 = vunpack.c.l.b16 %v5062
      %v5095 = vunpack.c.l.b16 %v5063
      %v5096 = vunpack.c.l.b16 %v5064
      %v5097 = vunpack.c.l.b16 %v5065
      %v5098 = vunpack.c.l.b16 %v5066
      %v5099 = vunpack.c.l.b16 %v5067
      %v5100 = vunpack.c.l.b16 %v5068
      %v5101 = vunpack.c.l.b16 %v5069
      %v5102 = vunpack.c.l.b16 %v5070
      %v5103 = vunpack.c.l.b16 %v5071
      %v5104 = vunpack.c.l.b16 %v5072
      %v5105 = vunpack.c.l.b16 %v5073
      %v5106 = vunpack.c.l.b16 %v5074
      %v5107 = vunpack.c.l.b16 %v5075
      %v5108 = vpack.c.b16 %v5093, %v5092
      %v5109 = vpack.c.b16 %v5095, %v5094
      %v5110 = vpack.c.b16 %v5097, %v5096
      %v5111 = vpack.c.b16 %v5099, %v5098
      %v5112 = vpack.c.b16 %v5101, %v5100
      %v5113 = vpack.c.b16 %v5103, %v5102
      %v5114 = vpack.c.b16 %v5105, %v5104
      %v5115 = vpack.c.b16 %v5107, %v5106
      %5124 = vmatprep.subr.bf16.mxu0 0
      %5125 = vmatpush1.bf16.msra.mxu0 %v5115
      %5126 = vmatprep.subr.bf16.mxu0 0
      %5127 = vmatpush1.bf16.msra.mxu0 %v5114
      %5128 = vmatprep.subr.bf16.mxu0 0
      %5129 = vmatpush1.bf16.msra.mxu0 %v5113
      %5130 = vmatprep.subr.bf16.mxu0 0
      %5131 = vmatpush1.bf16.msra.mxu0 %v5112
      %5132 = vmatprep.subr.bf16.mxu0 0
      %5133 = vmatpush1.bf16.msra.mxu0 %v5111
      %5134 = vmatprep.subr.bf16.mxu0 0
      %5135 = vmatpush1.bf16.msra.mxu0 %v5110
      %5136 = vmatprep.subr.bf16.mxu0 0
      %5137 = vmatpush1.bf16.msra.mxu0 %v5109
      %5138 = vmatprep.subr.bf16.mxu0 0
      %5139 = vmatpush1.bf16.msra.mxu0 %v5108
      %5140 = vmatprep.subr.bf16.mxu0 0
      %5141 = vmatpush2.bf16.msra.mxu0 0
      %5142 = vmatprep.subr.bf16.mxu0 0
      %5143 = vmatpush2.bf16.msra.mxu0 0
      %5144 = vmatprep.subr.bf16.mxu0 0
      %5145 = vmatpush2.bf16.msra.mxu0 0
      %5146 = vmatprep.subr.bf16.mxu0 0
      %5147 = vmatpush2.bf16.msra.mxu0 0
      %5148 = vmatprep.subr.bf16.mxu0 0
      %5149 = vmatpush2.bf16.msra.mxu0 0
      %5150 = vmatprep.subr.bf16.mxu0 0
      %5151 = vmatpush2.bf16.msra.mxu0 0
      %5152 = vmatprep.subr.bf16.mxu0 0
      %5153 = vmatpush2.bf16.msra.mxu0 0
      %5154 = vmatprep.subr.bf16.mxu0 0
      %5155 = vmatpush2.bf16.msra.mxu0 0
      %5156 = vmatprep.mubr.bf16.mxu0 0
      %5157 = vmatmul.mubr.bf16.gmra.mxu0 %v3905
      %v5158 = vpop.f32.mrf.mxu0
      %v5159 = vadd.f32 0.0, %v5158
      %v5160 = vpop.f32.mrf.mxu0
      %v5161 = vpop.f32.mrf.mxu0
      %v5162 = vadd.f32 0.0, %v5161
      %v5163 = vpop.f32.mrf.mxu0
      %5164 = vmatprep.mubr.bf16.mxu0 0
      %5165 = vmatmul.mubr.bf16.gmra.mxu0 %v3906
      %v5166 = vpop.f32.mrf.mxu0
      %v5167 = vadd.f32 0.0, %v5166
      %v5168 = vpop.f32.mrf.mxu0
      %v5169 = vpop.f32.mrf.mxu0
      %v5170 = vadd.f32 0.0, %v5169
      %v5171 = vpop.f32.mrf.mxu0
      %5172 = vmatprep.mubr.bf16.mxu0 0
      %5173 = vmatmul.mubr.bf16.gmra.mxu0 %v3907
      %v5174 = vpop.f32.mrf.mxu0
      %v5175 = vadd.f32 0.0, %v5174
      %v5176 = vpop.f32.mrf.mxu0
      %v5177 = vpop.f32.mrf.mxu0
      %v5178 = vadd.f32 0.0, %v5177
      %v5179 = vpop.f32.mrf.mxu0
      %5180 = vmatprep.mubr.bf16.mxu0 0
      %5181 = vmatmul.mubr.bf16.gmra.mxu0 %v3908
      %v5182 = vpop.f32.mrf.mxu0
      %v5183 = vadd.f32 0.0, %v5182
      %v5184 = vpop.f32.mrf.mxu0
      %v5185 = vpop.f32.mrf.mxu0
      %v5186 = vadd.f32 0.0, %v5185
      %v5187 = vpop.f32.mrf.mxu0
      %5188 = vmatprep.mubr.bf16.mxu0 0
      %5189 = vmatmul.mubr.bf16.gmra.mxu0 %v3909
      %v5190 = vpop.f32.mrf.mxu0
      %v5191 = vadd.f32 0.0, %v5190
      %v5192 = vpop.f32.mrf.mxu0
      %v5193 = vpop.f32.mrf.mxu0
      %v5194 = vadd.f32 0.0, %v5193
      %v5195 = vpop.f32.mrf.mxu0
      %5196 = vmatprep.mubr.bf16.mxu0 0
      %5197 = vmatmul.mubr.bf16.gmra.mxu0 %v3910
      %v5198 = vpop.f32.mrf.mxu0
      %v5199 = vadd.f32 0.0, %v5198
      %v5200 = vpop.f32.mrf.mxu0
      %v5201 = vpop.f32.mrf.mxu0
      %v5202 = vadd.f32 0.0, %v5201
      %v5203 = vpop.f32.mrf.mxu0
      %5204 = vmatprep.mubr.bf16.mxu0 0
      %5205 = vmatmul.mubr.bf16.gmra.mxu0 %v3911
      %v5206 = vpop.f32.mrf.mxu0
      %v5207 = vadd.f32 0.0, %v5206
      %v5208 = vpop.f32.mrf.mxu0
      %v5209 = vpop.f32.mrf.mxu0
      %v5210 = vadd.f32 0.0, %v5209
      %v5211 = vpop.f32.mrf.mxu0
      %5212 = vmatprep.mubr.bf16.mxu0 0
      %5213 = vmatmul.mubr.bf16.gmra.mxu0 %v3912
      %v5214 = vpop.f32.mrf.mxu0
      %v5215 = vadd.f32 0.0, %v5214
      %v5216 = vpop.f32.mrf.mxu0
      %v5217 = vpop.f32.mrf.mxu0
      %v5218 = vadd.f32 0.0, %v5217
      %v5219 = vpop.f32.mrf.mxu0
      %5220 = vmatprep.mubr.bf16.mxu0 0
      %5221 = vmatmul.mubr.bf16.gmra.mxu0 %v3913
      %v5222 = vpop.f32.mrf.mxu0
      %v5223 = vadd.f32 0.0, %v5222
      %v5224 = vpop.f32.mrf.mxu0
      %v5225 = vpop.f32.mrf.mxu0
      %v5226 = vadd.f32 0.0, %v5225
      %v5227 = vpop.f32.mrf.mxu0
      %5228 = vmatprep.mubr.bf16.mxu0 0
      %5229 = vmatmul.mubr.bf16.gmra.mxu0 %v3914
      %v5230 = vpop.f32.mrf.mxu0
      %v5231 = vadd.f32 0.0, %v5230
      %v5232 = vpop.f32.mrf.mxu0
      %v5233 = vpop.f32.mrf.mxu0
      %v5234 = vadd.f32 0.0, %v5233
      %v5235 = vpop.f32.mrf.mxu0
      %5236 = vmatprep.mubr.bf16.mxu0 0
      %5237 = vmatmul.mubr.bf16.gmra.mxu0 %v3915
      %v5238 = vpop.f32.mrf.mxu0
      %v5239 = vadd.f32 0.0, %v5238
      %v5240 = vpop.f32.mrf.mxu0
      %v5241 = vpop.f32.mrf.mxu0
      %v5242 = vadd.f32 0.0, %v5241
      %v5243 = vpop.f32.mrf.mxu0
      %5244 = vmatprep.mubr.bf16.mxu0 0
      %5245 = vmatmul.mubr.bf16.gmra.mxu0 %v3916
      %v5246 = vpop.f32.mrf.mxu0
      %v5247 = vadd.f32 0.0, %v5246
      %v5248 = vpop.f32.mrf.mxu0
      %v5249 = vpop.f32.mrf.mxu0
      %v5250 = vadd.f32 0.0, %v5249
      %v5251 = vpop.f32.mrf.mxu0
      %5252 = vmatprep.mubr.bf16.mxu0 0
      %5253 = vmatmul.mubr.bf16.gmra.mxu0 %v3917
      %v5254 = vpop.f32.mrf.mxu0
      %v5255 = vadd.f32 0.0, %v5254
      %v5256 = vpop.f32.mrf.mxu0
      %v5257 = vpop.f32.mrf.mxu0
      %v5258 = vadd.f32 0.0, %v5257
      %v5259 = vpop.f32.mrf.mxu0
      %5260 = vmatprep.mubr.bf16.mxu0 0
      %5261 = vmatmul.mubr.bf16.gmra.mxu0 %v3918
      %v5262 = vpop.f32.mrf.mxu0
      %v5263 = vadd.f32 0.0, %v5262
      %v5264 = vpop.f32.mrf.mxu0
      %v5265 = vpop.f32.mrf.mxu0
      %v5266 = vadd.f32 0.0, %v5265
      %v5267 = vpop.f32.mrf.mxu0
      %5268 = vmatprep.mubr.bf16.mxu0 0
      %5269 = vmatmul.mubr.bf16.gmra.mxu0 %v3919
      %v5270 = vpop.f32.mrf.mxu0
      %v5271 = vadd.f32 0.0, %v5270
      %v5272 = vpop.f32.mrf.mxu0
      %v5273 = vpop.f32.mrf.mxu0
      %v5274 = vadd.f32 0.0, %v5273
      %v5275 = vpop.f32.mrf.mxu0
      %5276 = vmatprep.mubr.bf16.mxu0 0
      %5277 = vmatmul.mubr.bf16.gmra.mxu0 %v3920
      %v5278 = vpop.f32.mrf.mxu0
      %v5279 = vadd.f32 0.0, %v5278
      %v5280 = vpop.f32.mrf.mxu0
      %v5281 = vpop.f32.mrf.mxu0
      %v5282 = vadd.f32 0.0, %v5281
      %v5283 = vpop.f32.mrf.mxu0
      %5284 = vmatprep.mubr.bf16.mxu0 0
      %5285 = vmatmul.mubr.bf16.gmra.mxu0 %v3921
      %v5286 = vpop.f32.mrf.mxu0
      %v5287 = vadd.f32 0.0, %v5286
      %v5288 = vpop.f32.mrf.mxu0
      %v5289 = vpop.f32.mrf.mxu0
      %v5290 = vadd.f32 0.0, %v5289
      %v5291 = vpop.f32.mrf.mxu0
      %5292 = vmatprep.mubr.bf16.mxu0 0
      %5293 = vmatmul.mubr.bf16.gmra.mxu0 %v3922
      %v5294 = vpop.f32.mrf.mxu0
      %v5295 = vadd.f32 0.0, %v5294
      %v5296 = vpop.f32.mrf.mxu0
      %v5297 = vpop.f32.mrf.mxu0
      %v5298 = vadd.f32 0.0, %v5297
      %v5299 = vpop.f32.mrf.mxu0
      %5300 = vmatprep.mubr.bf16.mxu0 0
      %5301 = vmatmul.mubr.bf16.gmra.mxu0 %v3923
      %v5302 = vpop.f32.mrf.mxu0
      %v5303 = vadd.f32 0.0, %v5302
      %v5304 = vpop.f32.mrf.mxu0
      %v5305 = vpop.f32.mrf.mxu0
      %v5306 = vadd.f32 0.0, %v5305
      %v5307 = vpop.f32.mrf.mxu0
      %5308 = vmatprep.mubr.bf16.mxu0 0
      %5309 = vmatmul.mubr.bf16.gmra.mxu0 %v3924
      %v5310 = vpop.f32.mrf.mxu0
      %v5311 = vadd.f32 0.0, %v5310
      %v5312 = vpop.f32.mrf.mxu0
      %v5313 = vpop.f32.mrf.mxu0
      %v5314 = vadd.f32 0.0, %v5313
      %v5315 = vpop.f32.mrf.mxu0
      %5316 = vmatprep.mubr.bf16.mxu0 0
      %5317 = vmatmul.mubr.bf16.gmra.mxu0 %v3925
      %v5318 = vpop.f32.mrf.mxu0
      %v5319 = vadd.f32 0.0, %v5318
      %v5320 = vpop.f32.mrf.mxu0
      %v5321 = vpop.f32.mrf.mxu0
      %v5322 = vadd.f32 0.0, %v5321
      %v5323 = vpop.f32.mrf.mxu0
      %5324 = vmatprep.mubr.bf16.mxu0 0
      %5325 = vmatmul.mubr.bf16.gmra.mxu0 %v3926
      %v5326 = vpop.f32.mrf.mxu0
      %v5327 = vadd.f32 0.0, %v5326
      %v5328 = vpop.f32.mrf.mxu0
      %v5329 = vpop.f32.mrf.mxu0
      %v5330 = vadd.f32 0.0, %v5329
      %v5331 = vpop.f32.mrf.mxu0
      %5332 = vmatprep.mubr.bf16.mxu0 0
      %5333 = vmatmul.mubr.bf16.gmra.mxu0 %v3927
      %v5334 = vpop.f32.mrf.mxu0
      %v5335 = vadd.f32 0.0, %v5334
      %v5336 = vpop.f32.mrf.mxu0
      %v5337 = vpop.f32.mrf.mxu0
      %v5338 = vadd.f32 0.0, %v5337
      %v5339 = vpop.f32.mrf.mxu0
      %5340 = vmatprep.mubr.bf16.mxu0 0
      %5341 = vmatmul.mubr.bf16.gmra.mxu0 %v3928
      %v5342 = vpop.f32.mrf.mxu0
      %v5343 = vadd.f32 0.0, %v5342
      %v5344 = vpop.f32.mrf.mxu0
      %v5345 = vpop.f32.mrf.mxu0
      %v5346 = vadd.f32 0.0, %v5345
      %v5347 = vpop.f32.mrf.mxu0
      %5348 = vmatprep.mubr.bf16.mxu0 0
      %5349 = vmatmul.mubr.bf16.gmra.mxu0 %v3929
      %v5350 = vpop.f32.mrf.mxu0
      %v5351 = vadd.f32 0.0, %v5350
      %v5352 = vpop.f32.mrf.mxu0
      %v5353 = vpop.f32.mrf.mxu0
      %v5354 = vadd.f32 0.0, %v5353
      %v5355 = vpop.f32.mrf.mxu0
      %5356 = vmatprep.mubr.bf16.mxu0 0
      %5357 = vmatmul.mubr.bf16.gmra.mxu0 %v3930
      %v5358 = vpop.f32.mrf.mxu0
      %v5359 = vadd.f32 0.0, %v5358
      %v5360 = vpop.f32.mrf.mxu0
      %v5361 = vpop.f32.mrf.mxu0
      %v5362 = vadd.f32 0.0, %v5361
      %v5363 = vpop.f32.mrf.mxu0
      %5364 = vmatprep.mubr.bf16.mxu0 0
      %5365 = vmatmul.mubr.bf16.gmra.mxu0 %v3931
      %v5366 = vpop.f32.mrf.mxu0
      %v5367 = vadd.f32 0.0, %v5366
      %v5368 = vpop.f32.mrf.mxu0
      %v5369 = vpop.f32.mrf.mxu0
      %v5370 = vadd.f32 0.0, %v5369
      %v5371 = vpop.f32.mrf.mxu0
      %5372 = vmatprep.mubr.bf16.mxu0 0
      %5373 = vmatmul.mubr.bf16.gmra.mxu0 %v3932
      %v5374 = vpop.f32.mrf.mxu0
      %v5375 = vadd.f32 0.0, %v5374
      %v5376 = vpop.f32.mrf.mxu0
      %v5377 = vpop.f32.mrf.mxu0
      %v5378 = vadd.f32 0.0, %v5377
      %v5379 = vpop.f32.mrf.mxu0
      %5380 = vmatprep.mubr.bf16.mxu0 0
      %5381 = vmatmul.mubr.bf16.gmra.mxu0 %v3933
      %v5382 = vpop.f32.mrf.mxu0
      %v5383 = vadd.f32 0.0, %v5382
      %v5384 = vpop.f32.mrf.mxu0
      %v5385 = vpop.f32.mrf.mxu0
      %v5386 = vadd.f32 0.0, %v5385
      %v5387 = vpop.f32.mrf.mxu0
      %5388 = vmatprep.mubr.bf16.mxu0 0
      %5389 = vmatmul.mubr.bf16.gmra.mxu0 %v3934
      %v5390 = vpop.f32.mrf.mxu0
      %v5391 = vadd.f32 0.0, %v5390
      %v5392 = vpop.f32.mrf.mxu0
      %v5393 = vpop.f32.mrf.mxu0
      %v5394 = vadd.f32 0.0, %v5393
      %v5395 = vpop.f32.mrf.mxu0
      %5396 = vmatprep.mubr.bf16.mxu0 0
      %5397 = vmatmul.mubr.bf16.gmra.mxu0 %v3935
      %v5398 = vpop.f32.mrf.mxu0
      %v5399 = vadd.f32 0.0, %v5398
      %v5400 = vpop.f32.mrf.mxu0
      %v5401 = vpop.f32.mrf.mxu0
      %v5402 = vadd.f32 0.0, %v5401
      %v5403 = vpop.f32.mrf.mxu0
      %5404 = vmatprep.mubr.bf16.mxu0 0
      %5405 = vmatmul.mubr.bf16.gmra.mxu0 %v3936
      %v5406 = vpop.f32.mrf.mxu0
      %v5407 = vadd.f32 0.0, %v5406
      %v5408 = vpop.f32.mrf.mxu0
      %v5409 = vpop.f32.mrf.mxu0
      %v5410 = vadd.f32 0.0, %v5409
      %v5411 = vpop.f32.mrf.mxu0
      %5412 = vdwg.mxu0
      %v5413 = vadd.f32 %v4996, %v5159
      %v5414 = vadd.f32 %v4997, %v5162
      %v5415 = vadd.f32 %v4998, %v5167
      %v5416 = vadd.f32 %v4999, %v5170
      %v5417 = vadd.f32 %v5000, %v5175
      %v5418 = vadd.f32 %v5001, %v5178
      %v5419 = vadd.f32 %v5002, %v5183
      %v5420 = vadd.f32 %v5003, %v5186
      %v5421 = vadd.f32 %v5004, %v5191
      %v5422 = vadd.f32 %v5005, %v5194
      %v5423 = vadd.f32 %v5006, %v5199
      %v5424 = vadd.f32 %v5007, %v5202
      %v5425 = vadd.f32 %v5008, %v5207
      %v5426 = vadd.f32 %v5009, %v5210
      %v5427 = vadd.f32 %v5010, %v5215
      %v5428 = vadd.f32 %v5011, %v5218
      %v5429 = vadd.f32 %v5012, %v5223
      %v5430 = vadd.f32 %v5013, %v5226
      %v5431 = vadd.f32 %v5014, %v5231
      %v5432 = vadd.f32 %v5015, %v5234
      %v5433 = vadd.f32 %v5016, %v5239
      %v5434 = vadd.f32 %v5017, %v5242
      %v5435 = vadd.f32 %v5018, %v5247
      %v5436 = vadd.f32 %v5019, %v5250
      %v5437 = vadd.f32 %v5020, %v5255
      %v5438 = vadd.f32 %v5021, %v5258
      %v5439 = vadd.f32 %v5022, %v5263
      %v5440 = vadd.f32 %v5023, %v5266
      %v5441 = vadd.f32 %v5024, %v5271
      %v5442 = vadd.f32 %v5025, %v5274
      %v5443 = vadd.f32 %v5026, %v5279
      %v5444 = vadd.f32 %v5027, %v5282
      %v5445 = vadd.f32 %v5028, %v5287
      %v5446 = vadd.f32 %v5029, %v5290
      %v5447 = vadd.f32 %v5030, %v5295
      %v5448 = vadd.f32 %v5031, %v5298
      %v5449 = vadd.f32 %v5032, %v5303
      %v5450 = vadd.f32 %v5033, %v5306
      %v5451 = vadd.f32 %v5034, %v5311
      %v5452 = vadd.f32 %v5035, %v5314
      %v5453 = vadd.f32 %v5036, %v5319
      %v5454 = vadd.f32 %v5037, %v5322
      %v5455 = vadd.f32 %v5038, %v5327
      %v5456 = vadd.f32 %v5039, %v5330
      %v5457 = vadd.f32 %v5040, %v5335
      %v5458 = vadd.f32 %v5041, %v5338
      %v5459 = vadd.f32 %v5042, %v5343
      %v5460 = vadd.f32 %v5043, %v5346
      %v5461 = vadd.f32 %v5044, %v5351
      %v5462 = vadd.f32 %v5045, %v5354
      %v5463 = vadd.f32 %v5046, %v5359
      %v5464 = vadd.f32 %v5047, %v5362
      %v5465 = vadd.f32 %v5048, %v5367
      %v5466 = vadd.f32 %v5049, %v5370
      %v5467 = vadd.f32 %v5050, %v5375
      %v5468 = vadd.f32 %v5051, %v5378
      %v5469 = vadd.f32 %v5052, %v5383
      %v5470 = vadd.f32 %v5053, %v5386
      %v5471 = vadd.f32 %v5054, %v5391
      %v5472 = vadd.f32 %v5055, %v5394
      %v5473 = vadd.f32 %v5056, %v5399
      %v5474 = vadd.f32 %v5057, %v5402
      %v5475 = vadd.f32 %v5058, %v5407
      %v5476 = vadd.f32 %v5059, %v5410
      %v5477 = vld [vmem:[%s2 + $0x1] sm:$0x1]
      %v5478 = vlaneseq
      %v5479 = vshrl.u32 %v5478, 7
      %v5480 = vsub.s32 0, %v5479
      %v5481 = vrot.slane %v5477, %v5480
      %v5482 = vadd.f32 %v5413, %v5481
      %v5483 = vadd.f32 %v5414, %v5481
      %v5484 = vadd.f32 %v5415, %v5481
      %v5485 = vadd.f32 %v5416, %v5481
      %v5486 = vadd.f32 %v5417, %v5481
      %v5487 = vadd.f32 %v5418, %v5481
      %v5488 = vadd.f32 %v5419, %v5481
      %v5489 = vadd.f32 %v5420, %v5481
      %v5490 = vadd.f32 %v5421, %v5481
      %v5491 = vadd.f32 %v5422, %v5481
      %v5492 = vadd.f32 %v5423, %v5481
      %v5493 = vadd.f32 %v5424, %v5481
      %v5494 = vadd.f32 %v5425, %v5481
      %v5495 = vadd.f32 %v5426, %v5481
      %v5496 = vadd.f32 %v5427, %v5481
      %v5497 = vadd.f32 %v5428, %v5481
      %v5498 = vadd.f32 %v5429, %v5481
      %v5499 = vadd.f32 %v5430, %v5481
      %v5500 = vadd.f32 %v5431, %v5481
      %v5501 = vadd.f32 %v5432, %v5481
      %v5502 = vadd.f32 %v5433, %v5481
      %v5503 = vadd.f32 %v5434, %v5481
      %v5504 = vadd.f32 %v5435, %v5481
      %v5505 = vadd.f32 %v5436, %v5481
      %v5506 = vadd.f32 %v5437, %v5481
      %v5507 = vadd.f32 %v5438, %v5481
      %v5508 = vadd.f32 %v5439, %v5481
      %v5509 = vadd.f32 %v5440, %v5481
      %v5510 = vadd.f32 %v5441, %v5481
      %v5511 = vadd.f32 %v5442, %v5481
      %v5512 = vadd.f32 %v5443, %v5481
      %v5513 = vadd.f32 %v5444, %v5481
      %v5514 = vadd.f32 %v5445, %v5481
      %v5515 = vadd.f32 %v5446, %v5481
      %v5516 = vadd.f32 %v5447, %v5481
      %v5517 = vadd.f32 %v5448, %v5481
      %v5518 = vadd.f32 %v5449, %v5481
      %v5519 = vadd.f32 %v5450, %v5481
      %v5520 = vadd.f32 %v5451, %v5481
      %v5521 = vadd.f32 %v5452, %v5481
      %v5522 = vadd.f32 %v5453, %v5481
      %v5523 = vadd.f32 %v5454, %v5481
      %v5524 = vadd.f32 %v5455, %v5481
      %v5525 = vadd.f32 %v5456, %v5481
      %v5526 = vadd.f32 %v5457, %v5481
      %v5527 = vadd.f32 %v5458, %v5481
      %v5528 = vadd.f32 %v5459, %v5481
      %v5529 = vadd.f32 %v5460, %v5481
      %v5530 = vadd.f32 %v5461, %v5481
      %v5531 = vadd.f32 %v5462, %v5481
      %v5532 = vadd.f32 %v5463, %v5481
      %v5533 = vadd.f32 %v5464, %v5481
      %v5534 = vadd.f32 %v5465, %v5481
      %v5535 = vadd.f32 %v5466, %v5481
      %v5536 = vadd.f32 %v5467, %v5481
      %v5537 = vadd.f32 %v5468, %v5481
      %v5538 = vadd.f32 %v5469, %v5481
      %v5539 = vadd.f32 %v5470, %v5481
      %v5540 = vadd.f32 %v5471, %v5481
      %v5541 = vadd.f32 %v5472, %v5481
      %v5542 = vadd.f32 %v5473, %v5481
      %v5543 = vadd.f32 %v5474, %v5481
      %v5544 = vadd.f32 %v5475, %v5481
      %v5545 = vadd.f32 %v5476, %v5481
      %v5546 = vmul.f32 %v5482, 0.5
      %v5547 = vmul.f32 %v5483, 0.5
      %v5548 = vmul.f32 %v5484, 0.5
      %v5549 = vmul.f32 %v5485, 0.5
      %v5550 = vmul.f32 %v5486, 0.5
      %v5551 = vmul.f32 %v5487, 0.5
      %v5552 = vmul.f32 %v5488, 0.5
      %v5553 = vmul.f32 %v5489, 0.5
      %v5554 = vmul.f32 %v5490, 0.5
      %v5555 = vmul.f32 %v5491, 0.5
      %v5556 = vmul.f32 %v5492, 0.5
      %v5557 = vmul.f32 %v5493, 0.5
      %v5558 = vmul.f32 %v5494, 0.5
      %v5559 = vmul.f32 %v5495, 0.5
      %v5560 = vmul.f32 %v5496, 0.5
      %v5561 = vmul.f32 %v5497, 0.5
      %v5562 = vmul.f32 %v5498, 0.5
      %v5563 = vmul.f32 %v5499, 0.5
      %v5564 = vmul.f32 %v5500, 0.5
      %v5565 = vmul.f32 %v5501, 0.5
      %v5566 = vmul.f32 %v5502, 0.5
      %v5567 = vmul.f32 %v5503, 0.5
      %v5568 = vmul.f32 %v5504, 0.5
      %v5569 = vmul.f32 %v5505, 0.5
      %v5570 = vmul.f32 %v5506, 0.5
      %v5571 = vmul.f32 %v5507, 0.5
      %v5572 = vmul.f32 %v5508, 0.5
      %v5573 = vmul.f32 %v5509, 0.5
      %v5574 = vmul.f32 %v5510, 0.5
      %v5575 = vmul.f32 %v5511, 0.5
      %v5576 = vmul.f32 %v5512, 0.5
      %v5577 = vmul.f32 %v5513, 0.5
      %v5578 = vmul.f32 %v5514, 0.5
      %v5579 = vmul.f32 %v5515, 0.5
      %v5580 = vmul.f32 %v5516, 0.5
      %v5581 = vmul.f32 %v5517, 0.5
      %v5582 = vmul.f32 %v5518, 0.5
      %v5583 = vmul.f32 %v5519, 0.5
      %v5584 = vmul.f32 %v5520, 0.5
      %v5585 = vmul.f32 %v5521, 0.5
      %v5586 = vmul.f32 %v5522, 0.5
      %v5587 = vmul.f32 %v5523, 0.5
      %v5588 = vmul.f32 %v5524, 0.5
      %v5589 = vmul.f32 %v5525, 0.5
      %v5590 = vmul.f32 %v5526, 0.5
      %v5591 = vmul.f32 %v5527, 0.5
      %v5592 = vmul.f32 %v5528, 0.5
      %v5593 = vmul.f32 %v5529, 0.5
      %v5594 = vmul.f32 %v5530, 0.5
      %v5595 = vmul.f32 %v5531, 0.5
      %v5596 = vmul.f32 %v5532, 0.5
      %v5597 = vmul.f32 %v5533, 0.5
      %v5598 = vmul.f32 %v5534, 0.5
      %v5599 = vmul.f32 %v5535, 0.5
      %v5600 = vmul.f32 %v5536, 0.5
      %v5601 = vmul.f32 %v5537, 0.5
      %v5602 = vmul.f32 %v5538, 0.5
      %v5603 = vmul.f32 %v5539, 0.5
      %v5604 = vmul.f32 %v5540, 0.5
      %v5605 = vmul.f32 %v5541, 0.5
      %v5606 = vmul.f32 %v5542, 0.5
      %v5607 = vmul.f32 %v5543, 0.5
      %v5608 = vmul.f32 %v5544, 0.5
      %v5609 = vmul.f32 %v5545, 0.5
      %v5610 = vtanh.pop %v5546
      %v5611 = vtanh.pop %v5547
      %v5612 = vtanh.pop %v5548
      %v5613 = vtanh.pop %v5549
      %v5614 = vtanh.pop %v5550
      %v5615 = vtanh.pop %v5551
      %v5616 = vtanh.pop %v5552
      %v5617 = vtanh.pop %v5553
      %v5618 = vtanh.pop %v5554
      %v5619 = vtanh.pop %v5555
      %v5620 = vtanh.pop %v5556
      %v5621 = vtanh.pop %v5557
      %v5622 = vtanh.pop %v5558
      %v5623 = vtanh.pop %v5559
      %v5624 = vtanh.pop %v5560
      %v5625 = vtanh.pop %v5561
      %v5626 = vtanh.pop %v5562
      %v5627 = vtanh.pop %v5563
      %v5628 = vtanh.pop %v5564
      %v5629 = vtanh.pop %v5565
      %v5630 = vtanh.pop %v5566
      %v5631 = vtanh.pop %v5567
      %v5632 = vtanh.pop %v5568
      %v5633 = vtanh.pop %v5569
      %v5634 = vtanh.pop %v5570
      %v5635 = vtanh.pop %v5571
      %v5636 = vtanh.pop %v5572
      %v5637 = vtanh.pop %v5573
      %v5638 = vtanh.pop %v5574
      %v5639 = vtanh.pop %v5575
      %v5640 = vtanh.pop %v5576
      %v5641 = vtanh.pop %v5577
      %v5642 = vtanh.pop %v5578
      %v5643 = vtanh.pop %v5579
      %v5644 = vtanh.pop %v5580
      %v5645 = vtanh.pop %v5581
      %v5646 = vtanh.pop %v5582
      %v5647 = vtanh.pop %v5583
      %v5648 = vtanh.pop %v5584
      %v5649 = vtanh.pop %v5585
      %v5650 = vtanh.pop %v5586
      %v5651 = vtanh.pop %v5587
      %v5652 = vtanh.pop %v5588
      %v5653 = vtanh.pop %v5589
      %v5654 = vtanh.pop %v5590
      %v5655 = vtanh.pop %v5591
      %v5656 = vtanh.pop %v5592
      %v5657 = vtanh.pop %v5593
      %v5658 = vtanh.pop %v5594
      %v5659 = vtanh.pop %v5595
      %v5660 = vtanh.pop %v5596
      %v5661 = vtanh.pop %v5597
      %v5662 = vtanh.pop %v5598
      %v5663 = vtanh.pop %v5599
      %v5664 = vtanh.pop %v5600
      %v5665 = vtanh.pop %v5601
      %v5666 = vtanh.pop %v5602
      %v5667 = vtanh.pop %v5603
      %v5668 = vtanh.pop %v5604
      %v5669 = vtanh.pop %v5605
      %v5670 = vtanh.pop %v5606
      %v5671 = vtanh.pop %v5607
      %v5672 = vtanh.pop %v5608
      %v5673 = vtanh.pop %v5609
      %v5674 = vmul.f32 %v5610, 0.5
      %v5675 = vmul.f32 %v5611, 0.5
      %v5676 = vmul.f32 %v5612, 0.5
      %v5677 = vmul.f32 %v5613, 0.5
      %v5678 = vmul.f32 %v5614, 0.5
      %v5679 = vmul.f32 %v5615, 0.5
      %v5680 = vmul.f32 %v5616, 0.5
      %v5681 = vmul.f32 %v5617, 0.5
      %v5682 = vmul.f32 %v5618, 0.5
      %v5683 = vmul.f32 %v5619, 0.5
      %v5684 = vmul.f32 %v5620, 0.5
      %v5685 = vmul.f32 %v5621, 0.5
      %v5686 = vmul.f32 %v5622, 0.5
      %v5687 = vmul.f32 %v5623, 0.5
      %v5688 = vmul.f32 %v5624, 0.5
      %v5689 = vmul.f32 %v5625, 0.5
      %v5690 = vmul.f32 %v5626, 0.5
      %v5691 = vmul.f32 %v5627, 0.5
      %v5692 = vmul.f32 %v5628, 0.5
      %v5693 = vmul.f32 %v5629, 0.5
      %v5694 = vmul.f32 %v5630, 0.5
      %v5695 = vmul.f32 %v5631, 0.5
      %v5696 = vmul.f32 %v5632, 0.5
      %v5697 = vmul.f32 %v5633, 0.5
      %v5698 = vmul.f32 %v5634, 0.5
      %v5699 = vmul.f32 %v5635, 0.5
      %v5700 = vmul.f32 %v5636, 0.5
      %v5701 = vmul.f32 %v5637, 0.5
      %v5702 = vmul.f32 %v5638, 0.5
      %v5703 = vmul.f32 %v5639, 0.5
      %v5704 = vmul.f32 %v5640, 0.5
      %v5705 = vmul.f32 %v5641, 0.5
      %v5706 = vmul.f32 %v5642, 0.5
      %v5707 = vmul.f32 %v5643, 0.5
      %v5708 = vmul.f32 %v5644, 0.5
      %v5709 = vmul.f32 %v5645, 0.5
      %v5710 = vmul.f32 %v5646, 0.5
      %v5711 = vmul.f32 %v5647, 0.5
      %v5712 = vmul.f32 %v5648, 0.5
      %v5713 = vmul.f32 %v5649, 0.5
      %v5714 = vmul.f32 %v5650, 0.5
      %v5715 = vmul.f32 %v5651, 0.5
      %v5716 = vmul.f32 %v5652, 0.5
      %v5717 = vmul.f32 %v5653, 0.5
      %v5718 = vmul.f32 %v5654, 0.5
      %v5719 = vmul.f32 %v5655, 0.5
      %v5720 = vmul.f32 %v5656, 0.5
      %v5721 = vmul.f32 %v5657, 0.5
      %v5722 = vmul.f32 %v5658, 0.5
      %v5723 = vmul.f32 %v5659, 0.5
      %v5724 = vmul.f32 %v5660, 0.5
      %v5725 = vmul.f32 %v5661, 0.5
      %v5726 = vmul.f32 %v5662, 0.5
      %v5727 = vmul.f32 %v5663, 0.5
      %v5728 = vmul.f32 %v5664, 0.5
      %v5729 = vmul.f32 %v5665, 0.5
      %v5730 = vmul.f32 %v5666, 0.5
      %v5731 = vmul.f32 %v5667, 0.5
      %v5732 = vmul.f32 %v5668, 0.5
      %v5733 = vmul.f32 %v5669, 0.5
      %v5734 = vmul.f32 %v5670, 0.5
      %v5735 = vmul.f32 %v5671, 0.5
      %v5736 = vmul.f32 %v5672, 0.5
      %v5737 = vmul.f32 %v5673, 0.5
      %v5738 = vadd.f32 %v5674, 0.5
      %v5739 = vadd.f32 %v5675, 0.5
      %v5740 = vadd.f32 %v5676, 0.5
      %v5741 = vadd.f32 %v5677, 0.5
      %v5742 = vadd.f32 %v5678, 0.5
      %v5743 = vadd.f32 %v5679, 0.5
      %v5744 = vadd.f32 %v5680, 0.5
      %v5745 = vadd.f32 %v5681, 0.5
      %v5746 = vadd.f32 %v5682, 0.5
      %v5747 = vadd.f32 %v5683, 0.5
      %v5748 = vadd.f32 %v5684, 0.5
      %v5749 = vadd.f32 %v5685, 0.5
      %v5750 = vadd.f32 %v5686, 0.5
      %v5751 = vadd.f32 %v5687, 0.5
      %v5752 = vadd.f32 %v5688, 0.5
      %v5753 = vadd.f32 %v5689, 0.5
      %v5754 = vadd.f32 %v5690, 0.5
      %v5755 = vadd.f32 %v5691, 0.5
      %v5756 = vadd.f32 %v5692, 0.5
      %v5757 = vadd.f32 %v5693, 0.5
      %v5758 = vadd.f32 %v5694, 0.5
      %v5759 = vadd.f32 %v5695, 0.5
      %v5760 = vadd.f32 %v5696, 0.5
      %v5761 = vadd.f32 %v5697, 0.5
      %v5762 = vadd.f32 %v5698, 0.5
      %v5763 = vadd.f32 %v5699, 0.5
      %v5764 = vadd.f32 %v5700, 0.5
      %v5765 = vadd.f32 %v5701, 0.5
      %v5766 = vadd.f32 %v5702, 0.5
      %v5767 = vadd.f32 %v5703, 0.5
      %v5768 = vadd.f32 %v5704, 0.5
      %v5769 = vadd.f32 %v5705, 0.5
      %v5770 = vadd.f32 %v5706, 0.5
      %v5771 = vadd.f32 %v5707, 0.5
      %v5772 = vadd.f32 %v5708, 0.5
      %v5773 = vadd.f32 %v5709, 0.5
      %v5774 = vadd.f32 %v5710, 0.5
      %v5775 = vadd.f32 %v5711, 0.5
      %v5776 = vadd.f32 %v5712, 0.5
      %v5777 = vadd.f32 %v5713, 0.5
      %v5778 = vadd.f32 %v5714, 0.5
      %v5779 = vadd.f32 %v5715, 0.5
      %v5780 = vadd.f32 %v5716, 0.5
      %v5781 = vadd.f32 %v5717, 0.5
      %v5782 = vadd.f32 %v5718, 0.5
      %v5783 = vadd.f32 %v5719, 0.5
      %v5784 = vadd.f32 %v5720, 0.5
      %v5785 = vadd.f32 %v5721, 0.5
      %v5786 = vadd.f32 %v5722, 0.5
      %v5787 = vadd.f32 %v5723, 0.5
      %v5788 = vadd.f32 %v5724, 0.5
      %v5789 = vadd.f32 %v5725, 0.5
      %v5790 = vadd.f32 %v5726, 0.5
      %v5791 = vadd.f32 %v5727, 0.5
      %v5792 = vadd.f32 %v5728, 0.5
      %v5793 = vadd.f32 %v5729, 0.5
      %v5794 = vadd.f32 %v5730, 0.5
      %v5795 = vadd.f32 %v5731, 0.5
      %v5796 = vadd.f32 %v5732, 0.5
      %v5797 = vadd.f32 %v5733, 0.5
      %v5798 = vadd.f32 %v5734, 0.5
      %v5799 = vadd.f32 %v5735, 0.5
      %v5800 = vadd.f32 %v5736, 0.5
      %v5801 = vadd.f32 %v5737, 0.5
      %v5802 = vmul.f32 %v5482, %v5738
      %v5803 = vmul.f32 %v5483, %v5739
      %v5804 = vmul.f32 %v5484, %v5740
      %v5805 = vmul.f32 %v5485, %v5741
      %v5806 = vmul.f32 %v5486, %v5742
      %v5807 = vmul.f32 %v5487, %v5743
      %v5808 = vmul.f32 %v5488, %v5744
      %v5809 = vmul.f32 %v5489, %v5745
      %v5810 = vmul.f32 %v5490, %v5746
      %v5811 = vmul.f32 %v5491, %v5747
      %v5812 = vmul.f32 %v5492, %v5748
      %v5813 = vmul.f32 %v5493, %v5749
      %v5814 = vmul.f32 %v5494, %v5750
      %v5815 = vmul.f32 %v5495, %v5751
      %v5816 = vmul.f32 %v5496, %v5752
      %v5817 = vmul.f32 %v5497, %v5753
      %v5818 = vmul.f32 %v5498, %v5754
      %v5819 = vmul.f32 %v5499, %v5755
      %v5820 = vmul.f32 %v5500, %v5756
      %v5821 = vmul.f32 %v5501, %v5757
      %v5822 = vmul.f32 %v5502, %v5758
      %v5823 = vmul.f32 %v5503, %v5759
      %v5824 = vmul.f32 %v5504, %v5760
      %v5825 = vmul.f32 %v5505, %v5761
      %v5826 = vmul.f32 %v5506, %v5762
      %v5827 = vmul.f32 %v5507, %v5763
      %v5828 = vmul.f32 %v5508, %v5764
      %v5829 = vmul.f32 %v5509, %v5765
      %v5830 = vmul.f32 %v5510, %v5766
      %v5831 = vmul.f32 %v5511, %v5767
      %v5832 = vmul.f32 %v5512, %v5768
      %v5833 = vmul.f32 %v5513, %v5769
      %v5834 = vmul.f32 %v5514, %v5770
      %v5835 = vmul.f32 %v5515, %v5771
      %v5836 = vmul.f32 %v5516, %v5772
      %v5837 = vmul.f32 %v5517, %v5773
      %v5838 = vmul.f32 %v5518, %v5774
      %v5839 = vmul.f32 %v5519, %v5775
      %v5840 = vmul.f32 %v5520, %v5776
      %v5841 = vmul.f32 %v5521, %v5777
      %v5842 = vmul.f32 %v5522, %v5778
      %v5843 = vmul.f32 %v5523, %v5779
      %v5844 = vmul.f32 %v5524, %v5780
      %v5845 = vmul.f32 %v5525, %v5781
      %v5846 = vmul.f32 %v5526, %v5782
      %v5847 = vmul.f32 %v5527, %v5783
      %v5848 = vmul.f32 %v5528, %v5784
      %v5849 = vmul.f32 %v5529, %v5785
      %v5850 = vmul.f32 %v5530, %v5786
      %v5851 = vmul.f32 %v5531, %v5787
      %v5852 = vmul.f32 %v5532, %v5788
      %v5853 = vmul.f32 %v5533, %v5789
      %v5854 = vmul.f32 %v5534, %v5790
      %v5855 = vmul.f32 %v5535, %v5791
      %v5856 = vmul.f32 %v5536, %v5792
      %v5857 = vmul.f32 %v5537, %v5793
      %v5858 = vmul.f32 %v5538, %v5794
      %v5859 = vmul.f32 %v5539, %v5795
      %v5860 = vmul.f32 %v5540, %v5796
      %v5861 = vmul.f32 %v5541, %v5797
      %v5862 = vmul.f32 %v5542, %v5798
      %v5863 = vmul.f32 %v5543, %v5799
      %v5864 = vmul.f32 %v5544, %v5800
      %v5865 = vmul.f32 %v5545, %v5801
      %v5866 = vpack.c.bf16 %v5803, %v5802
      %v5867 = vpack.c.bf16 %v5805, %v5804
      %v5868 = vpack.c.bf16 %v5807, %v5806
      %v5869 = vpack.c.bf16 %v5809, %v5808
      %v5870 = vpack.c.bf16 %v5811, %v5810
      %v5871 = vpack.c.bf16 %v5813, %v5812
      %v5872 = vpack.c.bf16 %v5815, %v5814
      %v5873 = vpack.c.bf16 %v5817, %v5816
      %v5874 = vpack.c.bf16 %v5819, %v5818
      %v5875 = vpack.c.bf16 %v5821, %v5820
      %v5876 = vpack.c.bf16 %v5823, %v5822
      %v5877 = vpack.c.bf16 %v5825, %v5824
      %v5878 = vpack.c.bf16 %v5827, %v5826
      %v5879 = vpack.c.bf16 %v5829, %v5828
      %v5880 = vpack.c.bf16 %v5831, %v5830
      %v5881 = vpack.c.bf16 %v5833, %v5832
      %v5882 = vpack.c.bf16 %v5835, %v5834
      %v5883 = vpack.c.bf16 %v5837, %v5836
      %v5884 = vpack.c.bf16 %v5839, %v5838
      %v5885 = vpack.c.bf16 %v5841, %v5840
      %v5886 = vpack.c.bf16 %v5843, %v5842
      %v5887 = vpack.c.bf16 %v5845, %v5844
      %v5888 = vpack.c.bf16 %v5847, %v5846
      %v5889 = vpack.c.bf16 %v5849, %v5848
      %v5890 = vpack.c.bf16 %v5851, %v5850
      %v5891 = vpack.c.bf16 %v5853, %v5852
      %v5892 = vpack.c.bf16 %v5855, %v5854
      %v5893 = vpack.c.bf16 %v5857, %v5856
      %v5894 = vpack.c.bf16 %v5859, %v5858
      %v5895 = vpack.c.bf16 %v5861, %v5860
      %v5896 = vpack.c.bf16 %v5863, %v5862
      %v5897 = vpack.c.bf16 %v5865, %v5864
      %v5898 = vld [vmem:[%s1 + $0x108] sm:$0xf]
      %v5899 = vld [vmem:[%s1 + $0x10c] sm:$0xf]
      %v5900 = vld [vmem:[%s1 + $0x110] sm:$0xf]
      %v5901 = vld [vmem:[%s1 + $0x114] sm:$0xf]
      %v5902 = vld [vmem:[%s1 + $0x118] sm:$0xf]
      %v5903 = vld [vmem:[%s1 + $0x11c] sm:$0xf]
      %v5904 = vld [vmem:[%s1 + $0x120] sm:$0xf]
      %v5905 = vld [vmem:[%s1 + $0x124] sm:$0xf]
      %v5906 = vld [vmem:[%s1 + $0x128] sm:$0xf]
      %v5907 = vld [vmem:[%s1 + $0x12c] sm:$0xf]
      %v5908 = vld [vmem:[%s1 + $0x130] sm:$0xf]
      %v5909 = vld [vmem:[%s1 + $0x134] sm:$0xf]
      %v5910 = vld [vmem:[%s1 + $0x138] sm:$0xf]
      %v5911 = vld [vmem:[%s1 + $0x13c] sm:$0xf]
      %v5912 = vld [vmem:[%s1 + $0x140] sm:$0xf]
      %v5913 = vld [vmem:[%s1 + $0x144] sm:$0xf]
      %v5914 = vld [vmem:[%s1 + $0x148] sm:$0xf]
      %v5915 = vld [vmem:[%s1 + $0x14c] sm:$0xf]
      %v5916 = vld [vmem:[%s1 + $0x150] sm:$0xf]
      %v5917 = vld [vmem:[%s1 + $0x154] sm:$0xf]
      %v5918 = vld [vmem:[%s1 + $0x158] sm:$0xf]
      %v5919 = vld [vmem:[%s1 + $0x15c] sm:$0xf]
      %v5920 = vld [vmem:[%s1 + $0x160] sm:$0xf]
      %v5921 = vld [vmem:[%s1 + $0x164] sm:$0xf]
      %v5922 = vld [vmem:[%s1 + $0x168] sm:$0xf]
      %v5923 = vld [vmem:[%s1 + $0x16c] sm:$0xf]
      %v5924 = vld [vmem:[%s1 + $0x170] sm:$0xf]
      %v5925 = vld [vmem:[%s1 + $0x174] sm:$0xf]
      %v5926 = vld [vmem:[%s1 + $0x178] sm:$0xf]
      %v5927 = vld [vmem:[%s1 + $0x17c] sm:$0xf]
      %v5928 = vld [vmem:[%s1 + $0x180] sm:$0xf]
      %v5929 = vld [vmem:[%s1 + $0x184] sm:$0xf]
      %v5946 = vunpack.c.l.b16 %v5914
      %v5947 = vunpack.c.l.b16 %v5915
      %v5948 = vunpack.c.l.b16 %v5916
      %v5949 = vunpack.c.l.b16 %v5917
      %v5950 = vunpack.c.l.b16 %v5918
      %v5951 = vunpack.c.l.b16 %v5919
      %v5952 = vunpack.c.l.b16 %v5920
      %v5953 = vunpack.c.l.b16 %v5921
      %v5954 = vunpack.c.l.b16 %v5922
      %v5955 = vunpack.c.l.b16 %v5923
      %v5956 = vunpack.c.l.b16 %v5924
      %v5957 = vunpack.c.l.b16 %v5925
      %v5958 = vunpack.c.l.b16 %v5926
      %v5959 = vunpack.c.l.b16 %v5927
      %v5960 = vunpack.c.l.b16 %v5928
      %v5961 = vunpack.c.l.b16 %v5929
      %v5962 = vpack.c.b16 %v5947, %v5946
      %v5963 = vpack.c.b16 %v5949, %v5948
      %v5964 = vpack.c.b16 %v5951, %v5950
      %v5965 = vpack.c.b16 %v5953, %v5952
      %v5966 = vpack.c.b16 %v5955, %v5954
      %v5967 = vpack.c.b16 %v5957, %v5956
      %v5968 = vpack.c.b16 %v5959, %v5958
      %v5969 = vpack.c.b16 %v5961, %v5960
      %5978 = vmatprep.subr.bf16.mxu0 0
      %5979 = vmatpush1.bf16.msra.mxu0 %v5969
      %5980 = vmatprep.subr.bf16.mxu0 0
      %5981 = vmatpush1.bf16.msra.mxu0 %v5968
      %5982 = vmatprep.subr.bf16.mxu0 0
      %5983 = vmatpush1.bf16.msra.mxu0 %v5967
      %5984 = vmatprep.subr.bf16.mxu0 0
      %5985 = vmatpush1.bf16.msra.mxu0 %v5966
      %5986 = vmatprep.subr.bf16.mxu0 0
      %5987 = vmatpush1.bf16.msra.mxu0 %v5965
      %5988 = vmatprep.subr.bf16.mxu0 0
      %5989 = vmatpush1.bf16.msra.mxu0 %v5964
      %5990 = vmatprep.subr.bf16.mxu0 0
      %5991 = vmatpush1.bf16.msra.mxu0 %v5963
      %5992 = vmatprep.subr.bf16.mxu0 0
      %5993 = vmatpush1.bf16.msra.mxu0 %v5962
      %5994 = vmatprep.subr.bf16.mxu0 0
      %5995 = vmatpush2.bf16.msra.mxu0 0
      %5996 = vmatprep.subr.bf16.mxu0 0
      %5997 = vmatpush2.bf16.msra.mxu0 0
      %5998 = vmatprep.subr.bf16.mxu0 0
      %5999 = vmatpush2.bf16.msra.mxu0 0
      %6000 = vmatprep.subr.bf16.mxu0 0
      %6001 = vmatpush2.bf16.msra.mxu0 0
      %6002 = vmatprep.subr.bf16.mxu0 0
      %6003 = vmatpush2.bf16.msra.mxu0 0
      %6004 = vmatprep.subr.bf16.mxu0 0
      %6005 = vmatpush2.bf16.msra.mxu0 0
      %6006 = vmatprep.subr.bf16.mxu0 0
      %6007 = vmatpush2.bf16.msra.mxu0 0
      %6008 = vmatprep.subr.bf16.mxu0 0
      %6009 = vmatpush2.bf16.msra.mxu0 0
      %6010 = vmatprep.mubr.bf16.mxu0 0
      %6011 = vmatmul.mubr.bf16.gmra.mxu0 %v5874
      %v6012 = vpop.f32.mrf.mxu0
      %v6013 = vadd.f32 0.0, %v6012
      %v6014 = vpop.f32.mrf.mxu0
      %v6015 = vpop.f32.mrf.mxu0
      %v6016 = vadd.f32 0.0, %v6015
      %v6017 = vpop.f32.mrf.mxu0
      %6018 = vmatprep.mubr.bf16.mxu0 0
      %6019 = vmatmul.mubr.bf16.gmra.mxu0 %v5875
      %v6020 = vpop.f32.mrf.mxu0
      %v6021 = vadd.f32 0.0, %v6020
      %v6022 = vpop.f32.mrf.mxu0
      %v6023 = vpop.f32.mrf.mxu0
      %v6024 = vadd.f32 0.0, %v6023
      %v6025 = vpop.f32.mrf.mxu0
      %6026 = vmatprep.mubr.bf16.mxu0 0
      %6027 = vmatmul.mubr.bf16.gmra.mxu0 %v5876
      %v6028 = vpop.f32.mrf.mxu0
      %v6029 = vadd.f32 0.0, %v6028
      %v6030 = vpop.f32.mrf.mxu0
      %v6031 = vpop.f32.mrf.mxu0
      %v6032 = vadd.f32 0.0, %v6031
      %v6033 = vpop.f32.mrf.mxu0
      %6034 = vmatprep.mubr.bf16.mxu0 0
      %6035 = vmatmul.mubr.bf16.gmra.mxu0 %v5877
      %v6036 = vpop.f32.mrf.mxu0
      %v6037 = vadd.f32 0.0, %v6036
      %v6038 = vpop.f32.mrf.mxu0
      %v6039 = vpop.f32.mrf.mxu0
      %v6040 = vadd.f32 0.0, %v6039
      %v6041 = vpop.f32.mrf.mxu0
      %6042 = vmatprep.mubr.bf16.mxu0 0
      %6043 = vmatmul.mubr.bf16.gmra.mxu0 %v5878
      %v6044 = vpop.f32.mrf.mxu0
      %v6045 = vadd.f32 0.0, %v6044
      %v6046 = vpop.f32.mrf.mxu0
      %v6047 = vpop.f32.mrf.mxu0
      %v6048 = vadd.f32 0.0, %v6047
      %v6049 = vpop.f32.mrf.mxu0
      %6050 = vmatprep.mubr.bf16.mxu0 0
      %6051 = vmatmul.mubr.bf16.gmra.mxu0 %v5879
      %v6052 = vpop.f32.mrf.mxu0
      %v6053 = vadd.f32 0.0, %v6052
      %v6054 = vpop.f32.mrf.mxu0
      %v6055 = vpop.f32.mrf.mxu0
      %v6056 = vadd.f32 0.0, %v6055
      %v6057 = vpop.f32.mrf.mxu0
      %6058 = vmatprep.mubr.bf16.mxu0 0
      %6059 = vmatmul.mubr.bf16.gmra.mxu0 %v5880
      %v6060 = vpop.f32.mrf.mxu0
      %v6061 = vadd.f32 0.0, %v6060
      %v6062 = vpop.f32.mrf.mxu0
      %v6063 = vpop.f32.mrf.mxu0
      %v6064 = vadd.f32 0.0, %v6063
      %v6065 = vpop.f32.mrf.mxu0
      %6066 = vmatprep.mubr.bf16.mxu0 0
      %6067 = vmatmul.mubr.bf16.gmra.mxu0 %v5881
      %v6068 = vpop.f32.mrf.mxu0
      %v6069 = vadd.f32 0.0, %v6068
      %v6070 = vpop.f32.mrf.mxu0
      %v6071 = vpop.f32.mrf.mxu0
      %v6072 = vadd.f32 0.0, %v6071
      %v6073 = vpop.f32.mrf.mxu0
      %6074 = vdwg.mxu0
      %v6091 = vunpack.c.l.b16 %v5898
      %v6092 = vunpack.c.l.b16 %v5899
      %v6093 = vunpack.c.l.b16 %v5900
      %v6094 = vunpack.c.l.b16 %v5901
      %v6095 = vunpack.c.l.b16 %v5902
      %v6096 = vunpack.c.l.b16 %v5903
      %v6097 = vunpack.c.l.b16 %v5904
      %v6098 = vunpack.c.l.b16 %v5905
      %v6099 = vunpack.c.l.b16 %v5906
      %v6100 = vunpack.c.l.b16 %v5907
      %v6101 = vunpack.c.l.b16 %v5908
      %v6102 = vunpack.c.l.b16 %v5909
      %v6103 = vunpack.c.l.b16 %v5910
      %v6104 = vunpack.c.l.b16 %v5911
      %v6105 = vunpack.c.l.b16 %v5912
      %v6106 = vunpack.c.l.b16 %v5913
      %v6107 = vpack.c.b16 %v6092, %v6091
      %v6108 = vpack.c.b16 %v6094, %v6093
      %v6109 = vpack.c.b16 %v6096, %v6095
      %v6110 = vpack.c.b16 %v6098, %v6097
      %v6111 = vpack.c.b16 %v6100, %v6099
      %v6112 = vpack.c.b16 %v6102, %v6101
      %v6113 = vpack.c.b16 %v6104, %v6103
      %v6114 = vpack.c.b16 %v6106, %v6105
      %6123 = vmatprep.subr.bf16.mxu0 0
      %6124 = vmatpush1.bf16.msra.mxu0 %v6114
      %6125 = vmatprep.subr.bf16.mxu0 0
      %6126 = vmatpush1.bf16.msra.mxu0 %v6113
      %6127 = vmatprep.subr.bf16.mxu0 0
      %6128 = vmatpush1.bf16.msra.mxu0 %v6112
      %6129 = vmatprep.subr.bf16.mxu0 0
      %6130 = vmatpush1.bf16.msra.mxu0 %v6111
      %6131 = vmatprep.subr.bf16.mxu0 0
      %6132 = vmatpush1.bf16.msra.mxu0 %v6110
      %6133 = vmatprep.subr.bf16.mxu0 0
      %6134 = vmatpush1.bf16.msra.mxu0 %v6109
      %6135 = vmatprep.subr.bf16.mxu0 0
      %6136 = vmatpush1.bf16.msra.mxu0 %v6108
      %6137 = vmatprep.subr.bf16.mxu0 0
      %6138 = vmatpush1.bf16.msra.mxu0 %v6107
      %6139 = vmatprep.subr.bf16.mxu0 0
      %6140 = vmatpush2.bf16.msra.mxu0 0
      %6141 = vmatprep.subr.bf16.mxu0 0
      %6142 = vmatpush2.bf16.msra.mxu0 0
      %6143 = vmatprep.subr.bf16.mxu0 0
      %6144 = vmatpush2.bf16.msra.mxu0 0
      %6145 = vmatprep.subr.bf16.mxu0 0
      %6146 = vmatpush2.bf16.msra.mxu0 0
      %6147 = vmatprep.subr.bf16.mxu0 0
      %6148 = vmatpush2.bf16.msra.mxu0 0
      %6149 = vmatprep.subr.bf16.mxu0 0
      %6150 = vmatpush2.bf16.msra.mxu0 0
      %6151 = vmatprep.subr.bf16.mxu0 0
      %6152 = vmatpush2.bf16.msra.mxu0 0
      %6153 = vmatprep.subr.bf16.mxu0 0
      %6154 = vmatpush2.bf16.msra.mxu0 0
      %6155 = vmatprep.mubr.bf16.mxu0 0
      %6156 = vmatmul.mubr.bf16.gmra.mxu0 %v5866
      %v6157 = vpop.f32.mrf.mxu0
      %v6158 = vadd.f32 %v6013, %v6157
      %v6159 = vpop.f32.mrf.mxu0
      %v6160 = vpop.f32.mrf.mxu0
      %v6161 = vadd.f32 %v6016, %v6160
      %v6162 = vpop.f32.mrf.mxu0
      %6163 = vmatprep.mubr.bf16.mxu0 0
      %6164 = vmatmul.mubr.bf16.gmra.mxu0 %v5867
      %v6165 = vpop.f32.mrf.mxu0
      %v6166 = vadd.f32 %v6021, %v6165
      %v6167 = vpop.f32.mrf.mxu0
      %v6168 = vpop.f32.mrf.mxu0
      %v6169 = vadd.f32 %v6024, %v6168
      %v6170 = vpop.f32.mrf.mxu0
      %6171 = vmatprep.mubr.bf16.mxu0 0
      %6172 = vmatmul.mubr.bf16.gmra.mxu0 %v5868
      %v6173 = vpop.f32.mrf.mxu0
      %v6174 = vadd.f32 %v6029, %v6173
      %v6175 = vpop.f32.mrf.mxu0
      %v6176 = vpop.f32.mrf.mxu0
      %v6177 = vadd.f32 %v6032, %v6176
      %v6178 = vpop.f32.mrf.mxu0
      %6179 = vmatprep.mubr.bf16.mxu0 0
      %6180 = vmatmul.mubr.bf16.gmra.mxu0 %v5869
      %v6181 = vpop.f32.mrf.mxu0
      %v6182 = vadd.f32 %v6037, %v6181
      %v6183 = vpop.f32.mrf.mxu0
      %v6184 = vpop.f32.mrf.mxu0
      %v6185 = vadd.f32 %v6040, %v6184
      %v6186 = vpop.f32.mrf.mxu0
      %6187 = vmatprep.mubr.bf16.mxu0 0
      %6188 = vmatmul.mubr.bf16.gmra.mxu0 %v5870
      %v6189 = vpop.f32.mrf.mxu0
      %v6190 = vadd.f32 %v6045, %v6189
      %v6191 = vpop.f32.mrf.mxu0
      %v6192 = vpop.f32.mrf.mxu0
      %v6193 = vadd.f32 %v6048, %v6192
      %v6194 = vpop.f32.mrf.mxu0
      %6195 = vmatprep.mubr.bf16.mxu0 0
      %6196 = vmatmul.mubr.bf16.gmra.mxu0 %v5871
      %v6197 = vpop.f32.mrf.mxu0
      %v6198 = vadd.f32 %v6053, %v6197
      %v6199 = vpop.f32.mrf.mxu0
      %v6200 = vpop.f32.mrf.mxu0
      %v6201 = vadd.f32 %v6056, %v6200
      %v6202 = vpop.f32.mrf.mxu0
      %6203 = vmatprep.mubr.bf16.mxu0 0
      %6204 = vmatmul.mubr.bf16.gmra.mxu0 %v5872
      %v6205 = vpop.f32.mrf.mxu0
      %v6206 = vadd.f32 %v6061, %v6205
      %v6207 = vpop.f32.mrf.mxu0
      %v6208 = vpop.f32.mrf.mxu0
      %v6209 = vadd.f32 %v6064, %v6208
      %v6210 = vpop.f32.mrf.mxu0
      %6211 = vmatprep.mubr.bf16.mxu0 0
      %6212 = vmatmul.mubr.bf16.gmra.mxu0 %v5873
      %v6213 = vpop.f32.mrf.mxu0
      %v6214 = vadd.f32 %v6069, %v6213
      %v6215 = vpop.f32.mrf.mxu0
      %v6216 = vpop.f32.mrf.mxu0
      %v6217 = vadd.f32 %v6072, %v6216
      %v6218 = vpop.f32.mrf.mxu0
      %6219 = vdwg.mxu0
      %v6220 = vld [vmem:[%s1 + $0x188] sm:$0xf]
      %v6221 = vld [vmem:[%s1 + $0x18c] sm:$0xf]
      %v6222 = vld [vmem:[%s1 + $0x190] sm:$0xf]
      %v6223 = vld [vmem:[%s1 + $0x194] sm:$0xf]
      %v6224 = vld [vmem:[%s1 + $0x198] sm:$0xf]
      %v6225 = vld [vmem:[%s1 + $0x19c] sm:$0xf]
      %v6226 = vld [vmem:[%s1 + $0x1a0] sm:$0xf]
      %v6227 = vld [vmem:[%s1 + $0x1a4] sm:$0xf]
      %v6228 = vld [vmem:[%s1 + $0x1a8] sm:$0xf]
      %v6229 = vld [vmem:[%s1 + $0x1ac] sm:$0xf]
      %v6230 = vld [vmem:[%s1 + $0x1b0] sm:$0xf]
      %v6231 = vld [vmem:[%s1 + $0x1b4] sm:$0xf]
      %v6232 = vld [vmem:[%s1 + $0x1b8] sm:$0xf]
      %v6233 = vld [vmem:[%s1 + $0x1bc] sm:$0xf]
      %v6234 = vld [vmem:[%s1 + $0x1c0] sm:$0xf]
      %v6235 = vld [vmem:[%s1 + $0x1c4] sm:$0xf]
      %v6252 = vunpack.c.l.b16 %v6220
      %v6253 = vunpack.c.l.b16 %v6221
      %v6254 = vunpack.c.l.b16 %v6222
      %v6255 = vunpack.c.l.b16 %v6223
      %v6256 = vunpack.c.l.b16 %v6224
      %v6257 = vunpack.c.l.b16 %v6225
      %v6258 = vunpack.c.l.b16 %v6226
      %v6259 = vunpack.c.l.b16 %v6227
      %v6260 = vunpack.c.l.b16 %v6228
      %v6261 = vunpack.c.l.b16 %v6229
      %v6262 = vunpack.c.l.b16 %v6230
      %v6263 = vunpack.c.l.b16 %v6231
      %v6264 = vunpack.c.l.b16 %v6232
      %v6265 = vunpack.c.l.b16 %v6233
      %v6266 = vunpack.c.l.b16 %v6234
      %v6267 = vunpack.c.l.b16 %v6235
      %v6268 = vpack.c.b16 %v6253, %v6252
      %v6269 = vpack.c.b16 %v6255, %v6254
      %v6270 = vpack.c.b16 %v6257, %v6256
      %v6271 = vpack.c.b16 %v6259, %v6258
      %v6272 = vpack.c.b16 %v6261, %v6260
      %v6273 = vpack.c.b16 %v6263, %v6262
      %v6274 = vpack.c.b16 %v6265, %v6264
      %v6275 = vpack.c.b16 %v6267, %v6266
      %6284 = vmatprep.subr.bf16.mxu0 0
      %6285 = vmatpush1.bf16.msra.mxu0 %v6275
      %6286 = vmatprep.subr.bf16.mxu0 0
      %6287 = vmatpush1.bf16.msra.mxu0 %v6274
      %6288 = vmatprep.subr.bf16.mxu0 0
      %6289 = vmatpush1.bf16.msra.mxu0 %v6273
      %6290 = vmatprep.subr.bf16.mxu0 0
      %6291 = vmatpush1.bf16.msra.mxu0 %v6272
      %6292 = vmatprep.subr.bf16.mxu0 0
      %6293 = vmatpush1.bf16.msra.mxu0 %v6271
      %6294 = vmatprep.subr.bf16.mxu0 0
      %6295 = vmatpush1.bf16.msra.mxu0 %v6270
      %6296 = vmatprep.subr.bf16.mxu0 0
      %6297 = vmatpush1.bf16.msra.mxu0 %v6269
      %6298 = vmatprep.subr.bf16.mxu0 0
      %6299 = vmatpush1.bf16.msra.mxu0 %v6268
      %6300 = vmatprep.subr.bf16.mxu0 0
      %6301 = vmatpush2.bf16.msra.mxu0 0
      %6302 = vmatprep.subr.bf16.mxu0 0
      %6303 = vmatpush2.bf16.msra.mxu0 0
      %6304 = vmatprep.subr.bf16.mxu0 0
      %6305 = vmatpush2.bf16.msra.mxu0 0
      %6306 = vmatprep.subr.bf16.mxu0 0
      %6307 = vmatpush2.bf16.msra.mxu0 0
      %6308 = vmatprep.subr.bf16.mxu0 0
      %6309 = vmatpush2.bf16.msra.mxu0 0
      %6310 = vmatprep.subr.bf16.mxu0 0
      %6311 = vmatpush2.bf16.msra.mxu0 0
      %6312 = vmatprep.subr.bf16.mxu0 0
      %6313 = vmatpush2.bf16.msra.mxu0 0
      %6314 = vmatprep.subr.bf16.mxu0 0
      %6315 = vmatpush2.bf16.msra.mxu0 0
      %6316 = vmatprep.mubr.bf16.mxu0 0
      %6317 = vmatmul.mubr.bf16.gmra.mxu0 %v5882
      %v6318 = vpop.f32.mrf.mxu0
      %v6319 = vadd.f32 0.0, %v6318
      %v6320 = vpop.f32.mrf.mxu0
      %v6321 = vpop.f32.mrf.mxu0
      %v6322 = vadd.f32 0.0, %v6321
      %v6323 = vpop.f32.mrf.mxu0
      %6324 = vmatprep.mubr.bf16.mxu0 0
      %6325 = vmatmul.mubr.bf16.gmra.mxu0 %v5883
      %v6326 = vpop.f32.mrf.mxu0
      %v6327 = vadd.f32 0.0, %v6326
      %v6328 = vpop.f32.mrf.mxu0
      %v6329 = vpop.f32.mrf.mxu0
      %v6330 = vadd.f32 0.0, %v6329
      %v6331 = vpop.f32.mrf.mxu0
      %6332 = vmatprep.mubr.bf16.mxu0 0
      %6333 = vmatmul.mubr.bf16.gmra.mxu0 %v5884
      %v6334 = vpop.f32.mrf.mxu0
      %v6335 = vadd.f32 0.0, %v6334
      %v6336 = vpop.f32.mrf.mxu0
      %v6337 = vpop.f32.mrf.mxu0
      %v6338 = vadd.f32 0.0, %v6337
      %v6339 = vpop.f32.mrf.mxu0
      %6340 = vmatprep.mubr.bf16.mxu0 0
      %6341 = vmatmul.mubr.bf16.gmra.mxu0 %v5885
      %v6342 = vpop.f32.mrf.mxu0
      %v6343 = vadd.f32 0.0, %v6342
      %v6344 = vpop.f32.mrf.mxu0
      %v6345 = vpop.f32.mrf.mxu0
      %v6346 = vadd.f32 0.0, %v6345
      %v6347 = vpop.f32.mrf.mxu0
      %6348 = vmatprep.mubr.bf16.mxu0 0
      %6349 = vmatmul.mubr.bf16.gmra.mxu0 %v5886
      %v6350 = vpop.f32.mrf.mxu0
      %v6351 = vadd.f32 0.0, %v6350
      %v6352 = vpop.f32.mrf.mxu0
      %v6353 = vpop.f32.mrf.mxu0
      %v6354 = vadd.f32 0.0, %v6353
      %v6355 = vpop.f32.mrf.mxu0
      %6356 = vmatprep.mubr.bf16.mxu0 0
      %6357 = vmatmul.mubr.bf16.gmra.mxu0 %v5887
      %v6358 = vpop.f32.mrf.mxu0
      %v6359 = vadd.f32 0.0, %v6358
      %v6360 = vpop.f32.mrf.mxu0
      %v6361 = vpop.f32.mrf.mxu0
      %v6362 = vadd.f32 0.0, %v6361
      %v6363 = vpop.f32.mrf.mxu0
      %6364 = vmatprep.mubr.bf16.mxu0 0
      %6365 = vmatmul.mubr.bf16.gmra.mxu0 %v5888
      %v6366 = vpop.f32.mrf.mxu0
      %v6367 = vadd.f32 0.0, %v6366
      %v6368 = vpop.f32.mrf.mxu0
      %v6369 = vpop.f32.mrf.mxu0
      %v6370 = vadd.f32 0.0, %v6369
      %v6371 = vpop.f32.mrf.mxu0
      %6372 = vmatprep.mubr.bf16.mxu0 0
      %6373 = vmatmul.mubr.bf16.gmra.mxu0 %v5889
      %v6374 = vpop.f32.mrf.mxu0
      %v6375 = vadd.f32 0.0, %v6374
      %v6376 = vpop.f32.mrf.mxu0
      %v6377 = vpop.f32.mrf.mxu0
      %v6378 = vadd.f32 0.0, %v6377
      %v6379 = vpop.f32.mrf.mxu0
      %6380 = vdwg.mxu0
      %v6381 = vadd.f32 %v6158, %v6319
      %v6382 = vadd.f32 %v6161, %v6322
      %v6383 = vadd.f32 %v6166, %v6327
      %v6384 = vadd.f32 %v6169, %v6330
      %v6385 = vadd.f32 %v6174, %v6335
      %v6386 = vadd.f32 %v6177, %v6338
      %v6387 = vadd.f32 %v6182, %v6343
      %v6388 = vadd.f32 %v6185, %v6346
      %v6389 = vadd.f32 %v6190, %v6351
      %v6390 = vadd.f32 %v6193, %v6354
      %v6391 = vadd.f32 %v6198, %v6359
      %v6392 = vadd.f32 %v6201, %v6362
      %v6393 = vadd.f32 %v6206, %v6367
      %v6394 = vadd.f32 %v6209, %v6370
      %v6395 = vadd.f32 %v6214, %v6375
      %v6396 = vadd.f32 %v6217, %v6378
      %v6397 = vld [vmem:[%s1 + $0x1c8] sm:$0xf]
      %v6398 = vld [vmem:[%s1 + $0x1cc] sm:$0xf]
      %v6399 = vld [vmem:[%s1 + $0x1d0] sm:$0xf]
      %v6400 = vld [vmem:[%s1 + $0x1d4] sm:$0xf]
      %v6401 = vld [vmem:[%s1 + $0x1d8] sm:$0xf]
      %v6402 = vld [vmem:[%s1 + $0x1dc] sm:$0xf]
      %v6403 = vld [vmem:[%s1 + $0x1e0] sm:$0xf]
      %v6404 = vld [vmem:[%s1 + $0x1e4] sm:$0xf]
      %v6405 = vld [vmem:[%s1 + $0x1e8] sm:$0xf]
      %v6406 = vld [vmem:[%s1 + $0x1ec] sm:$0xf]
      %v6407 = vld [vmem:[%s1 + $0x1f0] sm:$0xf]
      %v6408 = vld [vmem:[%s1 + $0x1f4] sm:$0xf]
      %v6409 = vld [vmem:[%s1 + $0x1f8] sm:$0xf]
      %v6410 = vld [vmem:[%s1 + $0x1fc] sm:$0xf]
      %v6411 = vld [vmem:[%s1 + $0x200] sm:$0xf]
      %v6412 = vld [vmem:[%s1 + $0x204] sm:$0xf]
      %v6429 = vunpack.c.l.b16 %v6397
      %v6430 = vunpack.c.l.b16 %v6398
      %v6431 = vunpack.c.l.b16 %v6399
      %v6432 = vunpack.c.l.b16 %v6400
      %v6433 = vunpack.c.l.b16 %v6401
      %v6434 = vunpack.c.l.b16 %v6402
      %v6435 = vunpack.c.l.b16 %v6403
      %v6436 = vunpack.c.l.b16 %v6404
      %v6437 = vunpack.c.l.b16 %v6405
      %v6438 = vunpack.c.l.b16 %v6406
      %v6439 = vunpack.c.l.b16 %v6407
      %v6440 = vunpack.c.l.b16 %v6408
      %v6441 = vunpack.c.l.b16 %v6409
      %v6442 = vunpack.c.l.b16 %v6410
      %v6443 = vunpack.c.l.b16 %v6411
      %v6444 = vunpack.c.l.b16 %v6412
      %v6445 = vpack.c.b16 %v6430, %v6429
      %v6446 = vpack.c.b16 %v6432, %v6431
      %v6447 = vpack.c.b16 %v6434, %v6433
      %v6448 = vpack.c.b16 %v6436, %v6435
      %v6449 = vpack.c.b16 %v6438, %v6437
      %v6450 = vpack.c.b16 %v6440, %v6439
      %v6451 = vpack.c.b16 %v6442, %v6441
      %v6452 = vpack.c.b16 %v6444, %v6443
      %6461 = vmatprep.subr.bf16.mxu0 0
      %6462 = vmatpush1.bf16.msra.mxu0 %v6452
      %6463 = vmatprep.subr.bf16.mxu0 0
      %6464 = vmatpush1.bf16.msra.mxu0 %v6451
      %6465 = vmatprep.subr.bf16.mxu0 0
      %6466 = vmatpush1.bf16.msra.mxu0 %v6450
      %6467 = vmatprep.subr.bf16.mxu0 0
      %6468 = vmatpush1.bf16.msra.mxu0 %v6449
      %6469 = vmatprep.subr.bf16.mxu0 0
      %6470 = vmatpush1.bf16.msra.mxu0 %v6448
      %6471 = vmatprep.subr.bf16.mxu0 0
      %6472 = vmatpush1.bf16.msra.mxu0 %v6447
      %6473 = vmatprep.subr.bf16.mxu0 0
      %6474 = vmatpush1.bf16.msra.mxu0 %v6446
      %6475 = vmatprep.subr.bf16.mxu0 0
      %6476 = vmatpush1.bf16.msra.mxu0 %v6445
      %6477 = vmatprep.subr.bf16.mxu0 0
      %6478 = vmatpush2.bf16.msra.mxu0 0
      %6479 = vmatprep.subr.bf16.mxu0 0
      %6480 = vmatpush2.bf16.msra.mxu0 0
      %6481 = vmatprep.subr.bf16.mxu0 0
      %6482 = vmatpush2.bf16.msra.mxu0 0
      %6483 = vmatprep.subr.bf16.mxu0 0
      %6484 = vmatpush2.bf16.msra.mxu0 0
      %6485 = vmatprep.subr.bf16.mxu0 0
      %6486 = vmatpush2.bf16.msra.mxu0 0
      %6487 = vmatprep.subr.bf16.mxu0 0
      %6488 = vmatpush2.bf16.msra.mxu0 0
      %6489 = vmatprep.subr.bf16.mxu0 0
      %6490 = vmatpush2.bf16.msra.mxu0 0
      %6491 = vmatprep.subr.bf16.mxu0 0
      %6492 = vmatpush2.bf16.msra.mxu0 0
      %6493 = vmatprep.mubr.bf16.mxu0 0
      %6494 = vmatmul.mubr.bf16.gmra.mxu0 %v5890
      %v6495 = vpop.f32.mrf.mxu0
      %v6496 = vadd.f32 0.0, %v6495
      %v6497 = vpop.f32.mrf.mxu0
      %v6498 = vpop.f32.mrf.mxu0
      %v6499 = vadd.f32 0.0, %v6498
      %v6500 = vpop.f32.mrf.mxu0
      %6501 = vmatprep.mubr.bf16.mxu0 0
      %6502 = vmatmul.mubr.bf16.gmra.mxu0 %v5891
      %v6503 = vpop.f32.mrf.mxu0
      %v6504 = vadd.f32 0.0, %v6503
      %v6505 = vpop.f32.mrf.mxu0
      %v6506 = vpop.f32.mrf.mxu0
      %v6507 = vadd.f32 0.0, %v6506
      %v6508 = vpop.f32.mrf.mxu0
      %6509 = vmatprep.mubr.bf16.mxu0 0
      %6510 = vmatmul.mubr.bf16.gmra.mxu0 %v5892
      %v6511 = vpop.f32.mrf.mxu0
      %v6512 = vadd.f32 0.0, %v6511
      %v6513 = vpop.f32.mrf.mxu0
      %v6514 = vpop.f32.mrf.mxu0
      %v6515 = vadd.f32 0.0, %v6514
      %v6516 = vpop.f32.mrf.mxu0
      %6517 = vmatprep.mubr.bf16.mxu0 0
      %6518 = vmatmul.mubr.bf16.gmra.mxu0 %v5893
      %v6519 = vpop.f32.mrf.mxu0
      %v6520 = vadd.f32 0.0, %v6519
      %v6521 = vpop.f32.mrf.mxu0
      %v6522 = vpop.f32.mrf.mxu0
      %v6523 = vadd.f32 0.0, %v6522
      %v6524 = vpop.f32.mrf.mxu0
      %6525 = vmatprep.mubr.bf16.mxu0 0
      %6526 = vmatmul.mubr.bf16.gmra.mxu0 %v5894
      %v6527 = vpop.f32.mrf.mxu0
      %v6528 = vadd.f32 0.0, %v6527
      %v6529 = vpop.f32.mrf.mxu0
      %v6530 = vpop.f32.mrf.mxu0
      %v6531 = vadd.f32 0.0, %v6530
      %v6532 = vpop.f32.mrf.mxu0
      %6533 = vmatprep.mubr.bf16.mxu0 0
      %6534 = vmatmul.mubr.bf16.gmra.mxu0 %v5895
      %v6535 = vpop.f32.mrf.mxu0
      %v6536 = vadd.f32 0.0, %v6535
      %v6537 = vpop.f32.mrf.mxu0
      %v6538 = vpop.f32.mrf.mxu0
      %v6539 = vadd.f32 0.0, %v6538
      %v6540 = vpop.f32.mrf.mxu0
      %6541 = vmatprep.mubr.bf16.mxu0 0
      %6542 = vmatmul.mubr.bf16.gmra.mxu0 %v5896
      %v6543 = vpop.f32.mrf.mxu0
      %v6544 = vadd.f32 0.0, %v6543
      %v6545 = vpop.f32.mrf.mxu0
      %v6546 = vpop.f32.mrf.mxu0
      %v6547 = vadd.f32 0.0, %v6546
      %v6548 = vpop.f32.mrf.mxu0
      %6549 = vmatprep.mubr.bf16.mxu0 0
      %6550 = vmatmul.mubr.bf16.gmra.mxu0 %v5897
      %v6551 = vpop.f32.mrf.mxu0
      %v6552 = vadd.f32 0.0, %v6551
      %v6553 = vpop.f32.mrf.mxu0
      %v6554 = vpop.f32.mrf.mxu0
      %v6555 = vadd.f32 0.0, %v6554
      %v6556 = vpop.f32.mrf.mxu0
      %6557 = vdwg.mxu0
      %v6558 = vadd.f32 %v6381, %v6496
      %v6559 = vadd.f32 %v6382, %v6499
      %v6560 = vadd.f32 %v6383, %v6504
      %v6561 = vadd.f32 %v6384, %v6507
      %v6562 = vadd.f32 %v6385, %v6512
      %v6563 = vadd.f32 %v6386, %v6515
      %v6564 = vadd.f32 %v6387, %v6520
      %v6565 = vadd.f32 %v6388, %v6523
      %v6566 = vadd.f32 %v6389, %v6528
      %v6567 = vadd.f32 %v6390, %v6531
      %v6568 = vadd.f32 %v6391, %v6536
      %v6569 = vadd.f32 %v6392, %v6539
      %v6570 = vadd.f32 %v6393, %v6544
      %v6571 = vadd.f32 %v6394, %v6547
      %v6572 = vadd.f32 %v6395, %v6552
      %v6573 = vadd.f32 %v6396, %v6555
      %v6574 = vld [vmem:[%s2 + $0x2] sm:$0x1]
      %v6575 = vlaneseq
      %v6576 = vshrl.u32 %v6575, 7
      %v6577 = vsub.s32 0, %v6576
      %v6578 = vrot.slane %v6574, %v6577
      %v6579 = vadd.f32 %v6558, %v6578
      %v6580 = vadd.f32 %v6559, %v6578
      %v6581 = vadd.f32 %v6560, %v6578
      %v6582 = vadd.f32 %v6561, %v6578
      %v6583 = vadd.f32 %v6562, %v6578
      %v6584 = vadd.f32 %v6563, %v6578
      %v6585 = vadd.f32 %v6564, %v6578
      %v6586 = vadd.f32 %v6565, %v6578
      %v6587 = vadd.f32 %v6566, %v6578
      %v6588 = vadd.f32 %v6567, %v6578
      %v6589 = vadd.f32 %v6568, %v6578
      %v6590 = vadd.f32 %v6569, %v6578
      %v6591 = vadd.f32 %v6570, %v6578
      %v6592 = vadd.f32 %v6571, %v6578
      %v6593 = vadd.f32 %v6572, %v6578
      %v6594 = vadd.f32 %v6573, %v6578
      %v6595 = vmul.f32 %v6579, 0.5
      %v6596 = vmul.f32 %v6580, 0.5
      %v6597 = vmul.f32 %v6581, 0.5
      %v6598 = vmul.f32 %v6582, 0.5
      %v6599 = vmul.f32 %v6583, 0.5
      %v6600 = vmul.f32 %v6584, 0.5
      %v6601 = vmul.f32 %v6585, 0.5
      %v6602 = vmul.f32 %v6586, 0.5
      %v6603 = vmul.f32 %v6587, 0.5
      %v6604 = vmul.f32 %v6588, 0.5
      %v6605 = vmul.f32 %v6589, 0.5
      %v6606 = vmul.f32 %v6590, 0.5
      %v6607 = vmul.f32 %v6591, 0.5
      %v6608 = vmul.f32 %v6592, 0.5
      %v6609 = vmul.f32 %v6593, 0.5
      %v6610 = vmul.f32 %v6594, 0.5
      %v6611 = vtanh.pop %v6595
      %v6612 = vtanh.pop %v6596
      %v6613 = vtanh.pop %v6597
      %v6614 = vtanh.pop %v6598
      %v6615 = vtanh.pop %v6599
      %v6616 = vtanh.pop %v6600
      %v6617 = vtanh.pop %v6601
      %v6618 = vtanh.pop %v6602
      %v6619 = vtanh.pop %v6603
      %v6620 = vtanh.pop %v6604
      %v6621 = vtanh.pop %v6605
      %v6622 = vtanh.pop %v6606
      %v6623 = vtanh.pop %v6607
      %v6624 = vtanh.pop %v6608
      %v6625 = vtanh.pop %v6609
      %v6626 = vtanh.pop %v6610
      %v6627 = vmul.f32 %v6611, 0.5
      %v6628 = vmul.f32 %v6612, 0.5
      %v6629 = vmul.f32 %v6613, 0.5
      %v6630 = vmul.f32 %v6614, 0.5
      %v6631 = vmul.f32 %v6615, 0.5
      %v6632 = vmul.f32 %v6616, 0.5
      %v6633 = vmul.f32 %v6617, 0.5
      %v6634 = vmul.f32 %v6618, 0.5
      %v6635 = vmul.f32 %v6619, 0.5
      %v6636 = vmul.f32 %v6620, 0.5
      %v6637 = vmul.f32 %v6621, 0.5
      %v6638 = vmul.f32 %v6622, 0.5
      %v6639 = vmul.f32 %v6623, 0.5
      %v6640 = vmul.f32 %v6624, 0.5
      %v6641 = vmul.f32 %v6625, 0.5
      %v6642 = vmul.f32 %v6626, 0.5
      %v6643 = vadd.f32 %v6627, 0.5
      %v6644 = vadd.f32 %v6628, 0.5
      %v6645 = vadd.f32 %v6629, 0.5
      %v6646 = vadd.f32 %v6630, 0.5
      %v6647 = vadd.f32 %v6631, 0.5
      %v6648 = vadd.f32 %v6632, 0.5
      %v6649 = vadd.f32 %v6633, 0.5
      %v6650 = vadd.f32 %v6634, 0.5
      %v6651 = vadd.f32 %v6635, 0.5
      %v6652 = vadd.f32 %v6636, 0.5
      %v6653 = vadd.f32 %v6637, 0.5
      %v6654 = vadd.f32 %v6638, 0.5
      %v6655 = vadd.f32 %v6639, 0.5
      %v6656 = vadd.f32 %v6640, 0.5
      %v6657 = vadd.f32 %v6641, 0.5
      %v6658 = vadd.f32 %v6642, 0.5
      %v6659 = vmul.f32 %v6579, %v6643
      %v6660 = vmul.f32 %v6580, %v6644
      %v6661 = vmul.f32 %v6581, %v6645
      %v6662 = vmul.f32 %v6582, %v6646
      %v6663 = vmul.f32 %v6583, %v6647
      %v6664 = vmul.f32 %v6584, %v6648
      %v6665 = vmul.f32 %v6585, %v6649
      %v6666 = vmul.f32 %v6586, %v6650
      %v6667 = vmul.f32 %v6587, %v6651
      %v6668 = vmul.f32 %v6588, %v6652
      %v6669 = vmul.f32 %v6589, %v6653
      %v6670 = vmul.f32 %v6590, %v6654
      %v6671 = vmul.f32 %v6591, %v6655
      %v6672 = vmul.f32 %v6592, %v6656
      %v6673 = vmul.f32 %v6593, %v6657
      %v6674 = vmul.f32 %v6594, %v6658
      %v6675 = vpack.c.bf16 %v6660, %v6659
      %v6676 = vpack.c.bf16 %v6662, %v6661
      %v6677 = vpack.c.bf16 %v6664, %v6663
      %v6678 = vpack.c.bf16 %v6666, %v6665
      %v6679 = vpack.c.bf16 %v6668, %v6667
      %v6680 = vpack.c.bf16 %v6670, %v6669
      %v6681 = vpack.c.bf16 %v6672, %v6671
      %v6682 = vpack.c.bf16 %v6674, %v6673
      %v6683 = vld [vmem:[%s1 + $0x208] sm:$0xf]
      %v6684 = vld [vmem:[%s1 + $0x20c] sm:$0xf]
      %v6685 = vld [vmem:[%s1 + $0x210] sm:$0xf]
      %v6686 = vld [vmem:[%s1 + $0x214] sm:$0xf]
      %v6687 = vld [vmem:[%s1 + $0x218] sm:$0xf]
      %v6688 = vld [vmem:[%s1 + $0x21c] sm:$0xf]
      %v6689 = vld [vmem:[%s1 + $0x220] sm:$0xf]
      %v6690 = vld [vmem:[%s1 + $0x224] sm:$0xf]
      %v6691 = vld [vmem:[%s1 + $0x228] sm:$0xf]
      %v6692 = vld [vmem:[%s1 + $0x22c] sm:$0xf]
      %v6693 = vld [vmem:[%s1 + $0x230] sm:$0xf]
      %v6694 = vld [vmem:[%s1 + $0x234] sm:$0xf]
      %v6695 = vld [vmem:[%s1 + $0x238] sm:$0xf]
      %v6696 = vld [vmem:[%s1 + $0x23c] sm:$0xf]
      %v6697 = vld [vmem:[%s1 + $0x240] sm:$0xf]
      %v6698 = vld [vmem:[%s1 + $0x244] sm:$0xf]
      %v6699 = vld [vmem:[%s1 + $0x248] sm:$0xf]
      %v6700 = vld [vmem:[%s1 + $0x24c] sm:$0xf]
      %v6701 = vld [vmem:[%s1 + $0x250] sm:$0xf]
      %v6702 = vld [vmem:[%s1 + $0x254] sm:$0xf]
      %v6703 = vld [vmem:[%s1 + $0x258] sm:$0xf]
      %v6704 = vld [vmem:[%s1 + $0x25c] sm:$0xf]
      %v6705 = vld [vmem:[%s1 + $0x260] sm:$0xf]
      %v6706 = vld [vmem:[%s1 + $0x264] sm:$0xf]
      %v6707 = vld [vmem:[%s1 + $0x268] sm:$0xf]
      %v6708 = vld [vmem:[%s1 + $0x26c] sm:$0xf]
      %v6709 = vld [vmem:[%s1 + $0x270] sm:$0xf]
      %v6710 = vld [vmem:[%s1 + $0x274] sm:$0xf]
      %v6711 = vld [vmem:[%s1 + $0x278] sm:$0xf]
      %v6712 = vld [vmem:[%s1 + $0x27c] sm:$0xf]
      %v6713 = vld [vmem:[%s1 + $0x280] sm:$0xf]
      %v6714 = vld [vmem:[%s1 + $0x284] sm:$0xf]
      %v6731 = vunpack.c.l.b16 %v6699
      %v6732 = vunpack.c.l.b16 %v6700
      %v6733 = vunpack.c.l.b16 %v6701
      %v6734 = vunpack.c.l.b16 %v6702
      %v6735 = vunpack.c.l.b16 %v6703
      %v6736 = vunpack.c.l.b16 %v6704
      %v6737 = vunpack.c.l.b16 %v6705
      %v6738 = vunpack.c.l.b16 %v6706
      %v6739 = vunpack.c.l.b16 %v6707
      %v6740 = vunpack.c.l.b16 %v6708
      %v6741 = vunpack.c.l.b16 %v6709
      %v6742 = vunpack.c.l.b16 %v6710
      %v6743 = vunpack.c.l.b16 %v6711
      %v6744 = vunpack.c.l.b16 %v6712
      %v6745 = vunpack.c.l.b16 %v6713
      %v6746 = vunpack.c.l.b16 %v6714
      %v6747 = vpack.c.b16 %v6732, %v6731
      %v6748 = vpack.c.b16 %v6734, %v6733
      %v6749 = vpack.c.b16 %v6736, %v6735
      %v6750 = vpack.c.b16 %v6738, %v6737
      %v6751 = vpack.c.b16 %v6740, %v6739
      %v6752 = vpack.c.b16 %v6742, %v6741
      %v6753 = vpack.c.b16 %v6744, %v6743
      %v6754 = vpack.c.b16 %v6746, %v6745
      %6763 = vmatprep.subr.bf16.mxu0 0
      %6764 = vmatpush1.bf16.msra.mxu0 %v6754
      %6765 = vmatprep.subr.bf16.mxu0 0
      %6766 = vmatpush1.bf16.msra.mxu0 %v6753
      %6767 = vmatprep.subr.bf16.mxu0 0
      %6768 = vmatpush1.bf16.msra.mxu0 %v6752
      %6769 = vmatprep.subr.bf16.mxu0 0
      %6770 = vmatpush1.bf16.msra.mxu0 %v6751
      %6771 = vmatprep.subr.bf16.mxu0 0
      %6772 = vmatpush1.bf16.msra.mxu0 %v6750
      %6773 = vmatprep.subr.bf16.mxu0 0
      %6774 = vmatpush1.bf16.msra.mxu0 %v6749
      %6775 = vmatprep.subr.bf16.mxu0 0
      %6776 = vmatpush1.bf16.msra.mxu0 %v6748
      %6777 = vmatprep.subr.bf16.mxu0 0
      %6778 = vmatpush1.bf16.msra.mxu0 %v6747
      %6779 = vmatprep.subr.bf16.mxu0 0
      %6780 = vmatpush2.bf16.msra.mxu0 0
      %6781 = vmatprep.subr.bf16.mxu0 0
      %6782 = vmatpush2.bf16.msra.mxu0 0
      %6783 = vmatprep.subr.bf16.mxu0 0
      %6784 = vmatpush2.bf16.msra.mxu0 0
      %6785 = vmatprep.subr.bf16.mxu0 0
      %6786 = vmatpush2.bf16.msra.mxu0 0
      %6787 = vmatprep.subr.bf16.mxu0 0
      %6788 = vmatpush2.bf16.msra.mxu0 0
      %6789 = vmatprep.subr.bf16.mxu0 0
      %6790 = vmatpush2.bf16.msra.mxu0 0
      %6791 = vmatprep.subr.bf16.mxu0 0
      %6792 = vmatpush2.bf16.msra.mxu0 0
      %6793 = vmatprep.subr.bf16.mxu0 0
      %6794 = vmatpush2.bf16.msra.mxu0 0
      %6795 = vmatprep.mubr.bf16.mxu0 0
      %6796 = vmatmul.mubr.bf16.gmra.mxu0 %v6677
      %v6797 = vpop.f32.mrf.mxu0
      %v6798 = vadd.f32 0.0, %v6797
      %v6799 = vpop.f32.mrf.mxu0
      %v6800 = vpop.f32.mrf.mxu0
      %v6801 = vadd.f32 0.0, %v6800
      %v6802 = vpop.f32.mrf.mxu0
      %6803 = vmatprep.mubr.bf16.mxu0 0
      %6804 = vmatmul.mubr.bf16.gmra.mxu0 %v6678
      %v6805 = vpop.f32.mrf.mxu0
      %v6806 = vadd.f32 0.0, %v6805
      %v6807 = vpop.f32.mrf.mxu0
      %v6808 = vpop.f32.mrf.mxu0
      %v6809 = vadd.f32 0.0, %v6808
      %v6810 = vpop.f32.mrf.mxu0
      %6811 = vdwg.mxu0
      %v6828 = vunpack.c.l.b16 %v6683
      %v6829 = vunpack.c.l.b16 %v6684
      %v6830 = vunpack.c.l.b16 %v6685
      %v6831 = vunpack.c.l.b16 %v6686
      %v6832 = vunpack.c.l.b16 %v6687
      %v6833 = vunpack.c.l.b16 %v6688
      %v6834 = vunpack.c.l.b16 %v6689
      %v6835 = vunpack.c.l.b16 %v6690
      %v6836 = vunpack.c.l.b16 %v6691
      %v6837 = vunpack.c.l.b16 %v6692
      %v6838 = vunpack.c.l.b16 %v6693
      %v6839 = vunpack.c.l.b16 %v6694
      %v6840 = vunpack.c.l.b16 %v6695
      %v6841 = vunpack.c.l.b16 %v6696
      %v6842 = vunpack.c.l.b16 %v6697
      %v6843 = vunpack.c.l.b16 %v6698
      %v6844 = vpack.c.b16 %v6829, %v6828
      %v6845 = vpack.c.b16 %v6831, %v6830
      %v6846 = vpack.c.b16 %v6833, %v6832
      %v6847 = vpack.c.b16 %v6835, %v6834
      %v6848 = vpack.c.b16 %v6837, %v6836
      %v6849 = vpack.c.b16 %v6839, %v6838
      %v6850 = vpack.c.b16 %v6841, %v6840
      %v6851 = vpack.c.b16 %v6843, %v6842
      %6860 = vmatprep.subr.bf16.mxu0 0
      %6861 = vmatpush1.bf16.msra.mxu0 %v6851
      %6862 = vmatprep.subr.bf16.mxu0 0
      %6863 = vmatpush1.bf16.msra.mxu0 %v6850
      %6864 = vmatprep.subr.bf16.mxu0 0
      %6865 = vmatpush1.bf16.msra.mxu0 %v6849
      %6866 = vmatprep.subr.bf16.mxu0 0
      %6867 = vmatpush1.bf16.msra.mxu0 %v6848
      %6868 = vmatprep.subr.bf16.mxu0 0
      %6869 = vmatpush1.bf16.msra.mxu0 %v6847
      %6870 = vmatprep.subr.bf16.mxu0 0
      %6871 = vmatpush1.bf16.msra.mxu0 %v6846
      %6872 = vmatprep.subr.bf16.mxu0 0
      %6873 = vmatpush1.bf16.msra.mxu0 %v6845
      %6874 = vmatprep.subr.bf16.mxu0 0
      %6875 = vmatpush1.bf16.msra.mxu0 %v6844
      %6876 = vmatprep.subr.bf16.mxu0 0
      %6877 = vmatpush2.bf16.msra.mxu0 0
      %6878 = vmatprep.subr.bf16.mxu0 0
      %6879 = vmatpush2.bf16.msra.mxu0 0
      %6880 = vmatprep.subr.bf16.mxu0 0
      %6881 = vmatpush2.bf16.msra.mxu0 0
      %6882 = vmatprep.subr.bf16.mxu0 0
      %6883 = vmatpush2.bf16.msra.mxu0 0
      %6884 = vmatprep.subr.bf16.mxu0 0
      %6885 = vmatpush2.bf16.msra.mxu0 0
      %6886 = vmatprep.subr.bf16.mxu0 0
      %6887 = vmatpush2.bf16.msra.mxu0 0
      %6888 = vmatprep.subr.bf16.mxu0 0
      %6889 = vmatpush2.bf16.msra.mxu0 0
      %6890 = vmatprep.subr.bf16.mxu0 0
      %6891 = vmatpush2.bf16.msra.mxu0 0
      %6892 = vmatprep.mubr.bf16.mxu0 0
      %6893 = vmatmul.mubr.bf16.gmra.mxu0 %v6675
      %v6894 = vpop.f32.mrf.mxu0
      %v6895 = vadd.f32 %v6798, %v6894
      %v6896 = vpop.f32.mrf.mxu0
      %v6897 = vpop.f32.mrf.mxu0
      %v6898 = vadd.f32 %v6801, %v6897
      %v6899 = vpop.f32.mrf.mxu0
      %6900 = vmatprep.mubr.bf16.mxu0 0
      %6901 = vmatmul.mubr.bf16.gmra.mxu0 %v6676
      %v6902 = vpop.f32.mrf.mxu0
      %v6903 = vadd.f32 %v6806, %v6902
      %v6904 = vpop.f32.mrf.mxu0
      %v6905 = vpop.f32.mrf.mxu0
      %v6906 = vadd.f32 %v6809, %v6905
      %v6907 = vpop.f32.mrf.mxu0
      %6908 = vdwg.mxu0
      %v6909 = vld [vmem:[%s1 + $0x288] sm:$0xf]
      %v6910 = vld [vmem:[%s1 + $0x28c] sm:$0xf]
      %v6911 = vld [vmem:[%s1 + $0x290] sm:$0xf]
      %v6912 = vld [vmem:[%s1 + $0x294] sm:$0xf]
      %v6913 = vld [vmem:[%s1 + $0x298] sm:$0xf]
      %v6914 = vld [vmem:[%s1 + $0x29c] sm:$0xf]
      %v6915 = vld [vmem:[%s1 + $0x2a0] sm:$0xf]
      %v6916 = vld [vmem:[%s1 + $0x2a4] sm:$0xf]
      %v6917 = vld [vmem:[%s1 + $0x2a8] sm:$0xf]
      %v6918 = vld [vmem:[%s1 + $0x2ac] sm:$0xf]
      %v6919 = vld [vmem:[%s1 + $0x2b0] sm:$0xf]
      %v6920 = vld [vmem:[%s1 + $0x2b4] sm:$0xf]
      %v6921 = vld [vmem:[%s1 + $0x2b8] sm:$0xf]
      %v6922 = vld [vmem:[%s1 + $0x2bc] sm:$0xf]
      %v6923 = vld [vmem:[%s1 + $0x2c0] sm:$0xf]
      %v6924 = vld [vmem:[%s1 + $0x2c4] sm:$0xf]
      %v6941 = vunpack.c.l.b16 %v6909
      %v6942 = vunpack.c.l.b16 %v6910
      %v6943 = vunpack.c.l.b16 %v6911
      %v6944 = vunpack.c.l.b16 %v6912
      %v6945 = vunpack.c.l.b16 %v6913
      %v6946 = vunpack.c.l.b16 %v6914
      %v6947 = vunpack.c.l.b16 %v6915
      %v6948 = vunpack.c.l.b16 %v6916
      %v6949 = vunpack.c.l.b16 %v6917
      %v6950 = vunpack.c.l.b16 %v6918
      %v6951 = vunpack.c.l.b16 %v6919
      %v6952 = vunpack.c.l.b16 %v6920
      %v6953 = vunpack.c.l.b16 %v6921
      %v6954 = vunpack.c.l.b16 %v6922
      %v6955 = vunpack.c.l.b16 %v6923
      %v6956 = vunpack.c.l.b16 %v6924
      %v6957 = vpack.c.b16 %v6942, %v6941
      %v6958 = vpack.c.b16 %v6944, %v6943
      %v6959 = vpack.c.b16 %v6946, %v6945
      %v6960 = vpack.c.b16 %v6948, %v6947
      %v6961 = vpack.c.b16 %v6950, %v6949
      %v6962 = vpack.c.b16 %v6952, %v6951
      %v6963 = vpack.c.b16 %v6954, %v6953
      %v6964 = vpack.c.b16 %v6956, %v6955
      %6973 = vmatprep.subr.bf16.mxu0 0
      %6974 = vmatpush1.bf16.msra.mxu0 %v6964
      %6975 = vmatprep.subr.bf16.mxu0 0
      %6976 = vmatpush1.bf16.msra.mxu0 %v6963
      %6977 = vmatprep.subr.bf16.mxu0 0
      %6978 = vmatpush1.bf16.msra.mxu0 %v6962
      %6979 = vmatprep.subr.bf16.mxu0 0
      %6980 = vmatpush1.bf16.msra.mxu0 %v6961
      %6981 = vmatprep.subr.bf16.mxu0 0
      %6982 = vmatpush1.bf16.msra.mxu0 %v6960
      %6983 = vmatprep.subr.bf16.mxu0 0
      %6984 = vmatpush1.bf16.msra.mxu0 %v6959
      %6985 = vmatprep.subr.bf16.mxu0 0
      %6986 = vmatpush1.bf16.msra.mxu0 %v6958
      %6987 = vmatprep.subr.bf16.mxu0 0
      %6988 = vmatpush1.bf16.msra.mxu0 %v6957
      %6989 = vmatprep.subr.bf16.mxu0 0
      %6990 = vmatpush2.bf16.msra.mxu0 0
      %6991 = vmatprep.subr.bf16.mxu0 0
      %6992 = vmatpush2.bf16.msra.mxu0 0
      %6993 = vmatprep.subr.bf16.mxu0 0
      %6994 = vmatpush2.bf16.msra.mxu0 0
      %6995 = vmatprep.subr.bf16.mxu0 0
      %6996 = vmatpush2.bf16.msra.mxu0 0
      %6997 = vmatprep.subr.bf16.mxu0 0
      %6998 = vmatpush2.bf16.msra.mxu0 0
      %6999 = vmatprep.subr.bf16.mxu0 0
      %7000 = vmatpush2.bf16.msra.mxu0 0
      %7001 = vmatprep.subr.bf16.mxu0 0
      %7002 = vmatpush2.bf16.msra.mxu0 0
      %7003 = vmatprep.subr.bf16.mxu0 0
      %7004 = vmatpush2.bf16.msra.mxu0 0
      %7005 = vmatprep.mubr.bf16.mxu0 0
      %7006 = vmatmul.mubr.bf16.gmra.mxu0 %v6679
      %v7007 = vpop.f32.mrf.mxu0
      %v7008 = vadd.f32 0.0, %v7007
      %v7009 = vpop.f32.mrf.mxu0
      %v7010 = vpop.f32.mrf.mxu0
      %v7011 = vadd.f32 0.0, %v7010
      %v7012 = vpop.f32.mrf.mxu0
      %7013 = vmatprep.mubr.bf16.mxu0 0
      %7014 = vmatmul.mubr.bf16.gmra.mxu0 %v6680
      %v7015 = vpop.f32.mrf.mxu0
      %v7016 = vadd.f32 0.0, %v7015
      %v7017 = vpop.f32.mrf.mxu0
      %v7018 = vpop.f32.mrf.mxu0
      %v7019 = vadd.f32 0.0, %v7018
      %v7020 = vpop.f32.mrf.mxu0
      %7021 = vdwg.mxu0
      %v7022 = vadd.f32 %v6895, %v7008
      %v7023 = vadd.f32 %v6898, %v7011
      %v7024 = vadd.f32 %v6903, %v7016
      %v7025 = vadd.f32 %v6906, %v7019
      %v7026 = vld [vmem:[%s1 + $0x2c8] sm:$0xf]
      %v7027 = vld [vmem:[%s1 + $0x2cc] sm:$0xf]
      %v7028 = vld [vmem:[%s1 + $0x2d0] sm:$0xf]
      %v7029 = vld [vmem:[%s1 + $0x2d4] sm:$0xf]
      %v7030 = vld [vmem:[%s1 + $0x2d8] sm:$0xf]
      %v7031 = vld [vmem:[%s1 + $0x2dc] sm:$0xf]
      %v7032 = vld [vmem:[%s1 + $0x2e0] sm:$0xf]
      %v7033 = vld [vmem:[%s1 + $0x2e4] sm:$0xf]
      %v7034 = vld [vmem:[%s1 + $0x2e8] sm:$0xf]
      %v7035 = vld [vmem:[%s1 + $0x2ec] sm:$0xf]
      %v7036 = vld [vmem:[%s1 + $0x2f0] sm:$0xf]
      %v7037 = vld [vmem:[%s1 + $0x2f4] sm:$0xf]
      %v7038 = vld [vmem:[%s1 + $0x2f8] sm:$0xf]
      %v7039 = vld [vmem:[%s1 + $0x2fc] sm:$0xf]
      %v7040 = vld [vmem:[%s1 + $0x300] sm:$0xf]
      %v7041 = vld [vmem:[%s1 + $0x304] sm:$0xf]
      %v7058 = vunpack.c.l.b16 %v7026
      %v7059 = vunpack.c.l.b16 %v7027
      %v7060 = vunpack.c.l.b16 %v7028
      %v7061 = vunpack.c.l.b16 %v7029
      %v7062 = vunpack.c.l.b16 %v7030
      %v7063 = vunpack.c.l.b16 %v7031
      %v7064 = vunpack.c.l.b16 %v7032
      %v7065 = vunpack.c.l.b16 %v7033
      %v7066 = vunpack.c.l.b16 %v7034
      %v7067 = vunpack.c.l.b16 %v7035
      %v7068 = vunpack.c.l.b16 %v7036
      %v7069 = vunpack.c.l.b16 %v7037
      %v7070 = vunpack.c.l.b16 %v7038
      %v7071 = vunpack.c.l.b16 %v7039
      %v7072 = vunpack.c.l.b16 %v7040
      %v7073 = vunpack.c.l.b16 %v7041
      %v7074 = vpack.c.b16 %v7059, %v7058
      %v7075 = vpack.c.b16 %v7061, %v7060
      %v7076 = vpack.c.b16 %v7063, %v7062
      %v7077 = vpack.c.b16 %v7065, %v7064
      %v7078 = vpack.c.b16 %v7067, %v7066
      %v7079 = vpack.c.b16 %v7069, %v7068
      %v7080 = vpack.c.b16 %v7071, %v7070
      %v7081 = vpack.c.b16 %v7073, %v7072
      %7090 = vmatprep.subr.bf16.mxu0 0
      %7091 = vmatpush1.bf16.msra.mxu0 %v7081
      %7092 = vmatprep.subr.bf16.mxu0 0
      %7093 = vmatpush1.bf16.msra.mxu0 %v7080
      %7094 = vmatprep.subr.bf16.mxu0 0
      %7095 = vmatpush1.bf16.msra.mxu0 %v7079
      %7096 = vmatprep.subr.bf16.mxu0 0
      %7097 = vmatpush1.bf16.msra.mxu0 %v7078
      %7098 = vmatprep.subr.bf16.mxu0 0
      %7099 = vmatpush1.bf16.msra.mxu0 %v7077
      %7100 = vmatprep.subr.bf16.mxu0 0
      %7101 = vmatpush1.bf16.msra.mxu0 %v7076
      %7102 = vmatprep.subr.bf16.mxu0 0
      %7103 = vmatpush1.bf16.msra.mxu0 %v7075
      %7104 = vmatprep.subr.bf16.mxu0 0
      %7105 = vmatpush1.bf16.msra.mxu0 %v7074
      %7106 = vmatprep.subr.bf16.mxu0 0
      %7107 = vmatpush2.bf16.msra.mxu0 0
      %7108 = vmatprep.subr.bf16.mxu0 0
      %7109 = vmatpush2.bf16.msra.mxu0 0
      %7110 = vmatprep.subr.bf16.mxu0 0
      %7111 = vmatpush2.bf16.msra.mxu0 0
      %7112 = vmatprep.subr.bf16.mxu0 0
      %7113 = vmatpush2.bf16.msra.mxu0 0
      %7114 = vmatprep.subr.bf16.mxu0 0
      %7115 = vmatpush2.bf16.msra.mxu0 0
      %7116 = vmatprep.subr.bf16.mxu0 0
      %7117 = vmatpush2.bf16.msra.mxu0 0
      %7118 = vmatprep.subr.bf16.mxu0 0
      %7119 = vmatpush2.bf16.msra.mxu0 0
      %7120 = vmatprep.subr.bf16.mxu0 0
      %7121 = vmatpush2.bf16.msra.mxu0 0
      %7122 = vmatprep.mubr.bf16.mxu0 0
      %7123 = vmatmul.mubr.bf16.gmra.mxu0 %v6681
      %v7124 = vpop.f32.mrf.mxu0
      %v7125 = vadd.f32 0.0, %v7124
      %v7126 = vpop.f32.mrf.mxu0
      %v7127 = vpop.f32.mrf.mxu0
      %v7128 = vadd.f32 0.0, %v7127
      %v7129 = vpop.f32.mrf.mxu0
      %7130 = vmatprep.mubr.bf16.mxu0 0
      %7131 = vmatmul.mubr.bf16.gmra.mxu0 %v6682
      %v7132 = vpop.f32.mrf.mxu0
      %v7133 = vadd.f32 0.0, %v7132
      %v7134 = vpop.f32.mrf.mxu0
      %v7135 = vpop.f32.mrf.mxu0
      %v7136 = vadd.f32 0.0, %v7135
      %v7137 = vpop.f32.mrf.mxu0
      %7138 = vdwg.mxu0
      %v7139 = vadd.f32 %v7022, %v7125
      %v7140 = vadd.f32 %v7023, %v7128
      %v7141 = vadd.f32 %v7024, %v7133
      %v7142 = vadd.f32 %v7025, %v7136
      %v7143 = vld [vmem:[%s2 + $0x3] sm:$0x1]
      %v7144 = vlaneseq
      %v7145 = vshrl.u32 %v7144, 7
      %v7146 = vsub.s32 0, %v7145
      %v7147 = vrot.slane %v7143, %v7146
      %v7148 = vadd.f32 %v7139, %v7147
      %v7149 = vadd.f32 %v7140, %v7147
      %v7150 = vadd.f32 %v7141, %v7147
      %v7151 = vadd.f32 %v7142, %v7147
      %v7152 = vmul.f32 %v7148, 0.5
      %v7153 = vmul.f32 %v7149, 0.5
      %v7154 = vmul.f32 %v7150, 0.5
      %v7155 = vmul.f32 %v7151, 0.5
      %v7156 = vtanh.pop %v7152
      %v7157 = vtanh.pop %v7153
      %v7158 = vtanh.pop %v7154
      %v7159 = vtanh.pop %v7155
      %v7160 = vmul.f32 %v7156, 0.5
      %v7161 = vmul.f32 %v7157, 0.5
      %v7162 = vmul.f32 %v7158, 0.5
      %v7163 = vmul.f32 %v7159, 0.5
      %v7164 = vadd.f32 %v7160, 0.5
      %v7165 = vadd.f32 %v7161, 0.5
      %v7166 = vadd.f32 %v7162, 0.5
      %v7167 = vadd.f32 %v7163, 0.5
      %v7168 = vmul.f32 %v7148, %v7164
      %v7169 = vmul.f32 %v7149, %v7165
      %v7170 = vmul.f32 %v7150, %v7166
      %v7171 = vmul.f32 %v7151, %v7167
      %v7172 = vpack.c.bf16 %v7169, %v7168
      %v7173 = vpack.c.bf16 %v7171, %v7170
      %v7174 = vld [vmem:[%s1 + $0x308] sm:$0xf]
      %v7175 = vld [vmem:[%s1 + $0x30c] sm:$0xf]
      %v7176 = vld [vmem:[%s1 + $0x310] sm:$0xf]
      %v7177 = vld [vmem:[%s1 + $0x314] sm:$0xf]
      %v7178 = vld [vmem:[%s1 + $0x318] sm:$0xf]
      %v7179 = vld [vmem:[%s1 + $0x31c] sm:$0xf]
      %v7180 = vld [vmem:[%s1 + $0x320] sm:$0xf]
      %v7181 = vld [vmem:[%s1 + $0x324] sm:$0xf]
      %v7182 = vld [vmem:[%s1 + $0x328] sm:$0xf]
      %v7183 = vld [vmem:[%s1 + $0x32c] sm:$0xf]
      %v7184 = vld [vmem:[%s1 + $0x330] sm:$0xf]
      %v7185 = vld [vmem:[%s1 + $0x334] sm:$0xf]
      %v7186 = vld [vmem:[%s1 + $0x338] sm:$0xf]
      %v7187 = vld [vmem:[%s1 + $0x33c] sm:$0xf]
      %v7188 = vld [vmem:[%s1 + $0x340] sm:$0xf]
      %v7189 = vld [vmem:[%s1 + $0x344] sm:$0xf]
      %v7190 = vld [vmem:[%s2 + $0x4] sm:$0x1]
      %v7191 = vlaneseq
      %v7192 = vshrl.u32 %v7191, 7
      %v7193 = vsub.s32 0, %v7192
      %v7194 = vrot.slane %v7190, %v7193
      %v7211 = vunpack.c.l.b16 %v7174
      %v7212 = vunpack.c.l.b16 %v7175
      %v7213 = vunpack.c.l.b16 %v7176
      %v7214 = vunpack.c.l.b16 %v7177
      %v7215 = vunpack.c.l.b16 %v7178
      %v7216 = vunpack.c.l.b16 %v7179
      %v7217 = vunpack.c.l.b16 %v7180
      %v7218 = vunpack.c.l.b16 %v7181
      %v7219 = vunpack.c.l.b16 %v7182
      %v7220 = vunpack.c.l.b16 %v7183
      %v7221 = vunpack.c.l.b16 %v7184
      %v7222 = vunpack.c.l.b16 %v7185
      %v7223 = vunpack.c.l.b16 %v7186
      %v7224 = vunpack.c.l.b16 %v7187
      %v7225 = vunpack.c.l.b16 %v7188
      %v7226 = vunpack.c.l.b16 %v7189
      %v7227 = vpack.c.b16 %v7212, %v7211
      %v7228 = vpack.c.b16 %v7214, %v7213
      %v7229 = vpack.c.b16 %v7216, %v7215
      %v7230 = vpack.c.b16 %v7218, %v7217
      %v7231 = vpack.c.b16 %v7220, %v7219
      %v7232 = vpack.c.b16 %v7222, %v7221
      %v7233 = vpack.c.b16 %v7224, %v7223
      %v7234 = vpack.c.b16 %v7226, %v7225
      %7243 = vmatprep.subr.bf16.mxu0 0
      %7244 = vmatpush1.bf16.msra.mxu0 %v7234
      %7245 = vmatprep.subr.bf16.mxu0 0
      %7246 = vmatpush1.bf16.msra.mxu0 %v7233
      %7247 = vmatprep.subr.bf16.mxu0 0
      %7248 = vmatpush1.bf16.msra.mxu0 %v7232
      %7249 = vmatprep.subr.bf16.mxu0 0
      %7250 = vmatpush1.bf16.msra.mxu0 %v7231
      %7251 = vmatprep.subr.bf16.mxu0 0
      %7252 = vmatpush1.bf16.msra.mxu0 %v7230
      %7253 = vmatprep.subr.bf16.mxu0 0
      %7254 = vmatpush1.bf16.msra.mxu0 %v7229
      %7255 = vmatprep.subr.bf16.mxu0 0
      %7256 = vmatpush1.bf16.msra.mxu0 %v7228
      %7257 = vmatprep.subr.bf16.mxu0 0
      %7258 = vmatpush1.bf16.msra.mxu0 %v7227
      %7259 = vmatprep.subr.bf16.mxu0 0
      %7260 = vmatpush2.bf16.msra.mxu0 0
      %7261 = vmatprep.subr.bf16.mxu0 0
      %7262 = vmatpush2.bf16.msra.mxu0 0
      %7263 = vmatprep.subr.bf16.mxu0 0
      %7264 = vmatpush2.bf16.msra.mxu0 0
      %7265 = vmatprep.subr.bf16.mxu0 0
      %7266 = vmatpush2.bf16.msra.mxu0 0
      %7267 = vmatprep.subr.bf16.mxu0 0
      %7268 = vmatpush2.bf16.msra.mxu0 0
      %7269 = vmatprep.subr.bf16.mxu0 0
      %7270 = vmatpush2.bf16.msra.mxu0 0
      %7271 = vmatprep.subr.bf16.mxu0 0
      %7272 = vmatpush2.bf16.msra.mxu0 0
      %7273 = vmatprep.subr.bf16.mxu0 0
      %7274 = vmatpush2.bf16.msra.mxu0 0
      %7275 = vmatprep.mubr.bf16.mxu0 0
      %7276 = vmatmul.mubr.bf16.gmra.mxu0 %v5866
      %v7277 = vpop.f32.mrf.mxu0
      %v7278 = vadd.f32 %v7194, %v7277
      %v7279 = vpop.f32.mrf.mxu0
      %v7280 = vpop.f32.mrf.mxu0
      %v7281 = vadd.f32 %v7194, %v7280
      %v7282 = vpop.f32.mrf.mxu0
      %7283 = vmatprep.mubr.bf16.mxu0 0
      %7284 = vmatmul.mubr.bf16.gmra.mxu0 %v5867
      %v7285 = vpop.f32.mrf.mxu0
      %v7286 = vadd.f32 %v7194, %v7285
      %v7287 = vpop.f32.mrf.mxu0
      %v7288 = vpop.f32.mrf.mxu0
      %v7289 = vadd.f32 %v7194, %v7288
      %v7290 = vpop.f32.mrf.mxu0
      %7291 = vmatprep.mubr.bf16.mxu0 0
      %7292 = vmatmul.mubr.bf16.gmra.mxu0 %v5868
      %v7293 = vpop.f32.mrf.mxu0
      %v7294 = vadd.f32 %v7194, %v7293
      %v7295 = vpop.f32.mrf.mxu0
      %v7296 = vpop.f32.mrf.mxu0
      %v7297 = vadd.f32 %v7194, %v7296
      %v7298 = vpop.f32.mrf.mxu0
      %7299 = vmatprep.mubr.bf16.mxu0 0
      %7300 = vmatmul.mubr.bf16.gmra.mxu0 %v5869
      %v7301 = vpop.f32.mrf.mxu0
      %v7302 = vadd.f32 %v7194, %v7301
      %v7303 = vpop.f32.mrf.mxu0
      %v7304 = vpop.f32.mrf.mxu0
      %v7305 = vadd.f32 %v7194, %v7304
      %v7306 = vpop.f32.mrf.mxu0
      %7307 = vmatprep.mubr.bf16.mxu0 0
      %7308 = vmatmul.mubr.bf16.gmra.mxu0 %v5870
      %v7309 = vpop.f32.mrf.mxu0
      %v7310 = vadd.f32 %v7194, %v7309
      %v7311 = vpop.f32.mrf.mxu0
      %v7312 = vpop.f32.mrf.mxu0
      %v7313 = vadd.f32 %v7194, %v7312
      %v7314 = vpop.f32.mrf.mxu0
      %7315 = vmatprep.mubr.bf16.mxu0 0
      %7316 = vmatmul.mubr.bf16.gmra.mxu0 %v5871
      %v7317 = vpop.f32.mrf.mxu0
      %v7318 = vadd.f32 %v7194, %v7317
      %v7319 = vpop.f32.mrf.mxu0
      %v7320 = vpop.f32.mrf.mxu0
      %v7321 = vadd.f32 %v7194, %v7320
      %v7322 = vpop.f32.mrf.mxu0
      %7323 = vmatprep.mubr.bf16.mxu0 0
      %7324 = vmatmul.mubr.bf16.gmra.mxu0 %v5872
      %v7325 = vpop.f32.mrf.mxu0
      %v7326 = vadd.f32 %v7194, %v7325
      %v7327 = vpop.f32.mrf.mxu0
      %v7328 = vpop.f32.mrf.mxu0
      %v7329 = vadd.f32 %v7194, %v7328
      %v7330 = vpop.f32.mrf.mxu0
      %7331 = vmatprep.mubr.bf16.mxu0 0
      %7332 = vmatmul.mubr.bf16.gmra.mxu0 %v5873
      %v7333 = vpop.f32.mrf.mxu0
      %v7334 = vadd.f32 %v7194, %v7333
      %v7335 = vpop.f32.mrf.mxu0
      %v7336 = vpop.f32.mrf.mxu0
      %v7337 = vadd.f32 %v7194, %v7336
      %v7338 = vpop.f32.mrf.mxu0
      %7339 = vmatprep.mubr.bf16.mxu0 0
      %7340 = vmatmul.mubr.bf16.gmra.mxu0 %v5874
      %v7341 = vpop.f32.mrf.mxu0
      %v7342 = vadd.f32 %v7194, %v7341
      %v7343 = vpop.f32.mrf.mxu0
      %v7344 = vpop.f32.mrf.mxu0
      %v7345 = vadd.f32 %v7194, %v7344
      %v7346 = vpop.f32.mrf.mxu0
      %7347 = vmatprep.mubr.bf16.mxu0 0
      %7348 = vmatmul.mubr.bf16.gmra.mxu0 %v5875
      %v7349 = vpop.f32.mrf.mxu0
      %v7350 = vadd.f32 %v7194, %v7349
      %v7351 = vpop.f32.mrf.mxu0
      %v7352 = vpop.f32.mrf.mxu0
      %v7353 = vadd.f32 %v7194, %v7352
      %v7354 = vpop.f32.mrf.mxu0
      %7355 = vmatprep.mubr.bf16.mxu0 0
      %7356 = vmatmul.mubr.bf16.gmra.mxu0 %v5876
      %v7357 = vpop.f32.mrf.mxu0
      %v7358 = vadd.f32 %v7194, %v7357
      %v7359 = vpop.f32.mrf.mxu0
      %v7360 = vpop.f32.mrf.mxu0
      %v7361 = vadd.f32 %v7194, %v7360
      %v7362 = vpop.f32.mrf.mxu0
      %7363 = vmatprep.mubr.bf16.mxu0 0
      %7364 = vmatmul.mubr.bf16.gmra.mxu0 %v5877
      %v7365 = vpop.f32.mrf.mxu0
      %v7366 = vadd.f32 %v7194, %v7365
      %v7367 = vpop.f32.mrf.mxu0
      %v7368 = vpop.f32.mrf.mxu0
      %v7369 = vadd.f32 %v7194, %v7368
      %v7370 = vpop.f32.mrf.mxu0
      %7371 = vmatprep.mubr.bf16.mxu0 0
      %7372 = vmatmul.mubr.bf16.gmra.mxu0 %v5878
      %v7373 = vpop.f32.mrf.mxu0
      %v7374 = vadd.f32 %v7194, %v7373
      %v7375 = vpop.f32.mrf.mxu0
      %v7376 = vpop.f32.mrf.mxu0
      %v7377 = vadd.f32 %v7194, %v7376
      %v7378 = vpop.f32.mrf.mxu0
      %7379 = vmatprep.mubr.bf16.mxu0 0
      %7380 = vmatmul.mubr.bf16.gmra.mxu0 %v5879
      %v7381 = vpop.f32.mrf.mxu0
      %v7382 = vadd.f32 %v7194, %v7381
      %v7383 = vpop.f32.mrf.mxu0
      %v7384 = vpop.f32.mrf.mxu0
      %v7385 = vadd.f32 %v7194, %v7384
      %v7386 = vpop.f32.mrf.mxu0
      %7387 = vmatprep.mubr.bf16.mxu0 0
      %7388 = vmatmul.mubr.bf16.gmra.mxu0 %v5880
      %v7389 = vpop.f32.mrf.mxu0
      %v7390 = vadd.f32 %v7194, %v7389
      %v7391 = vpop.f32.mrf.mxu0
      %v7392 = vpop.f32.mrf.mxu0
      %v7393 = vadd.f32 %v7194, %v7392
      %v7394 = vpop.f32.mrf.mxu0
      %7395 = vmatprep.mubr.bf16.mxu0 0
      %7396 = vmatmul.mubr.bf16.gmra.mxu0 %v5881
      %v7397 = vpop.f32.mrf.mxu0
      %v7398 = vadd.f32 %v7194, %v7397
      %v7399 = vpop.f32.mrf.mxu0
      %v7400 = vpop.f32.mrf.mxu0
      %v7401 = vadd.f32 %v7194, %v7400
      %v7402 = vpop.f32.mrf.mxu0
      %7403 = vmatprep.mubr.bf16.mxu0 0
      %7404 = vmatmul.mubr.bf16.gmra.mxu0 %v5882
      %v7405 = vpop.f32.mrf.mxu0
      %v7406 = vadd.f32 %v7194, %v7405
      %v7407 = vpop.f32.mrf.mxu0
      %v7408 = vpop.f32.mrf.mxu0
      %v7409 = vadd.f32 %v7194, %v7408
      %v7410 = vpop.f32.mrf.mxu0
      %7411 = vmatprep.mubr.bf16.mxu0 0
      %7412 = vmatmul.mubr.bf16.gmra.mxu0 %v5883
      %v7413 = vpop.f32.mrf.mxu0
      %v7414 = vadd.f32 %v7194, %v7413
      %v7415 = vpop.f32.mrf.mxu0
      %v7416 = vpop.f32.mrf.mxu0
      %v7417 = vadd.f32 %v7194, %v7416
      %v7418 = vpop.f32.mrf.mxu0
      %7419 = vmatprep.mubr.bf16.mxu0 0
      %7420 = vmatmul.mubr.bf16.gmra.mxu0 %v5884
      %v7421 = vpop.f32.mrf.mxu0
      %v7422 = vadd.f32 %v7194, %v7421
      %v7423 = vpop.f32.mrf.mxu0
      %v7424 = vpop.f32.mrf.mxu0
      %v7425 = vadd.f32 %v7194, %v7424
      %v7426 = vpop.f32.mrf.mxu0
      %7427 = vmatprep.mubr.bf16.mxu0 0
      %7428 = vmatmul.mubr.bf16.gmra.mxu0 %v5885
      %v7429 = vpop.f32.mrf.mxu0
      %v7430 = vadd.f32 %v7194, %v7429
      %v7431 = vpop.f32.mrf.mxu0
      %v7432 = vpop.f32.mrf.mxu0
      %v7433 = vadd.f32 %v7194, %v7432
      %v7434 = vpop.f32.mrf.mxu0
      %7435 = vmatprep.mubr.bf16.mxu0 0
      %7436 = vmatmul.mubr.bf16.gmra.mxu0 %v5886
      %v7437 = vpop.f32.mrf.mxu0
      %v7438 = vadd.f32 %v7194, %v7437
      %v7439 = vpop.f32.mrf.mxu0
      %v7440 = vpop.f32.mrf.mxu0
      %v7441 = vadd.f32 %v7194, %v7440
      %v7442 = vpop.f32.mrf.mxu0
      %7443 = vmatprep.mubr.bf16.mxu0 0
      %7444 = vmatmul.mubr.bf16.gmra.mxu0 %v5887
      %v7445 = vpop.f32.mrf.mxu0
      %v7446 = vadd.f32 %v7194, %v7445
      %v7447 = vpop.f32.mrf.mxu0
      %v7448 = vpop.f32.mrf.mxu0
      %v7449 = vadd.f32 %v7194, %v7448
      %v7450 = vpop.f32.mrf.mxu0
      %7451 = vmatprep.mubr.bf16.mxu0 0
      %7452 = vmatmul.mubr.bf16.gmra.mxu0 %v5888
      %v7453 = vpop.f32.mrf.mxu0
      %v7454 = vadd.f32 %v7194, %v7453
      %v7455 = vpop.f32.mrf.mxu0
      %v7456 = vpop.f32.mrf.mxu0
      %v7457 = vadd.f32 %v7194, %v7456
      %v7458 = vpop.f32.mrf.mxu0
      %7459 = vmatprep.mubr.bf16.mxu0 0
      %7460 = vmatmul.mubr.bf16.gmra.mxu0 %v5889
      %v7461 = vpop.f32.mrf.mxu0
      %v7462 = vadd.f32 %v7194, %v7461
      %v7463 = vpop.f32.mrf.mxu0
      %v7464 = vpop.f32.mrf.mxu0
      %v7465 = vadd.f32 %v7194, %v7464
      %v7466 = vpop.f32.mrf.mxu0
      %7467 = vmatprep.mubr.bf16.mxu0 0
      %7468 = vmatmul.mubr.bf16.gmra.mxu0 %v5890
      %v7469 = vpop.f32.mrf.mxu0
      %v7470 = vadd.f32 %v7194, %v7469
      %v7471 = vpop.f32.mrf.mxu0
      %v7472 = vpop.f32.mrf.mxu0
      %v7473 = vadd.f32 %v7194, %v7472
      %v7474 = vpop.f32.mrf.mxu0
      %7475 = vmatprep.mubr.bf16.mxu0 0
      %7476 = vmatmul.mubr.bf16.gmra.mxu0 %v5891
      %v7477 = vpop.f32.mrf.mxu0
      %v7478 = vadd.f32 %v7194, %v7477
      %v7479 = vpop.f32.mrf.mxu0
      %v7480 = vpop.f32.mrf.mxu0
      %v7481 = vadd.f32 %v7194, %v7480
      %v7482 = vpop.f32.mrf.mxu0
      %7483 = vmatprep.mubr.bf16.mxu0 0
      %7484 = vmatmul.mubr.bf16.gmra.mxu0 %v5892
      %v7485 = vpop.f32.mrf.mxu0
      %v7486 = vadd.f32 %v7194, %v7485
      %v7487 = vpop.f32.mrf.mxu0
      %v7488 = vpop.f32.mrf.mxu0
      %v7489 = vadd.f32 %v7194, %v7488
      %v7490 = vpop.f32.mrf.mxu0
      %7491 = vmatprep.mubr.bf16.mxu0 0
      %7492 = vmatmul.mubr.bf16.gmra.mxu0 %v5893
      %v7493 = vpop.f32.mrf.mxu0
      %v7494 = vadd.f32 %v7194, %v7493
      %v7495 = vpop.f32.mrf.mxu0
      %v7496 = vpop.f32.mrf.mxu0
      %v7497 = vadd.f32 %v7194, %v7496
      %v7498 = vpop.f32.mrf.mxu0
      %7499 = vmatprep.mubr.bf16.mxu0 0
      %7500 = vmatmul.mubr.bf16.gmra.mxu0 %v5894
      %v7501 = vpop.f32.mrf.mxu0
      %v7502 = vadd.f32 %v7194, %v7501
      %v7503 = vpop.f32.mrf.mxu0
      %v7504 = vpop.f32.mrf.mxu0
      %v7505 = vadd.f32 %v7194, %v7504
      %v7506 = vpop.f32.mrf.mxu0
      %7507 = vmatprep.mubr.bf16.mxu0 0
      %7508 = vmatmul.mubr.bf16.gmra.mxu0 %v5895
      %v7509 = vpop.f32.mrf.mxu0
      %v7510 = vadd.f32 %v7194, %v7509
      %v7511 = vpop.f32.mrf.mxu0
      %v7512 = vpop.f32.mrf.mxu0
      %v7513 = vadd.f32 %v7194, %v7512
      %v7514 = vpop.f32.mrf.mxu0
      %7515 = vmatprep.mubr.bf16.mxu0 0
      %7516 = vmatmul.mubr.bf16.gmra.mxu0 %v5896
      %v7517 = vpop.f32.mrf.mxu0
      %v7518 = vadd.f32 %v7194, %v7517
      %v7519 = vpop.f32.mrf.mxu0
      %v7520 = vpop.f32.mrf.mxu0
      %v7521 = vadd.f32 %v7194, %v7520
      %v7522 = vpop.f32.mrf.mxu0
      %7523 = vmatprep.mubr.bf16.mxu0 0
      %7524 = vmatmul.mubr.bf16.gmra.mxu0 %v5897
      %v7525 = vpop.f32.mrf.mxu0
      %v7526 = vadd.f32 %v7194, %v7525
      %v7527 = vpop.f32.mrf.mxu0
      %v7528 = vpop.f32.mrf.mxu0
      %v7529 = vadd.f32 %v7194, %v7528
      %v7530 = vpop.f32.mrf.mxu0
      %7531 = vdwg.mxu0
      %v7532 = vmul.f32 %v7278, 0.5
      %v7533 = vmul.f32 %v7281, 0.5
      %v7534 = vmul.f32 %v7286, 0.5
      %v7535 = vmul.f32 %v7289, 0.5
      %v7536 = vmul.f32 %v7294, 0.5
      %v7537 = vmul.f32 %v7297, 0.5
      %v7538 = vmul.f32 %v7302, 0.5
      %v7539 = vmul.f32 %v7305, 0.5
      %v7540 = vmul.f32 %v7310, 0.5
      %v7541 = vmul.f32 %v7313, 0.5
      %v7542 = vmul.f32 %v7318, 0.5
      %v7543 = vmul.f32 %v7321, 0.5
      %v7544 = vmul.f32 %v7326, 0.5
      %v7545 = vmul.f32 %v7329, 0.5
      %v7546 = vmul.f32 %v7334, 0.5
      %v7547 = vmul.f32 %v7337, 0.5
      %v7548 = vmul.f32 %v7342, 0.5
      %v7549 = vmul.f32 %v7345, 0.5
      %v7550 = vmul.f32 %v7350, 0.5
      %v7551 = vmul.f32 %v7353, 0.5
      %v7552 = vmul.f32 %v7358, 0.5
      %v7553 = vmul.f32 %v7361, 0.5
      %v7554 = vmul.f32 %v7366, 0.5
      %v7555 = vmul.f32 %v7369, 0.5
      %v7556 = vmul.f32 %v7374, 0.5
      %v7557 = vmul.f32 %v7377, 0.5
      %v7558 = vmul.f32 %v7382, 0.5
      %v7559 = vmul.f32 %v7385, 0.5
      %v7560 = vmul.f32 %v7390, 0.5
      %v7561 = vmul.f32 %v7393, 0.5
      %v7562 = vmul.f32 %v7398, 0.5
      %v7563 = vmul.f32 %v7401, 0.5
      %v7564 = vmul.f32 %v7406, 0.5
      %v7565 = vmul.f32 %v7409, 0.5
      %v7566 = vmul.f32 %v7414, 0.5
      %v7567 = vmul.f32 %v7417, 0.5
      %v7568 = vmul.f32 %v7422, 0.5
      %v7569 = vmul.f32 %v7425, 0.5
      %v7570 = vmul.f32 %v7430, 0.5
      %v7571 = vmul.f32 %v7433, 0.5
      %v7572 = vmul.f32 %v7438, 0.5
      %v7573 = vmul.f32 %v7441, 0.5
      %v7574 = vmul.f32 %v7446, 0.5
      %v7575 = vmul.f32 %v7449, 0.5
      %v7576 = vmul.f32 %v7454, 0.5
      %v7577 = vmul.f32 %v7457, 0.5
      %v7578 = vmul.f32 %v7462, 0.5
      %v7579 = vmul.f32 %v7465, 0.5
      %v7580 = vmul.f32 %v7470, 0.5
      %v7581 = vmul.f32 %v7473, 0.5
      %v7582 = vmul.f32 %v7478, 0.5
      %v7583 = vmul.f32 %v7481, 0.5
      %v7584 = vmul.f32 %v7486, 0.5
      %v7585 = vmul.f32 %v7489, 0.5
      %v7586 = vmul.f32 %v7494, 0.5
      %v7587 = vmul.f32 %v7497, 0.5
      %v7588 = vmul.f32 %v7502, 0.5
      %v7589 = vmul.f32 %v7505, 0.5
      %v7590 = vmul.f32 %v7510, 0.5
      %v7591 = vmul.f32 %v7513, 0.5
      %v7592 = vmul.f32 %v7518, 0.5
      %v7593 = vmul.f32 %v7521, 0.5
      %v7594 = vmul.f32 %v7526, 0.5
      %v7595 = vmul.f32 %v7529, 0.5
      %v7596 = vtanh.pop %v7532
      %v7597 = vtanh.pop %v7533
      %v7598 = vtanh.pop %v7534
      %v7599 = vtanh.pop %v7535
      %v7600 = vtanh.pop %v7536
      %v7601 = vtanh.pop %v7537
      %v7602 = vtanh.pop %v7538
      %v7603 = vtanh.pop %v7539
      %v7604 = vtanh.pop %v7540
      %v7605 = vtanh.pop %v7541
      %v7606 = vtanh.pop %v7542
      %v7607 = vtanh.pop %v7543
      %v7608 = vtanh.pop %v7544
      %v7609 = vtanh.pop %v7545
      %v7610 = vtanh.pop %v7546
      %v7611 = vtanh.pop %v7547
      %v7612 = vtanh.pop %v7548
      %v7613 = vtanh.pop %v7549
      %v7614 = vtanh.pop %v7550
      %v7615 = vtanh.pop %v7551
      %v7616 = vtanh.pop %v7552
      %v7617 = vtanh.pop %v7553
      %v7618 = vtanh.pop %v7554
      %v7619 = vtanh.pop %v7555
      %v7620 = vtanh.pop %v7556
      %v7621 = vtanh.pop %v7557
      %v7622 = vtanh.pop %v7558
      %v7623 = vtanh.pop %v7559
      %v7624 = vtanh.pop %v7560
      %v7625 = vtanh.pop %v7561
      %v7626 = vtanh.pop %v7562
      %v7627 = vtanh.pop %v7563
      %v7628 = vtanh.pop %v7564
      %v7629 = vtanh.pop %v7565
      %v7630 = vtanh.pop %v7566
      %v7631 = vtanh.pop %v7567
      %v7632 = vtanh.pop %v7568
      %v7633 = vtanh.pop %v7569
      %v7634 = vtanh.pop %v7570
      %v7635 = vtanh.pop %v7571
      %v7636 = vtanh.pop %v7572
      %v7637 = vtanh.pop %v7573
      %v7638 = vtanh.pop %v7574
      %v7639 = vtanh.pop %v7575
      %v7640 = vtanh.pop %v7576
      %v7641 = vtanh.pop %v7577
      %v7642 = vtanh.pop %v7578
      %v7643 = vtanh.pop %v7579
      %v7644 = vtanh.pop %v7580
      %v7645 = vtanh.pop %v7581
      %v7646 = vtanh.pop %v7582
      %v7647 = vtanh.pop %v7583
      %v7648 = vtanh.pop %v7584
      %v7649 = vtanh.pop %v7585
      %v7650 = vtanh.pop %v7586
      %v7651 = vtanh.pop %v7587
      %v7652 = vtanh.pop %v7588
      %v7653 = vtanh.pop %v7589
      %v7654 = vtanh.pop %v7590
      %v7655 = vtanh.pop %v7591
      %v7656 = vtanh.pop %v7592
      %v7657 = vtanh.pop %v7593
      %v7658 = vtanh.pop %v7594
      %v7659 = vtanh.pop %v7595
      %v7660 = vmul.f32 %v7596, 0.5
      %v7661 = vmul.f32 %v7597, 0.5
      %v7662 = vmul.f32 %v7598, 0.5
      %v7663 = vmul.f32 %v7599, 0.5
      %v7664 = vmul.f32 %v7600, 0.5
      %v7665 = vmul.f32 %v7601, 0.5
      %v7666 = vmul.f32 %v7602, 0.5
      %v7667 = vmul.f32 %v7603, 0.5
      %v7668 = vmul.f32 %v7604, 0.5
      %v7669 = vmul.f32 %v7605, 0.5
      %v7670 = vmul.f32 %v7606, 0.5
      %v7671 = vmul.f32 %v7607, 0.5
      %v7672 = vmul.f32 %v7608, 0.5
      %v7673 = vmul.f32 %v7609, 0.5
      %v7674 = vmul.f32 %v7610, 0.5
      %v7675 = vmul.f32 %v7611, 0.5
      %v7676 = vmul.f32 %v7612, 0.5
      %v7677 = vmul.f32 %v7613, 0.5
      %v7678 = vmul.f32 %v7614, 0.5
      %v7679 = vmul.f32 %v7615, 0.5
      %v7680 = vmul.f32 %v7616, 0.5
      %v7681 = vmul.f32 %v7617, 0.5
      %v7682 = vmul.f32 %v7618, 0.5
      %v7683 = vmul.f32 %v7619, 0.5
      %v7684 = vmul.f32 %v7620, 0.5
      %v7685 = vmul.f32 %v7621, 0.5
      %v7686 = vmul.f32 %v7622, 0.5
      %v7687 = vmul.f32 %v7623, 0.5
      %v7688 = vmul.f32 %v7624, 0.5
      %v7689 = vmul.f32 %v7625, 0.5
      %v7690 = vmul.f32 %v7626, 0.5
      %v7691 = vmul.f32 %v7627, 0.5
      %v7692 = vmul.f32 %v7628, 0.5
      %v7693 = vmul.f32 %v7629, 0.5
      %v7694 = vmul.f32 %v7630, 0.5
      %v7695 = vmul.f32 %v7631, 0.5
      %v7696 = vmul.f32 %v7632, 0.5
      %v7697 = vmul.f32 %v7633, 0.5
      %v7698 = vmul.f32 %v7634, 0.5
      %v7699 = vmul.f32 %v7635, 0.5
      %v7700 = vmul.f32 %v7636, 0.5
      %v7701 = vmul.f32 %v7637, 0.5
      %v7702 = vmul.f32 %v7638, 0.5
      %v7703 = vmul.f32 %v7639, 0.5
      %v7704 = vmul.f32 %v7640, 0.5
      %v7705 = vmul.f32 %v7641, 0.5
      %v7706 = vmul.f32 %v7642, 0.5
      %v7707 = vmul.f32 %v7643, 0.5
      %v7708 = vmul.f32 %v7644, 0.5
      %v7709 = vmul.f32 %v7645, 0.5
      %v7710 = vmul.f32 %v7646, 0.5
      %v7711 = vmul.f32 %v7647, 0.5
      %v7712 = vmul.f32 %v7648, 0.5
      %v7713 = vmul.f32 %v7649, 0.5
      %v7714 = vmul.f32 %v7650, 0.5
      %v7715 = vmul.f32 %v7651, 0.5
      %v7716 = vmul.f32 %v7652, 0.5
      %v7717 = vmul.f32 %v7653, 0.5
      %v7718 = vmul.f32 %v7654, 0.5
      %v7719 = vmul.f32 %v7655, 0.5
      %v7720 = vmul.f32 %v7656, 0.5
      %v7721 = vmul.f32 %v7657, 0.5
      %v7722 = vmul.f32 %v7658, 0.5
      %v7723 = vmul.f32 %v7659, 0.5
      %v7724 = vadd.f32 %v7660, 0.5
      %v7725 = vadd.f32 %v7661, 0.5
      %v7726 = vadd.f32 %v7662, 0.5
      %v7727 = vadd.f32 %v7663, 0.5
      %v7728 = vadd.f32 %v7664, 0.5
      %v7729 = vadd.f32 %v7665, 0.5
      %v7730 = vadd.f32 %v7666, 0.5
      %v7731 = vadd.f32 %v7667, 0.5
      %v7732 = vadd.f32 %v7668, 0.5
      %v7733 = vadd.f32 %v7669, 0.5
      %v7734 = vadd.f32 %v7670, 0.5
      %v7735 = vadd.f32 %v7671, 0.5
      %v7736 = vadd.f32 %v7672, 0.5
      %v7737 = vadd.f32 %v7673, 0.5
      %v7738 = vadd.f32 %v7674, 0.5
      %v7739 = vadd.f32 %v7675, 0.5
      %v7740 = vadd.f32 %v7676, 0.5
      %v7741 = vadd.f32 %v7677, 0.5
      %v7742 = vadd.f32 %v7678, 0.5
      %v7743 = vadd.f32 %v7679, 0.5
      %v7744 = vadd.f32 %v7680, 0.5
      %v7745 = vadd.f32 %v7681, 0.5
      %v7746 = vadd.f32 %v7682, 0.5
      %v7747 = vadd.f32 %v7683, 0.5
      %v7748 = vadd.f32 %v7684, 0.5
      %v7749 = vadd.f32 %v7685, 0.5
      %v7750 = vadd.f32 %v7686, 0.5
      %v7751 = vadd.f32 %v7687, 0.5
      %v7752 = vadd.f32 %v7688, 0.5
      %v7753 = vadd.f32 %v7689, 0.5
      %v7754 = vadd.f32 %v7690, 0.5
      %v7755 = vadd.f32 %v7691, 0.5
      %v7756 = vadd.f32 %v7692, 0.5
      %v7757 = vadd.f32 %v7693, 0.5
      %v7758 = vadd.f32 %v7694, 0.5
      %v7759 = vadd.f32 %v7695, 0.5
      %v7760 = vadd.f32 %v7696, 0.5
      %v7761 = vadd.f32 %v7697, 0.5
      %v7762 = vadd.f32 %v7698, 0.5
      %v7763 = vadd.f32 %v7699, 0.5
      %v7764 = vadd.f32 %v7700, 0.5
      %v7765 = vadd.f32 %v7701, 0.5
      %v7766 = vadd.f32 %v7702, 0.5
      %v7767 = vadd.f32 %v7703, 0.5
      %v7768 = vadd.f32 %v7704, 0.5
      %v7769 = vadd.f32 %v7705, 0.5
      %v7770 = vadd.f32 %v7706, 0.5
      %v7771 = vadd.f32 %v7707, 0.5
      %v7772 = vadd.f32 %v7708, 0.5
      %v7773 = vadd.f32 %v7709, 0.5
      %v7774 = vadd.f32 %v7710, 0.5
      %v7775 = vadd.f32 %v7711, 0.5
      %v7776 = vadd.f32 %v7712, 0.5
      %v7777 = vadd.f32 %v7713, 0.5
      %v7778 = vadd.f32 %v7714, 0.5
      %v7779 = vadd.f32 %v7715, 0.5
      %v7780 = vadd.f32 %v7716, 0.5
      %v7781 = vadd.f32 %v7717, 0.5
      %v7782 = vadd.f32 %v7718, 0.5
      %v7783 = vadd.f32 %v7719, 0.5
      %v7784 = vadd.f32 %v7720, 0.5
      %v7785 = vadd.f32 %v7721, 0.5
      %v7786 = vadd.f32 %v7722, 0.5
      %v7787 = vadd.f32 %v7723, 0.5
      %v7788 = vmul.f32 %v7278, %v7724
      %v7789 = vmul.f32 %v7281, %v7725
      %v7790 = vmul.f32 %v7286, %v7726
      %v7791 = vmul.f32 %v7289, %v7727
      %v7792 = vmul.f32 %v7294, %v7728
      %v7793 = vmul.f32 %v7297, %v7729
      %v7794 = vmul.f32 %v7302, %v7730
      %v7795 = vmul.f32 %v7305, %v7731
      %v7796 = vmul.f32 %v7310, %v7732
      %v7797 = vmul.f32 %v7313, %v7733
      %v7798 = vmul.f32 %v7318, %v7734
      %v7799 = vmul.f32 %v7321, %v7735
      %v7800 = vmul.f32 %v7326, %v7736
      %v7801 = vmul.f32 %v7329, %v7737
      %v7802 = vmul.f32 %v7334, %v7738
      %v7803 = vmul.f32 %v7337, %v7739
      %v7804 = vmul.f32 %v7342, %v7740
      %v7805 = vmul.f32 %v7345, %v7741
      %v7806 = vmul.f32 %v7350, %v7742
      %v7807 = vmul.f32 %v7353, %v7743
      %v7808 = vmul.f32 %v7358, %v7744
      %v7809 = vmul.f32 %v7361, %v7745
      %v7810 = vmul.f32 %v7366, %v7746
      %v7811 = vmul.f32 %v7369, %v7747
      %v7812 = vmul.f32 %v7374, %v7748
      %v7813 = vmul.f32 %v7377, %v7749
      %v7814 = vmul.f32 %v7382, %v7750
      %v7815 = vmul.f32 %v7385, %v7751
      %v7816 = vmul.f32 %v7390, %v7752
      %v7817 = vmul.f32 %v7393, %v7753
      %v7818 = vmul.f32 %v7398, %v7754
      %v7819 = vmul.f32 %v7401, %v7755
      %v7820 = vmul.f32 %v7406, %v7756
      %v7821 = vmul.f32 %v7409, %v7757
      %v7822 = vmul.f32 %v7414, %v7758
      %v7823 = vmul.f32 %v7417, %v7759
      %v7824 = vmul.f32 %v7422, %v7760
      %v7825 = vmul.f32 %v7425, %v7761
      %v7826 = vmul.f32 %v7430, %v7762
      %v7827 = vmul.f32 %v7433, %v7763
      %v7828 = vmul.f32 %v7438, %v7764
      %v7829 = vmul.f32 %v7441, %v7765
      %v7830 = vmul.f32 %v7446, %v7766
      %v7831 = vmul.f32 %v7449, %v7767
      %v7832 = vmul.f32 %v7454, %v7768
      %v7833 = vmul.f32 %v7457, %v7769
      %v7834 = vmul.f32 %v7462, %v7770
      %v7835 = vmul.f32 %v7465, %v7771
      %v7836 = vmul.f32 %v7470, %v7772
      %v7837 = vmul.f32 %v7473, %v7773
      %v7838 = vmul.f32 %v7478, %v7774
      %v7839 = vmul.f32 %v7481, %v7775
      %v7840 = vmul.f32 %v7486, %v7776
      %v7841 = vmul.f32 %v7489, %v7777
      %v7842 = vmul.f32 %v7494, %v7778
      %v7843 = vmul.f32 %v7497, %v7779
      %v7844 = vmul.f32 %v7502, %v7780
      %v7845 = vmul.f32 %v7505, %v7781
      %v7846 = vmul.f32 %v7510, %v7782
      %v7847 = vmul.f32 %v7513, %v7783
      %v7848 = vmul.f32 %v7518, %v7784
      %v7849 = vmul.f32 %v7521, %v7785
      %v7850 = vmul.f32 %v7526, %v7786
      %v7851 = vmul.f32 %v7529, %v7787
      %v7852 = vpack.c.bf16 %v7789, %v7788
      %v7853 = vpack.c.bf16 %v7791, %v7790
      %v7854 = vpack.c.bf16 %v7793, %v7792
      %v7855 = vpack.c.bf16 %v7795, %v7794
      %v7856 = vpack.c.bf16 %v7797, %v7796
      %v7857 = vpack.c.bf16 %v7799, %v7798
      %v7858 = vpack.c.bf16 %v7801, %v7800
      %v7859 = vpack.c.bf16 %v7803, %v7802
      %v7860 = vpack.c.bf16 %v7805, %v7804
      %v7861 = vpack.c.bf16 %v7807, %v7806
      %v7862 = vpack.c.bf16 %v7809, %v7808
      %v7863 = vpack.c.bf16 %v7811, %v7810
      %v7864 = vpack.c.bf16 %v7813, %v7812
      %v7865 = vpack.c.bf16 %v7815, %v7814
      %v7866 = vpack.c.bf16 %v7817, %v7816
      %v7867 = vpack.c.bf16 %v7819, %v7818
      %v7868 = vpack.c.bf16 %v7821, %v7820
      %v7869 = vpack.c.bf16 %v7823, %v7822
      %v7870 = vpack.c.bf16 %v7825, %v7824
      %v7871 = vpack.c.bf16 %v7827, %v7826
      %v7872 = vpack.c.bf16 %v7829, %v7828
      %v7873 = vpack.c.bf16 %v7831, %v7830
      %v7874 = vpack.c.bf16 %v7833, %v7832
      %v7875 = vpack.c.bf16 %v7835, %v7834
      %v7876 = vpack.c.bf16 %v7837, %v7836
      %v7877 = vpack.c.bf16 %v7839, %v7838
      %v7878 = vpack.c.bf16 %v7841, %v7840
      %v7879 = vpack.c.bf16 %v7843, %v7842
      %v7880 = vpack.c.bf16 %v7845, %v7844
      %v7881 = vpack.c.bf16 %v7847, %v7846
      %v7882 = vpack.c.bf16 %v7849, %v7848
      %v7883 = vpack.c.bf16 %v7851, %v7850
      %v7884 = vld [vmem:[%s1 + $0x3c8] sm:$0xf]
      %v7885 = vld [vmem:[%s1 + $0x3cc] sm:$0xf]
      %v7886 = vld [vmem:[%s1 + $0x3d0] sm:$0xf]
      %v7887 = vld [vmem:[%s1 + $0x3d4] sm:$0xf]
      %v7888 = vld [vmem:[%s1 + $0x3d8] sm:$0xf]
      %v7889 = vld [vmem:[%s1 + $0x3dc] sm:$0xf]
      %v7890 = vld [vmem:[%s1 + $0x3e0] sm:$0xf]
      %v7891 = vld [vmem:[%s1 + $0x3e4] sm:$0xf]
      %v7892 = vld [vmem:[%s1 + $0x3e8] sm:$0xf]
      %v7893 = vld [vmem:[%s1 + $0x3ec] sm:$0xf]
      %v7894 = vld [vmem:[%s1 + $0x3f0] sm:$0xf]
      %v7895 = vld [vmem:[%s1 + $0x3f4] sm:$0xf]
      %v7896 = vld [vmem:[%s1 + $0x3f8] sm:$0xf]
      %v7897 = vld [vmem:[%s1 + $0x3fc] sm:$0xf]
      %v7898 = vld [vmem:[%s1 + $0x400] sm:$0xf]
      %v7899 = vld [vmem:[%s1 + $0x404] sm:$0xf]
      %v7900 = vld [vmem:[%s2 + $0x7] sm:$0x1]
      %v7901 = vlaneseq
      %v7902 = vshrl.u32 %v7901, 7
      %v7903 = vsub.s32 0, %v7902
      %v7904 = vrot.slane %v7900, %v7903
      %v7921 = vunpack.c.l.b16 %v7884
      %v7922 = vunpack.c.l.b16 %v7885
      %v7923 = vunpack.c.l.b16 %v7886
      %v7924 = vunpack.c.l.b16 %v7887
      %v7925 = vunpack.c.l.b16 %v7888
      %v7926 = vunpack.c.l.b16 %v7889
      %v7927 = vunpack.c.l.b16 %v7890
      %v7928 = vunpack.c.l.b16 %v7891
      %v7929 = vunpack.c.l.b16 %v7892
      %v7930 = vunpack.c.l.b16 %v7893
      %v7931 = vunpack.c.l.b16 %v7894
      %v7932 = vunpack.c.l.b16 %v7895
      %v7933 = vunpack.c.l.b16 %v7896
      %v7934 = vunpack.c.l.b16 %v7897
      %v7935 = vunpack.c.l.b16 %v7898
      %v7936 = vunpack.c.l.b16 %v7899
      %v7937 = vpack.c.b16 %v7922, %v7921
      %v7938 = vpack.c.b16 %v7924, %v7923
      %v7939 = vpack.c.b16 %v7926, %v7925
      %v7940 = vpack.c.b16 %v7928, %v7927
      %v7941 = vpack.c.b16 %v7930, %v7929
      %v7942 = vpack.c.b16 %v7932, %v7931
      %v7943 = vpack.c.b16 %v7934, %v7933
      %v7944 = vpack.c.b16 %v7936, %v7935
      %7953 = vmatprep.subr.bf16.mxu0 0
      %7954 = vmatpush1.bf16.msra.mxu0 %v7944
      %7955 = vmatprep.subr.bf16.mxu0 0
      %7956 = vmatpush1.bf16.msra.mxu0 %v7943
      %7957 = vmatprep.subr.bf16.mxu0 0
      %7958 = vmatpush1.bf16.msra.mxu0 %v7942
      %7959 = vmatprep.subr.bf16.mxu0 0
      %7960 = vmatpush1.bf16.msra.mxu0 %v7941
      %7961 = vmatprep.subr.bf16.mxu0 0
      %7962 = vmatpush1.bf16.msra.mxu0 %v7940
      %7963 = vmatprep.subr.bf16.mxu0 0
      %7964 = vmatpush1.bf16.msra.mxu0 %v7939
      %7965 = vmatprep.subr.bf16.mxu0 0
      %7966 = vmatpush1.bf16.msra.mxu0 %v7938
      %7967 = vmatprep.subr.bf16.mxu0 0
      %7968 = vmatpush1.bf16.msra.mxu0 %v7937
      %7969 = vmatprep.subr.bf16.mxu0 0
      %7970 = vmatpush2.bf16.msra.mxu0 0
      %7971 = vmatprep.subr.bf16.mxu0 0
      %7972 = vmatpush2.bf16.msra.mxu0 0
      %7973 = vmatprep.subr.bf16.mxu0 0
      %7974 = vmatpush2.bf16.msra.mxu0 0
      %7975 = vmatprep.subr.bf16.mxu0 0
      %7976 = vmatpush2.bf16.msra.mxu0 0
      %7977 = vmatprep.subr.bf16.mxu0 0
      %7978 = vmatpush2.bf16.msra.mxu0 0
      %7979 = vmatprep.subr.bf16.mxu0 0
      %7980 = vmatpush2.bf16.msra.mxu0 0
      %7981 = vmatprep.subr.bf16.mxu0 0
      %7982 = vmatpush2.bf16.msra.mxu0 0
      %7983 = vmatprep.subr.bf16.mxu0 0
      %7984 = vmatpush2.bf16.msra.mxu0 0
      %7985 = vmatprep.mubr.bf16.mxu0 0
      %7986 = vmatmul.mubr.bf16.gmra.mxu0 %v7852
      %v7987 = vpop.f32.mrf.mxu0
      %v7988 = vadd.f32 %v7904, %v7987
      %v7989 = vpop.f32.mrf.mxu0
      %v7990 = vpop.f32.mrf.mxu0
      %v7991 = vadd.f32 %v7904, %v7990
      %v7992 = vpop.f32.mrf.mxu0
      %7993 = vmatprep.mubr.bf16.mxu0 0
      %7994 = vmatmul.mubr.bf16.gmra.mxu0 %v7853
      %v7995 = vpop.f32.mrf.mxu0
      %v7996 = vadd.f32 %v7904, %v7995
      %v7997 = vpop.f32.mrf.mxu0
      %v7998 = vpop.f32.mrf.mxu0
      %v7999 = vadd.f32 %v7904, %v7998
      %v8000 = vpop.f32.mrf.mxu0
      %8001 = vmatprep.mubr.bf16.mxu0 0
      %8002 = vmatmul.mubr.bf16.gmra.mxu0 %v7854
      %v8003 = vpop.f32.mrf.mxu0
      %v8004 = vadd.f32 %v7904, %v8003
      %v8005 = vpop.f32.mrf.mxu0
      %v8006 = vpop.f32.mrf.mxu0
      %v8007 = vadd.f32 %v7904, %v8006
      %v8008 = vpop.f32.mrf.mxu0
      %8009 = vmatprep.mubr.bf16.mxu0 0
      %8010 = vmatmul.mubr.bf16.gmra.mxu0 %v7855
      %v8011 = vpop.f32.mrf.mxu0
      %v8012 = vadd.f32 %v7904, %v8011
      %v8013 = vpop.f32.mrf.mxu0
      %v8014 = vpop.f32.mrf.mxu0
      %v8015 = vadd.f32 %v7904, %v8014
      %v8016 = vpop.f32.mrf.mxu0
      %8017 = vmatprep.mubr.bf16.mxu0 0
      %8018 = vmatmul.mubr.bf16.gmra.mxu0 %v7856
      %v8019 = vpop.f32.mrf.mxu0
      %v8020 = vadd.f32 %v7904, %v8019
      %v8021 = vpop.f32.mrf.mxu0
      %v8022 = vpop.f32.mrf.mxu0
      %v8023 = vadd.f32 %v7904, %v8022
      %v8024 = vpop.f32.mrf.mxu0
      %8025 = vmatprep.mubr.bf16.mxu0 0
      %8026 = vmatmul.mubr.bf16.gmra.mxu0 %v7857
      %v8027 = vpop.f32.mrf.mxu0
      %v8028 = vadd.f32 %v7904, %v8027
      %v8029 = vpop.f32.mrf.mxu0
      %v8030 = vpop.f32.mrf.mxu0
      %v8031 = vadd.f32 %v7904, %v8030
      %v8032 = vpop.f32.mrf.mxu0
      %8033 = vmatprep.mubr.bf16.mxu0 0
      %8034 = vmatmul.mubr.bf16.gmra.mxu0 %v7858
      %v8035 = vpop.f32.mrf.mxu0
      %v8036 = vadd.f32 %v7904, %v8035
      %v8037 = vpop.f32.mrf.mxu0
      %v8038 = vpop.f32.mrf.mxu0
      %v8039 = vadd.f32 %v7904, %v8038
      %v8040 = vpop.f32.mrf.mxu0
      %8041 = vmatprep.mubr.bf16.mxu0 0
      %8042 = vmatmul.mubr.bf16.gmra.mxu0 %v7859
      %v8043 = vpop.f32.mrf.mxu0
      %v8044 = vadd.f32 %v7904, %v8043
      %v8045 = vpop.f32.mrf.mxu0
      %v8046 = vpop.f32.mrf.mxu0
      %v8047 = vadd.f32 %v7904, %v8046
      %v8048 = vpop.f32.mrf.mxu0
      %8049 = vmatprep.mubr.bf16.mxu0 0
      %8050 = vmatmul.mubr.bf16.gmra.mxu0 %v7860
      %v8051 = vpop.f32.mrf.mxu0
      %v8052 = vadd.f32 %v7904, %v8051
      %v8053 = vpop.f32.mrf.mxu0
      %v8054 = vpop.f32.mrf.mxu0
      %v8055 = vadd.f32 %v7904, %v8054
      %v8056 = vpop.f32.mrf.mxu0
      %8057 = vmatprep.mubr.bf16.mxu0 0
      %8058 = vmatmul.mubr.bf16.gmra.mxu0 %v7861
      %v8059 = vpop.f32.mrf.mxu0
      %v8060 = vadd.f32 %v7904, %v8059
      %v8061 = vpop.f32.mrf.mxu0
      %v8062 = vpop.f32.mrf.mxu0
      %v8063 = vadd.f32 %v7904, %v8062
      %v8064 = vpop.f32.mrf.mxu0
      %8065 = vmatprep.mubr.bf16.mxu0 0
      %8066 = vmatmul.mubr.bf16.gmra.mxu0 %v7862
      %v8067 = vpop.f32.mrf.mxu0
      %v8068 = vadd.f32 %v7904, %v8067
      %v8069 = vpop.f32.mrf.mxu0
      %v8070 = vpop.f32.mrf.mxu0
      %v8071 = vadd.f32 %v7904, %v8070
      %v8072 = vpop.f32.mrf.mxu0
      %8073 = vmatprep.mubr.bf16.mxu0 0
      %8074 = vmatmul.mubr.bf16.gmra.mxu0 %v7863
      %v8075 = vpop.f32.mrf.mxu0
      %v8076 = vadd.f32 %v7904, %v8075
      %v8077 = vpop.f32.mrf.mxu0
      %v8078 = vpop.f32.mrf.mxu0
      %v8079 = vadd.f32 %v7904, %v8078
      %v8080 = vpop.f32.mrf.mxu0
      %8081 = vmatprep.mubr.bf16.mxu0 0
      %8082 = vmatmul.mubr.bf16.gmra.mxu0 %v7864
      %v8083 = vpop.f32.mrf.mxu0
      %v8084 = vadd.f32 %v7904, %v8083
      %v8085 = vpop.f32.mrf.mxu0
      %v8086 = vpop.f32.mrf.mxu0
      %v8087 = vadd.f32 %v7904, %v8086
      %v8088 = vpop.f32.mrf.mxu0
      %8089 = vmatprep.mubr.bf16.mxu0 0
      %8090 = vmatmul.mubr.bf16.gmra.mxu0 %v7865
      %v8091 = vpop.f32.mrf.mxu0
      %v8092 = vadd.f32 %v7904, %v8091
      %v8093 = vpop.f32.mrf.mxu0
      %v8094 = vpop.f32.mrf.mxu0
      %v8095 = vadd.f32 %v7904, %v8094
      %v8096 = vpop.f32.mrf.mxu0
      %8097 = vmatprep.mubr.bf16.mxu0 0
      %8098 = vmatmul.mubr.bf16.gmra.mxu0 %v7866
      %v8099 = vpop.f32.mrf.mxu0
      %v8100 = vadd.f32 %v7904, %v8099
      %v8101 = vpop.f32.mrf.mxu0
      %v8102 = vpop.f32.mrf.mxu0
      %v8103 = vadd.f32 %v7904, %v8102
      %v8104 = vpop.f32.mrf.mxu0
      %8105 = vmatprep.mubr.bf16.mxu0 0
      %8106 = vmatmul.mubr.bf16.gmra.mxu0 %v7867
      %v8107 = vpop.f32.mrf.mxu0
      %v8108 = vadd.f32 %v7904, %v8107
      %v8109 = vpop.f32.mrf.mxu0
      %v8110 = vpop.f32.mrf.mxu0
      %v8111 = vadd.f32 %v7904, %v8110
      %v8112 = vpop.f32.mrf.mxu0
      %8113 = vmatprep.mubr.bf16.mxu0 0
      %8114 = vmatmul.mubr.bf16.gmra.mxu0 %v7868
      %v8115 = vpop.f32.mrf.mxu0
      %v8116 = vadd.f32 %v7904, %v8115
      %v8117 = vpop.f32.mrf.mxu0
      %v8118 = vpop.f32.mrf.mxu0
      %v8119 = vadd.f32 %v7904, %v8118
      %v8120 = vpop.f32.mrf.mxu0
      %8121 = vmatprep.mubr.bf16.mxu0 0
      %8122 = vmatmul.mubr.bf16.gmra.mxu0 %v7869
      %v8123 = vpop.f32.mrf.mxu0
      %v8124 = vadd.f32 %v7904, %v8123
      %v8125 = vpop.f32.mrf.mxu0
      %v8126 = vpop.f32.mrf.mxu0
      %v8127 = vadd.f32 %v7904, %v8126
      %v8128 = vpop.f32.mrf.mxu0
      %8129 = vmatprep.mubr.bf16.mxu0 0
      %8130 = vmatmul.mubr.bf16.gmra.mxu0 %v7870
      %v8131 = vpop.f32.mrf.mxu0
      %v8132 = vadd.f32 %v7904, %v8131
      %v8133 = vpop.f32.mrf.mxu0
      %v8134 = vpop.f32.mrf.mxu0
      %v8135 = vadd.f32 %v7904, %v8134
      %v8136 = vpop.f32.mrf.mxu0
      %8137 = vmatprep.mubr.bf16.mxu0 0
      %8138 = vmatmul.mubr.bf16.gmra.mxu0 %v7871
      %v8139 = vpop.f32.mrf.mxu0
      %v8140 = vadd.f32 %v7904, %v8139
      %v8141 = vpop.f32.mrf.mxu0
      %v8142 = vpop.f32.mrf.mxu0
      %v8143 = vadd.f32 %v7904, %v8142
      %v8144 = vpop.f32.mrf.mxu0
      %8145 = vmatprep.mubr.bf16.mxu0 0
      %8146 = vmatmul.mubr.bf16.gmra.mxu0 %v7872
      %v8147 = vpop.f32.mrf.mxu0
      %v8148 = vadd.f32 %v7904, %v8147
      %v8149 = vpop.f32.mrf.mxu0
      %v8150 = vpop.f32.mrf.mxu0
      %v8151 = vadd.f32 %v7904, %v8150
      %v8152 = vpop.f32.mrf.mxu0
      %8153 = vmatprep.mubr.bf16.mxu0 0
      %8154 = vmatmul.mubr.bf16.gmra.mxu0 %v7873
      %v8155 = vpop.f32.mrf.mxu0
      %v8156 = vadd.f32 %v7904, %v8155
      %v8157 = vpop.f32.mrf.mxu0
      %v8158 = vpop.f32.mrf.mxu0
      %v8159 = vadd.f32 %v7904, %v8158
      %v8160 = vpop.f32.mrf.mxu0
      %8161 = vmatprep.mubr.bf16.mxu0 0
      %8162 = vmatmul.mubr.bf16.gmra.mxu0 %v7874
      %v8163 = vpop.f32.mrf.mxu0
      %v8164 = vadd.f32 %v7904, %v8163
      %v8165 = vpop.f32.mrf.mxu0
      %v8166 = vpop.f32.mrf.mxu0
      %v8167 = vadd.f32 %v7904, %v8166
      %v8168 = vpop.f32.mrf.mxu0
      %8169 = vmatprep.mubr.bf16.mxu0 0
      %8170 = vmatmul.mubr.bf16.gmra.mxu0 %v7875
      %v8171 = vpop.f32.mrf.mxu0
      %v8172 = vadd.f32 %v7904, %v8171
      %v8173 = vpop.f32.mrf.mxu0
      %v8174 = vpop.f32.mrf.mxu0
      %v8175 = vadd.f32 %v7904, %v8174
      %v8176 = vpop.f32.mrf.mxu0
      %8177 = vmatprep.mubr.bf16.mxu0 0
      %8178 = vmatmul.mubr.bf16.gmra.mxu0 %v7876
      %v8179 = vpop.f32.mrf.mxu0
      %v8180 = vadd.f32 %v7904, %v8179
      %v8181 = vpop.f32.mrf.mxu0
      %v8182 = vpop.f32.mrf.mxu0
      %v8183 = vadd.f32 %v7904, %v8182
      %v8184 = vpop.f32.mrf.mxu0
      %8185 = vmatprep.mubr.bf16.mxu0 0
      %8186 = vmatmul.mubr.bf16.gmra.mxu0 %v7877
      %v8187 = vpop.f32.mrf.mxu0
      %v8188 = vadd.f32 %v7904, %v8187
      %v8189 = vpop.f32.mrf.mxu0
      %v8190 = vpop.f32.mrf.mxu0
      %v8191 = vadd.f32 %v7904, %v8190
      %v8192 = vpop.f32.mrf.mxu0
      %8193 = vmatprep.mubr.bf16.mxu0 0
      %8194 = vmatmul.mubr.bf16.gmra.mxu0 %v7878
      %v8195 = vpop.f32.mrf.mxu0
      %v8196 = vadd.f32 %v7904, %v8195
      %v8197 = vpop.f32.mrf.mxu0
      %v8198 = vpop.f32.mrf.mxu0
      %v8199 = vadd.f32 %v7904, %v8198
      %v8200 = vpop.f32.mrf.mxu0
      %8201 = vmatprep.mubr.bf16.mxu0 0
      %8202 = vmatmul.mubr.bf16.gmra.mxu0 %v7879
      %v8203 = vpop.f32.mrf.mxu0
      %v8204 = vadd.f32 %v7904, %v8203
      %v8205 = vpop.f32.mrf.mxu0
      %v8206 = vpop.f32.mrf.mxu0
      %v8207 = vadd.f32 %v7904, %v8206
      %v8208 = vpop.f32.mrf.mxu0
      %8209 = vmatprep.mubr.bf16.mxu0 0
      %8210 = vmatmul.mubr.bf16.gmra.mxu0 %v7880
      %v8211 = vpop.f32.mrf.mxu0
      %v8212 = vadd.f32 %v7904, %v8211
      %v8213 = vpop.f32.mrf.mxu0
      %v8214 = vpop.f32.mrf.mxu0
      %v8215 = vadd.f32 %v7904, %v8214
      %v8216 = vpop.f32.mrf.mxu0
      %8217 = vmatprep.mubr.bf16.mxu0 0
      %8218 = vmatmul.mubr.bf16.gmra.mxu0 %v7881
      %v8219 = vpop.f32.mrf.mxu0
      %v8220 = vadd.f32 %v7904, %v8219
      %v8221 = vpop.f32.mrf.mxu0
      %v8222 = vpop.f32.mrf.mxu0
      %v8223 = vadd.f32 %v7904, %v8222
      %v8224 = vpop.f32.mrf.mxu0
      %8225 = vmatprep.mubr.bf16.mxu0 0
      %8226 = vmatmul.mubr.bf16.gmra.mxu0 %v7882
      %v8227 = vpop.f32.mrf.mxu0
      %v8228 = vadd.f32 %v7904, %v8227
      %v8229 = vpop.f32.mrf.mxu0
      %v8230 = vpop.f32.mrf.mxu0
      %v8231 = vadd.f32 %v7904, %v8230
      %v8232 = vpop.f32.mrf.mxu0
      %8233 = vmatprep.mubr.bf16.mxu0 0
      %8234 = vmatmul.mubr.bf16.gmra.mxu0 %v7883
      %v8235 = vpop.f32.mrf.mxu0
      %v8236 = vadd.f32 %v7904, %v8235
      %v8237 = vpop.f32.mrf.mxu0
      %v8238 = vpop.f32.mrf.mxu0
      %v8239 = vadd.f32 %v7904, %v8238
      %v8240 = vpop.f32.mrf.mxu0
      %8241 = vdwg.mxu0
      %v8242 = vpack.c.bf16 %v7991, %v7988
      %v8243 = vpack.c.bf16 %v7999, %v7996
      %v8244 = vpack.c.bf16 %v8007, %v8004
      %v8245 = vpack.c.bf16 %v8015, %v8012
      %v8246 = vpack.c.bf16 %v8023, %v8020
      %v8247 = vpack.c.bf16 %v8031, %v8028
      %v8248 = vpack.c.bf16 %v8039, %v8036
      %v8249 = vpack.c.bf16 %v8047, %v8044
      %v8250 = vpack.c.bf16 %v8055, %v8052
      %v8251 = vpack.c.bf16 %v8063, %v8060
      %v8252 = vpack.c.bf16 %v8071, %v8068
      %v8253 = vpack.c.bf16 %v8079, %v8076
      %v8254 = vpack.c.bf16 %v8087, %v8084
      %v8255 = vpack.c.bf16 %v8095, %v8092
      %v8256 = vpack.c.bf16 %v8103, %v8100
      %v8257 = vpack.c.bf16 %v8111, %v8108
      %v8258 = vpack.c.bf16 %v8119, %v8116
      %v8259 = vpack.c.bf16 %v8127, %v8124
      %v8260 = vpack.c.bf16 %v8135, %v8132
      %v8261 = vpack.c.bf16 %v8143, %v8140
      %v8262 = vpack.c.bf16 %v8151, %v8148
      %v8263 = vpack.c.bf16 %v8159, %v8156
      %v8264 = vpack.c.bf16 %v8167, %v8164
      %v8265 = vpack.c.bf16 %v8175, %v8172
      %v8266 = vpack.c.bf16 %v8183, %v8180
      %v8267 = vpack.c.bf16 %v8191, %v8188
      %v8268 = vpack.c.bf16 %v8199, %v8196
      %v8269 = vpack.c.bf16 %v8207, %v8204
      %v8270 = vpack.c.bf16 %v8215, %v8212
      %v8271 = vpack.c.bf16 %v8223, %v8220
      %v8272 = vpack.c.bf16 %v8231, %v8228
      %v8273 = vpack.c.bf16 %v8239, %v8236
      %v8306 = vunpack.c.l.b16 %v8242
      %v8307 = vunpack.c.h.b16 %v8242
      %v8308 = vunpack.c.l.b16 %v8243
      %v8309 = vunpack.c.h.b16 %v8243
      %v8310 = vunpack.c.l.b16 %v8244
      %v8311 = vunpack.c.h.b16 %v8244
      %v8312 = vunpack.c.l.b16 %v8245
      %v8313 = vunpack.c.h.b16 %v8245
      %v8314 = vunpack.c.l.b16 %v8246
      %v8315 = vunpack.c.h.b16 %v8246
      %v8316 = vunpack.c.l.b16 %v8247
      %v8317 = vunpack.c.h.b16 %v8247
      %v8318 = vunpack.c.l.b16 %v8248
      %v8319 = vunpack.c.h.b16 %v8248
      %v8320 = vunpack.c.l.b16 %v8249
      %v8321 = vunpack.c.h.b16 %v8249
      %v8322 = vunpack.c.l.b16 %v8250
      %v8323 = vunpack.c.h.b16 %v8250
      %v8324 = vunpack.c.l.b16 %v8251
      %v8325 = vunpack.c.h.b16 %v8251
      %v8326 = vunpack.c.l.b16 %v8252
      %v8327 = vunpack.c.h.b16 %v8252
      %v8328 = vunpack.c.l.b16 %v8253
      %v8329 = vunpack.c.h.b16 %v8253
      %v8330 = vunpack.c.l.b16 %v8254
      %v8331 = vunpack.c.h.b16 %v8254
      %v8332 = vunpack.c.l.b16 %v8255
      %v8333 = vunpack.c.h.b16 %v8255
      %v8334 = vunpack.c.l.b16 %v8256
      %v8335 = vunpack.c.h.b16 %v8256
      %v8336 = vunpack.c.l.b16 %v8257
      %v8337 = vunpack.c.h.b16 %v8257
      %v8338 = vunpack.c.l.b16 %v8258
      %v8339 = vunpack.c.h.b16 %v8258
      %v8340 = vunpack.c.l.b16 %v8259
      %v8341 = vunpack.c.h.b16 %v8259
      %v8342 = vunpack.c.l.b16 %v8260
      %v8343 = vunpack.c.h.b16 %v8260
      %v8344 = vunpack.c.l.b16 %v8261
      %v8345 = vunpack.c.h.b16 %v8261
      %v8346 = vunpack.c.l.b16 %v8262
      %v8347 = vunpack.c.h.b16 %v8262
      %v8348 = vunpack.c.l.b16 %v8263
      %v8349 = vunpack.c.h.b16 %v8263
      %v8350 = vunpack.c.l.b16 %v8264
      %v8351 = vunpack.c.h.b16 %v8264
      %v8352 = vunpack.c.l.b16 %v8265
      %v8353 = vunpack.c.h.b16 %v8265
      %v8354 = vunpack.c.l.b16 %v8266
      %v8355 = vunpack.c.h.b16 %v8266
      %v8356 = vunpack.c.l.b16 %v8267
      %v8357 = vunpack.c.h.b16 %v8267
      %v8358 = vunpack.c.l.b16 %v8268
      %v8359 = vunpack.c.h.b16 %v8268
      %v8360 = vunpack.c.l.b16 %v8269
      %v8361 = vunpack.c.h.b16 %v8269
      %v8362 = vunpack.c.l.b16 %v8270
      %v8363 = vunpack.c.h.b16 %v8270
      %v8364 = vunpack.c.l.b16 %v8271
      %v8365 = vunpack.c.h.b16 %v8271
      %v8366 = vunpack.c.l.b16 %v8272
      %v8367 = vunpack.c.h.b16 %v8272
      %v8368 = vunpack.c.l.b16 %v8273
      %v8369 = vunpack.c.h.b16 %v8273
      %v8370 = vpack.c.b16 %v8306, %v8306
      %v8371 = vpack.c.b16 %v8307, %v8307
      %v8372 = vpack.c.b16 %v8308, %v8308
      %v8373 = vpack.c.b16 %v8309, %v8309
      %v8374 = vpack.c.b16 %v8310, %v8310
      %v8375 = vpack.c.b16 %v8311, %v8311
      %v8376 = vpack.c.b16 %v8312, %v8312
      %v8377 = vpack.c.b16 %v8313, %v8313
      %v8378 = vpack.c.b16 %v8314, %v8314
      %v8379 = vpack.c.b16 %v8315, %v8315
      %v8380 = vpack.c.b16 %v8316, %v8316
      %v8381 = vpack.c.b16 %v8317, %v8317
      %v8382 = vpack.c.b16 %v8318, %v8318
      %v8383 = vpack.c.b16 %v8319, %v8319
      %v8384 = vpack.c.b16 %v8320, %v8320
      %v8385 = vpack.c.b16 %v8321, %v8321
      %v8386 = vpack.c.b16 %v8322, %v8322
      %v8387 = vpack.c.b16 %v8323, %v8323
      %v8388 = vpack.c.b16 %v8324, %v8324
      %v8389 = vpack.c.b16 %v8325, %v8325
      %v8390 = vpack.c.b16 %v8326, %v8326
      %v8391 = vpack.c.b16 %v8327, %v8327
      %v8392 = vpack.c.b16 %v8328, %v8328
      %v8393 = vpack.c.b16 %v8329, %v8329
      %v8394 = vpack.c.b16 %v8330, %v8330
      %v8395 = vpack.c.b16 %v8331, %v8331
      %v8396 = vpack.c.b16 %v8332, %v8332
      %v8397 = vpack.c.b16 %v8333, %v8333
      %v8398 = vpack.c.b16 %v8334, %v8334
      %v8399 = vpack.c.b16 %v8335, %v8335
      %v8400 = vpack.c.b16 %v8336, %v8336
      %v8401 = vpack.c.b16 %v8337, %v8337
      %v8402 = vpack.c.b16 %v8338, %v8338
      %v8403 = vpack.c.b16 %v8339, %v8339
      %v8404 = vpack.c.b16 %v8340, %v8340
      %v8405 = vpack.c.b16 %v8341, %v8341
      %v8406 = vpack.c.b16 %v8342, %v8342
      %v8407 = vpack.c.b16 %v8343, %v8343
      %v8408 = vpack.c.b16 %v8344, %v8344
      %v8409 = vpack.c.b16 %v8345, %v8345
      %v8410 = vpack.c.b16 %v8346, %v8346
      %v8411 = vpack.c.b16 %v8347, %v8347
      %v8412 = vpack.c.b16 %v8348, %v8348
      %v8413 = vpack.c.b16 %v8349, %v8349
      %v8414 = vpack.c.b16 %v8350, %v8350
      %v8415 = vpack.c.b16 %v8351, %v8351
      %v8416 = vpack.c.b16 %v8352, %v8352
      %v8417 = vpack.c.b16 %v8353, %v8353
      %v8418 = vpack.c.b16 %v8354, %v8354
      %v8419 = vpack.c.b16 %v8355, %v8355
      %v8420 = vpack.c.b16 %v8356, %v8356
      %v8421 = vpack.c.b16 %v8357, %v8357
      %v8422 = vpack.c.b16 %v8358, %v8358
      %v8423 = vpack.c.b16 %v8359, %v8359
      %v8424 = vpack.c.b16 %v8360, %v8360
      %v8425 = vpack.c.b16 %v8361, %v8361
      %v8426 = vpack.c.b16 %v8362, %v8362
      %v8427 = vpack.c.b16 %v8363, %v8363
      %v8428 = vpack.c.b16 %v8364, %v8364
      %v8429 = vpack.c.b16 %v8365, %v8365
      %v8430 = vpack.c.b16 %v8366, %v8366
      %v8431 = vpack.c.b16 %v8367, %v8367
      %v8432 = vpack.c.b16 %v8368, %v8368
      %v8433 = vpack.c.b16 %v8369, %v8369
      %8498 = vst [vmem:[%s172] sm:$0xf] %v8370
      %8499 = vst [vmem:[%s172 + $0x4] sm:$0xf] %v8371
      %8500 = vst [vmem:[%s172 + $0x8] sm:$0xf] %v8372
      %8501 = vst [vmem:[%s172 + $0xc] sm:$0xf] %v8373
      %8502 = vst [vmem:[%s172 + $0x10] sm:$0xf] %v8374
      %8503 = vst [vmem:[%s172 + $0x14] sm:$0xf] %v8375
      %8504 = vst [vmem:[%s172 + $0x18] sm:$0xf] %v8376
      %8505 = vst [vmem:[%s172 + $0x1c] sm:$0xf] %v8377
      %8506 = vst [vmem:[%s172 + $0x20] sm:$0xf] %v8378
      %8507 = vst [vmem:[%s172 + $0x24] sm:$0xf] %v8379
      %8508 = vst [vmem:[%s172 + $0x28] sm:$0xf] %v8380
      %8509 = vst [vmem:[%s172 + $0x2c] sm:$0xf] %v8381
      %8510 = vst [vmem:[%s172 + $0x30] sm:$0xf] %v8382
      %8511 = vst [vmem:[%s172 + $0x34] sm:$0xf] %v8383
      %8512 = vst [vmem:[%s172 + $0x38] sm:$0xf] %v8384
      %8513 = vst [vmem:[%s172 + $0x3c] sm:$0xf] %v8385
      %8514 = vst [vmem:[%s172 + $0x40] sm:$0xf] %v8386
      %8515 = vst [vmem:[%s172 + $0x44] sm:$0xf] %v8387
      %8516 = vst [vmem:[%s172 + $0x48] sm:$0xf] %v8388
      %8517 = vst [vmem:[%s172 + $0x4c] sm:$0xf] %v8389
      %8518 = vst [vmem:[%s172 + $0x50] sm:$0xf] %v8390
      %8519 = vst [vmem:[%s172 + $0x54] sm:$0xf] %v8391
      %8520 = vst [vmem:[%s172 + $0x58] sm:$0xf] %v8392
      %8521 = vst [vmem:[%s172 + $0x5c] sm:$0xf] %v8393
      %8522 = vst [vmem:[%s172 + $0x60] sm:$0xf] %v8394
      %8523 = vst [vmem:[%s172 + $0x64] sm:$0xf] %v8395
      %8524 = vst [vmem:[%s172 + $0x68] sm:$0xf] %v8396
      %8525 = vst [vmem:[%s172 + $0x6c] sm:$0xf] %v8397
      %8526 = vst [vmem:[%s172 + $0x70] sm:$0xf] %v8398
      %8527 = vst [vmem:[%s172 + $0x74] sm:$0xf] %v8399
      %8528 = vst [vmem:[%s172 + $0x78] sm:$0xf] %v8400
      %8529 = vst [vmem:[%s172 + $0x7c] sm:$0xf] %v8401
      %8530 = vst [vmem:[%s172 + $0x80] sm:$0xf] %v8402
      %8531 = vst [vmem:[%s172 + $0x84] sm:$0xf] %v8403
      %8532 = vst [vmem:[%s172 + $0x88] sm:$0xf] %v8404
      %8533 = vst [vmem:[%s172 + $0x8c] sm:$0xf] %v8405
      %8534 = vst [vmem:[%s172 + $0x90] sm:$0xf] %v8406
      %8535 = vst [vmem:[%s172 + $0x94] sm:$0xf] %v8407
      %8536 = vst [vmem:[%s172 + $0x98] sm:$0xf] %v8408
      %8537 = vst [vmem:[%s172 + $0x9c] sm:$0xf] %v8409
      %8538 = vst [vmem:[%s172 + $0xa0] sm:$0xf] %v8410
      %8539 = vst [vmem:[%s172 + $0xa4] sm:$0xf] %v8411
      %8540 = vst [vmem:[%s172 + $0xa8] sm:$0xf] %v8412
      %8541 = vst [vmem:[%s172 + $0xac] sm:$0xf] %v8413
      %8542 = vst [vmem:[%s172 + $0xb0] sm:$0xf] %v8414
      %8543 = vst [vmem:[%s172 + $0xb4] sm:$0xf] %v8415
      %8544 = vst [vmem:[%s172 + $0xb8] sm:$0xf] %v8416
      %8545 = vst [vmem:[%s172 + $0xbc] sm:$0xf] %v8417
      %8546 = vst [vmem:[%s172 + $0xc0] sm:$0xf] %v8418
      %8547 = vst [vmem:[%s172 + $0xc4] sm:$0xf] %v8419
      %8548 = vst [vmem:[%s172 + $0xc8] sm:$0xf] %v8420
      %8549 = vst [vmem:[%s172 + $0xcc] sm:$0xf] %v8421
      %8550 = vst [vmem:[%s172 + $0xd0] sm:$0xf] %v8422
      %8551 = vst [vmem:[%s172 + $0xd4] sm:$0xf] %v8423
      %8552 = vst [vmem:[%s172 + $0xd8] sm:$0xf] %v8424
      %8553 = vst [vmem:[%s172 + $0xdc] sm:$0xf] %v8425
      %8554 = vst [vmem:[%s172 + $0xe0] sm:$0xf] %v8426
      %8555 = vst [vmem:[%s172 + $0xe4] sm:$0xf] %v8427
      %8556 = vst [vmem:[%s172 + $0xe8] sm:$0xf] %v8428
      %8557 = vst [vmem:[%s172 + $0xec] sm:$0xf] %v8429
      %8558 = vst [vmem:[%s172 + $0xf0] sm:$0xf] %v8430
      %8559 = vst [vmem:[%s172 + $0xf4] sm:$0xf] %v8431
      %8560 = vst [vmem:[%s172 + $0xf8] sm:$0xf] %v8432
      %8561 = vst [vmem:[%s172 + $0xfc] sm:$0xf] %v8433
      %v8562 = vld [vmem:[%s1 + $0x348] sm:$0xf]
      %v8563 = vld [vmem:[%s1 + $0x34c] sm:$0xf]
      %v8564 = vld [vmem:[%s1 + $0x350] sm:$0xf]
      %v8565 = vld [vmem:[%s1 + $0x354] sm:$0xf]
      %v8566 = vld [vmem:[%s1 + $0x358] sm:$0xf]
      %v8567 = vld [vmem:[%s1 + $0x35c] sm:$0xf]
      %v8568 = vld [vmem:[%s1 + $0x360] sm:$0xf]
      %v8569 = vld [vmem:[%s1 + $0x364] sm:$0xf]
      %v8570 = vld [vmem:[%s1 + $0x368] sm:$0xf]
      %v8571 = vld [vmem:[%s1 + $0x36c] sm:$0xf]
      %v8572 = vld [vmem:[%s1 + $0x370] sm:$0xf]
      %v8573 = vld [vmem:[%s1 + $0x374] sm:$0xf]
      %v8574 = vld [vmem:[%s1 + $0x378] sm:$0xf]
      %v8575 = vld [vmem:[%s1 + $0x37c] sm:$0xf]
      %v8576 = vld [vmem:[%s1 + $0x380] sm:$0xf]
      %v8577 = vld [vmem:[%s1 + $0x384] sm:$0xf]
      %v8578 = vld [vmem:[%s2 + $0x5] sm:$0x1]
      %v8579 = vlaneseq
      %v8580 = vshrl.u32 %v8579, 7
      %v8581 = vsub.s32 0, %v8580
      %v8582 = vrot.slane %v8578, %v8581
      %v8599 = vunpack.c.l.b16 %v8562
      %v8600 = vunpack.c.l.b16 %v8563
      %v8601 = vunpack.c.l.b16 %v8564
      %v8602 = vunpack.c.l.b16 %v8565
      %v8603 = vunpack.c.l.b16 %v8566
      %v8604 = vunpack.c.l.b16 %v8567
      %v8605 = vunpack.c.l.b16 %v8568
      %v8606 = vunpack.c.l.b16 %v8569
      %v8607 = vunpack.c.l.b16 %v8570
      %v8608 = vunpack.c.l.b16 %v8571
      %v8609 = vunpack.c.l.b16 %v8572
      %v8610 = vunpack.c.l.b16 %v8573
      %v8611 = vunpack.c.l.b16 %v8574
      %v8612 = vunpack.c.l.b16 %v8575
      %v8613 = vunpack.c.l.b16 %v8576
      %v8614 = vunpack.c.l.b16 %v8577
      %v8615 = vpack.c.b16 %v8600, %v8599
      %v8616 = vpack.c.b16 %v8602, %v8601
      %v8617 = vpack.c.b16 %v8604, %v8603
      %v8618 = vpack.c.b16 %v8606, %v8605
      %v8619 = vpack.c.b16 %v8608, %v8607
      %v8620 = vpack.c.b16 %v8610, %v8609
      %v8621 = vpack.c.b16 %v8612, %v8611
      %v8622 = vpack.c.b16 %v8614, %v8613
      %8631 = vmatprep.subr.bf16.mxu0 0
      %8632 = vmatpush1.bf16.msra.mxu0 %v8622
      %8633 = vmatprep.subr.bf16.mxu0 0
      %8634 = vmatpush1.bf16.msra.mxu0 %v8621
      %8635 = vmatprep.subr.bf16.mxu0 0
      %8636 = vmatpush1.bf16.msra.mxu0 %v8620
      %8637 = vmatprep.subr.bf16.mxu0 0
      %8638 = vmatpush1.bf16.msra.mxu0 %v8619
      %8639 = vmatprep.subr.bf16.mxu0 0
      %8640 = vmatpush1.bf16.msra.mxu0 %v8618
      %8641 = vmatprep.subr.bf16.mxu0 0
      %8642 = vmatpush1.bf16.msra.mxu0 %v8617
      %8643 = vmatprep.subr.bf16.mxu0 0
      %8644 = vmatpush1.bf16.msra.mxu0 %v8616
      %8645 = vmatprep.subr.bf16.mxu0 0
      %8646 = vmatpush1.bf16.msra.mxu0 %v8615
      %8647 = vmatprep.subr.bf16.mxu0 0
      %8648 = vmatpush2.bf16.msra.mxu0 0
      %8649 = vmatprep.subr.bf16.mxu0 0
      %8650 = vmatpush2.bf16.msra.mxu0 0
      %8651 = vmatprep.subr.bf16.mxu0 0
      %8652 = vmatpush2.bf16.msra.mxu0 0
      %8653 = vmatprep.subr.bf16.mxu0 0
      %8654 = vmatpush2.bf16.msra.mxu0 0
      %8655 = vmatprep.subr.bf16.mxu0 0
      %8656 = vmatpush2.bf16.msra.mxu0 0
      %8657 = vmatprep.subr.bf16.mxu0 0
      %8658 = vmatpush2.bf16.msra.mxu0 0
      %8659 = vmatprep.subr.bf16.mxu0 0
      %8660 = vmatpush2.bf16.msra.mxu0 0
      %8661 = vmatprep.subr.bf16.mxu0 0
      %8662 = vmatpush2.bf16.msra.mxu0 0
      %8663 = vmatprep.mubr.bf16.mxu0 0
      %8664 = vmatmul.mubr.bf16.gmra.mxu0 %v6675
      %v8665 = vpop.f32.mrf.mxu0
      %v8666 = vadd.f32 %v8582, %v8665
      %v8667 = vpop.f32.mrf.mxu0
      %v8668 = vpop.f32.mrf.mxu0
      %v8669 = vadd.f32 %v8582, %v8668
      %v8670 = vpop.f32.mrf.mxu0
      %8671 = vmatprep.mubr.bf16.mxu0 0
      %8672 = vmatmul.mubr.bf16.gmra.mxu0 %v6676
      %v8673 = vpop.f32.mrf.mxu0
      %v8674 = vadd.f32 %v8582, %v8673
      %v8675 = vpop.f32.mrf.mxu0
      %v8676 = vpop.f32.mrf.mxu0
      %v8677 = vadd.f32 %v8582, %v8676
      %v8678 = vpop.f32.mrf.mxu0
      %8679 = vmatprep.mubr.bf16.mxu0 0
      %8680 = vmatmul.mubr.bf16.gmra.mxu0 %v6677
      %v8681 = vpop.f32.mrf.mxu0
      %v8682 = vadd.f32 %v8582, %v8681
      %v8683 = vpop.f32.mrf.mxu0
      %v8684 = vpop.f32.mrf.mxu0
      %v8685 = vadd.f32 %v8582, %v8684
      %v8686 = vpop.f32.mrf.mxu0
      %8687 = vmatprep.mubr.bf16.mxu0 0
      %8688 = vmatmul.mubr.bf16.gmra.mxu0 %v6678
      %v8689 = vpop.f32.mrf.mxu0
      %v8690 = vadd.f32 %v8582, %v8689
      %v8691 = vpop.f32.mrf.mxu0
      %v8692 = vpop.f32.mrf.mxu0
      %v8693 = vadd.f32 %v8582, %v8692
      %v8694 = vpop.f32.mrf.mxu0
      %8695 = vmatprep.mubr.bf16.mxu0 0
      %8696 = vmatmul.mubr.bf16.gmra.mxu0 %v6679
      %v8697 = vpop.f32.mrf.mxu0
      %v8698 = vadd.f32 %v8582, %v8697
      %v8699 = vpop.f32.mrf.mxu0
      %v8700 = vpop.f32.mrf.mxu0
      %v8701 = vadd.f32 %v8582, %v8700
      %v8702 = vpop.f32.mrf.mxu0
      %8703 = vmatprep.mubr.bf16.mxu0 0
      %8704 = vmatmul.mubr.bf16.gmra.mxu0 %v6680
      %v8705 = vpop.f32.mrf.mxu0
      %v8706 = vadd.f32 %v8582, %v8705
      %v8707 = vpop.f32.mrf.mxu0
      %v8708 = vpop.f32.mrf.mxu0
      %v8709 = vadd.f32 %v8582, %v8708
      %v8710 = vpop.f32.mrf.mxu0
      %8711 = vmatprep.mubr.bf16.mxu0 0
      %8712 = vmatmul.mubr.bf16.gmra.mxu0 %v6681
      %v8713 = vpop.f32.mrf.mxu0
      %v8714 = vadd.f32 %v8582, %v8713
      %v8715 = vpop.f32.mrf.mxu0
      %v8716 = vpop.f32.mrf.mxu0
      %v8717 = vadd.f32 %v8582, %v8716
      %v8718 = vpop.f32.mrf.mxu0
      %8719 = vmatprep.mubr.bf16.mxu0 0
      %8720 = vmatmul.mubr.bf16.gmra.mxu0 %v6682
      %v8721 = vpop.f32.mrf.mxu0
      %v8722 = vadd.f32 %v8582, %v8721
      %v8723 = vpop.f32.mrf.mxu0
      %v8724 = vpop.f32.mrf.mxu0
      %v8725 = vadd.f32 %v8582, %v8724
      %v8726 = vpop.f32.mrf.mxu0
      %8727 = vdwg.mxu0
      %v8728 = vmul.f32 %v8666, 0.5
      %v8729 = vmul.f32 %v8669, 0.5
      %v8730 = vmul.f32 %v8674, 0.5
      %v8731 = vmul.f32 %v8677, 0.5
      %v8732 = vmul.f32 %v8682, 0.5
      %v8733 = vmul.f32 %v8685, 0.5
      %v8734 = vmul.f32 %v8690, 0.5
      %v8735 = vmul.f32 %v8693, 0.5
      %v8736 = vmul.f32 %v8698, 0.5
      %v8737 = vmul.f32 %v8701, 0.5
      %v8738 = vmul.f32 %v8706, 0.5
      %v8739 = vmul.f32 %v8709, 0.5
      %v8740 = vmul.f32 %v8714, 0.5
      %v8741 = vmul.f32 %v8717, 0.5
      %v8742 = vmul.f32 %v8722, 0.5
      %v8743 = vmul.f32 %v8725, 0.5
      %v8744 = vtanh.pop %v8728
      %v8745 = vtanh.pop %v8729
      %v8746 = vtanh.pop %v8730
      %v8747 = vtanh.pop %v8731
      %v8748 = vtanh.pop %v8732
      %v8749 = vtanh.pop %v8733
      %v8750 = vtanh.pop %v8734
      %v8751 = vtanh.pop %v8735
      %v8752 = vtanh.pop %v8736
      %v8753 = vtanh.pop %v8737
      %v8754 = vtanh.pop %v8738
      %v8755 = vtanh.pop %v8739
      %v8756 = vtanh.pop %v8740
      %v8757 = vtanh.pop %v8741
      %v8758 = vtanh.pop %v8742
      %v8759 = vtanh.pop %v8743
      %v8760 = vmul.f32 %v8744, 0.5
      %v8761 = vmul.f32 %v8745, 0.5
      %v8762 = vmul.f32 %v8746, 0.5
      %v8763 = vmul.f32 %v8747, 0.5
      %v8764 = vmul.f32 %v8748, 0.5
      %v8765 = vmul.f32 %v8749, 0.5
      %v8766 = vmul.f32 %v8750, 0.5
      %v8767 = vmul.f32 %v8751, 0.5
      %v8768 = vmul.f32 %v8752, 0.5
      %v8769 = vmul.f32 %v8753, 0.5
      %v8770 = vmul.f32 %v8754, 0.5
      %v8771 = vmul.f32 %v8755, 0.5
      %v8772 = vmul.f32 %v8756, 0.5
      %v8773 = vmul.f32 %v8757, 0.5
      %v8774 = vmul.f32 %v8758, 0.5
      %v8775 = vmul.f32 %v8759, 0.5
      %v8776 = vadd.f32 %v8760, 0.5
      %v8777 = vadd.f32 %v8761, 0.5
      %v8778 = vadd.f32 %v8762, 0.5
      %v8779 = vadd.f32 %v8763, 0.5
      %v8780 = vadd.f32 %v8764, 0.5
      %v8781 = vadd.f32 %v8765, 0.5
      %v8782 = vadd.f32 %v8766, 0.5
      %v8783 = vadd.f32 %v8767, 0.5
      %v8784 = vadd.f32 %v8768, 0.5
      %v8785 = vadd.f32 %v8769, 0.5
      %v8786 = vadd.f32 %v8770, 0.5
      %v8787 = vadd.f32 %v8771, 0.5
      %v8788 = vadd.f32 %v8772, 0.5
      %v8789 = vadd.f32 %v8773, 0.5
      %v8790 = vadd.f32 %v8774, 0.5
      %v8791 = vadd.f32 %v8775, 0.5
      %v8792 = vmul.f32 %v8666, %v8776
      %v8793 = vmul.f32 %v8669, %v8777
      %v8794 = vmul.f32 %v8674, %v8778
      %v8795 = vmul.f32 %v8677, %v8779
      %v8796 = vmul.f32 %v8682, %v8780
      %v8797 = vmul.f32 %v8685, %v8781
      %v8798 = vmul.f32 %v8690, %v8782
      %v8799 = vmul.f32 %v8693, %v8783
      %v8800 = vmul.f32 %v8698, %v8784
      %v8801 = vmul.f32 %v8701, %v8785
      %v8802 = vmul.f32 %v8706, %v8786
      %v8803 = vmul.f32 %v8709, %v8787
      %v8804 = vmul.f32 %v8714, %v8788
      %v8805 = vmul.f32 %v8717, %v8789
      %v8806 = vmul.f32 %v8722, %v8790
      %v8807 = vmul.f32 %v8725, %v8791
      %v8808 = vpack.c.bf16 %v8793, %v8792
      %v8809 = vpack.c.bf16 %v8795, %v8794
      %v8810 = vpack.c.bf16 %v8797, %v8796
      %v8811 = vpack.c.bf16 %v8799, %v8798
      %v8812 = vpack.c.bf16 %v8801, %v8800
      %v8813 = vpack.c.bf16 %v8803, %v8802
      %v8814 = vpack.c.bf16 %v8805, %v8804
      %v8815 = vpack.c.bf16 %v8807, %v8806
      %v8816 = vld [vmem:[%s1 + $0x408] sm:$0xf]
      %v8817 = vld [vmem:[%s1 + $0x40c] sm:$0xf]
      %v8818 = vld [vmem:[%s1 + $0x410] sm:$0xf]
      %v8819 = vld [vmem:[%s1 + $0x414] sm:$0xf]
      %v8820 = vld [vmem:[%s1 + $0x418] sm:$0xf]
      %v8821 = vld [vmem:[%s1 + $0x41c] sm:$0xf]
      %v8822 = vld [vmem:[%s1 + $0x420] sm:$0xf]
      %v8823 = vld [vmem:[%s1 + $0x424] sm:$0xf]
      %v8824 = vld [vmem:[%s1 + $0x428] sm:$0xf]
      %v8825 = vld [vmem:[%s1 + $0x42c] sm:$0xf]
      %v8826 = vld [vmem:[%s1 + $0x430] sm:$0xf]
      %v8827 = vld [vmem:[%s1 + $0x434] sm:$0xf]
      %v8828 = vld [vmem:[%s1 + $0x438] sm:$0xf]
      %v8829 = vld [vmem:[%s1 + $0x43c] sm:$0xf]
      %v8830 = vld [vmem:[%s1 + $0x440] sm:$0xf]
      %v8831 = vld [vmem:[%s1 + $0x444] sm:$0xf]
      %v8832 = vld [vmem:[%s2 + $0x8] sm:$0x1]
      %v8833 = vlaneseq
      %v8834 = vshrl.u32 %v8833, 7
      %v8835 = vsub.s32 0, %v8834
      %v8836 = vrot.slane %v8832, %v8835
      %v8853 = vunpack.c.l.b16 %v8816
      %v8854 = vunpack.c.l.b16 %v8817
      %v8855 = vunpack.c.l.b16 %v8818
      %v8856 = vunpack.c.l.b16 %v8819
      %v8857 = vunpack.c.l.b16 %v8820
      %v8858 = vunpack.c.l.b16 %v8821
      %v8859 = vunpack.c.l.b16 %v8822
      %v8860 = vunpack.c.l.b16 %v8823
      %v8861 = vunpack.c.l.b16 %v8824
      %v8862 = vunpack.c.l.b16 %v8825
      %v8863 = vunpack.c.l.b16 %v8826
      %v8864 = vunpack.c.l.b16 %v8827
      %v8865 = vunpack.c.l.b16 %v8828
      %v8866 = vunpack.c.l.b16 %v8829
      %v8867 = vunpack.c.l.b16 %v8830
      %v8868 = vunpack.c.l.b16 %v8831
      %v8869 = vpack.c.b16 %v8854, %v8853
      %v8870 = vpack.c.b16 %v8856, %v8855
      %v8871 = vpack.c.b16 %v8858, %v8857
      %v8872 = vpack.c.b16 %v8860, %v8859
      %v8873 = vpack.c.b16 %v8862, %v8861
      %v8874 = vpack.c.b16 %v8864, %v8863
      %v8875 = vpack.c.b16 %v8866, %v8865
      %v8876 = vpack.c.b16 %v8868, %v8867
      %8885 = vmatprep.subr.bf16.mxu0 0
      %8886 = vmatpush1.bf16.msra.mxu0 %v8876
      %8887 = vmatprep.subr.bf16.mxu0 0
      %8888 = vmatpush1.bf16.msra.mxu0 %v8875
      %8889 = vmatprep.subr.bf16.mxu0 0
      %8890 = vmatpush1.bf16.msra.mxu0 %v8874
      %8891 = vmatprep.subr.bf16.mxu0 0
      %8892 = vmatpush1.bf16.msra.mxu0 %v8873
      %8893 = vmatprep.subr.bf16.mxu0 0
      %8894 = vmatpush1.bf16.msra.mxu0 %v8872
      %8895 = vmatprep.subr.bf16.mxu0 0
      %8896 = vmatpush1.bf16.msra.mxu0 %v8871
      %8897 = vmatprep.subr.bf16.mxu0 0
      %8898 = vmatpush1.bf16.msra.mxu0 %v8870
      %8899 = vmatprep.subr.bf16.mxu0 0
      %8900 = vmatpush1.bf16.msra.mxu0 %v8869
      %8901 = vmatprep.subr.bf16.mxu0 0
      %8902 = vmatpush2.bf16.msra.mxu0 0
      %8903 = vmatprep.subr.bf16.mxu0 0
      %8904 = vmatpush2.bf16.msra.mxu0 0
      %8905 = vmatprep.subr.bf16.mxu0 0
      %8906 = vmatpush2.bf16.msra.mxu0 0
      %8907 = vmatprep.subr.bf16.mxu0 0
      %8908 = vmatpush2.bf16.msra.mxu0 0
      %8909 = vmatprep.subr.bf16.mxu0 0
      %8910 = vmatpush2.bf16.msra.mxu0 0
      %8911 = vmatprep.subr.bf16.mxu0 0
      %8912 = vmatpush2.bf16.msra.mxu0 0
      %8913 = vmatprep.subr.bf16.mxu0 0
      %8914 = vmatpush2.bf16.msra.mxu0 0
      %8915 = vmatprep.subr.bf16.mxu0 0
      %8916 = vmatpush2.bf16.msra.mxu0 0
      %8917 = vmatprep.mubr.bf16.mxu0 0
      %8918 = vmatmul.mubr.bf16.gmra.mxu0 %v8808
      %v8919 = vpop.f32.mrf.mxu0
      %v8920 = vadd.f32 %v8836, %v8919
      %v8921 = vpop.f32.mrf.mxu0
      %v8922 = vpop.f32.mrf.mxu0
      %v8923 = vadd.f32 %v8836, %v8922
      %v8924 = vpop.f32.mrf.mxu0
      %8925 = vmatprep.mubr.bf16.mxu0 0
      %8926 = vmatmul.mubr.bf16.gmra.mxu0 %v8809
      %v8927 = vpop.f32.mrf.mxu0
      %v8928 = vadd.f32 %v8836, %v8927
      %v8929 = vpop.f32.mrf.mxu0
      %v8930 = vpop.f32.mrf.mxu0
      %v8931 = vadd.f32 %v8836, %v8930
      %v8932 = vpop.f32.mrf.mxu0
      %8933 = vmatprep.mubr.bf16.mxu0 0
      %8934 = vmatmul.mubr.bf16.gmra.mxu0 %v8810
      %v8935 = vpop.f32.mrf.mxu0
      %v8936 = vadd.f32 %v8836, %v8935
      %v8937 = vpop.f32.mrf.mxu0
      %v8938 = vpop.f32.mrf.mxu0
      %v8939 = vadd.f32 %v8836, %v8938
      %v8940 = vpop.f32.mrf.mxu0
      %8941 = vmatprep.mubr.bf16.mxu0 0
      %8942 = vmatmul.mubr.bf16.gmra.mxu0 %v8811
      %v8943 = vpop.f32.mrf.mxu0
      %v8944 = vadd.f32 %v8836, %v8943
      %v8945 = vpop.f32.mrf.mxu0
      %v8946 = vpop.f32.mrf.mxu0
      %v8947 = vadd.f32 %v8836, %v8946
      %v8948 = vpop.f32.mrf.mxu0
      %8949 = vmatprep.mubr.bf16.mxu0 0
      %8950 = vmatmul.mubr.bf16.gmra.mxu0 %v8812
      %v8951 = vpop.f32.mrf.mxu0
      %v8952 = vadd.f32 %v8836, %v8951
      %v8953 = vpop.f32.mrf.mxu0
      %v8954 = vpop.f32.mrf.mxu0
      %v8955 = vadd.f32 %v8836, %v8954
      %v8956 = vpop.f32.mrf.mxu0
      %8957 = vmatprep.mubr.bf16.mxu0 0
      %8958 = vmatmul.mubr.bf16.gmra.mxu0 %v8813
      %v8959 = vpop.f32.mrf.mxu0
      %v8960 = vadd.f32 %v8836, %v8959
      %v8961 = vpop.f32.mrf.mxu0
      %v8962 = vpop.f32.mrf.mxu0
      %v8963 = vadd.f32 %v8836, %v8962
      %v8964 = vpop.f32.mrf.mxu0
      %8965 = vmatprep.mubr.bf16.mxu0 0
      %8966 = vmatmul.mubr.bf16.gmra.mxu0 %v8814
      %v8967 = vpop.f32.mrf.mxu0
      %v8968 = vadd.f32 %v8836, %v8967
      %v8969 = vpop.f32.mrf.mxu0
      %v8970 = vpop.f32.mrf.mxu0
      %v8971 = vadd.f32 %v8836, %v8970
      %v8972 = vpop.f32.mrf.mxu0
      %8973 = vmatprep.mubr.bf16.mxu0 0
      %8974 = vmatmul.mubr.bf16.gmra.mxu0 %v8815
      %v8975 = vpop.f32.mrf.mxu0
      %v8976 = vadd.f32 %v8836, %v8975
      %v8977 = vpop.f32.mrf.mxu0
      %v8978 = vpop.f32.mrf.mxu0
      %v8979 = vadd.f32 %v8836, %v8978
      %v8980 = vpop.f32.mrf.mxu0
      %8981 = vdwg.mxu0
      %v8982 = vpack.c.bf16 %v8923, %v8920
      %v8983 = vpack.c.bf16 %v8931, %v8928
      %v8984 = vpack.c.bf16 %v8939, %v8936
      %v8985 = vpack.c.bf16 %v8947, %v8944
      %v8986 = vpack.c.bf16 %v8955, %v8952
      %v8987 = vpack.c.bf16 %v8963, %v8960
      %v8988 = vpack.c.bf16 %v8971, %v8968
      %v8989 = vpack.c.bf16 %v8979, %v8976
      %v8998 = vunpack.c.l.b16 %v8982
      %v8999 = vunpack.c.h.b16 %v8982
      %v9000 = vunpack.c.l.b16 %v8983
      %v9001 = vunpack.c.h.b16 %v8983
      %v9002 = vunpack.c.l.b16 %v8984
      %v9003 = vunpack.c.h.b16 %v8984
      %v9004 = vunpack.c.l.b16 %v8985
      %v9005 = vunpack.c.h.b16 %v8985
      %v9006 = vunpack.c.l.b16 %v8986
      %v9007 = vunpack.c.h.b16 %v8986
      %v9008 = vunpack.c.l.b16 %v8987
      %v9009 = vunpack.c.h.b16 %v8987
      %v9010 = vunpack.c.l.b16 %v8988
      %v9011 = vunpack.c.h.b16 %v8988
      %v9012 = vunpack.c.l.b16 %v8989
      %v9013 = vunpack.c.h.b16 %v8989
      %v9014 = vpack.c.b16 %v8998, %v8998
      %v9015 = vpack.c.b16 %v8999, %v8999
      %v9016 = vpack.c.b16 %v9000, %v9000
      %v9017 = vpack.c.b16 %v9001, %v9001
      %v9018 = vpack.c.b16 %v9002, %v9002
      %v9019 = vpack.c.b16 %v9003, %v9003
      %v9020 = vpack.c.b16 %v9004, %v9004
      %v9021 = vpack.c.b16 %v9005, %v9005
      %v9022 = vpack.c.b16 %v9006, %v9006
      %v9023 = vpack.c.b16 %v9007, %v9007
      %v9024 = vpack.c.b16 %v9008, %v9008
      %v9025 = vpack.c.b16 %v9009, %v9009
      %v9026 = vpack.c.b16 %v9010, %v9010
      %v9027 = vpack.c.b16 %v9011, %v9011
      %v9028 = vpack.c.b16 %v9012, %v9012
      %v9029 = vpack.c.b16 %v9013, %v9013
      %9046 = vst [vmem:[%s172 + $0x100] sm:$0xf] %v9014
      %9047 = vst [vmem:[%s172 + $0x104] sm:$0xf] %v9015
      %9048 = vst [vmem:[%s172 + $0x108] sm:$0xf] %v9016
      %9049 = vst [vmem:[%s172 + $0x10c] sm:$0xf] %v9017
      %9050 = vst [vmem:[%s172 + $0x110] sm:$0xf] %v9018
      %9051 = vst [vmem:[%s172 + $0x114] sm:$0xf] %v9019
      %9052 = vst [vmem:[%s172 + $0x118] sm:$0xf] %v9020
      %9053 = vst [vmem:[%s172 + $0x11c] sm:$0xf] %v9021
      %9054 = vst [vmem:[%s172 + $0x120] sm:$0xf] %v9022
      %9055 = vst [vmem:[%s172 + $0x124] sm:$0xf] %v9023
      %9056 = vst [vmem:[%s172 + $0x128] sm:$0xf] %v9024
      %9057 = vst [vmem:[%s172 + $0x12c] sm:$0xf] %v9025
      %9058 = vst [vmem:[%s172 + $0x130] sm:$0xf] %v9026
      %9059 = vst [vmem:[%s172 + $0x134] sm:$0xf] %v9027
      %9060 = vst [vmem:[%s172 + $0x138] sm:$0xf] %v9028
      %9061 = vst [vmem:[%s172 + $0x13c] sm:$0xf] %v9029
      %v9062 = vld [vmem:[%s1 + $0x388] sm:$0xf]
      %v9063 = vld [vmem:[%s1 + $0x38c] sm:$0xf]
      %v9064 = vld [vmem:[%s1 + $0x390] sm:$0xf]
      %v9065 = vld [vmem:[%s1 + $0x394] sm:$0xf]
      %v9066 = vld [vmem:[%s1 + $0x398] sm:$0xf]
      %v9067 = vld [vmem:[%s1 + $0x39c] sm:$0xf]
      %v9068 = vld [vmem:[%s1 + $0x3a0] sm:$0xf]
      %v9069 = vld [vmem:[%s1 + $0x3a4] sm:$0xf]
      %v9070 = vld [vmem:[%s1 + $0x3a8] sm:$0xf]
      %v9071 = vld [vmem:[%s1 + $0x3ac] sm:$0xf]
      %v9072 = vld [vmem:[%s1 + $0x3b0] sm:$0xf]
      %v9073 = vld [vmem:[%s1 + $0x3b4] sm:$0xf]
      %v9074 = vld [vmem:[%s1 + $0x3b8] sm:$0xf]
      %v9075 = vld [vmem:[%s1 + $0x3bc] sm:$0xf]
      %v9076 = vld [vmem:[%s1 + $0x3c0] sm:$0xf]
      %v9077 = vld [vmem:[%s1 + $0x3c4] sm:$0xf]
      %v9078 = vld [vmem:[%s2 + $0x6] sm:$0x1]
      %v9079 = vlaneseq
      %v9080 = vshrl.u32 %v9079, 7
      %v9081 = vsub.s32 0, %v9080
      %v9082 = vrot.slane %v9078, %v9081
      %v9099 = vunpack.c.l.b16 %v9062
      %v9100 = vunpack.c.l.b16 %v9063
      %v9101 = vunpack.c.l.b16 %v9064
      %v9102 = vunpack.c.l.b16 %v9065
      %v9103 = vunpack.c.l.b16 %v9066
      %v9104 = vunpack.c.l.b16 %v9067
      %v9105 = vunpack.c.l.b16 %v9068
      %v9106 = vunpack.c.l.b16 %v9069
      %v9107 = vunpack.c.l.b16 %v9070
      %v9108 = vunpack.c.l.b16 %v9071
      %v9109 = vunpack.c.l.b16 %v9072
      %v9110 = vunpack.c.l.b16 %v9073
      %v9111 = vunpack.c.l.b16 %v9074
      %v9112 = vunpack.c.l.b16 %v9075
      %v9113 = vunpack.c.l.b16 %v9076
      %v9114 = vunpack.c.l.b16 %v9077
      %v9115 = vpack.c.b16 %v9100, %v9099
      %v9116 = vpack.c.b16 %v9102, %v9101
      %v9117 = vpack.c.b16 %v9104, %v9103
      %v9118 = vpack.c.b16 %v9106, %v9105
      %v9119 = vpack.c.b16 %v9108, %v9107
      %v9120 = vpack.c.b16 %v9110, %v9109
      %v9121 = vpack.c.b16 %v9112, %v9111
      %v9122 = vpack.c.b16 %v9114, %v9113
      %9131 = vmatprep.subr.bf16.mxu0 0
      %9132 = vmatpush1.bf16.msra.mxu0 %v9122
      %9133 = vmatprep.subr.bf16.mxu0 0
      %9134 = vmatpush1.bf16.msra.mxu0 %v9121
      %9135 = vmatprep.subr.bf16.mxu0 0
      %9136 = vmatpush1.bf16.msra.mxu0 %v9120
      %9137 = vmatprep.subr.bf16.mxu0 0
      %9138 = vmatpush1.bf16.msra.mxu0 %v9119
      %9139 = vmatprep.subr.bf16.mxu0 0
      %9140 = vmatpush1.bf16.msra.mxu0 %v9118
      %9141 = vmatprep.subr.bf16.mxu0 0
      %9142 = vmatpush1.bf16.msra.mxu0 %v9117
      %9143 = vmatprep.subr.bf16.mxu0 0
      %9144 = vmatpush1.bf16.msra.mxu0 %v9116
      %9145 = vmatprep.subr.bf16.mxu0 0
      %9146 = vmatpush1.bf16.msra.mxu0 %v9115
      %9147 = vmatprep.subr.bf16.mxu0 0
      %9148 = vmatpush2.bf16.msra.mxu0 0
      %9149 = vmatprep.subr.bf16.mxu0 0
      %9150 = vmatpush2.bf16.msra.mxu0 0
      %9151 = vmatprep.subr.bf16.mxu0 0
      %9152 = vmatpush2.bf16.msra.mxu0 0
      %9153 = vmatprep.subr.bf16.mxu0 0
      %9154 = vmatpush2.bf16.msra.mxu0 0
      %9155 = vmatprep.subr.bf16.mxu0 0
      %9156 = vmatpush2.bf16.msra.mxu0 0
      %9157 = vmatprep.subr.bf16.mxu0 0
      %9158 = vmatpush2.bf16.msra.mxu0 0
      %9159 = vmatprep.subr.bf16.mxu0 0
      %9160 = vmatpush2.bf16.msra.mxu0 0
      %9161 = vmatprep.subr.bf16.mxu0 0
      %9162 = vmatpush2.bf16.msra.mxu0 0
      %9163 = vmatprep.mubr.bf16.mxu0 0
      %9164 = vmatmul.mubr.bf16.gmra.mxu0 %v7172
      %v9165 = vpop.f32.mrf.mxu0
      %v9166 = vadd.f32 %v9082, %v9165
      %v9167 = vpop.f32.mrf.mxu0
      %v9168 = vpop.f32.mrf.mxu0
      %v9169 = vadd.f32 %v9082, %v9168
      %v9170 = vpop.f32.mrf.mxu0
      %9171 = vmatprep.mubr.bf16.mxu0 0
      %9172 = vmatmul.mubr.bf16.gmra.mxu0 %v7173
      %v9173 = vpop.f32.mrf.mxu0
      %v9174 = vadd.f32 %v9082, %v9173
      %v9175 = vpop.f32.mrf.mxu0
      %v9176 = vpop.f32.mrf.mxu0
      %v9177 = vadd.f32 %v9082, %v9176
      %v9178 = vpop.f32.mrf.mxu0
      %9179 = vdwg.mxu0
      %v9180 = vmul.f32 %v9166, 0.5
      %v9181 = vmul.f32 %v9169, 0.5
      %v9182 = vmul.f32 %v9174, 0.5
      %v9183 = vmul.f32 %v9177, 0.5
      %v9184 = vtanh.pop %v9180
      %v9185 = vtanh.pop %v9181
      %v9186 = vtanh.pop %v9182
      %v9187 = vtanh.pop %v9183
      %v9188 = vmul.f32 %v9184, 0.5
      %v9189 = vmul.f32 %v9185, 0.5
      %v9190 = vmul.f32 %v9186, 0.5
      %v9191 = vmul.f32 %v9187, 0.5
      %v9192 = vadd.f32 %v9188, 0.5
      %v9193 = vadd.f32 %v9189, 0.5
      %v9194 = vadd.f32 %v9190, 0.5
      %v9195 = vadd.f32 %v9191, 0.5
      %v9196 = vmul.f32 %v9166, %v9192
      %v9197 = vmul.f32 %v9169, %v9193
      %v9198 = vmul.f32 %v9174, %v9194
      %v9199 = vmul.f32 %v9177, %v9195
      %v9200 = vpack.c.bf16 %v9197, %v9196
      %v9201 = vpack.c.bf16 %v9199, %v9198
      %v9202 = vld [vmem:[%s1 + $0x448] sm:$0xf]
      %v9203 = vld [vmem:[%s1 + $0x44c] sm:$0xf]
      %v9204 = vld [vmem:[%s1 + $0x450] sm:$0xf]
      %v9205 = vld [vmem:[%s1 + $0x454] sm:$0xf]
      %v9206 = vld [vmem:[%s1 + $0x458] sm:$0xf]
      %v9207 = vld [vmem:[%s1 + $0x45c] sm:$0xf]
      %v9208 = vld [vmem:[%s1 + $0x460] sm:$0xf]
      %v9209 = vld [vmem:[%s1 + $0x464] sm:$0xf]
      %v9210 = vld [vmem:[%s1 + $0x468] sm:$0xf]
      %v9211 = vld [vmem:[%s1 + $0x46c] sm:$0xf]
      %v9212 = vld [vmem:[%s1 + $0x470] sm:$0xf]
      %v9213 = vld [vmem:[%s1 + $0x474] sm:$0xf]
      %v9214 = vld [vmem:[%s1 + $0x478] sm:$0xf]
      %v9215 = vld [vmem:[%s1 + $0x47c] sm:$0xf]
      %v9216 = vld [vmem:[%s1 + $0x480] sm:$0xf]
      %v9217 = vld [vmem:[%s1 + $0x484] sm:$0xf]
      %v9218 = vld [vmem:[%s2 + $0x9] sm:$0x1]
      %v9219 = vlaneseq
      %v9220 = vshrl.u32 %v9219, 7
      %v9221 = vsub.s32 0, %v9220
      %v9222 = vrot.slane %v9218, %v9221
      %v9239 = vunpack.c.l.b16 %v9202
      %v9240 = vunpack.c.l.b16 %v9203
      %v9241 = vunpack.c.l.b16 %v9204
      %v9242 = vunpack.c.l.b16 %v9205
      %v9243 = vunpack.c.l.b16 %v9206
      %v9244 = vunpack.c.l.b16 %v9207
      %v9245 = vunpack.c.l.b16 %v9208
      %v9246 = vunpack.c.l.b16 %v9209
      %v9247 = vunpack.c.l.b16 %v9210
      %v9248 = vunpack.c.l.b16 %v9211
      %v9249 = vunpack.c.l.b16 %v9212
      %v9250 = vunpack.c.l.b16 %v9213
      %v9251 = vunpack.c.l.b16 %v9214
      %v9252 = vunpack.c.l.b16 %v9215
      %v9253 = vunpack.c.l.b16 %v9216
      %v9254 = vunpack.c.l.b16 %v9217
      %v9255 = vpack.c.b16 %v9240, %v9239
      %v9256 = vpack.c.b16 %v9242, %v9241
      %v9257 = vpack.c.b16 %v9244, %v9243
      %v9258 = vpack.c.b16 %v9246, %v9245
      %v9259 = vpack.c.b16 %v9248, %v9247
      %v9260 = vpack.c.b16 %v9250, %v9249
      %v9261 = vpack.c.b16 %v9252, %v9251
      %v9262 = vpack.c.b16 %v9254, %v9253
      %9271 = vmatprep.subr.bf16.mxu0 0
      %9272 = vmatpush1.bf16.msra.mxu0 %v9262
      %9273 = vmatprep.subr.bf16.mxu0 0
      %9274 = vmatpush1.bf16.msra.mxu0 %v9261
      %9275 = vmatprep.subr.bf16.mxu0 0
      %9276 = vmatpush1.bf16.msra.mxu0 %v9260
      %9277 = vmatprep.subr.bf16.mxu0 0
      %9278 = vmatpush1.bf16.msra.mxu0 %v9259
      %9279 = vmatprep.subr.bf16.mxu0 0
      %9280 = vmatpush1.bf16.msra.mxu0 %v9258
      %9281 = vmatprep.subr.bf16.mxu0 0
      %9282 = vmatpush1.bf16.msra.mxu0 %v9257
      %9283 = vmatprep.subr.bf16.mxu0 0
      %9284 = vmatpush1.bf16.msra.mxu0 %v9256
      %9285 = vmatprep.subr.bf16.mxu0 0
      %9286 = vmatpush1.bf16.msra.mxu0 %v9255
      %9287 = vmatprep.subr.bf16.mxu0 0
      %9288 = vmatpush2.bf16.msra.mxu0 0
      %9289 = vmatprep.subr.bf16.mxu0 0
      %9290 = vmatpush2.bf16.msra.mxu0 0
      %9291 = vmatprep.subr.bf16.mxu0 0
      %9292 = vmatpush2.bf16.msra.mxu0 0
      %9293 = vmatprep.subr.bf16.mxu0 0
      %9294 = vmatpush2.bf16.msra.mxu0 0
      %9295 = vmatprep.subr.bf16.mxu0 0
      %9296 = vmatpush2.bf16.msra.mxu0 0
      %9297 = vmatprep.subr.bf16.mxu0 0
      %9298 = vmatpush2.bf16.msra.mxu0 0
      %9299 = vmatprep.subr.bf16.mxu0 0
      %9300 = vmatpush2.bf16.msra.mxu0 0
      %9301 = vmatprep.subr.bf16.mxu0 0
      %9302 = vmatpush2.bf16.msra.mxu0 0
      %9303 = vmatprep.mubr.bf16.mxu0 0
      %9304 = vmatmul.mubr.bf16.gmra.mxu0 %v9200
      %v9305 = vpop.f32.mrf.mxu0
      %v9306 = vadd.f32 %v9222, %v9305
      %v9307 = vpop.f32.mrf.mxu0
      %v9308 = vpop.f32.mrf.mxu0
      %v9309 = vadd.f32 %v9222, %v9308
      %v9310 = vpop.f32.mrf.mxu0
      %9311 = vmatprep.mubr.bf16.mxu0 0
      %9312 = vmatmul.mubr.bf16.gmra.mxu0 %v9201
      %v9313 = vpop.f32.mrf.mxu0
      %v9314 = vadd.f32 %v9222, %v9313
      %v9315 = vpop.f32.mrf.mxu0
      %v9316 = vpop.f32.mrf.mxu0
      %v9317 = vadd.f32 %v9222, %v9316
      %v9318 = vpop.f32.mrf.mxu0
      %9319 = vdwg.mxu0
      %v9320 = vpack.c.bf16 %v9309, %v9306
      %v9321 = vpack.c.bf16 %v9317, %v9314
      %v9324 = vunpack.c.l.b16 %v9320
      %v9325 = vunpack.c.h.b16 %v9320
      %v9326 = vunpack.c.l.b16 %v9321
      %v9327 = vunpack.c.h.b16 %v9321
      %v9328 = vpack.c.b16 %v9324, %v9324
      %v9329 = vpack.c.b16 %v9325, %v9325
      %v9330 = vpack.c.b16 %v9326, %v9326
      %v9331 = vpack.c.b16 %v9327, %v9327
      %9336 = vst [vmem:[%s172 + $0x140] sm:$0xf] %v9328
      %9337 = vst [vmem:[%s172 + $0x144] sm:$0xf] %v9329
      %9338 = vst [vmem:[%s172 + $0x148] sm:$0xf] %v9330
      %9339 = vst [vmem:[%s172 + $0x14c] sm:$0xf] %v9331
      %s9340 = smul.u32 84, %s14
      %p9341 = scmp.lt.s32.totalorder %s9340, 167
      %s9342 = scalar_select %p9341, %s9340, 167
      %s9343 = smul.addr %s9342, 4
      %s9344 = scalar_lea.vmem %s3, %s9343
      // Predicated region
      $region33: #{_forward_impl.1} parent=31 // pred_check
        %p9345 = pneg %p100
      $region34: #{_forward_impl.1} parent=31 // pred_check_branch
        %9347 = sbr.rel (%p9345) target = $region36
      $region35: #{_forward_impl.1} parent=31 // pred_region
        %s9348 = smul.u32 84, %s14
      $region36: #{_forward_impl.1} parent=31 // pred_fallthru
        _
    $region32: #{_forward_impl.1} parent=5 // pred_fallthru
      _
    %p9349 = scmp.le.s32.totalorder 2, %s9
    // Predicated region
    $region37: #{_forward_impl.1} parent=5 // pred_check
      %p9350 = pneg %p9349
    $region38: #{_forward_impl.1} parent=5 // pred_check_branch
      %9352 = sbr.rel (%p9350) target = $region40
    $region39: #{_forward_impl.1} parent=5 // pred_region
      %s9353 = ssub.s32 %s9, 2
      // Predicated region
      $region41: #{_forward_impl.1} parent=39 // pred_check
        %p9354 = pneg %p106
      $region42: #{_forward_impl.1} parent=39 // pred_check_branch
        %9356 = sbr.rel (%p9354) target = $region44
      $region43: #{_forward_impl.1} parent=39 // pred_region
        %s9357 = smul.u32 84, %s15
        %p9358 = scmp.lt.s32.totalorder %s9357, 167
        %s9359 = scalar_select %p9358, %s9357, 167
        %s9360 = smul.addr %s9359, 4
        %s9361 = scalar_lea.vmem %s3, %s9360
      $region44: #{_forward_impl.1} parent=39 // pred_fallthru
        _
    $region40: #{_forward_impl.1} parent=5 // pred_fallthru
      _
  $region6: #{_forward_impl.1} parent=0 // loop_footer
    %s13 = sadd.s32 1, %s9
  $region7: #{_forward_impl.1} parent=0 // loop_footer_branch
    %8 = sbr.rel target = $region3
  $region8: #{_forward_impl.1} parent=0 // loop_exit
    _

</llo_original>
